<compile_context>
chip_gen: v7x
topology: tpu7x:2x2x1
jax: 0.10.0
libtpu: 0.0.40
codegen_flags: <defaults>
</compile_context>

<pallas_src>
import functools
import math

import jax
import jax.numpy as jnp
from jax.experimental import pallas as pl
from jax.experimental.pallas import tpu as pltpu

# Model-wide static configuration (chosen so MXU lane widths stay friendly).
CIN = 3            # image channels
C = 128            # backbone / RPN channels
HID = 128          # ROI box-head hidden width
A = 3              # anchors per location
NCLS = 5           # classes (incl. background)
KBB = 16           # backbone dx-folded K lanes (3*CIN = 9, padded to 16)
RPN_HEAD_N = 16    # obj(3) | bbox(12) | pad(1)
PRED_N = 32        # cls(5) | bbox coord-major(20) | pad(7)
_BBOX_CLIP = math.log(1000.0 / 16.0)   # torchvision clamp on dw/dh before exp
ROWS_PER_TILE = 1024                    # target matmul rows per grid step

MEAN = jnp.array([0.485, 0.456, 0.406], jnp.float32)
STD = jnp.array([0.229, 0.224, 0.225], jnp.float32)


def _round_up(n, m):
    return ((n + m - 1) // m) * m


def _vmem_limit():
    # Generation-aware scoped-VMEM budget (v5e/v6e: 128 MiB phys, v7x: 64 MiB).
    try:
        info_fn = getattr(pltpu, "get_tpu_info", None)
        if info_fn is not None:
            cap = getattr(info_fn(), "vmem_capacity_bytes", None)
            if cap:
                return max(16 * 1024 * 1024, min(int(cap * 0.45), 64 * 1024 * 1024))
    except Exception:
        pass
    return 32 * 1024 * 1024


_VMEM_LIMIT = _vmem_limit()


def _tiling(H, W):
    """Padded width (mult of 8), row-tile height (so TH*W8 % 128 == 0), padded H."""
    W8 = _round_up(W, 8)
    step = 128 // math.gcd(W8, 128)
    th = min(max(1, ROWS_PER_TILE // W8), H)
    TH = _round_up(max(th, 1), step)
    H_t = _round_up(H, TH)
    return W8, TH, H_t, H_t // TH


# ----------------------------------------------------------------------------
# Pallas kernels
# ----------------------------------------------------------------------------
def _conv_dy_kernel(x_ref, w_ref, b_ref, o_ref, acc_ref, *, n_rows, W8):
    # 3x3 conv: dx taps folded onto lanes, dy taps accumulated into VMEM scratch.
    for dy in range(3):
        patch = x_ref[dy * W8: dy * W8 + n_rows, :]       # sublane-aligned slice
        c = jnp.dot(patch, w_ref[dy], preferred_element_type=jnp.float32)
        if dy == 0:
            acc_ref[...] = c
        else:
            acc_ref[...] += c
    o_ref[...] = jnp.maximum(acc_ref[...] + b_ref[...], 0.0).astype(o_ref.dtype)


def pallas_backbone(cols_t, w, b, B, n_t, TH, W8):
    rows_in = (TH + 2) * W8
    rows_out = TH * W8
    K = cols_t.shape[-1]
    Cc = w.shape[-1]
    return pl.pallas_call(
        functools.partial(_conv_dy_kernel, n_rows=rows_out, W8=W8),
        out_shape=jax.ShapeDtypeStruct((B, n_t * rows_out, Cc), jnp.bfloat16),
        grid=(B, n_t),
        in_specs=[
            pl.BlockSpec((pl.Squeezed(), rows_in, K), lambda b, i: (b * n_t + i, 0, 0)),
            pl.BlockSpec((3, K, Cc), lambda b, i: (0, 0, 0)),
            pl.BlockSpec((1, Cc), lambda b, i: (0, 0)),
        ],
        out_specs=pl.BlockSpec((pl.Squeezed(), rows_out, Cc), lambda b, i: (b, i, 0)),
        scratch_shapes=[pltpu.VMEM((rows_out, Cc), jnp.float32)],
        compiler_params=pltpu.CompilerParams(
            dimension_semantics=("parallel", "parallel"),
            vmem_limit_bytes=_VMEM_LIMIT),
    )(cols_t, w, b)


def _rpn_kernel(xw_ref, wdy_ref, cb_ref, hw_ref, hb_ref, o_ref, acc_ref, *, n_rows, W8):
    # Fused RPN: 3x3 conv (dy taps accumulated in VMEM scratch) + ReLU + narrow
    # (objectness | bbox) 1x1 head with a 16-lane f32 writeback.
    for dy in range(3):
        patch = xw_ref[dy * W8: dy * W8 + n_rows, :]
        c = jnp.dot(patch, wdy_ref[dy], preferred_element_type=jnp.float32)
        if dy == 0:
            acc_ref[...] = c
        else:
            acc_ref[...] += c
    t = jnp.maximum(acc_ref[...] + cb_ref[...], 0.0)
    o_ref[...] = jnp.dot(t.astype(jnp.bfloat16), hw_ref[...],
                         preferred_element_type=jnp.float32) + hb_ref[...]


def pallas_rpn(xw_t, w_dy, conv_b, head_w, head_b, B, n_t, TH, W8):
    rows_in = (TH + 2) * W8
    rows_out = TH * W8
    C3 = xw_t.shape[-1]
    n_c = w_dy.shape[-1]
    N = head_w.shape[-1]
    return pl.pallas_call(
        functools.partial(_rpn_kernel, n_rows=rows_out, W8=W8),
        out_shape=jax.ShapeDtypeStruct((B, n_t * rows_out, N), jnp.float32),
        grid=(B, n_t),
        in_specs=[
            pl.BlockSpec((pl.Squeezed(), rows_in, C3), lambda b, i: (b * n_t + i, 0, 0)),
            pl.BlockSpec((3, C3, n_c), lambda b, i: (0, 0, 0)),
            pl.BlockSpec((1, n_c), lambda b, i: (0, 0)),
            pl.BlockSpec((n_c, N), lambda b, i: (0, 0)),
            pl.BlockSpec((1, N), lambda b, i: (0, 0)),
        ],
        out_specs=pl.BlockSpec((pl.Squeezed(), rows_out, N), lambda b, i: (b, i, 0)),
        scratch_shapes=[pltpu.VMEM((rows_out, n_c), jnp.float32)],
        compiler_params=pltpu.CompilerParams(
            dimension_semantics=("parallel", "parallel"),
            vmem_limit_bytes=_VMEM_LIMIT),
    )(xw_t, w_dy, conv_b, head_w, head_b)


def _decode_clip_cols(a, d, H, W):
    """Shared box decode (with dw/dh clamp) + clip; returns (N,1) coord columns."""
    aw = a[:, 2:3] - a[:, 0:1]
    ah = a[:, 3:4] - a[:, 1:2]
    ax = a[:, 0:1] + 0.5 * aw
    ay = a[:, 1:2] + 0.5 * ah
    dw = jnp.minimum(d[:, 2:3], _BBOX_CLIP)
    dh = jnp.minimum(d[:, 3:4], _BBOX_CLIP)
    cx = d[:, 0:1] * aw + ax
    cy = d[:, 1:2] * ah + ay
    w = jnp.exp(dw) * aw
    h = jnp.exp(dh) * ah
    x1 = jnp.clip(cx - 0.5 * w, 0.0, float(W))
    y1 = jnp.clip(cy - 0.5 * h, 0.0, float(H))
    x2 = jnp.clip(cx + 0.5 * w, 0.0, float(W))
    y2 = jnp.clip(cy + 0.5 * h, 0.0, float(H))
    return x1, y1, x2, y2


def _roi_kernel(anch_ref, delt_ref, feat_ref, xc_ref, yc_ref,
                prop_ref, pool_ref, acc_ref, cnt_ref, *, H, W):
    # Proposal decode + clip + in-box average pooling, spatially chunked so the
    # feature is streamed one row-tile at a time (VMEM-bounded reduction).
    t = pl.program_id(1)
    x1, y1, x2, y2 = _decode_clip_cols(anch_ref[...], delt_ref[...], H, W)
    xc = xc_ref[...]
    yc = yc_ref[...]
    inside = jnp.where((xc >= x1) & (xc <= x2) & (yc >= y1) & (yc <= y2), 1.0, 0.0)
    cnt = jnp.sum(inside, axis=-1, keepdims=True)
    part = jnp.dot(inside.astype(jnp.bfloat16), feat_ref[...],
                   preferred_element_type=jnp.float32)

    @pl.when(t == 0)
    def _():
        acc_ref[...] = part
        cnt_ref[...] = cnt

    @pl.when(t > 0)
    def _():
        acc_ref[...] += part
        cnt_ref[...] += cnt

    @pl.when(t == pl.num_programs(1) - 1)
    def _():
        prop_ref[...] = jnp.concatenate([x1, y1, x2, y2], axis=-1)
        denom = jnp.maximum(cnt_ref[...], 1.0)
        pool_ref[...] = (acc_ref[...] * pl.reciprocal(denom, approx=True)
                         ).astype(pool_ref.dtype)


def pallas_roi_decode_pool(anch_sel, delt_sel, feat_p, xc, yc, H, W, chunk):
    B, R_pad, _ = anch_sel.shape
    Cc = feat_p.shape[-1]
    n_t = feat_p.shape[1] // chunk
    return pl.pallas_call(
        functools.partial(_roi_kernel, H=H, W=W),
        out_shape=(jax.ShapeDtypeStruct((B, R_pad, 4), jnp.float32),
                   jax.ShapeDtypeStruct((B, R_pad, Cc), jnp.bfloat16)),
        grid=(B, n_t),
        in_specs=[
            pl.BlockSpec((pl.Squeezed(), R_pad, 4), lambda b, t: (b, 0, 0)),
            pl.BlockSpec((pl.Squeezed(), R_pad, 4), lambda b, t: (b, 0, 0)),
            pl.BlockSpec((pl.Squeezed(), chunk, Cc), lambda b, t: (b, t, 0)),
            pl.BlockSpec((1, chunk), lambda b, t: (0, t)),
            pl.BlockSpec((1, chunk), lambda b, t: (0, t)),
        ],
        out_specs=(pl.BlockSpec((pl.Squeezed(), R_pad, 4), lambda b, t: (b, 0, 0)),
                   pl.BlockSpec((pl.Squeezed(), R_pad, Cc), lambda b, t: (b, 0, 0))),
        scratch_shapes=[pltpu.VMEM((R_pad, Cc), jnp.float32),
                        pltpu.VMEM((R_pad, 1), jnp.float32)],
        compiler_params=pltpu.CompilerParams(
            dimension_semantics=("parallel", "arbitrary"),
            vmem_limit_bytes=_VMEM_LIMIT),
    )(anch_sel, delt_sel, feat_p, xc, yc)


def _box_head_kernel(p_ref, prop_ref, w1_ref, b1_ref, w2_ref, b2_ref, wp_ref, bp_ref,
                     box_ref, score_ref, label_ref, *, H, W):
    # FC1 -> ReLU -> FC2 -> ReLU -> predictor, fused with the whole detection tail:
    # softmax, foreground argmax, per-class delta gather, box decode + clip.
    h1 = jnp.maximum(jnp.dot(p_ref[...], w1_ref[...],
                             preferred_element_type=jnp.float32) + b1_ref[...], 0.0)
    h2 = jnp.maximum(jnp.dot(h1.astype(jnp.bfloat16), w2_ref[...],
                             preferred_element_type=jnp.float32) + b2_ref[...], 0.0)
    out = jnp.dot(h2.astype(jnp.bfloat16), wp_ref[...],
                  preferred_element_type=jnp.float32) + bp_ref[...]
    logits = out[:, :NCLS]
    m = jnp.max(logits, axis=-1, keepdims=True)
    e = jnp.exp(logits - m)
    probs = e / jnp.sum(e, axis=-1, keepdims=True)
    fg = probs[:, 1:NCLS]
    best = jnp.max(fg, axis=-1, keepdims=True)
    lane = jax.lax.broadcasted_iota(jnp.int32, fg.shape, 1)
    fg_idx = jnp.min(jnp.where(fg >= best, lane, NCLS - 2), axis=-1, keepdims=True)
    labels = fg_idx + 1
    onehot = (jax.lax.broadcasted_iota(jnp.int32, logits.shape, 1) == labels
              ).astype(jnp.float32)
    d_cols = [jnp.sum(out[:, NCLS + k * NCLS: NCLS + (k + 1) * NCLS] * onehot,
                      axis=-1, keepdims=True) for k in range(4)]
    deltas = jnp.concatenate(d_cols, axis=-1)
    x1, y1, x2, y2 = _decode_clip_cols(prop_ref[...], deltas, H, W)
    box_ref[...] = jnp.concatenate([x1, y1, x2, y2], axis=-1)
    score_ref[...] = best
    label_ref[...] = labels


def pallas_box_head(pooled, prop, w1, b1, w2, b2, wp, bp, H, W):
    M, K = pooled.shape
    TM = M if M <= 256 else 256
    M_pad = _round_up(M, TM)
    if M_pad != M:
        pooled = jnp.pad(pooled, ((0, M_pad - M), (0, 0)))
        prop = jnp.pad(prop, ((0, M_pad - M), (0, 0)))
    NP = wp.shape[-1]
    boxes, scores, labels = pl.pallas_call(
        functools.partial(_box_head_kernel, H=H, W=W),
        out_shape=(jax.ShapeDtypeStruct((M_pad, 4), jnp.float32),
                   jax.ShapeDtypeStruct((M_pad, 1), jnp.float32),
                   jax.ShapeDtypeStruct((M_pad, 1), jnp.int32)),
        grid=(M_pad // TM,),
        in_specs=[
            pl.BlockSpec((TM, K), lambda i: (i, 0)),
            pl.BlockSpec((TM, 4), lambda i: (i, 0)),
            pl.BlockSpec((K, HID), lambda i: (0, 0)),
            pl.BlockSpec((1, HID), lambda i: (0, 0)),
            pl.BlockSpec((HID, HID), lambda i: (0, 0)),
            pl.BlockSpec((1, HID), lambda i: (0, 0)),
            pl.BlockSpec((HID, NP), lambda i: (0, 0)),
            pl.BlockSpec((1, NP), lambda i: (0, 0)),
        ],
        out_specs=(pl.BlockSpec((TM, 4), lambda i: (i, 0)),
                   pl.BlockSpec((TM, 1), lambda i: (i, 0)),
                   pl.BlockSpec((TM, 1), lambda i: (i, 0))),
        compiler_params=pltpu.CompilerParams(
            dimension_semantics=("parallel",),
            vmem_limit_bytes=_VMEM_LIMIT),
    )(pooled, prop, w1, b1, w2, b2, wp, bp)
    return boxes[:M], scores[:M, 0], labels[:M, 0]


# ----------------------------------------------------------------------------
# Plain-JAX glue (layout building, anchors, top-k, parameter setup)
# ----------------------------------------------------------------------------
def _tile_with_halo(x, TH, n_t):
    """x: (B, H_t+2, W8, K) -> per-tile 2-row halo'd blocks (B*n_t, (TH+2)*W8, K)."""
    B, _, W8, K = x.shape
    main = x[:, :n_t * TH].reshape(B, n_t, TH, W8, K)
    idx = jnp.arange(n_t)[:, None] * TH + TH + jnp.arange(2)[None, :]
    halo = x[:, idx]                                           # (B, n_t, 2, W8, K)
    return jnp.concatenate([main, halo], axis=2).reshape(B * n_t, (TH + 2) * W8, K)


def make_anchors(H, W, sizes=(4.0, 8.0, 16.0)):
    ys = jnp.arange(H, dtype=jnp.float32) + 0.5
    xs = jnp.arange(W, dtype=jnp.float32) + 0.5
    yy, xx = jnp.meshgrid(ys, xs, indexing="ij")
    ctr = jnp.stack([xx.ravel(), yy.ravel()], axis=-1)          # (HW, 2)  x, y
    per_size = []
    for s in sizes:
        half = s / 2.0
        per_size.append(jnp.concatenate([ctr - half, ctr + half], axis=-1))
    return jnp.stack(per_size, axis=1).reshape(-1, 4)           # (HW*A, 4)


def init_params(key, cin=CIN, c=C, a=A, hid=HID, ncls=NCLS):
    ks = jax.random.split(key, 8)

    def w(k, shape, scale=0.05):
        return (scale * jax.random.normal(k, shape)).astype(jnp.float32)

    return {
        "backbone_w": w(ks[0], (3, 3, cin, c)),
        "backbone_b": jnp.zeros((c,), jnp.float32),
        "rpn_conv_w": w(ks[1], (3, 3, c, c)),
        "rpn_conv_b": jnp.zeros((c,), jnp.float32),
        "rpn_cls_w": w(ks[2], (c, a)),
        "rpn_cls_b": jnp.zeros((a,), jnp.float32),
        "rpn_bbox_w": w(ks[3], (c, 4 * a)),
        "rpn_bbox_b": jnp.zeros((4 * a,), jnp.float32),
        "fc1_w": w(ks[4], (c, hid)),
        "fc1_b": jnp.zeros((hid,), jnp.float32),
        "fc2_w": w(ks[5], (hid, hid)),
        "fc2_b": jnp.zeros((hid,), jnp.float32),
        "cls_w": w(ks[6], (hid, ncls)),
        "cls_b": jnp.zeros((ncls,), jnp.float32),
        "bbox_w": w(ks[7], (hid, ncls * 4)),
        "bbox_b": jnp.zeros((ncls * 4,), jnp.float32),
    }


def prepare_params(params):
    """One-time weight transforms: fold 1/std into the backbone conv (mean is
    subtracted in the wrapper so zero padding stays exact), dx-fold the conv
    weights, merge the narrow heads into slim lane-padded matmuls (bbox regressor
    reordered coord-major for the fused gather), cast MXU operands to bf16."""
    inv_std = 1.0 / STD
    wb = params["backbone_w"]                               # (3,3,CIN,C)
    cin, c = wb.shape[2], wb.shape[3]
    w_fold = wb * inv_std[None, None, :, None]
    bb_w = jnp.pad(w_fold.reshape(3, 3 * cin, c), ((0, 0), (0, KBB - 3 * cin), (0, 0)))

    rpn_w = params["rpn_conv_w"].reshape(3, 3 * c, c)       # dy taps, (dx,cin) folded

    rpn_hw = jnp.concatenate([params["rpn_cls_w"], params["rpn_bbox_w"]], axis=1)
    rpn_hb = jnp.concatenate([params["rpn_cls_b"], params["rpn_bbox_b"]], axis=0)
    rpn_hw = jnp.pad(rpn_hw, ((0, 0), (0, RPN_HEAD_N - 5 * A)))
    rpn_hb = jnp.pad(rpn_hb, (0, RPN_HEAD_N - 5 * A))

    hid = params["fc1_w"].shape[1]
    bw = params["bbox_w"].reshape(hid, NCLS, 4).transpose(0, 2, 1).reshape(hid, 4 * NCLS)
    bb = params["bbox_b"].reshape(NCLS, 4).T.reshape(4 * NCLS)
    pred_w = jnp.pad(jnp.concatenate([params["cls_w"], bw], axis=1),
                     ((0, 0), (0, PRED_N - 5 * NCLS)))
    pred_b = jnp.pad(jnp.concatenate([params["cls_b"], bb], axis=0),
                     (0, PRED_N - 5 * NCLS))

    bf = jnp.bfloat16
    return {
        "bb_w": bb_w.astype(bf), "bb_b": params["backbone_b"].reshape(1, -1),
        "rpn_w": rpn_w.astype(bf), "rpn_cb": params["rpn_conv_b"].reshape(1, -1),
        "rpn_hw": rpn_hw.astype(bf), "rpn_hb": rpn_hb.reshape(1, -1),
        "fc1_w": params["fc1_w"].astype(bf), "fc1_b": params["fc1_b"].reshape(1, -1),
        "fc2_w": params["fc2_w"].astype(bf), "fc2_b": params["fc2_b"].reshape(1, -1),
        "pred_w": pred_w.astype(bf), "pred_b": pred_b.reshape(1, -1),
    }


# ----------------------------------------------------------------------------
# GeneralizedRCNN forward (inference / eval path)
# ----------------------------------------------------------------------------
def generalized_rcnn_forward(p, images_nchw, num_proposals=8):
    B, cin, H, W = images_nchw.shape
    W8, TH, H_t, n_t = _tiling(H, W)
    chunk = TH * W8
    HWp = H_t * W8
    R_pad = _round_up(max(num_proposals, 1), 8)

    # --- self.transform: subtract mean here; 1/std is folded into the backbone ---
    x = jnp.transpose(images_nchw, (0, 2, 3, 1)).astype(jnp.float32) - MEAN
    # TODO(synk): GeneralizedRCNNTransform resize + batching-to-common-size omitted
    # (original_image_sizes == image_sizes, so postprocess rescaling is identity).

    # --- self.backbone: 3x3 conv + ReLU (dx lanes folded, dy accumulated in-kernel) ---
    img_p = jnp.pad(x, ((0, 0), (1, H_t + 1 - H), (1, W8 + 1 - W), (0, 0)))
    colsf = jnp.concatenate([img_p[:, :, g:g + W8, :] for g in range(3)], axis=-1)
    colsf = jnp.pad(colsf, ((0, 0), (0, 0), (0, 0), (0, KBB - 3 * cin)))
    cols_t = _tile_with_halo(colsf.astype(jnp.bfloat16), TH, n_t)
    feat_p = pallas_backbone(cols_t, p["bb_w"], p["bb_b"], B, n_t, TH, W8)  # (B,HWp,C)

    # --- self.rpn: fused conv + heads, row-tiled grid (B, n_t) ---
    valid = (jnp.arange(H_t)[:, None] < H) & (jnp.arange(W8)[None, :] < W)  # (H_t,W8)
    featz = feat_p.reshape(B, H_t, W8, C) * valid[None, :, :, None].astype(feat_p.dtype)
    featpad = jnp.pad(featz, ((0, 0), (1, 1), (1, 1), (0, 0)))
    xwf = jnp.concatenate([featpad[:, :, g:g + W8, :] for g in range(3)], axis=-1)
    # TODO(synk): the dx lane-fold still duplicates RPN input HBM traffic ~3x; a fully
    # in-kernel halo-DMA assembly would remove it (matters most on v5e).
    xw_t = _tile_with_halo(xwf, TH, n_t)
    rpn_out = pallas_rpn(xw_t, p["rpn_w"], p["rpn_cb"], p["rpn_hw"], p["rpn_hb"],
                         B, n_t, TH, W8)                                    # (B,HWp,16)

    validf = valid.reshape(1, HWp)
    obj = jnp.where(validf[:, :, None], rpn_out[:, :, :A], -jnp.inf).reshape(B, HWp * A)
    rdeltas = rpn_out[:, :, A:A + 4 * A].reshape(B, HWp * A, 4)
    anchors = make_anchors(H_t, W8)                                         # (HWp*A,4)

    _, top_idx = jax.lax.top_k(obj, R_pad)                                  # (B,R_pad)
    anch_sel = jnp.take(anchors, top_idx, axis=0)
    delt_sel = jnp.take_along_axis(rdeltas, top_idx[:, :, None], axis=1)
    # TODO(synk): RPN NMS and pre/post-NMS top-n filtering beyond top-k not implemented.

    # --- self.roi_heads: chunked decode+clip+pool, then fused head + detection tail ---
    ys = jnp.arange(H_t, dtype=jnp.float32) + 0.5
    xs = jnp.arange(W8, dtype=jnp.float32) + 0.5
    yy, xx = jnp.meshgrid(ys, xs, indexing="ij")
    proposals, pooled = pallas_roi_decode_pool(
        anch_sel, delt_sel, feat_p, xx.reshape(1, HWp), yy.reshape(1, HWp), H, W, chunk)
    # TODO(synk): bilinear 7x7 RoIAlign approximated by in-box average pooling.

    boxes, scores, labels = pallas_box_head(
        pooled.reshape(B * R_pad, C), proposals.reshape(B * R_pad, 4),
        p["fc1_w"], p["fc1_b"], p["fc2_w"], p["fc2_b"], p["pred_w"], p["pred_b"], H, W)
    # TODO(synk): per-class score thresholding + NMS in roi_heads omitted.

    boxes = boxes.reshape(B, R_pad, 4)[:, :num_proposals]
    scores = scores.reshape(B, R_pad)[:, :num_proposals]
    labels = labels.reshape(B, R_pad)[:, :num_proposals]
    return [
        {"boxes": boxes[b], "labels": labels[b], "scores": scores[b]}
        for b in range(B)
    ]


if __name__ == "__main__":
    key = jax.random.PRNGKey(0)
    pkey, ikey = jax.random.split(key)
    params = init_params(pkey)
    prepped = prepare_params(params)
    # list[Tensor] of equally-sized images -> stacked NCHW batch (torch convention)
    images = jax.random.uniform(ikey, (2, 3, 16, 16), dtype=jnp.float32)
    fwd = jax.jit(generalized_rcnn_forward)
    detections = fwd(prepped, images)
    for det in detections:
        jax.block_until_ready(det["boxes"])
        jax.block_until_ready(det["labels"])
        jax.block_until_ready(det["scores"])
    print("KERNEL_OK")
</pallas_src>

<mosaic_0001>
module attributes {stable_mosaic.version = 11 : i64} {
  func.func @_conv_dy_kernel(%arg0: i32, %arg1: i32, %arg2: memref<1x288x16xbf16, #tpu.memory_space<vmem>>, %arg3: memref<3x16x128xbf16, #tpu.memory_space<vmem>>, %arg4: memref<1x128xf32, #tpu.memory_space<vmem>>, %arg5: memref<1x256x128xbf16, #tpu.memory_space<vmem>>, %arg6: memref<256x128xf32, #tpu.memory_space<vmem>>) attributes {dimension_semantics = [#tpu.dimension_semantics<parallel>, #tpu.dimension_semantics<parallel>], iteration_bounds = array<i64: 2, 1>, scalar_prefetch = 0 : i64, scratch_operands = 1 : i64, tpu.core_type = #tpu.core_type<tc>, window_params = [{transform_indices = @transform_0, window_bounds = array<i64: 1, 288, 16>}, {pipeline_mode = #tpu.pipeline_mode<synchronous>, transform_indices = @transform_1, window_bounds = array<i64: 3, 16, 128>}, {pipeline_mode = #tpu.pipeline_mode<synchronous>, transform_indices = @transform_2, window_bounds = array<i64: 1, 128>}, {transform_indices = @transform_3, window_bounds = array<i64: 1, 256, 128>}]} {
    %c0 = arith.constant 0 : index
    %c0_0 = arith.constant 0 : index
    %c0_1 = arith.constant 0 : index
    %0 = vector.load %arg2[%c0, %c0_0, %c0_1] : memref<1x288x16xbf16, #tpu.memory_space<vmem>>, vector<1x256x16xbf16>
    %1 = vector.shape_cast %0 : vector<1x256x16xbf16> to vector<256x16xbf16>
    %c0_2 = arith.constant 0 : index
    %c0_3 = arith.constant 0 : index
    %c0_4 = arith.constant 0 : index
    %2 = vector.load %arg3[%c0_2, %c0_3, %c0_4] : memref<3x16x128xbf16, #tpu.memory_space<vmem>>, vector<1x16x128xbf16>
    %3 = vector.shape_cast %2 : vector<1x16x128xbf16> to vector<16x128xbf16>
    %cst = arith.constant dense<0.000000e+00> : vector<256x128xf32>
    %4 = tpu.matmul %1, %3, %cst {dimension_numbers = #tpu.dot_dimension_numbers<[1], [0], [0], [1], [0, 0, 1, 1], [], []>} : vector<256x16xbf16>, vector<16x128xbf16>, vector<256x128xf32> -> vector<256x128xf32>
    %c0_5 = arith.constant 0 : index
    %c0_6 = arith.constant 0 : index
    %5 = vector.load %arg6[%c0_5, %c0_6] : memref<256x128xf32, #tpu.memory_space<vmem>>, vector<256x128xf32>
    tpu.vector_store %arg6[%c0_5, %c0_6], %4 {strides = array<i32>} : memref<256x128xf32, #tpu.memory_space<vmem>>, vector<256x128xf32>,
    %c0_7 = arith.constant 0 : index
    %c16 = arith.constant 16 : index
    %c0_8 = arith.constant 0 : index
    %6 = vector.load %arg2[%c0_7, %c16, %c0_8] : memref<1x288x16xbf16, #tpu.memory_space<vmem>>, vector<1x256x16xbf16>
    %7 = vector.shape_cast %6 : vector<1x256x16xbf16> to vector<256x16xbf16>
    %c1 = arith.constant 1 : index
    %c0_9 = arith.constant 0 : index
    %c0_10 = arith.constant 0 : index
    %8 = vector.load %arg3[%c1, %c0_9, %c0_10] : memref<3x16x128xbf16, #tpu.memory_space<vmem>>, vector<1x16x128xbf16>
    %9 = vector.shape_cast %8 : vector<1x16x128xbf16> to vector<16x128xbf16>
    %cst_11 = arith.constant dense<0.000000e+00> : vector<256x128xf32>
    %10 = tpu.matmul %7, %9, %cst_11 {dimension_numbers = #tpu.dot_dimension_numbers<[1], [0], [0], [1], [0, 0, 1, 1], [], []>} : vector<256x16xbf16>, vector<16x128xbf16>, vector<256x128xf32> -> vector<256x128xf32>
    %c0_12 = arith.constant 0 : index
    %c0_13 = arith.constant 0 : index
    %11 = vector.load %arg6[%c0_12, %c0_13] : memref<256x128xf32, #tpu.memory_space<vmem>>, vector<256x128xf32>
    %12 = arith.addf %11, %10 : vector<256x128xf32>
    %c0_14 = arith.constant 0 : index
    %c0_15 = arith.constant 0 : index
    %13 = vector.load %arg6[%c0_14, %c0_15] : memref<256x128xf32, #tpu.memory_space<vmem>>, vector<256x128xf32>
    tpu.vector_store %arg6[%c0_14, %c0_15], %12 {strides = array<i32>} : memref<256x128xf32, #tpu.memory_space<vmem>>, vector<256x128xf32>,
    %c0_16 = arith.constant 0 : index
    %c32 = arith.constant 32 : index
    %c0_17 = arith.constant 0 : index
    %14 = vector.load %arg2[%c0_16, %c32, %c0_17] : memref<1x288x16xbf16, #tpu.memory_space<vmem>>, vector<1x256x16xbf16>
    %15 = vector.shape_cast %14 : vector<1x256x16xbf16> to vector<256x16xbf16>
    %c2 = arith.constant 2 : index
    %c0_18 = arith.constant 0 : index
    %c0_19 = arith.constant 0 : index
    %16 = vector.load %arg3[%c2, %c0_18, %c0_19] : memref<3x16x128xbf16, #tpu.memory_space<vmem>>, vector<1x16x128xbf16>
    %17 = vector.shape_cast %16 : vector<1x16x128xbf16> to vector<16x128xbf16>
    %cst_20 = arith.constant dense<0.000000e+00> : vector<256x128xf32>
    %18 = tpu.matmul %15, %17, %cst_20 {dimension_numbers = #tpu.dot_dimension_numbers<[1], [0], [0], [1], [0, 0, 1, 1], [], []>} : vector<256x16xbf16>, vector<16x128xbf16>, vector<256x128xf32> -> vector<256x128xf32>
    %c0_21 = arith.constant 0 : index
    %c0_22 = arith.constant 0 : index
    %19 = vector.load %arg6[%c0_21, %c0_22] : memref<256x128xf32, #tpu.memory_space<vmem>>, vector<256x128xf32>
    %20 = arith.addf %19, %18 : vector<256x128xf32>
    %c0_23 = arith.constant 0 : index
    %c0_24 = arith.constant 0 : index
    %21 = vector.load %arg6[%c0_23, %c0_24] : memref<256x128xf32, #tpu.memory_space<vmem>>, vector<256x128xf32>
    tpu.vector_store %arg6[%c0_23, %c0_24], %20 {strides = array<i32>} : memref<256x128xf32, #tpu.memory_space<vmem>>, vector<256x128xf32>,
    %c0_25 = arith.constant 0 : index
    %c0_26 = arith.constant 0 : index
    %22 = vector.load %arg6[%c0_25, %c0_26] : memref<256x128xf32, #tpu.memory_space<vmem>>, vector<256x128xf32>
    %c0_27 = arith.constant 0 : index
    %c0_28 = arith.constant 0 : index
    %23 = vector.load %arg4[%c0_27, %c0_28] : memref<1x128xf32, #tpu.memory_space<vmem>>, vector<1x128xf32>
    %24 = vector.broadcast %23 : vector<1x128xf32> to vector<256x128xf32>
    %25 = arith.addf %22, %24 : vector<256x128xf32>
    %cst_29 = arith.constant 0.000000e+00 : f32
    %26 = vector.broadcast %cst_29 : f32 to vector<256x128xf32>
    %27 = arith.maximumf %25, %26 : vector<256x128xf32>
    %28 = arith.truncf %27 : vector<256x128xf32> to vector<256x128xbf16>
    %c0_30 = arith.constant 0 : index
    %c0_31 = arith.constant 0 : index
    %c0_32 = arith.constant 0 : index
    %29 = vector.load %arg5[%c0_30, %c0_31, %c0_32] : memref<1x256x128xbf16, #tpu.memory_space<vmem>>, vector<1x256x128xbf16>
    %30 = vector.shape_cast %29 : vector<1x256x128xbf16> to vector<256x128xbf16>
    %31 = vector.shape_cast %28 : vector<256x128xbf16> to vector<1x256x128xbf16>
    tpu.vector_store %arg5[%c0_30, %c0_31, %c0_32], %31 {strides = array<i32>} : memref<1x256x128xbf16, #tpu.memory_space<vmem>>, vector<1x256x128xbf16>,
    return
  }
  func.func @transform_0(%arg0: i32, %arg1: i32) -> (i32, i32, i32) {
    %c1_i32 = arith.constant 1 : i32
    %0 = arith.muli %arg0, %c1_i32 : i32
    %1 = arith.addi %0, %arg1 : i32
    %c0_i32 = arith.constant 0 : i32
    %c0_i32_0 = arith.constant 0 : i32
    %c0_i32_1 = arith.constant 0 : i32
    return %1, %c0_i32, %c0_i32_0 : i32, i32, i32
  }
  func.func @transform_1(%arg0: i32, %arg1: i32) -> (i32, i32, i32) {
    %c0_i32 = arith.constant 0 : i32
    %c0_i32_0 = arith.constant 0 : i32
    %c0_i32_1 = arith.constant 0 : i32
    %c0_i32_2 = arith.constant 0 : i32
    return %c0_i32, %c0_i32_0, %c0_i32_1 : i32, i32, i32
  }
  func.func @transform_2(%arg0: i32, %arg1: i32) -> (i32, i32) {
    %c0_i32 = arith.constant 0 : i32
    %c0_i32_0 = arith.constant 0 : i32
    %c0_i32_1 = arith.constant 0 : i32
    return %c0_i32, %c0_i32_0 : i32, i32
  }
  func.func @transform_3(%arg0: i32, %arg1: i32) -> (i32, i32, i32) {
    %c0_i32 = arith.constant 0 : i32
    %c0_i32_0 = arith.constant 0 : i32
    return %arg0, %arg1, %c0_i32 : i32, i32, i32
  }
}

module attributes {stable_mosaic.version = 11 : i64} {
  func.func @_rpn_kernel(%arg0: i32, %arg1: i32, %arg2: memref<1x288x384xbf16, #tpu.memory_space<vmem>>, %arg3: memref<3x384x128xbf16, #tpu.memory_space<vmem>>, %arg4: memref<1x128xf32, #tpu.memory_space<vmem>>, %arg5: memref<128x16xbf16, #tpu.memory_space<vmem>>, %arg6: memref<1x16xf32, #tpu.memory_space<vmem>>, %arg7: memref<1x256x16xf32, #tpu.memory_space<vmem>>, %arg8: memref<256x128xf32, #tpu.memory_space<vmem>>) attributes {dimension_semantics = [#tpu.dimension_semantics<parallel>, #tpu.dimension_semantics<parallel>], iteration_bounds = array<i64: 2, 1>, scalar_prefetch = 0 : i64, scratch_operands = 1 : i64, tpu.core_type = #tpu.core_type<tc>, window_params = [{transform_indices = @transform_0, window_bounds = array<i64: 1, 288, 384>}, {pipeline_mode = #tpu.pipeline_mode<synchronous>, transform_indices = @transform_1, window_bounds = array<i64: 3, 384, 128>}, {pipeline_mode = #tpu.pipeline_mode<synchronous>, transform_indices = @transform_2, window_bounds = array<i64: 1, 128>}, {pipeline_mode = #tpu.pipeline_mode<synchronous>, transform_indices = @transform_3, window_bounds = array<i64: 128, 16>}, {pipeline_mode = #tpu.pipeline_mode<synchronous>, transform_indices = @transform_4, window_bounds = array<i64: 1, 16>}, {transform_indices = @transform_5, window_bounds = array<i64: 1, 256, 16>}]} {
    %c0 = arith.constant 0 : index
    %c0_0 = arith.constant 0 : index
    %c0_1 = arith.constant 0 : index
    %0 = vector.load %arg2[%c0, %c0_0, %c0_1] : memref<1x288x384xbf16, #tpu.memory_space<vmem>>, vector<1x256x384xbf16>
    %1 = vector.shape_cast %0 : vector<1x256x384xbf16> to vector<256x384xbf16>
    %c0_2 = arith.constant 0 : index
    %c0_3 = arith.constant 0 : index
    %c0_4 = arith.constant 0 : index
    %2 = vector.load %arg3[%c0_2, %c0_3, %c0_4] : memref<3x384x128xbf16, #tpu.memory_space<vmem>>, vector<1x384x128xbf16>
    %3 = vector.shape_cast %2 : vector<1x384x128xbf16> to vector<384x128xbf16>
    %cst = arith.constant dense<0.000000e+00> : vector<256x128xf32>
    %4 = tpu.matmul %1, %3, %cst {dimension_numbers = #tpu.dot_dimension_numbers<[1], [0], [0], [1], [0, 0, 1, 1], [], []>} : vector<256x384xbf16>, vector<384x128xbf16>, vector<256x128xf32> -> vector<256x128xf32>
    %c0_5 = arith.constant 0 : index
    %c0_6 = arith.constant 0 : index
    %5 = vector.load %arg8[%c0_5, %c0_6] : memref<256x128xf32, #tpu.memory_space<vmem>>, vector<256x128xf32>
    tpu.vector_store %arg8[%c0_5, %c0_6], %4 {strides = array<i32>} : memref<256x128xf32, #tpu.memory_space<vmem>>, vector<256x128xf32>,
    %c0_7 = arith.constant 0 : index
    %c16 = arith.constant 16 : index
    %c0_8 = arith.constant 0 : index
    %6 = vector.load %arg2[%c0_7, %c16, %c0_8] : memref<1x288x384xbf16, #tpu.memory_space<vmem>>, vector<1x256x384xbf16>
    %7 = vector.shape_cast %6 : vector<1x256x384xbf16> to vector<256x384xbf16>
    %c1 = arith.constant 1 : index
    %c0_9 = arith.constant 0 : index
    %c0_10 = arith.constant 0 : index
    %8 = vector.load %arg3[%c1, %c0_9, %c0_10] : memref<3x384x128xbf16, #tpu.memory_space<vmem>>, vector<1x384x128xbf16>
    %9 = vector.shape_cast %8 : vector<1x384x128xbf16> to vector<384x128xbf16>
    %cst_11 = arith.constant dense<0.000000e+00> : vector<256x128xf32>
    %10 = tpu.matmul %7, %9, %cst_11 {dimension_numbers = #tpu.dot_dimension_numbers<[1], [0], [0], [1], [0, 0, 1, 1], [], []>} : vector<256x384xbf16>, vector<384x128xbf16>, vector<256x128xf32> -> vector<256x128xf32>
    %c0_12 = arith.constant 0 : index
    %c0_13 = arith.constant 0 : index
    %11 = vector.load %arg8[%c0_12, %c0_13] : memref<256x128xf32, #tpu.memory_space<vmem>>, vector<256x128xf32>
    %12 = arith.addf %11, %10 : vector<256x128xf32>
    %c0_14 = arith.constant 0 : index
    %c0_15 = arith.constant 0 : index
    %13 = vector.load %arg8[%c0_14, %c0_15] : memref<256x128xf32, #tpu.memory_space<vmem>>, vector<256x128xf32>
    tpu.vector_store %arg8[%c0_14, %c0_15], %12 {strides = array<i32>} : memref<256x128xf32, #tpu.memory_space<vmem>>, vector<256x128xf32>,
    %c0_16 = arith.constant 0 : index
    %c32 = arith.constant 32 : index
    %c0_17 = arith.constant 0 : index
    %14 = vector.load %arg2[%c0_16, %c32, %c0_17] : memref<1x288x384xbf16, #tpu.memory_space<vmem>>, vector<1x256x384xbf16>
    %15 = vector.shape_cast %14 : vector<1x256x384xbf16> to vector<256x384xbf16>
    %c2 = arith.constant 2 : index
    %c0_18 = arith.constant 0 : index
    %c0_19 = arith.constant 0 : index
    %16 = vector.load %arg3[%c2, %c0_18, %c0_19] : memref<3x384x128xbf16, #tpu.memory_space<vmem>>, vector<1x384x128xbf16>
    %17 = vector.shape_cast %16 : vector<1x384x128xbf16> to vector<384x128xbf16>
    %cst_20 = arith.constant dense<0.000000e+00> : vector<256x128xf32>
    %18 = tpu.matmul %15, %17, %cst_20 {dimension_numbers = #tpu.dot_dimension_numbers<[1], [0], [0], [1], [0, 0, 1, 1], [], []>} : vector<256x384xbf16>, vector<384x128xbf16>, vector<256x128xf32> -> vector<256x128xf32>
    %c0_21 = arith.constant 0 : index
    %c0_22 = arith.constant 0 : index
    %19 = vector.load %arg8[%c0_21, %c0_22] : memref<256x128xf32, #tpu.memory_space<vmem>>, vector<256x128xf32>
    %20 = arith.addf %19, %18 : vector<256x128xf32>
    %c0_23 = arith.constant 0 : index
    %c0_24 = arith.constant 0 : index
    %21 = vector.load %arg8[%c0_23, %c0_24] : memref<256x128xf32, #tpu.memory_space<vmem>>, vector<256x128xf32>
    tpu.vector_store %arg8[%c0_23, %c0_24], %20 {strides = array<i32>} : memref<256x128xf32, #tpu.memory_space<vmem>>, vector<256x128xf32>,
    %c0_25 = arith.constant 0 : index
    %c0_26 = arith.constant 0 : index
    %22 = vector.load %arg8[%c0_25, %c0_26] : memref<256x128xf32, #tpu.memory_space<vmem>>, vector<256x128xf32>
    %c0_27 = arith.constant 0 : index
    %c0_28 = arith.constant 0 : index
    %23 = vector.load %arg4[%c0_27, %c0_28] : memref<1x128xf32, #tpu.memory_space<vmem>>, vector<1x128xf32>
    %24 = vector.broadcast %23 : vector<1x128xf32> to vector<256x128xf32>
    %25 = arith.addf %22, %24 : vector<256x128xf32>
    %cst_29 = arith.constant 0.000000e+00 : f32
    %26 = vector.broadcast %cst_29 : f32 to vector<256x128xf32>
    %27 = arith.maximumf %25, %26 : vector<256x128xf32>
    %28 = arith.truncf %27 : vector<256x128xf32> to vector<256x128xbf16>
    %c0_30 = arith.constant 0 : index
    %c0_31 = arith.constant 0 : index
    %29 = vector.load %arg5[%c0_30, %c0_31] : memref<128x16xbf16, #tpu.memory_space<vmem>>, vector<128x16xbf16>
    %cst_32 = arith.constant dense<0.000000e+00> : vector<256x16xf32>
    %30 = tpu.matmul %28, %29, %cst_32 {dimension_numbers = #tpu.dot_dimension_numbers<[1], [0], [0], [1], [0, 0, 1, 1], [], []>} : vector<256x128xbf16>, vector<128x16xbf16>, vector<256x16xf32> -> vector<256x16xf32>
    %c0_33 = arith.constant 0 : index
    %c0_34 = arith.constant 0 : index
    %31 = vector.load %arg6[%c0_33, %c0_34] : memref<1x16xf32, #tpu.memory_space<vmem>>, vector<1x16xf32>
    %32 = vector.broadcast %31 : vector<1x16xf32> to vector<256x16xf32>
    %33 = arith.addf %30, %32 : vector<256x16xf32>
    %c0_35 = arith.constant 0 : index
    %c0_36 = arith.constant 0 : index
    %c0_37 = arith.constant 0 : index
    %34 = vector.load %arg7[%c0_35, %c0_36, %c0_37] : memref<1x256x16xf32, #tpu.memory_space<vmem>>, vector<1x256x16xf32>
    %35 = vector.shape_cast %34 : vector<1x256x16xf32> to vector<256x16xf32>
    %36 = vector.shape_cast %33 : vector<256x16xf32> to vector<1x256x16xf32>
    tpu.vector_store %arg7[%c0_35, %c0_36, %c0_37], %36 {strides = array<i32>} : memref<1x256x16xf32, #tpu.memory_space<vmem>>, vector<1x256x16xf32>,
    return
  }
  func.func @transform_0(%arg0: i32, %arg1: i32) -> (i32, i32, i32) {
    %c1_i32 = arith.constant 1 : i32
    %0 = arith.muli %arg0, %c1_i32 : i32
    %1 = arith.addi %0, %arg1 : i32
    %c0_i32 = arith.constant 0 : i32
    %c0_i32_0 = arith.constant 0 : i32
    %c0_i32_1 = arith.constant 0 : i32
    return %1, %c0_i32, %c0_i32_0 : i32, i32, i32
  }
  func.func @transform_1(%arg0: i32, %arg1: i32) -> (i32, i32, i32) {
    %c0_i32 = arith.constant 0 : i32
    %c0_i32_0 = arith.constant 0 : i32
    %c0_i32_1 = arith.constant 0 : i32
    %c0_i32_2 = arith.constant 0 : i32
    return %c0_i32, %c0_i32_0, %c0_i32_1 : i32, i32, i32
  }
  func.func @transform_2(%arg0: i32, %arg1: i32) -> (i32, i32) {
    %c0_i32 = arith.constant 0 : i32
    %c0_i32_0 = arith.constant 0 : i32
    %c0_i32_1 = arith.constant 0 : i32
    return %c0_i32, %c0_i32_0 : i32, i32
  }
  func.func @transform_3(%arg0: i32, %arg1: i32) -> (i32, i32) {
    %c0_i32 = arith.constant 0 : i32
    %c0_i32_0 = arith.constant 0 : i32
    %c0_i32_1 = arith.constant 0 : i32
    return %c0_i32, %c0_i32_0 : i32, i32
  }
  func.func @transform_4(%arg0: i32, %arg1: i32) -> (i32, i32) {
    %c0_i32 = arith.constant 0 : i32
    %c0_i32_0 = arith.constant 0 : i32
    %c0_i32_1 = arith.constant 0 : i32
    return %c0_i32, %c0_i32_0 : i32, i32
  }
  func.func @transform_5(%arg0: i32, %arg1: i32) -> (i32, i32, i32) {
    %c0_i32 = arith.constant 0 : i32
    %c0_i32_0 = arith.constant 0 : i32
    return %arg0, %arg1, %c0_i32 : i32, i32, i32
  }
}

module attributes {stable_mosaic.version = 11 : i64} {
  func.func @_roi_kernel(%arg0: i32, %arg1: i32, %arg2: memref<1x8x4xf32, #tpu.memory_space<vmem>>, %arg3: memref<1x8x4xf32, #tpu.memory_space<vmem>>, %arg4: memref<1x256x128xbf16, #tpu.memory_space<vmem>>, %arg5: memref<1x256xf32, #tpu.memory_space<vmem>>, %arg6: memref<1x256xf32, #tpu.memory_space<vmem>>, %arg7: memref<1x8x4xf32, #tpu.memory_space<vmem>>, %arg8: memref<1x8x128xbf16, #tpu.memory_space<vmem>>, %arg9: memref<8x128xf32, #tpu.memory_space<vmem>>, %arg10: memref<8x1xf32, #tpu.memory_space<vmem>>) attributes {dimension_semantics = [#tpu.dimension_semantics<parallel>, #tpu.dimension_semantics<arbitrary>], iteration_bounds = array<i64: 2, 1>, scalar_prefetch = 0 : i64, scratch_operands = 2 : i64, tpu.core_type = #tpu.core_type<tc>, window_params = [{transform_indices = @transform_0, window_bounds = array<i64: 1, 8, 4>}, {transform_indices = @transform_1, window_bounds = array<i64: 1, 8, 4>}, {transform_indices = @transform_2, window_bounds = array<i64: 1, 256, 128>}, {transform_indices = @transform_3, window_bounds = array<i64: 1, 256>}, {transform_indices = @transform_4, window_bounds = array<i64: 1, 256>}, {transform_indices = @transform_5, window_bounds = array<i64: 1, 8, 4>}, {transform_indices = @transform_6, window_bounds = array<i64: 1, 8, 128>}]} {
    %c0 = arith.constant 0 : index
    %c0_0 = arith.constant 0 : index
    %c0_1 = arith.constant 0 : index
    %0 = vector.load %arg2[%c0, %c0_0, %c0_1] : memref<1x8x4xf32, #tpu.memory_space<vmem>>, vector<1x8x4xf32>
    %1 = vector.shape_cast %0 : vector<1x8x4xf32> to vector<8x4xf32>
    %c0_2 = arith.constant 0 : index
    %c0_3 = arith.constant 0 : index
    %c0_4 = arith.constant 0 : index
    %2 = vector.load %arg3[%c0_2, %c0_3, %c0_4] : memref<1x8x4xf32, #tpu.memory_space<vmem>>, vector<1x8x4xf32>
    %3 = vector.shape_cast %2 : vector<1x8x4xf32> to vector<8x4xf32>
    %4 = vector.extract_strided_slice %1 {offsets = [0, 2], sizes = [8, 1], strides = [1, 1]} : vector<8x4xf32> to vector<8x1xf32>
    %5 = vector.extract_strided_slice %1 {offsets = [0, 0], sizes = [8, 1], strides = [1, 1]} : vector<8x4xf32> to vector<8x1xf32>
    %6 = arith.subf %4, %5 : vector<8x1xf32>
    %7 = vector.extract_strided_slice %1 {offsets = [0, 3], sizes = [8, 1], strides = [1, 1]} : vector<8x4xf32> to vector<8x1xf32>
    %8 = vector.extract_strided_slice %1 {offsets = [0, 1], sizes = [8, 1], strides = [1, 1]} : vector<8x4xf32> to vector<8x1xf32>
    %9 = arith.subf %7, %8 : vector<8x1xf32>
    %10 = vector.extract_strided_slice %1 {offsets = [0, 0], sizes = [8, 1], strides = [1, 1]} : vector<8x4xf32> to vector<8x1xf32>
    %cst = arith.constant 5.000000e-01 : f32
    %11 = vector.broadcast %cst : f32 to vector<8x1xf32>
    %12 = arith.mulf %11, %6 : vector<8x1xf32>
    %13 = arith.addf %10, %12 : vector<8x1xf32>
    %14 = vector.extract_strided_slice %1 {offsets = [0, 1], sizes = [8, 1], strides = [1, 1]} : vector<8x4xf32> to vector<8x1xf32>
    %cst_5 = arith.constant 5.000000e-01 : f32
    %15 = vector.broadcast %cst_5 : f32 to vector<8x1xf32>
    %16 = arith.mulf %15, %9 : vector<8x1xf32>
    %17 = arith.addf %14, %16 : vector<8x1xf32>
    %18 = vector.extract_strided_slice %3 {offsets = [0, 2], sizes = [8, 1], strides = [1, 1]} : vector<8x4xf32> to vector<8x1xf32>
    %cst_6 = arith.constant 4.13516665 : f32
    %19 = vector.broadcast %cst_6 : f32 to vector<8x1xf32>
    %20 = arith.minimumf %18, %19 : vector<8x1xf32>
    %21 = vector.extract_strided_slice %3 {offsets = [0, 3], sizes = [8, 1], strides = [1, 1]} : vector<8x4xf32> to vector<8x1xf32>
    %cst_7 = arith.constant 4.13516665 : f32
    %22 = vector.broadcast %cst_7 : f32 to vector<8x1xf32>
    %23 = arith.minimumf %21, %22 : vector<8x1xf32>
    %24 = vector.extract_strided_slice %3 {offsets = [0, 0], sizes = [8, 1], strides = [1, 1]} : vector<8x4xf32> to vector<8x1xf32>
    %25 = arith.mulf %24, %6 : vector<8x1xf32>
    %26 = arith.addf %25, %13 : vector<8x1xf32>
    %27 = vector.extract_strided_slice %3 {offsets = [0, 1], sizes = [8, 1], strides = [1, 1]} : vector<8x4xf32> to vector<8x1xf32>
    %28 = arith.mulf %27, %9 : vector<8x1xf32>
    %29 = arith.addf %28, %17 : vector<8x1xf32>
    %30 = math.exp %20 : vector<8x1xf32>
    %31 = arith.mulf %30, %6 : vector<8x1xf32>
    %32 = math.exp %23 : vector<8x1xf32>
    %33 = arith.mulf %32, %9 : vector<8x1xf32>
    %cst_8 = arith.constant 5.000000e-01 : f32
    %34 = vector.broadcast %cst_8 : f32 to vector<8x1xf32>
    %35 = arith.mulf %34, %31 : vector<8x1xf32>
    %36 = arith.subf %26, %35 : vector<8x1xf32>
    %cst_9 = arith.constant 0.000000e+00 : f32
    %cst_10 = arith.constant 1.600000e+01 : f32
    %37 = vector.broadcast %cst_9 : f32 to vector<8x1xf32>
    %38 = arith.maximumf %37, %36 : vector<8x1xf32>
    %39 = vector.broadcast %cst_10 : f32 to vector<8x1xf32>
    %40 = arith.minimumf %39, %38 : vector<8x1xf32>
    %cst_11 = arith.constant 5.000000e-01 : f32
    %41 = vector.broadcast %cst_11 : f32 to vector<8x1xf32>
    %42 = arith.mulf %41, %33 : vector<8x1xf32>
    %43 = arith.subf %29, %42 : vector<8x1xf32>
    %cst_12 = arith.constant 0.000000e+00 : f32
    %cst_13 = arith.constant 1.600000e+01 : f32
    %44 = vector.broadcast %cst_12 : f32 to vector<8x1xf32>
    %45 = arith.maximumf %44, %43 : vector<8x1xf32>
    %46 = vector.broadcast %cst_13 : f32 to vector<8x1xf32>
    %47 = arith.minimumf %46, %45 : vector<8x1xf32>
    %cst_14 = arith.constant 5.000000e-01 : f32
    %48 = vector.broadcast %cst_14 : f32 to vector<8x1xf32>
    %49 = arith.mulf %48, %31 : vector<8x1xf32>
    %50 = arith.addf %26, %49 : vector<8x1xf32>
    %cst_15 = arith.constant 0.000000e+00 : f32
    %cst_16 = arith.constant 1.600000e+01 : f32
    %51 = vector.broadcast %cst_15 : f32 to vector<8x1xf32>
    %52 = arith.maximumf %51, %50 : vector<8x1xf32>
    %53 = vector.broadcast %cst_16 : f32 to vector<8x1xf32>
    %54 = arith.minimumf %53, %52 : vector<8x1xf32>
    %cst_17 = arith.constant 5.000000e-01 : f32
    %55 = vector.broadcast %cst_17 : f32 to vector<8x1xf32>
    %56 = arith.mulf %55, %33 : vector<8x1xf32>
    %57 = arith.addf %29, %56 : vector<8x1xf32>
    %cst_18 = arith.constant 0.000000e+00 : f32
    %cst_19 = arith.constant 1.600000e+01 : f32
    %58 = vector.broadcast %cst_18 : f32 to vector<8x1xf32>
    %59 = arith.maximumf %58, %57 : vector<8x1xf32>
    %60 = vector.broadcast %cst_19 : f32 to vector<8x1xf32>
    %61 = arith.minimumf %60, %59 : vector<8x1xf32>
    %c0_20 = arith.constant 0 : index
    %c0_21 = arith.constant 0 : index
    %62 = vector.load %arg5[%c0_20, %c0_21] : memref<1x256xf32, #tpu.memory_space<vmem>>, vector<1x256xf32>
    %c0_22 = arith.constant 0 : index
    %c0_23 = arith.constant 0 : index
    %63 = vector.load %arg6[%c0_22, %c0_23] : memref<1x256xf32, #tpu.memory_space<vmem>>, vector<1x256xf32>
    %64 = vector.broadcast %62 : vector<1x256xf32> to vector<8x256xf32>
    %65 = vector.broadcast %40 : vector<8x1xf32> to vector<8x256xf32>
    %66 = arith.cmpf oge, %64, %65 : vector<8x256xf32>
    %67 = vector.broadcast %62 : vector<1x256xf32> to vector<8x256xf32>
    %68 = vector.broadcast %54 : vector<8x1xf32> to vector<8x256xf32>
    %69 = arith.cmpf ole, %67, %68 : vector<8x256xf32>
    %70 = arith.andi %66, %69 : vector<8x256xi1>
    %71 = vector.broadcast %63 : vector<1x256xf32> to vector<8x256xf32>
    %72 = vector.broadcast %47 : vector<8x1xf32> to vector<8x256xf32>
    %73 = arith.cmpf oge, %71, %72 : vector<8x256xf32>
    %74 = arith.andi %70, %73 : vector<8x256xi1>
    %75 = vector.broadcast %63 : vector<1x256xf32> to vector<8x256xf32>
    %76 = vector.broadcast %61 : vector<8x1xf32> to vector<8x256xf32>
    %77 = arith.cmpf ole, %75, %76 : vector<8x256xf32>
    %78 = arith.andi %74, %77 : vector<8x256xi1>
    %cst_24 = arith.constant 1.000000e+00 : f32
    %cst_25 = arith.constant 0.000000e+00 : f32
    %79 = vector.broadcast %cst_24 : f32 to vector<8x256xf32>
    %80 = vector.broadcast %cst_25 : f32 to vector<8x256xf32>
    %81 = arith.select %78, %79, %80 : vector<8x256xi1>, vector<8x256xf32>
    %cst_26 = arith.constant dense<0.000000e+00> : vector<8xf32>
    %82 = vector.multi_reduction <add>, %81, %cst_26 [1] : vector<8x256xf32> to vector<8xf32>
    %83 = vector.shape_cast %82 : vector<8xf32> to vector<8x1xf32>
    %84 = arith.truncf %81 : vector<8x256xf32> to vector<8x256xbf16>
    %c0_27 = arith.constant 0 : index
    %c0_28 = arith.constant 0 : index
    %c0_29 = arith.constant 0 : index
    %85 = vector.load %arg4[%c0_27, %c0_28, %c0_29] : memref<1x256x128xbf16, #tpu.memory_space<vmem>>, vector<1x256x128xbf16>
    %86 = vector.shape_cast %85 : vector<1x256x128xbf16> to vector<256x128xbf16>
    %cst_30 = arith.constant dense<0.000000e+00> : vector<8x128xf32>
    %87 = tpu.matmul %84, %86, %cst_30 {dimension_numbers = #tpu.dot_dimension_numbers<[1], [0], [0], [1], [0, 0, 1, 1], [], []>} : vector<8x256xbf16>, vector<256x128xbf16>, vector<8x128xf32> -> vector<8x128xf32>
    %c0_i32 = arith.constant 0 : i32
    %88 = arith.cmpi eq, %arg1, %c0_i32 : i32
    %89 = arith.extui %88 : i1 to i32
    %c0_i32_31 = arith.constant 0 : i32
    %90 = arith.cmpi ne, %89, %c0_i32_31 : i32
    scf.if %90 {
      %c0_36 = arith.constant 0 : index
      %c0_37 = arith.constant 0 : index
      %97 = vector.load %arg9[%c0_36, %c0_37] : memref<8x128xf32, #tpu.memory_space<vmem>>, vector<8x128xf32>
      tpu.vector_store %arg9[%c0_36, %c0_37], %87 {strides = array<i32>} : memref<8x128xf32, #tpu.memory_space<vmem>>, vector<8x128xf32>,
      %c0_38 = arith.constant 0 : index
      %c0_39 = arith.constant 0 : index
      %98 = vector.load %arg10[%c0_38, %c0_39] : memref<8x1xf32, #tpu.memory_space<vmem>>, vector<8x1xf32>
      tpu.vector_store %arg10[%c0_38, %c0_39], %83 {strides = array<i32>} : memref<8x1xf32, #tpu.memory_space<vmem>>, vector<8x1xf32>,
    } else {
    }
    %c0_i32_32 = arith.constant 0 : i32
    %91 = arith.cmpi sgt, %arg1, %c0_i32_32 : i32
    %92 = arith.extui %91 : i1 to i32
    %c0_i32_33 = arith.constant 0 : i32
    %93 = arith.cmpi ne, %92, %c0_i32_33 : i32
    scf.if %93 {
      %c0_36 = arith.constant 0 : index
      %c0_37 = arith.constant 0 : index
      %97 = vector.load %arg9[%c0_36, %c0_37] : memref<8x128xf32, #tpu.memory_space<vmem>>, vector<8x128xf32>
      %98 = arith.addf %97, %87 : vector<8x128xf32>
      %c0_38 = arith.constant 0 : index
      %c0_39 = arith.constant 0 : index
      %99 = vector.load %arg9[%c0_38, %c0_39] : memref<8x128xf32, #tpu.memory_space<vmem>>, vector<8x128xf32>
      tpu.vector_store %arg9[%c0_38, %c0_39], %98 {strides = array<i32>} : memref<8x128xf32, #tpu.memory_space<vmem>>, vector<8x128xf32>,
      %c0_40 = arith.constant 0 : index
      %c0_41 = arith.constant 0 : index
      %100 = vector.load %arg10[%c0_40, %c0_41] : memref<8x1xf32, #tpu.memory_space<vmem>>, vector<8x1xf32>
      %101 = arith.addf %100, %83 : vector<8x1xf32>
      %c0_42 = arith.constant 0 : index
      %c0_43 = arith.constant 0 : index
      %102 = vector.load %arg10[%c0_42, %c0_43] : memref<8x1xf32, #tpu.memory_space<vmem>>, vector<8x1xf32>
      tpu.vector_store %arg10[%c0_42, %c0_43], %101 {strides = array<i32>} : memref<8x1xf32, #tpu.memory_space<vmem>>, vector<8x1xf32>,
    } else {
    }
    %c0_i32_34 = arith.constant 0 : i32
    %94 = arith.cmpi eq, %arg1, %c0_i32_34 : i32
    %95 = arith.extui %94 : i1 to i32
    %c0_i32_35 = arith.constant 0 : i32
    %96 = arith.cmpi ne, %95, %c0_i32_35 : i32
    scf.if %96 {
      %97 = tpu.concatenate %40, %47, %54, %61 in 1 : vector<8x1xf32>, vector<8x1xf32>, vector<8x1xf32>, vector<8x1xf32> -> vector<8x4xf32>
      %c0_36 = arith.constant 0 : index
      %c0_37 = arith.constant 0 : index
      %c0_38 = arith.constant 0 : index
      %98 = vector.load %arg7[%c0_36, %c0_37, %c0_38] : memref<1x8x4xf32, #tpu.memory_space<vmem>>, vector<1x8x4xf32>
      %99 = vector.shape_cast %98 : vector<1x8x4xf32> to vector<8x4xf32>
      %100 = vector.shape_cast %97 : vector<8x4xf32> to vector<1x8x4xf32>
      tpu.vector_store %arg7[%c0_36, %c0_37, %c0_38], %100 {strides = array<i32>} : memref<1x8x4xf32, #tpu.memory_space<vmem>>, vector<1x8x4xf32>,
      %c0_39 = arith.constant 0 : index
      %c0_40 = arith.constant 0 : index
      %101 = vector.load %arg10[%c0_39, %c0_40] : memref<8x1xf32, #tpu.memory_space<vmem>>, vector<8x1xf32>
      %cst_41 = arith.constant 1.000000e+00 : f32
      %102 = vector.broadcast %cst_41 : f32 to vector<8x1xf32>
      %103 = arith.maximumf %101, %102 : vector<8x1xf32>
      %c0_42 = arith.constant 0 : index
      %c0_43 = arith.constant 0 : index
      %104 = vector.load %arg9[%c0_42, %c0_43] : memref<8x128xf32, #tpu.memory_space<vmem>>, vector<8x128xf32>
      %105 = tpu.reciprocal %103 {approx = true} : vector<8x1xf32> -> vector<8x1xf32>
      %106 = vector.broadcast %105 : vector<8x1xf32> to vector<8x128xf32>
      %107 = arith.mulf %104, %106 : vector<8x128xf32>
      %108 = arith.truncf %107 : vector<8x128xf32> to vector<8x128xbf16>
      %c0_44 = arith.constant 0 : index
      %c0_45 = arith.constant 0 : index
      %c0_46 = arith.constant 0 : index
      %109 = vector.load %arg8[%c0_44, %c0_45, %c0_46] : memref<1x8x128xbf16, #tpu.memory_space<vmem>>, vector<1x8x128xbf16>
      %110 = vector.shape_cast %109 : vector<1x8x128xbf16> to vector<8x128xbf16>
      %111 = vector.shape_cast %108 : vector<8x128xbf16> to vector<1x8x128xbf16>
      tpu.vector_store %arg8[%c0_44, %c0_45, %c0_46], %111 {strides = array<i32>} : memref<1x8x128xbf16, #tpu.memory_space<vmem>>, vector<1x8x128xbf16>,
    } else {
    }
    return
  }
  func.func @transform_0(%arg0: i32, %arg1: i32) -> (i32, i32, i32) {
    %c0_i32 = arith.constant 0 : i32
    %c0_i32_0 = arith.constant 0 : i32
    %c0_i32_1 = arith.constant 0 : i32
    return %arg0, %c0_i32, %c0_i32_0 : i32, i32, i32
  }
  func.func @transform_1(%arg0: i32, %arg1: i32) -> (i32, i32, i32) {
    %c0_i32 = arith.constant 0 : i32
    %c0_i32_0 = arith.constant 0 : i32
    %c0_i32_1 = arith.constant 0 : i32
    return %arg0, %c0_i32, %c0_i32_0 : i32, i32, i32
  }
  func.func @transform_2(%arg0: i32, %arg1: i32) -> (i32, i32, i32) {
    %c0_i32 = arith.constant 0 : i32
    %c0_i32_0 = arith.constant 0 : i32
    return %arg0, %arg1, %c0_i32 : i32, i32, i32
  }
  func.func @transform_3(%arg0: i32, %arg1: i32) -> (i32, i32) {
    %c0_i32 = arith.constant 0 : i32
    %c0_i32_0 = arith.constant 0 : i32
    return %c0_i32, %arg1 : i32, i32
  }
  func.func @transform_4(%arg0: i32, %arg1: i32) -> (i32, i32) {
    %c0_i32 = arith.constant 0 : i32
    %c0_i32_0 = arith.constant 0 : i32
    return %c0_i32, %arg1 : i32, i32
  }
  func.func @transform_5(%arg0: i32, %arg1: i32) -> (i32, i32, i32) {
    %c0_i32 = arith.constant 0 : i32
    %c0_i32_0 = arith.constant 0 : i32
    %c0_i32_1 = arith.constant 0 : i32
    return %arg0, %c0_i32, %c0_i32_0 : i32, i32, i32
  }
  func.func @transform_6(%arg0: i32, %arg1: i32) -> (i32, i32, i32) {
    %c0_i32 = arith.constant 0 : i32
    %c0_i32_0 = arith.constant 0 : i32
    %c0_i32_1 = arith.constant 0 : i32
    return %arg0, %c0_i32, %c0_i32_0 : i32, i32, i32
  }
}

module attributes {stable_mosaic.version = 11 : i64} {
  func.func @_box_head_kernel(%arg0: i32, %arg1: memref<16x128xbf16, #tpu.memory_space<vmem>>, %arg2: memref<16x4xf32, #tpu.memory_space<vmem>>, %arg3: memref<128x128xbf16, #tpu.memory_space<vmem>>, %arg4: memref<1x128xf32, #tpu.memory_space<vmem>>, %arg5: memref<128x128xbf16, #tpu.memory_space<vmem>>, %arg6: memref<1x128xf32, #tpu.memory_space<vmem>>, %arg7: memref<128x32xbf16, #tpu.memory_space<vmem>>, %arg8: memref<1x32xf32, #tpu.memory_space<vmem>>, %arg9: memref<16x4xf32, #tpu.memory_space<vmem>>, %arg10: memref<16x1xf32, #tpu.memory_space<vmem>>, %arg11: memref<16x1xi32, #tpu.memory_space<vmem>>) attributes {dimension_semantics = [#tpu.dimension_semantics<parallel>], iteration_bounds = array<i64: 1>, scalar_prefetch = 0 : i64, scratch_operands = 0 : i64, tpu.core_type = #tpu.core_type<tc>, window_params = [{transform_indices = @transform_0, window_bounds = array<i64: 16, 128>}, {transform_indices = @transform_1, window_bounds = array<i64: 16, 4>}, {pipeline_mode = #tpu.pipeline_mode<synchronous>, transform_indices = @transform_2, window_bounds = array<i64: 128, 128>}, {pipeline_mode = #tpu.pipeline_mode<synchronous>, transform_indices = @transform_3, window_bounds = array<i64: 1, 128>}, {pipeline_mode = #tpu.pipeline_mode<synchronous>, transform_indices = @transform_4, window_bounds = array<i64: 128, 128>}, {pipeline_mode = #tpu.pipeline_mode<synchronous>, transform_indices = @transform_5, window_bounds = array<i64: 1, 128>}, {pipeline_mode = #tpu.pipeline_mode<synchronous>, transform_indices = @transform_6, window_bounds = array<i64: 128, 32>}, {pipeline_mode = #tpu.pipeline_mode<synchronous>, transform_indices = @transform_7, window_bounds = array<i64: 1, 32>}, {transform_indices = @transform_8, window_bounds = array<i64: 16, 4>}, {transform_indices = @transform_9, window_bounds = array<i64: 16, 1>}, {transform_indices = @transform_10, window_bounds = array<i64: 16, 1>}]} {
    %c0 = arith.constant 0 : index
    %c0_0 = arith.constant 0 : index
    %0 = vector.load %arg1[%c0, %c0_0] : memref<16x128xbf16, #tpu.memory_space<vmem>>, vector<16x128xbf16>
    %c0_1 = arith.constant 0 : index
    %c0_2 = arith.constant 0 : index
    %1 = vector.load %arg3[%c0_1, %c0_2] : memref<128x128xbf16, #tpu.memory_space<vmem>>, vector<128x128xbf16>
    %cst = arith.constant dense<0.000000e+00> : vector<16x128xf32>
    %2 = tpu.matmul %0, %1, %cst {dimension_numbers = #tpu.dot_dimension_numbers<[1], [0], [0], [1], [0, 0, 1, 1], [], []>} : vector<16x128xbf16>, vector<128x128xbf16>, vector<16x128xf32> -> vector<16x128xf32>
    %c0_3 = arith.constant 0 : index
    %c0_4 = arith.constant 0 : index
    %3 = vector.load %arg4[%c0_3, %c0_4] : memref<1x128xf32, #tpu.memory_space<vmem>>, vector<1x128xf32>
    %4 = vector.broadcast %3 : vector<1x128xf32> to vector<16x128xf32>
    %5 = arith.addf %2, %4 : vector<16x128xf32>
    %cst_5 = arith.constant 0.000000e+00 : f32
    %6 = vector.broadcast %cst_5 : f32 to vector<16x128xf32>
    %7 = arith.maximumf %5, %6 : vector<16x128xf32>
    %8 = arith.truncf %7 : vector<16x128xf32> to vector<16x128xbf16>
    %c0_6 = arith.constant 0 : index
    %c0_7 = arith.constant 0 : index
    %9 = vector.load %arg5[%c0_6, %c0_7] : memref<128x128xbf16, #tpu.memory_space<vmem>>, vector<128x128xbf16>
    %cst_8 = arith.constant dense<0.000000e+00> : vector<16x128xf32>
    %10 = tpu.matmul %8, %9, %cst_8 {dimension_numbers = #tpu.dot_dimension_numbers<[1], [0], [0], [1], [0, 0, 1, 1], [], []>} : vector<16x128xbf16>, vector<128x128xbf16>, vector<16x128xf32> -> vector<16x128xf32>
    %c0_9 = arith.constant 0 : index
    %c0_10 = arith.constant 0 : index
    %11 = vector.load %arg6[%c0_9, %c0_10] : memref<1x128xf32, #tpu.memory_space<vmem>>, vector<1x128xf32>
    %12 = vector.broadcast %11 : vector<1x128xf32> to vector<16x128xf32>
    %13 = arith.addf %10, %12 : vector<16x128xf32>
    %cst_11 = arith.constant 0.000000e+00 : f32
    %14 = vector.broadcast %cst_11 : f32 to vector<16x128xf32>
    %15 = arith.maximumf %13, %14 : vector<16x128xf32>
    %16 = arith.truncf %15 : vector<16x128xf32> to vector<16x128xbf16>
    %c0_12 = arith.constant 0 : index
    %c0_13 = arith.constant 0 : index
    %17 = vector.load %arg7[%c0_12, %c0_13] : memref<128x32xbf16, #tpu.memory_space<vmem>>, vector<128x32xbf16>
    %cst_14 = arith.constant dense<0.000000e+00> : vector<16x32xf32>
    %18 = tpu.matmul %16, %17, %cst_14 {dimension_numbers = #tpu.dot_dimension_numbers<[1], [0], [0], [1], [0, 0, 1, 1], [], []>} : vector<16x128xbf16>, vector<128x32xbf16>, vector<16x32xf32> -> vector<16x32xf32>
    %c0_15 = arith.constant 0 : index
    %c0_16 = arith.constant 0 : index
    %19 = vector.load %arg8[%c0_15, %c0_16] : memref<1x32xf32, #tpu.memory_space<vmem>>, vector<1x32xf32>
    %20 = vector.broadcast %19 : vector<1x32xf32> to vector<16x32xf32>
    %21 = arith.addf %18, %20 : vector<16x32xf32>
    %22 = vector.extract_strided_slice %21 {offsets = [0, 0], sizes = [16, 5], strides = [1, 1]} : vector<16x32xf32> to vector<16x5xf32>
    %cst_17 = arith.constant dense<0xFF800000> : vector<16xf32>
    %23 = vector.multi_reduction <maximumf>, %22, %cst_17 [1] : vector<16x5xf32> to vector<16xf32>
    %24 = vector.shape_cast %23 : vector<16xf32> to vector<16x1xf32>
    %25 = vector.broadcast %24 : vector<16x1xf32> to vector<16x5xf32>
    %26 = arith.subf %22, %25 : vector<16x5xf32>
    %27 = math.exp %26 : vector<16x5xf32>
    %cst_18 = arith.constant dense<0.000000e+00> : vector<16xf32>
    %28 = vector.multi_reduction <add>, %27, %cst_18 [1] : vector<16x5xf32> to vector<16xf32>
    %29 = vector.shape_cast %28 : vector<16xf32> to vector<16x1xf32>
    %30 = vector.broadcast %29 : vector<16x1xf32> to vector<16x5xf32>
    %31 = arith.divf %27, %30 : vector<16x5xf32>
    %32 = vector.extract_strided_slice %31 {offsets = [0, 1], sizes = [16, 4], strides = [1, 1]} : vector<16x5xf32> to vector<16x4xf32>
    %cst_19 = arith.constant dense<0xFF800000> : vector<16xf32>
    %33 = vector.multi_reduction <maximumf>, %32, %cst_19 [1] : vector<16x4xf32> to vector<16xf32>
    %34 = vector.shape_cast %33 : vector<16xf32> to vector<16x1xf32>
    %35 = tpu.iota {dimensions = array<i32: 1>} : vector<16x4xi32>
    %36 = vector.broadcast %34 : vector<16x1xf32> to vector<16x4xf32>
    %37 = arith.cmpf oge, %32, %36 : vector<16x4xf32>
    %c3_i32 = arith.constant 3 : i32
    %38 = vector.broadcast %c3_i32 : i32 to vector<16x4xi32>
    %39 = arith.select %37, %35, %38 : vector<16x4xi1>, vector<16x4xi32>
    %cst_20 = arith.constant dense<2147483647> : vector<16xi32>
    %40 = vector.multi_reduction <minsi>, %39, %cst_20 [1] : vector<16x4xi32> to vector<16xi32>
    %41 = vector.shape_cast %40 : vector<16xi32> to vector<16x1xi32>
    %c1_i32 = arith.constant 1 : i32
    %42 = vector.broadcast %c1_i32 : i32 to vector<16x1xi32>
    %43 = arith.addi %41, %42 : vector<16x1xi32>
    %44 = tpu.iota {dimensions = array<i32: 1>} : vector<16x5xi32>
    %45 = vector.broadcast %43 : vector<16x1xi32> to vector<16x5xi32>
    %46 = arith.cmpi eq, %44, %45 : vector<16x5xi32>
    %47 = arith.extui %46 : vector<16x5xi1> to vector<16x5xi32>
    %48 = arith.sitofp %47 : vector<16x5xi32> to vector<16x5xf32>
    %49 = vector.extract_strided_slice %21 {offsets = [0, 5], sizes = [16, 5], strides = [1, 1]} : vector<16x32xf32> to vector<16x5xf32>
    %50 = arith.mulf %49, %48 : vector<16x5xf32>
    %cst_21 = arith.constant dense<0.000000e+00> : vector<16xf32>
    %51 = vector.multi_reduction <add>, %50, %cst_21 [1] : vector<16x5xf32> to vector<16xf32>
    %52 = vector.shape_cast %51 : vector<16xf32> to vector<16x1xf32>
    %53 = vector.extract_strided_slice %21 {offsets = [0, 10], sizes = [16, 5], strides = [1, 1]} : vector<16x32xf32> to vector<16x5xf32>
    %54 = arith.mulf %53, %48 : vector<16x5xf32>
    %cst_22 = arith.constant dense<0.000000e+00> : vector<16xf32>
    %55 = vector.multi_reduction <add>, %54, %cst_22 [1] : vector<16x5xf32> to vector<16xf32>
    %56 = vector.shape_cast %55 : vector<16xf32> to vector<16x1xf32>
    %57 = vector.extract_strided_slice %21 {offsets = [0, 15], sizes = [16, 5], strides = [1, 1]} : vector<16x32xf32> to vector<16x5xf32>
    %58 = arith.mulf %57, %48 : vector<16x5xf32>
    %cst_23 = arith.constant dense<0.000000e+00> : vector<16xf32>
    %59 = vector.multi_reduction <add>, %58, %cst_23 [1] : vector<16x5xf32> to vector<16xf32>
    %60 = vector.shape_cast %59 : vector<16xf32> to vector<16x1xf32>
    %61 = vector.extract_strided_slice %21 {offsets = [0, 20], sizes = [16, 5], strides = [1, 1]} : vector<16x32xf32> to vector<16x5xf32>
    %62 = arith.mulf %61, %48 : vector<16x5xf32>
    %cst_24 = arith.constant dense<0.000000e+00> : vector<16xf32>
    %63 = vector.multi_reduction <add>, %62, %cst_24 [1] : vector<16x5xf32> to vector<16xf32>
    %64 = vector.shape_cast %63 : vector<16xf32> to vector<16x1xf32>
    %65 = tpu.concatenate %52, %56, %60, %64 in 1 : vector<16x1xf32>, vector<16x1xf32>, vector<16x1xf32>, vector<16x1xf32> -> vector<16x4xf32>
    %c0_25 = arith.constant 0 : index
    %c0_26 = arith.constant 0 : index
    %66 = vector.load %arg2[%c0_25, %c0_26] : memref<16x4xf32, #tpu.memory_space<vmem>>, vector<16x4xf32>
    %67 = vector.extract_strided_slice %66 {offsets = [0, 2], sizes = [16, 1], strides = [1, 1]} : vector<16x4xf32> to vector<16x1xf32>
    %68 = vector.extract_strided_slice %66 {offsets = [0, 0], sizes = [16, 1], strides = [1, 1]} : vector<16x4xf32> to vector<16x1xf32>
    %69 = arith.subf %67, %68 : vector<16x1xf32>
    %70 = vector.extract_strided_slice %66 {offsets = [0, 3], sizes = [16, 1], strides = [1, 1]} : vector<16x4xf32> to vector<16x1xf32>
    %71 = vector.extract_strided_slice %66 {offsets = [0, 1], sizes = [16, 1], strides = [1, 1]} : vector<16x4xf32> to vector<16x1xf32>
    %72 = arith.subf %70, %71 : vector<16x1xf32>
    %73 = vector.extract_strided_slice %66 {offsets = [0, 0], sizes = [16, 1], strides = [1, 1]} : vector<16x4xf32> to vector<16x1xf32>
    %cst_27 = arith.constant 5.000000e-01 : f32
    %74 = vector.broadcast %cst_27 : f32 to vector<16x1xf32>
    %75 = arith.mulf %74, %69 : vector<16x1xf32>
    %76 = arith.addf %73, %75 : vector<16x1xf32>
    %77 = vector.extract_strided_slice %66 {offsets = [0, 1], sizes = [16, 1], strides = [1, 1]} : vector<16x4xf32> to vector<16x1xf32>
    %cst_28 = arith.constant 5.000000e-01 : f32
    %78 = vector.broadcast %cst_28 : f32 to vector<16x1xf32>
    %79 = arith.mulf %78, %72 : vector<16x1xf32>
    %80 = arith.addf %77, %79 : vector<16x1xf32>
    %81 = vector.extract_strided_slice %65 {offsets = [0, 2], sizes = [16, 1], strides = [1, 1]} : vector<16x4xf32> to vector<16x1xf32>
    %cst_29 = arith.constant 4.13516665 : f32
    %82 = vector.broadcast %cst_29 : f32 to vector<16x1xf32>
    %83 = arith.minimumf %81, %82 : vector<16x1xf32>
    %84 = vector.extract_strided_slice %65 {offsets = [0, 3], sizes = [16, 1], strides = [1, 1]} : vector<16x4xf32> to vector<16x1xf32>
    %cst_30 = arith.constant 4.13516665 : f32
    %85 = vector.broadcast %cst_30 : f32 to vector<16x1xf32>
    %86 = arith.minimumf %84, %85 : vector<16x1xf32>
    %87 = vector.extract_strided_slice %65 {offsets = [0, 0], sizes = [16, 1], strides = [1, 1]} : vector<16x4xf32> to vector<16x1xf32>
    %88 = arith.mulf %87, %69 : vector<16x1xf32>
    %89 = arith.addf %88, %76 : vector<16x1xf32>
    %90 = vector.extract_strided_slice %65 {offsets = [0, 1], sizes = [16, 1], strides = [1, 1]} : vector<16x4xf32> to vector<16x1xf32>
    %91 = arith.mulf %90, %72 : vector<16x1xf32>
    %92 = arith.addf %91, %80 : vector<16x1xf32>
    %93 = math.exp %83 : vector<16x1xf32>
    %94 = arith.mulf %93, %69 : vector<16x1xf32>
    %95 = math.exp %86 : vector<16x1xf32>
    %96 = arith.mulf %95, %72 : vector<16x1xf32>
    %cst_31 = arith.constant 5.000000e-01 : f32
    %97 = vector.broadcast %cst_31 : f32 to vector<16x1xf32>
    %98 = arith.mulf %97, %94 : vector<16x1xf32>
    %99 = arith.subf %89, %98 : vector<16x1xf32>
    %cst_32 = arith.constant 0.000000e+00 : f32
    %cst_33 = arith.constant 1.600000e+01 : f32
    %100 = vector.broadcast %cst_32 : f32 to vector<16x1xf32>
    %101 = arith.maximumf %100, %99 : vector<16x1xf32>
    %102 = vector.broadcast %cst_33 : f32 to vector<16x1xf32>
    %103 = arith.minimumf %102, %101 : vector<16x1xf32>
    %cst_34 = arith.constant 5.000000e-01 : f32
    %104 = vector.broadcast %cst_34 : f32 to vector<16x1xf32>
    %105 = arith.mulf %104, %96 : vector<16x1xf32>
    %106 = arith.subf %92, %105 : vector<16x1xf32>
    %cst_35 = arith.constant 0.000000e+00 : f32
    %cst_36 = arith.constant 1.600000e+01 : f32
    %107 = vector.broadcast %cst_35 : f32 to vector<16x1xf32>
    %108 = arith.maximumf %107, %106 : vector<16x1xf32>
    %109 = vector.broadcast %cst_36 : f32 to vector<16x1xf32>
    %110 = arith.minimumf %109, %108 : vector<16x1xf32>
    %cst_37 = arith.constant 5.000000e-01 : f32
    %111 = vector.broadcast %cst_37 : f32 to vector<16x1xf32>
    %112 = arith.mulf %111, %94 : vector<16x1xf32>
    %113 = arith.addf %89, %112 : vector<16x1xf32>
    %cst_38 = arith.constant 0.000000e+00 : f32
    %cst_39 = arith.constant 1.600000e+01 : f32
    %114 = vector.broadcast %cst_38 : f32 to vector<16x1xf32>
    %115 = arith.maximumf %114, %113 : vector<16x1xf32>
    %116 = vector.broadcast %cst_39 : f32 to vector<16x1xf32>
    %117 = arith.minimumf %116, %115 : vector<16x1xf32>
    %cst_40 = arith.constant 5.000000e-01 : f32
    %118 = vector.broadcast %cst_40 : f32 to vector<16x1xf32>
    %119 = arith.mulf %118, %96 : vector<16x1xf32>
    %120 = arith.addf %92, %119 : vector<16x1xf32>
    %cst_41 = arith.constant 0.000000e+00 : f32
    %cst_42 = arith.constant 1.600000e+01 : f32
    %121 = vector.broadcast %cst_41 : f32 to vector<16x1xf32>
    %122 = arith.maximumf %121, %120 : vector<16x1xf32>
    %123 = vector.broadcast %cst_42 : f32 to vector<16x1xf32>
    %124 = arith.minimumf %123, %122 : vector<16x1xf32>
    %125 = tpu.concatenate %103, %110, %117, %124 in 1 : vector<16x1xf32>, vector<16x1xf32>, vector<16x1xf32>, vector<16x1xf32> -> vector<16x4xf32>
    %c0_43 = arith.constant 0 : index
    %c0_44 = arith.constant 0 : index
    %126 = vector.load %arg9[%c0_43, %c0_44] : memref<16x4xf32, #tpu.memory_space<vmem>>, vector<16x4xf32>
    tpu.vector_store %arg9[%c0_43, %c0_44], %125 {strides = array<i32>} : memref<16x4xf32, #tpu.memory_space<vmem>>, vector<16x4xf32>,
    %c0_45 = arith.constant 0 : index
    %c0_46 = arith.constant 0 : index
    %127 = vector.load %arg10[%c0_45, %c0_46] : memref<16x1xf32, #tpu.memory_space<vmem>>, vector<16x1xf32>
    tpu.vector_store %arg10[%c0_45, %c0_46], %34 {strides = array<i32>} : memref<16x1xf32, #tpu.memory_space<vmem>>, vector<16x1xf32>,
    %c0_47 = arith.constant 0 : index
    %c0_48 = arith.constant 0 : index
    %128 = vector.load %arg11[%c0_47, %c0_48] : memref<16x1xi32, #tpu.memory_space<vmem>>, vector<16x1xi32>
    tpu.vector_store %arg11[%c0_47, %c0_48], %43 {strides = array<i32>} : memref<16x1xi32, #tpu.memory_space<vmem>>, vector<16x1xi32>,
    return
  }
  func.func @transform_0(%arg0: i32) -> (i32, i32) {
    %c0_i32 = arith.constant 0 : i32
    %c0_i32_0 = arith.constant 0 : i32
    return %arg0, %c0_i32 : i32, i32
  }
  func.func @transform_1(%arg0: i32) -> (i32, i32) {
    %c0_i32 = arith.constant 0 : i32
    %c0_i32_0 = arith.constant 0 : i32
    return %arg0, %c0_i32 : i32, i32
  }
  func.func @transform_2(%arg0: i32) -> (i32, i32) {
    %c0_i32 = arith.constant 0 : i32
    %c0_i32_0 = arith.constant 0 : i32
    %c0_i32_1 = arith.constant 0 : i32
    return %c0_i32, %c0_i32_0 : i32, i32
  }
  func.func @transform_3(%arg0: i32) -> (i32, i32) {
    %c0_i32 = arith.constant 0 : i32
    %c0_i32_0 = arith.constant 0 : i32
    %c0_i32_1 = arith.constant 0 : i32
    return %c0_i32, %c0_i32_0 : i32, i32
  }
  func.func @transform_4(%arg0: i32) -> (i32, i32) {
    %c0_i32 = arith.constant 0 : i32
    %c0_i32_0 = arith.constant 0 : i32
    %c0_i32_1 = arith.constant 0 : i32
    return %c0_i32, %c0_i32_0 : i32, i32
  }
  func.func @transform_5(%arg0: i32) -> (i32, i32) {
    %c0_i32 = arith.constant 0 : i32
    %c0_i32_0 = arith.constant 0 : i32
    %c0_i32_1 = arith.constant 0 : i32
    return %c0_i32, %c0_i32_0 : i32, i32
  }
  func.func @transform_6(%arg0: i32) -> (i32, i32) {
    %c0_i32 = arith.constant 0 : i32
    %c0_i32_0 = arith.constant 0 : i32
    %c0_i32_1 = arith.constant 0 : i32
    return %c0_i32, %c0_i32_0 : i32, i32
  }
  func.func @transform_7(%arg0: i32) -> (i32, i32) {
    %c0_i32 = arith.constant 0 : i32
    %c0_i32_0 = arith.constant 0 : i32
    %c0_i32_1 = arith.constant 0 : i32
    return %c0_i32, %c0_i32_0 : i32, i32
  }
  func.func @transform_8(%arg0: i32) -> (i32, i32) {
    %c0_i32 = arith.constant 0 : i32
    %c0_i32_0 = arith.constant 0 : i32
    return %arg0, %c0_i32 : i32, i32
  }
  func.func @transform_9(%arg0: i32) -> (i32, i32) {
    %c0_i32 = arith.constant 0 : i32
    %c0_i32_0 = arith.constant 0 : i32
    return %arg0, %c0_i32 : i32, i32
  }
  func.func @transform_10(%arg0: i32) -> (i32, i32) {
    %c0_i32 = arith.constant 0 : i32
    %c0_i32_0 = arith.constant 0 : i32
    return %arg0, %c0_i32 : i32, i32
  }
}

</mosaic_0001>

<llo_original>
// kernel: custom-call
$region0: #{custom-call}
  #allocation0 [shape = 'u32[8,128]{1,0}', space=vmem, size = 0x1000, scoped, tag = 'scratch']
  #allocation1 [shape = 'u32[8,128]{1,0}', space=vmem, size = 0x1000, scoped, tag = 'scratch']
  #allocation2 [shape = 'u32[8,128]{1,0}', space=vmem, size = 0x1000, scoped, tag = 'scratch']
  #allocation3 [shape = 'u32[8,128]{1,0}', space=vmem, size = 0x1000, scoped, tag = 'scratch']
  #allocation4 [shape = 'u32[8,128]{1,0}', space=vmem, size = 0x1000, scoped, tag = 'scratch']
  #allocation5 [shape = 'u32[8,128]{1,0}', space=vmem, size = 0x1000, scoped, tag = 'scratch']
  #allocation6 [shape = 'u32[8,128]{1,0}', space=vmem, size = 0x1000, scoped, tag = 'scratch']
  %s0 = inlined_call_operand.vmem [shape: f32[2,768], index: 0, kind: input, shape index: {}]
  %s1 = inlined_call_operand.hbm [shape: f32[2,8], index: 1, kind: output, shape index: {0}]
  %s2 = inlined_call_operand.vmem [shape: s32[2,8], index: 2, kind: output, shape index: {1}]
  %3 = xla_tuple %s1, %s2
  %4 = xla_tuple 2147483648, 2147483647
  $region1: #{custom-call} parent=0
    #allocation7 [shape = 'u8[4096]{0}', space=vmem, size = 0x1000, scoped, tag = 'operand span for operand 1']
    #allocation8 [shape = 'u8[1024]{0}', space=vmem, size = 0x400, scoped, tag = 'packed  for operand 1']
    #allocation9 [shape = 's32[1]{0}', space=sflag, size = 0x4, scoped, tag = 'scoped memory for custom-call']
    #allocation10 [shape = 'u8[4096]{0}', space=vmem, size = 0x1000, scoped, tag = 'operand span for operand 2']
    #allocation11 [shape = 'u8[1024]{0}', space=vmem, size = 0x400, scoped, tag = 'packed  for operand 2']
    #allocation12 [shape = 'f32[8,2]{1,0:T(8,128)}', space=vmem, size = 0x1000, scoped, tag = 'scoped memory for custom-call']
    #allocation13 [shape = 'f32[8,2]{1,0:T(8,128)}', space=vmem, size = 0x1000, scoped, tag = 'scoped memory for custom-call']
    #allocation14 [shape = 's32[8,2]{1,0:T(8,128)}', space=vmem, size = 0x1000, scoped, tag = 'scoped memory for custom-call']
    #allocation15 [shape = 's32[8,2]{1,0:T(8,128)}', space=vmem, size = 0x1000, scoped, tag = 'scoped memory for custom-call']
    %5 = vsyncpa [#allocation9], 0
    %6 = xla_tuple [#allocation7], [#allocation10]
    %7 = vst [vmem:[#allocation12] sm:$0xff] 2147483648
    %8 = vst [vmem:[#allocation14] sm:$0xff] 2147483647
    %9 = xla_tuple [#allocation12], [#allocation14]
    %10 = xla_tuple [#allocation13], [#allocation15]
    $region2: #{custom-call} parent=1
      #allocation16 [shape = 'u8[8192]{0}', space=vmem, size = 0x2000, scoped, tag = 'operand span for operand 0']
      #allocation17 [shape = 's32[2048]{0}', space=vmem, size = 0x2000, scoped, tag = 'scoped memory for custom-call']
      // Predicated region
      $region3: #{custom-call} parent=2 // pred_check
        _
      $region4: #{custom-call} parent=2 // pred_check_branch
        %12 = sbr.rel (0) target = $region6
      $region5: #{custom-call} parent=2 // pred_region
        // Predicated region
        $region7: #{custom-call} parent=5 // pred_check
          _
        $region8: #{custom-call} parent=5 // pred_check_branch
          %14 = sbr.rel (0) target = $region10
        $region9: #{custom-call} parent=5 // pred_region
          // Predicated region
          $region11: #{custom-call} parent=9 // pred_check
            _
          $region12: #{custom-call} parent=9 // pred_check_branch
            %16 = sbr.rel (0) target = $region14
          $region13: #{custom-call} parent=9 // pred_region
            %s17 = scalar_lea.vmem %s0, 8
            %s18 = scalar_lea.vmem [#allocation16], 8
            loop: start=0, step=1, limit=1
            $region15: #{custom-call} parent=13 // loop_pre_header
              _
            $region16: #{custom-call} parent=13 // loop_header
              %s20 = sphi 0, %s24
              %p21 = scmp.ge.s32.totalorder %s20, 1
              %s25 = sphi %s0, %s0
              %s26 = sphi [#allocation16], [#allocation16]
            $region17: #{custom-call} parent=13 // loop_header_branch
              %23 = sbr.rel (%p21) target = $region21
            $region18: #{custom-call} parent=13 // loop_body
              %v27 = vld [vmem:[%s25] sm:$0xff]
              %28 = vst [vmem:[%s26] sm:$0xff] %v27
            $region19: #{custom-call} parent=13 // loop_footer
              %s24 = sadd.s32 1, %s20
            $region20: #{custom-call} parent=13 // loop_footer_branch
              %19 = sbr.rel target = $region16
            $region21: #{custom-call} parent=13 // loop_exit
              _
            loop: start=0, step=1, limit=1
            $region22: #{custom-call} parent=13 // loop_pre_header
              _
            $region23: #{custom-call} parent=13 // loop_header
              %s31 = sphi 0, %s35
              %p32 = scmp.ge.s32.totalorder %s31, 1
              %s36 = sphi %s17, %s17
              %s37 = sphi %s18, %s18
            $region24: #{custom-call} parent=13 // loop_header_branch
              %34 = sbr.rel (%p32) target = $region28
            $region25: #{custom-call} parent=13 // loop_body
              %v38 = vld [vmem:[%s36] sm:$0xf]
              %39 = vst [vmem:[%s37] sm:$0xf] %v38
            $region26: #{custom-call} parent=13 // loop_footer
              %s35 = sadd.s32 1, %s31
            $region27: #{custom-call} parent=13 // loop_footer_branch
              %30 = sbr.rel target = $region23
            $region28: #{custom-call} parent=13 // loop_exit
              _
          $region14: #{custom-call} parent=9 // pred_fallthru
            _
        $region10: #{custom-call} parent=5 // pred_fallthru
          _
        %40 = vnop
      $region6: #{custom-call} parent=2 // pred_fallthru
        _
      // Predicated region
      $region29: #{custom-call} parent=2 // pred_check
        _
      $region30: #{custom-call} parent=2 // pred_check_branch
        %42 = sbr.rel (0) target = $region32
      $region31: #{custom-call} parent=2 // pred_region
        _
      $region32: #{custom-call} parent=2 // pred_fallthru
        _
      %v43 = vlaneseq
      %v44 = vand.u32 %v43, 127
      %v45 = vlaneseq
      %v46 = vshrl.u32 %v45, 7
      %v47 = vshrl.u32 %v46, 1
      %v48 = vand.u32 %v46, 1
      %v49 = vmul.u32 %v47, 128
      %v50 = vadd.s32 %v44, %v49
      %v52 = vld [vmem:[#allocation16] sm:$0xff]
      %vm53 = vcmp.lt.s32.totalorder %v52, 0
      %v54 = vsub.s32 2147483647, %v52
      %v55 = vsel %vm53, %v54, %v52
      %vm57 = vcmp.lt.s32.totalorder %v50, 768
      %v58 = vsel %vm57, %v55, 2147483648
      %59 = vst [vmem:[#allocation16] sm:$0xff] %v58
      %s60 = scalar_lea.vmem [#allocation16], 8
      %v61 = vld [vmem:[%s60] sm:$0xff]
      %vm62 = vcmp.lt.s32.totalorder %v61, 0
      %v63 = vsub.s32 2147483647, %v61
      %v64 = vsel %vm62, %v63, %v61
      %v65 = vadd.s32 %v50, 512
      %vm66 = vcmp.lt.s32.totalorder %v65, 768
      %v67 = vsel %vm66, %v64, 2147483648
      %68 = vst [vmem:[%s60] sm:$0xff] %v67
      %v69 = vlaneseq
      %v70 = vand.u32 %v69, 127
      %v71 = vlaneseq
      %v72 = vshrl.u32 %v71, 7
      %v73 = vshrl.u32 %v72, 1
      %v74 = vand.u32 %v72, 1
      %v75 = vmul.u32 %v73, 128
      %v76 = vadd.s32 %v70, %v75
      %79 = vst [vmem:[#allocation17] sm:$0xff] %v76
      %v80 = vadd.s32 %v76, 512
      %s81 = scalar_lea.vmem [#allocation17], 8
      %82 = vst [vmem:[%s81] sm:$0xff] %v80
      %83 = xla_tuple [#allocation16], [#allocation17]
      %84 = vst [vmem:[#allocation13] sm:$0xff] 2147483648
      %85 = vst [vmem:[#allocation15] sm:$0xff] 2147483647
      %86 = xla_tuple [#allocation13], [#allocation15]
      loop: start=0, step=1, limit=8
      $region33: #{custom-call} parent=2 // loop_pre_header
        _
      $region34: #{custom-call} parent=2 // loop_header
        %s88 = sphi 0, %s92
        %p89 = scmp.ge.s32.totalorder %s88, 8
      $region35: #{custom-call} parent=2 // loop_header_branch
        %91 = sbr.rel (%p89) target = $region39
      $region36: #{custom-call} parent=2 // loop_body
        %v93 = vld [vmem:[#allocation16] sm:$0xff]
        %v94 = vld [vmem:[#allocation17] sm:$0xff]
        %95 = xla_tuple %v93, %v94
        %s96 = scalar_lea.vmem [#allocation16], 8
        %v97 = vld [vmem:[%s96] sm:$0xff]
        %s98 = scalar_lea.vmem [#allocation17], 8
        %v99 = vld [vmem:[%s98] sm:$0xff]
        %100 = xla_tuple %v97, %v99
        %vm101 = vcmp.gt.s32.totalorder %v97, %v93
        %vm102 = vcmp.eq.s32.totalorder %v97, %v93
        %vm103 = vcmp.lt.s32.totalorder %v99, %v94
        %vm104 = vmand %vm102, %vm103
        %vm105 = vmor %vm101, %vm104
        %v106 = vsel %vm105, %v97, %v93
        %v107 = vsel %vm105, %v99, %v94
        %108 = xla_tuple %v106, %v107
        %v109 = vrot.slane %v106, 2
        %v110 = vrot.slane %v107, 2
        %111 = xla_tuple %v109, %v110
        %vm112 = vcmp.gt.s32.totalorder %v109, %v106
        %vm113 = vcmp.eq.s32.totalorder %v109, %v106
        %vm114 = vcmp.lt.s32.totalorder %v110, %v107
        %vm115 = vmand %vm113, %vm114
        %vm116 = vmor %vm112, %vm115
        %v117 = vsel %vm116, %v109, %v106
        %v118 = vsel %vm116, %v110, %v107
        %119 = xla_tuple %v117, %v118
        %v120 = vrot.slane %v117, 2
        %v121 = vrot.slane %v118, 2
        %122 = xla_tuple %v120, %v121
        %vm123 = vcmp.gt.s32.totalorder %v120, %v117
        %vm124 = vcmp.eq.s32.totalorder %v120, %v117
        %vm125 = vcmp.lt.s32.totalorder %v121, %v118
        %vm126 = vmand %vm124, %vm125
        %vm127 = vmor %vm123, %vm126
        %v128 = vsel %vm127, %v120, %v117
        %v129 = vsel %vm127, %v121, %v118
        %130 = xla_tuple %v128, %v129
        %v131 = vrot.slane %v128, 2
        %v132 = vrot.slane %v129, 2
        %133 = xla_tuple %v131, %v132
        %vm134 = vcmp.gt.s32.totalorder %v131, %v128
        %vm135 = vcmp.eq.s32.totalorder %v131, %v128
        %vm136 = vcmp.lt.s32.totalorder %v132, %v129
        %vm137 = vmand %vm135, %vm136
        %vm138 = vmor %vm134, %vm137
        %v139 = vsel %vm138, %v131, %v128
        %v140 = vsel %vm138, %v132, %v129
        %141 = xla_tuple %v139, %v140
        %142 = vxpose.xlu0.b32.start [1/16] %v139, 128
        %143 = vxpose.xlu0.b32.cont [2/16] %v139, 128
        %144 = vxpose.xlu0.b32.cont [3/16] %v139, 128
        %145 = vxpose.xlu0.b32.cont [4/16] %v139, 128
        %146 = vxpose.xlu0.b32.cont [5/16] %v139, 128
        %147 = vxpose.xlu0.b32.cont [6/16] %v139, 128
        %148 = vxpose.xlu0.b32.cont [7/16] %v139, 128
        %149 = vxpose.xlu0.b32.cont [8/16] %v139, 128
        %150 = vxpose.xlu0.b32.cont [9/16] %v139, 128
        %151 = vxpose.xlu0.b32.cont [10/16] %v139, 128
        %152 = vxpose.xlu0.b32.cont [11/16] %v139, 128
        %153 = vxpose.xlu0.b32.cont [12/16] %v139, 128
        %154 = vxpose.xlu0.b32.cont [13/16] %v139, 128
        %155 = vxpose.xlu0.b32.cont [14/16] %v139, 128
        %156 = vxpose.xlu0.b32.cont [15/16] %v139, 128
        %157 = vxpose.xlu0.b32.end [16/16] %v139, 128
        %v158 = vpop.trf.xlu0
        %v159 = vpop.trf.xlu0
        %v160 = vpop.trf.xlu0
        %v161 = vpop.trf.xlu0
        %v162 = vpop.trf.xlu0
        %v163 = vpop.trf.xlu0
        %v164 = vpop.trf.xlu0
        %v165 = vpop.trf.xlu0
        %v166 = vpop.trf.xlu0
        %v167 = vpop.trf.xlu0
        %v168 = vpop.trf.xlu0
        %v169 = vpop.trf.xlu0
        %v170 = vpop.trf.xlu0
        %v171 = vpop.trf.xlu0
        %v172 = vpop.trf.xlu0
        %v173 = vpop.trf.xlu0
        %174 = vxpose.xlu0.b32.start [1/16] %v140, 128
        %175 = vxpose.xlu0.b32.cont [2/16] %v140, 128
        %176 = vxpose.xlu0.b32.cont [3/16] %v140, 128
        %177 = vxpose.xlu0.b32.cont [4/16] %v140, 128
        %178 = vxpose.xlu0.b32.cont [5/16] %v140, 128
        %179 = vxpose.xlu0.b32.cont [6/16] %v140, 128
        %180 = vxpose.xlu0.b32.cont [7/16] %v140, 128
        %181 = vxpose.xlu0.b32.cont [8/16] %v140, 128
        %182 = vxpose.xlu0.b32.cont [9/16] %v140, 128
        %183 = vxpose.xlu0.b32.cont [10/16] %v140, 128
        %184 = vxpose.xlu0.b32.cont [11/16] %v140, 128
        %185 = vxpose.xlu0.b32.cont [12/16] %v140, 128
        %186 = vxpose.xlu0.b32.cont [13/16] %v140, 128
        %187 = vxpose.xlu0.b32.cont [14/16] %v140, 128
        %188 = vxpose.xlu0.b32.cont [15/16] %v140, 128
        %189 = vxpose.xlu0.b32.end [16/16] %v140, 128
        %v190 = vpop.trf.xlu0
        %v191 = vpop.trf.xlu0
        %v192 = vpop.trf.xlu0
        %v193 = vpop.trf.xlu0
        %v194 = vpop.trf.xlu0
        %v195 = vpop.trf.xlu0
        %v196 = vpop.trf.xlu0
        %v197 = vpop.trf.xlu0
        %v198 = vpop.trf.xlu0
        %v199 = vpop.trf.xlu0
        %v200 = vpop.trf.xlu0
        %v201 = vpop.trf.xlu0
        %v202 = vpop.trf.xlu0
        %v203 = vpop.trf.xlu0
        %v204 = vpop.trf.xlu0
        %v205 = vpop.trf.xlu0
        %206 = xla_tuple %v158, %v190
        %207 = xla_tuple %v159, %v191
        %vm208 = vcmp.gt.s32.totalorder %v159, %v158
        %vm209 = vcmp.eq.s32.totalorder %v159, %v158
        %vm210 = vcmp.lt.s32.totalorder %v191, %v190
        %vm211 = vmand %vm209, %vm210
        %vm212 = vmor %vm208, %vm211
        %v213 = vsel %vm212, %v159, %v158
        %v214 = vsel %vm212, %v191, %v190
        %215 = xla_tuple %v213, %v214
        %216 = xla_tuple %v160, %v192
        %vm217 = vcmp.gt.s32.totalorder %v160, %v213
        %vm218 = vcmp.eq.s32.totalorder %v160, %v213
        %vm219 = vcmp.lt.s32.totalorder %v192, %v214
        %vm220 = vmand %vm218, %vm219
        %vm221 = vmor %vm217, %vm220
        %v222 = vsel %vm221, %v160, %v213
        %v223 = vsel %vm221, %v192, %v214
        %224 = xla_tuple %v222, %v223
        %225 = xla_tuple %v161, %v193
        %vm226 = vcmp.gt.s32.totalorder %v161, %v222
        %vm227 = vcmp.eq.s32.totalorder %v161, %v222
        %vm228 = vcmp.lt.s32.totalorder %v193, %v223
        %vm229 = vmand %vm227, %vm228
        %vm230 = vmor %vm226, %vm229
        %v231 = vsel %vm230, %v161, %v222
        %v232 = vsel %vm230, %v193, %v223
        %233 = xla_tuple %v231, %v232
        %234 = xla_tuple %v162, %v194
        %vm235 = vcmp.gt.s32.totalorder %v162, %v231
        %vm236 = vcmp.eq.s32.totalorder %v162, %v231
        %vm237 = vcmp.lt.s32.totalorder %v194, %v232
        %vm238 = vmand %vm236, %vm237
        %vm239 = vmor %vm235, %vm238
        %v240 = vsel %vm239, %v162, %v231
        %v241 = vsel %vm239, %v194, %v232
        %242 = xla_tuple %v240, %v241
        %243 = xla_tuple %v163, %v195
        %vm244 = vcmp.gt.s32.totalorder %v163, %v240
        %vm245 = vcmp.eq.s32.totalorder %v163, %v240
        %vm246 = vcmp.lt.s32.totalorder %v195, %v241
        %vm247 = vmand %vm245, %vm246
        %vm248 = vmor %vm244, %vm247
        %v249 = vsel %vm248, %v163, %v240
        %v250 = vsel %vm248, %v195, %v241
        %251 = xla_tuple %v249, %v250
        %252 = xla_tuple %v164, %v196
        %vm253 = vcmp.gt.s32.totalorder %v164, %v249
        %vm254 = vcmp.eq.s32.totalorder %v164, %v249
        %vm255 = vcmp.lt.s32.totalorder %v196, %v250
        %vm256 = vmand %vm254, %vm255
        %vm257 = vmor %vm253, %vm256
        %v258 = vsel %vm257, %v164, %v249
        %v259 = vsel %vm257, %v196, %v250
        %260 = xla_tuple %v258, %v259
        %261 = xla_tuple %v165, %v197
        %vm262 = vcmp.gt.s32.totalorder %v165, %v258
        %vm263 = vcmp.eq.s32.totalorder %v165, %v258
        %vm264 = vcmp.lt.s32.totalorder %v197, %v259
        %vm265 = vmand %vm263, %vm264
        %vm266 = vmor %vm262, %vm265
        %v267 = vsel %vm266, %v165, %v258
        %v268 = vsel %vm266, %v197, %v259
        %269 = xla_tuple %v267, %v268
        %270 = xla_tuple %v166, %v198
        %vm271 = vcmp.gt.s32.totalorder %v166, %v267
        %vm272 = vcmp.eq.s32.totalorder %v166, %v267
        %vm273 = vcmp.lt.s32.totalorder %v198, %v268
        %vm274 = vmand %vm272, %vm273
        %vm275 = vmor %vm271, %vm274
        %v276 = vsel %vm275, %v166, %v267
        %v277 = vsel %vm275, %v198, %v268
        %278 = xla_tuple %v276, %v277
        %279 = xla_tuple %v167, %v199
        %vm280 = vcmp.gt.s32.totalorder %v167, %v276
        %vm281 = vcmp.eq.s32.totalorder %v167, %v276
        %vm282 = vcmp.lt.s32.totalorder %v199, %v277
        %vm283 = vmand %vm281, %vm282
        %vm284 = vmor %vm280, %vm283
        %v285 = vsel %vm284, %v167, %v276
        %v286 = vsel %vm284, %v199, %v277
        %287 = xla_tuple %v285, %v286
        %288 = xla_tuple %v168, %v200
        %vm289 = vcmp.gt.s32.totalorder %v168, %v285
        %vm290 = vcmp.eq.s32.totalorder %v168, %v285
        %vm291 = vcmp.lt.s32.totalorder %v200, %v286
        %vm292 = vmand %vm290, %vm291
        %vm293 = vmor %vm289, %vm292
        %v294 = vsel %vm293, %v168, %v285
        %v295 = vsel %vm293, %v200, %v286
        %296 = xla_tuple %v294, %v295
        %297 = xla_tuple %v169, %v201
        %vm298 = vcmp.gt.s32.totalorder %v169, %v294
        %vm299 = vcmp.eq.s32.totalorder %v169, %v294
        %vm300 = vcmp.lt.s32.totalorder %v201, %v295
        %vm301 = vmand %vm299, %vm300
        %vm302 = vmor %vm298, %vm301
        %v303 = vsel %vm302, %v169, %v294
        %v304 = vsel %vm302, %v201, %v295
        %305 = xla_tuple %v303, %v304
        %306 = xla_tuple %v170, %v202
        %vm307 = vcmp.gt.s32.totalorder %v170, %v303
        %vm308 = vcmp.eq.s32.totalorder %v170, %v303
        %vm309 = vcmp.lt.s32.totalorder %v202, %v304
        %vm310 = vmand %vm308, %vm309
        %vm311 = vmor %vm307, %vm310
        %v312 = vsel %vm311, %v170, %v303
        %v313 = vsel %vm311, %v202, %v304
        %314 = xla_tuple %v312, %v313
        %315 = xla_tuple %v171, %v203
        %vm316 = vcmp.gt.s32.totalorder %v171, %v312
        %vm317 = vcmp.eq.s32.totalorder %v171, %v312
        %vm318 = vcmp.lt.s32.totalorder %v203, %v313
        %vm319 = vmand %vm317, %vm318
        %vm320 = vmor %vm316, %vm319
        %v321 = vsel %vm320, %v171, %v312
        %v322 = vsel %vm320, %v203, %v313
        %323 = xla_tuple %v321, %v322
        %324 = xla_tuple %v172, %v204
        %vm325 = vcmp.gt.s32.totalorder %v172, %v321
        %vm326 = vcmp.eq.s32.totalorder %v172, %v321
        %vm327 = vcmp.lt.s32.totalorder %v204, %v322
        %vm328 = vmand %vm326, %vm327
        %vm329 = vmor %vm325, %vm328
        %v330 = vsel %vm329, %v172, %v321
        %v331 = vsel %vm329, %v204, %v322
        %332 = xla_tuple %v330, %v331
        %333 = xla_tuple %v173, %v205
        %vm334 = vcmp.gt.s32.totalorder %v173, %v330
        %vm335 = vcmp.eq.s32.totalorder %v173, %v330
        %vm336 = vcmp.lt.s32.totalorder %v205, %v331
        %vm337 = vmand %vm335, %vm336
        %vm338 = vmor %vm334, %vm337
        %v339 = vsel %vm338, %v173, %v330
        %v340 = vsel %vm338, %v205, %v331
        %341 = xla_tuple %v339, %v340
        %v342 = vrot.slane %v339, 1
        %v343 = vrot.slane %v340, 1
        %344 = xla_tuple %v342, %v343
        %vm345 = vcmp.gt.s32.totalorder %v342, %v339
        %vm346 = vcmp.eq.s32.totalorder %v342, %v339
        %vm347 = vcmp.lt.s32.totalorder %v343, %v340
        %vm348 = vmand %vm346, %vm347
        %vm349 = vmor %vm345, %vm348
        %v350 = vsel %vm349, %v342, %v339
        %v351 = vsel %vm349, %v343, %v340
        %352 = xla_tuple %v350, %v351
        %v353 = vrot.slane %v350, 1
        %v354 = vrot.slane %v351, 1
        %355 = xla_tuple %v353, %v354
        %vm356 = vcmp.gt.s32.totalorder %v353, %v350
        %vm357 = vcmp.eq.s32.totalorder %v353, %v350
        %vm358 = vcmp.lt.s32.totalorder %v354, %v351
        %vm359 = vmand %vm357, %vm358
        %vm360 = vmor %vm356, %vm359
        %v361 = vsel %vm360, %v353, %v350
        %v362 = vsel %vm360, %v354, %v351
        %363 = xla_tuple %v361, %v362
        %v364 = vrot.slane %v361, 1
        %v365 = vrot.slane %v362, 1
        %366 = xla_tuple %v364, %v365
        %vm367 = vcmp.gt.s32.totalorder %v364, %v361
        %vm368 = vcmp.eq.s32.totalorder %v364, %v361
        %vm369 = vcmp.lt.s32.totalorder %v365, %v362
        %vm370 = vmand %vm368, %vm369
        %vm371 = vmor %vm367, %vm370
        %v372 = vsel %vm371, %v364, %v361
        %v373 = vsel %vm371, %v365, %v362
        %374 = xla_tuple %v372, %v373
        %v375 = vrot.slane %v372, 1
        %v376 = vrot.slane %v373, 1
        %377 = xla_tuple %v375, %v376
        %vm378 = vcmp.gt.s32.totalorder %v375, %v372
        %vm379 = vcmp.eq.s32.totalorder %v375, %v372
        %vm380 = vcmp.lt.s32.totalorder %v376, %v373
        %vm381 = vmand %vm379, %vm380
        %vm382 = vmor %vm378, %vm381
        %v383 = vsel %vm382, %v375, %v372
        %v384 = vsel %vm382, %v376, %v373
        %385 = xla_tuple %v383, %v384
        %v386 = vrot.slane %v383, 1
        %v387 = vrot.slane %v384, 1
        %388 = xla_tuple %v386, %v387
        %vm389 = vcmp.gt.s32.totalorder %v386, %v383
        %vm390 = vcmp.eq.s32.totalorder %v386, %v383
        %vm391 = vcmp.lt.s32.totalorder %v387, %v384
        %vm392 = vmand %vm390, %vm391
        %vm393 = vmor %vm389, %vm392
        %v394 = vsel %vm393, %v386, %v383
        %v395 = vsel %vm393, %v387, %v384
        %396 = xla_tuple %v394, %v395
        %v397 = vrot.slane %v394, 1
        %v398 = vrot.slane %v395, 1
        %399 = xla_tuple %v397, %v398
        %vm400 = vcmp.gt.s32.totalorder %v397, %v394
        %vm401 = vcmp.eq.s32.totalorder %v397, %v394
        %vm402 = vcmp.lt.s32.totalorder %v398, %v395
        %vm403 = vmand %vm401, %vm402
        %vm404 = vmor %vm400, %vm403
        %v405 = vsel %vm404, %v397, %v394
        %v406 = vsel %vm404, %v398, %v395
        %407 = xla_tuple %v405, %v406
        %v408 = vrot.slane %v405, 1
        %v409 = vrot.slane %v406, 1
        %410 = xla_tuple %v408, %v409
        %vm411 = vcmp.gt.s32.totalorder %v408, %v405
        %vm412 = vcmp.eq.s32.totalorder %v408, %v405
        %vm413 = vcmp.lt.s32.totalorder %v409, %v406
        %vm414 = vmand %vm412, %vm413
        %vm415 = vmor %vm411, %vm414
        %v416 = vsel %vm415, %v408, %v405
        %v417 = vsel %vm415, %v409, %v406
        %418 = xla_tuple %v416, %v417
        %s419 = scalar_lea.vmem [#allocation13], %s88
        %420 = vst [vmem:[%s419] sm:$0x1] %v416
        %s421 = scalar_lea.vmem [#allocation15], %s88
        %422 = vst [vmem:[%s421] sm:$0x1] %v417
        %423 = xla_tuple %420, %422
        %424 = vxpose.xlu0.b32.start [1/16] %v417, 128
        %425 = vxpose.xlu0.b32.cont [2/16] 0.0, 128
        %426 = vxpose.xlu0.b32.cont [3/16] 0.0, 128
        %427 = vxpose.xlu0.b32.cont [4/16] 0.0, 128
        %428 = vxpose.xlu0.b32.cont [5/16] 0.0, 128
        %429 = vxpose.xlu0.b32.cont [6/16] 0.0, 128
        %430 = vxpose.xlu0.b32.cont [7/16] 0.0, 128
        %431 = vxpose.xlu0.b32.cont [8/16] 0.0, 128
        %432 = vxpose.xlu0.b32.cont [9/16] 0.0, 128
        %433 = vxpose.xlu0.b32.cont [10/16] 0.0, 128
        %434 = vxpose.xlu0.b32.cont [11/16] 0.0, 128
        %435 = vxpose.xlu0.b32.cont [12/16] 0.0, 128
        %436 = vxpose.xlu0.b32.cont [13/16] 0.0, 128
        %437 = vxpose.xlu0.b32.cont [14/16] 0.0, 128
        %438 = vxpose.xlu0.b32.cont [15/16] 0.0, 128
        %439 = vxpose.xlu0.b32.end [16/16] 0.0, 128
        %v440 = vpop.trf.xlu0
        %v441 = vpop.trf.xlu0
        %v442 = vpop.trf.xlu0
        %v443 = vpop.trf.xlu0
        %v444 = vpop.trf.xlu0
        %v445 = vpop.trf.xlu0
        %v446 = vpop.trf.xlu0
        %v447 = vpop.trf.xlu0
        %v448 = vpop.trf.xlu0
        %v449 = vpop.trf.xlu0
        %v450 = vpop.trf.xlu0
        %v451 = vpop.trf.xlu0
        %v452 = vpop.trf.xlu0
        %v453 = vpop.trf.xlu0
        %v454 = vpop.trf.xlu0
        %v455 = vpop.trf.xlu0
        %s456 = vtos %v440
        %s457 = sshrl.u32 %s456, 9
        %p458 = scmp.lt.s32.totalorder %s456, 0
        %s459 = ssub.s32 0, %s456
        %s460 = scalar_select %p458, %s459, %s456
        %s461 = sand.u32 %s460, 511
        %s462 = ssub.s32 0, %s461
        %s463 = scalar_select %p458, %s462, %s461
        %s464 = sshrl.u32 %s463, 7
        %s465 = smul.u32 %s464, 256
        %s466 = sand.u32 %s463, 127
        %s467 = sadd.s32 %s465, %s466
        %v468 = vlaneseq
        %v469 = vstv %s467
        %vm471 = vcmp.eq.s32.totalorder %v468, %v469
        %s472 = smul.addr %s457, 8
        %s473 = scalar_lea.vmem [#allocation16], %s472
        %474 = vst.msk [vmem:[%s473] sm:$0xff] %vm471, 2147483648
        %s475 = smul.addr %s457, 8
        %s476 = scalar_lea.vmem [#allocation17], %s475
        %477 = vst.msk [vmem:[%s476] sm:$0xff] %vm471, 2147483647
        %478 = xla_tuple %474, %477
        %v479 = vrot.slane %v440, 1
        %s480 = vtos %v479
        %s481 = sshrl.u32 %s480, 9
        %p482 = scmp.lt.s32.totalorder %s480, 0
        %s483 = ssub.s32 0, %s480
        %s484 = scalar_select %p482, %s483, %s480
        %s485 = sand.u32 %s484, 511
        %s486 = ssub.s32 0, %s485
        %s487 = scalar_select %p482, %s486, %s485
        %s488 = sshrl.u32 %s487, 7
        %s489 = smul.u32 %s488, 256
        %s490 = sand.u32 %s487, 127
        %s491 = sadd.s32 %s489, %s490
        %v492 = vlaneseq
        %v493 = vstv %s491
        %v494 = vadd.s32 %v493, 128
        %vm495 = vcmp.eq.s32.totalorder %v492, %v494
        %s496 = smul.addr %s481, 8
        %s497 = scalar_lea.vmem [#allocation16], %s496
        %498 = vst.msk [vmem:[%s497] sm:$0xff] %vm495, 2147483648
        %s499 = smul.addr %s481, 8
        %s500 = scalar_lea.vmem [#allocation17], %s499
        %501 = vst.msk [vmem:[%s500] sm:$0xff] %vm495, 2147483647
        %502 = xla_tuple %498, %501
        %v503 = vrot.slane %v479, 1
      $region37: #{custom-call} parent=2 // loop_footer
        %s92 = sadd.s32 1, %s88
      $region38: #{custom-call} parent=2 // loop_footer_branch
        %87 = sbr.rel target = $region34
      $region39: #{custom-call} parent=2 // loop_exit
        _
      %s504 = scalar_lea.vmem [#allocation13], 7
      %v505 = vld [vmem:[%s504] ss:$-1 sm:$0xff]
      %s506 = scalar_lea.vmem [#allocation13], 7
      %v507 = vld [vmem:[%s506] ss:$-1 sm:$0xff]
      %508 = vst [vmem:[#allocation13] sm:$0xff] %v507
      %509 = vst [vmem:[#allocation13] sm:$0xff] %v505
      %s510 = scalar_lea.vmem [#allocation15], 7
      %v511 = vld [vmem:[%s510] ss:$-1 sm:$0xff]
      %s512 = scalar_lea.vmem [#allocation15], 7
      %v513 = vld [vmem:[%s512] ss:$-1 sm:$0xff]
      %514 = vst [vmem:[#allocation15] sm:$0xff] %v513
      %515 = vst [vmem:[#allocation15] sm:$0xff] %v511
      %516 = xla_tuple %509, %515
      %v517 = vld [vmem:[#allocation12] sm:$0xff]
      %v518 = vld [vmem:[#allocation14] sm:$0xff]
      %519 = xla_tuple %v517, %v518
      %v520 = vld [vmem:[#allocation13] sm:$0xff]
      %v521 = vld [vmem:[#allocation15] sm:$0xff]
      %522 = xla_tuple %v520, %v521
      %vm523 = vcmp.gt.s32.totalorder %v517, %v520
      %vm524 = vcmp.eq.s32.totalorder %v517, %v520
      %vm525 = vcmp.lt.s32.totalorder %v518, %v521
      %vm526 = vmand %vm524, %vm525
      %vm527 = vmor %vm523, %vm526
      %v528 = vsel %vm527, %v517, %v520
      %529 = vst [vmem:[#allocation12] sm:$0xff] %v528
      %v530 = vsel %vm527, %v520, %v517
      %531 = vst [vmem:[#allocation13] sm:$0xff] %v530
      %v532 = vsel %vm527, %v518, %v521
      %533 = vst [vmem:[#allocation14] sm:$0xff] %v532
      %v534 = vsel %vm527, %v521, %v518
      %535 = vst [vmem:[#allocation15] sm:$0xff] %v534
      %536 = xla_tuple %531, %535
      %537 = xla_tuple [#allocation12], [#allocation14]
      %v538 = vld [vmem:[#allocation12] sm:$0xff]
      %v539 = vld [vmem:[#allocation14] sm:$0xff]
      %540 = xla_tuple %v538, %v539
      %v542 = vunpack.c.l.s4 839939668
      %v543 = vunpack.c.0.s8 %v542
      %v544 = vlaneseq
      %v545 = vshrl.u32 %v544, 7
      %v546 = vsub.s32 %v543, %v545
      %v547 = vrot.slane %v538, %v546
      %v549 = vunpack.c.l.s4 839939668
      %v550 = vunpack.c.0.s8 %v549
      %v551 = vlaneseq
      %v552 = vshrl.u32 %v551, 7
      %v553 = vsub.s32 %v550, %v552
      %v554 = vrot.slane %v539, %v553
      %555 = xla_tuple %v547, %v554
      %vm556 = vcmp.gt.s32.totalorder %v538, %v547
      %vm557 = vcmp.eq.s32.totalorder %v538, %v547
      %vm558 = vcmp.lt.s32.totalorder %v539, %v554
      %vm559 = vmand %vm557, %vm558
      %vm560 = vmor %vm556, %vm559
      %v561 = vlaneseq
      %v562 = vshrl.u32 %v561, 7
      %v563 = vand.u32 %v562, 4
      %vm564 = vcmp.ne.s32.totalorder %v563, 0
      %vm565 = vmxor %vm560, %vm564
      %v566 = vsel %vm565, %v538, %v547
      %v567 = vsel %vm565, %v539, %v554
      %568 = xla_tuple %v566, %v567
      %v570 = vunpack.c.l.s4 1417023538
      %v571 = vunpack.c.0.s8 %v570
      %v572 = vlaneseq
      %v573 = vshrl.u32 %v572, 7
      %v574 = vsub.s32 %v571, %v573
      %v575 = vrot.slane %v566, %v574
      %v577 = vunpack.c.l.s4 1417023538
      %v578 = vunpack.c.0.s8 %v577
      %v579 = vlaneseq
      %v580 = vshrl.u32 %v579, 7
      %v581 = vsub.s32 %v578, %v580
      %v582 = vrot.slane %v567, %v581
      %583 = xla_tuple %v575, %v582
      %vm584 = vcmp.gt.s32.totalorder %v566, %v575
      %vm585 = vcmp.eq.s32.totalorder %v566, %v575
      %vm586 = vcmp.lt.s32.totalorder %v567, %v582
      %vm587 = vmand %vm585, %vm586
      %vm588 = vmor %vm584, %vm587
      %v589 = vlaneseq
      %v590 = vshrl.u32 %v589, 7
      %v591 = vand.u32 %v590, 2
      %vm592 = vcmp.ne.s32.totalorder %v591, 0
      %vm593 = vmxor %vm588, %vm592
      %v594 = vsel %vm593, %v566, %v575
      %v595 = vsel %vm593, %v567, %v582
      %596 = xla_tuple %v594, %v595
      %v598 = vunpack.c.l.s4 1732584193
      %v599 = vunpack.c.0.s8 %v598
      %v600 = vlaneseq
      %v601 = vshrl.u32 %v600, 7
      %v602 = vsub.s32 %v599, %v601
      %v603 = vrot.slane %v594, %v602
      %v605 = vunpack.c.l.s4 1732584193
      %v606 = vunpack.c.0.s8 %v605
      %v607 = vlaneseq
      %v608 = vshrl.u32 %v607, 7
      %v609 = vsub.s32 %v606, %v608
      %v610 = vrot.slane %v595, %v609
      %611 = xla_tuple %v603, %v610
      %vm612 = vcmp.gt.s32.totalorder %v594, %v603
      %vm613 = vcmp.eq.s32.totalorder %v594, %v603
      %vm614 = vcmp.lt.s32.totalorder %v595, %v610
      %vm615 = vmand %vm613, %vm614
      %vm616 = vmor %vm612, %vm615
      %v617 = vlaneseq
      %v618 = vshrl.u32 %v617, 7
      %v619 = vand.u32 %v618, 1
      %vm620 = vcmp.ne.s32.totalorder %v619, 0
      %vm621 = vmxor %vm616, %vm620
      %v622 = vsel %vm621, %v594, %v603
      %v623 = vsel %vm621, %v595, %v610
      %624 = xla_tuple %v622, %v623
      %625 = vst [vmem:[#allocation12] sm:$0xff] %v622
      %626 = vst [vmem:[#allocation14] sm:$0xff] %v623
      %627 = xla_tuple %625, %626
      %v628 = vld [vmem:[#allocation12] sm:$0xff]
      %v629 = vld [vmem:[#allocation14] sm:$0xff]
      %630 = xla_tuple %v628, %v629
      %v632 = vunpack.c.l.s4 839939668
      %v633 = vunpack.c.0.s8 %v632
      %v634 = vlaneseq
      %v635 = vshrl.u32 %v634, 7
      %v636 = vsub.s32 %v633, %v635
      %v637 = vrot.slane %v628, %v636
      %v639 = vunpack.c.l.s4 839939668
      %v640 = vunpack.c.0.s8 %v639
      %v641 = vlaneseq
      %v642 = vshrl.u32 %v641, 7
      %v643 = vsub.s32 %v640, %v642
      %v644 = vrot.slane %v629, %v643
      %645 = xla_tuple %v637, %v644
      %vm646 = vcmp.gt.s32.totalorder %v628, %v637
      %vm647 = vcmp.eq.s32.totalorder %v628, %v637
      %vm648 = vcmp.lt.s32.totalorder %v629, %v644
      %vm649 = vmand %vm647, %vm648
      %vm650 = vmor %vm646, %vm649
      %v651 = vlaneseq
      %v652 = vshrl.u32 %v651, 7
      %v653 = vand.u32 %v652, 4
      %vm654 = vcmp.ne.s32.totalorder %v653, 0
      %vm655 = vmxor %vm650, %vm654
      %v656 = vsel %vm655, %v628, %v637
      %v657 = vsel %vm655, %v629, %v644
      %658 = xla_tuple %v656, %v657
      %v660 = vunpack.c.l.s4 1417023538
      %v661 = vunpack.c.0.s8 %v660
      %v662 = vlaneseq
      %v663 = vshrl.u32 %v662, 7
      %v664 = vsub.s32 %v661, %v663
      %v665 = vrot.slane %v656, %v664
      %v667 = vunpack.c.l.s4 1417023538
      %v668 = vunpack.c.0.s8 %v667
      %v669 = vlaneseq
      %v670 = vshrl.u32 %v669, 7
      %v671 = vsub.s32 %v668, %v670
      %v672 = vrot.slane %v657, %v671
      %673 = xla_tuple %v665, %v672
      %vm674 = vcmp.gt.s32.totalorder %v656, %v665
      %vm675 = vcmp.eq.s32.totalorder %v656, %v665
      %vm676 = vcmp.lt.s32.totalorder %v657, %v672
      %vm677 = vmand %vm675, %vm676
      %vm678 = vmor %vm674, %vm677
      %v679 = vlaneseq
      %v680 = vshrl.u32 %v679, 7
      %v681 = vand.u32 %v680, 2
      %vm682 = vcmp.ne.s32.totalorder %v681, 0
      %vm683 = vmxor %vm678, %vm682
      %v684 = vsel %vm683, %v656, %v665
      %v685 = vsel %vm683, %v657, %v672
      %686 = xla_tuple %v684, %v685
      %v688 = vunpack.c.l.s4 1732584193
      %v689 = vunpack.c.0.s8 %v688
      %v690 = vlaneseq
      %v691 = vshrl.u32 %v690, 7
      %v692 = vsub.s32 %v689, %v691
      %v693 = vrot.slane %v684, %v692
      %v695 = vunpack.c.l.s4 1732584193
      %v696 = vunpack.c.0.s8 %v695
      %v697 = vlaneseq
      %v698 = vshrl.u32 %v697, 7
      %v699 = vsub.s32 %v696, %v698
      %v700 = vrot.slane %v685, %v699
      %701 = xla_tuple %v693, %v700
      %vm702 = vcmp.gt.s32.totalorder %v684, %v693
      %vm703 = vcmp.eq.s32.totalorder %v684, %v693
      %vm704 = vcmp.lt.s32.totalorder %v685, %v700
      %vm705 = vmand %vm703, %vm704
      %vm706 = vmor %vm702, %vm705
      %v707 = vlaneseq
      %v708 = vshrl.u32 %v707, 7
      %v709 = vand.u32 %v708, 1
      %vm710 = vcmp.ne.s32.totalorder %v709, 0
      %vm711 = vmxor %vm706, %vm710
      %v712 = vsel %vm711, %v684, %v693
      %v713 = vsel %vm711, %v685, %v700
      %714 = xla_tuple %v712, %v713
      %715 = vst [vmem:[#allocation12] sm:$0xff] %v712
      %716 = vst [vmem:[#allocation14] sm:$0xff] %v713
      %717 = xla_tuple %715, %716
      %718 = xla_tuple [#allocation13], [#allocation15]
      %v719 = vld [vmem:[#allocation13] sm:$0xff]
      %v720 = vld [vmem:[#allocation15] sm:$0xff]
      %721 = xla_tuple %v719, %v720
      %v723 = vunpack.c.l.s4 839939668
      %v724 = vunpack.c.0.s8 %v723
      %v725 = vlaneseq
      %v726 = vshrl.u32 %v725, 7
      %v727 = vsub.s32 %v724, %v726
      %v728 = vrot.slane %v719, %v727
      %v730 = vunpack.c.l.s4 839939668
      %v731 = vunpack.c.0.s8 %v730
      %v732 = vlaneseq
      %v733 = vshrl.u32 %v732, 7
      %v734 = vsub.s32 %v731, %v733
      %v735 = vrot.slane %v720, %v734
      %736 = xla_tuple %v728, %v735
      %vm737 = vcmp.gt.s32.totalorder %v719, %v728
      %vm738 = vcmp.eq.s32.totalorder %v719, %v728
      %vm739 = vcmp.lt.s32.totalorder %v720, %v735
      %vm740 = vmand %vm738, %vm739
      %vm741 = vmor %vm737, %vm740
      %v742 = vlaneseq
      %v743 = vshrl.u32 %v742, 7
      %v744 = vand.u32 %v743, 4
      %vm745 = vcmp.ne.s32.totalorder %v744, 0
      %vm746 = vmxor %vm741, %vm745
      %v747 = vsel %vm746, %v719, %v728
      %v748 = vsel %vm746, %v720, %v735
      %749 = xla_tuple %v747, %v748
      %v751 = vunpack.c.l.s4 1417023538
      %v752 = vunpack.c.0.s8 %v751
      %v753 = vlaneseq
      %v754 = vshrl.u32 %v753, 7
      %v755 = vsub.s32 %v752, %v754
      %v756 = vrot.slane %v747, %v755
      %v758 = vunpack.c.l.s4 1417023538
      %v759 = vunpack.c.0.s8 %v758
      %v760 = vlaneseq
      %v761 = vshrl.u32 %v760, 7
      %v762 = vsub.s32 %v759, %v761
      %v763 = vrot.slane %v748, %v762
      %764 = xla_tuple %v756, %v763
      %vm765 = vcmp.gt.s32.totalorder %v747, %v756
      %vm766 = vcmp.eq.s32.totalorder %v747, %v756
      %vm767 = vcmp.lt.s32.totalorder %v748, %v763
      %vm768 = vmand %vm766, %vm767
      %vm769 = vmor %vm765, %vm768
      %v770 = vlaneseq
      %v771 = vshrl.u32 %v770, 7
      %v772 = vand.u32 %v771, 2
      %vm773 = vcmp.ne.s32.totalorder %v772, 0
      %vm774 = vmxor %vm769, %vm773
      %v775 = vsel %vm774, %v747, %v756
      %v776 = vsel %vm774, %v748, %v763
      %777 = xla_tuple %v775, %v776
      %v779 = vunpack.c.l.s4 1732584193
      %v780 = vunpack.c.0.s8 %v779
      %v781 = vlaneseq
      %v782 = vshrl.u32 %v781, 7
      %v783 = vsub.s32 %v780, %v782
      %v784 = vrot.slane %v775, %v783
      %v786 = vunpack.c.l.s4 1732584193
      %v787 = vunpack.c.0.s8 %v786
      %v788 = vlaneseq
      %v789 = vshrl.u32 %v788, 7
      %v790 = vsub.s32 %v787, %v789
      %v791 = vrot.slane %v776, %v790
      %792 = xla_tuple %v784, %v791
      %vm793 = vcmp.gt.s32.totalorder %v775, %v784
      %vm794 = vcmp.eq.s32.totalorder %v775, %v784
      %vm795 = vcmp.lt.s32.totalorder %v776, %v791
      %vm796 = vmand %vm794, %vm795
      %vm797 = vmor %vm793, %vm796
      %v798 = vlaneseq
      %v799 = vshrl.u32 %v798, 7
      %v800 = vand.u32 %v799, 1
      %vm801 = vcmp.ne.s32.totalorder %v800, 0
      %vm802 = vmxor %vm797, %vm801
      %v803 = vsel %vm802, %v775, %v784
      %v804 = vsel %vm802, %v776, %v791
      %805 = xla_tuple %v803, %v804
      %806 = vst [vmem:[#allocation13] sm:$0xff] %v803
      %807 = vst [vmem:[#allocation15] sm:$0xff] %v804
      %808 = xla_tuple %806, %807
      %v809 = vld [vmem:[#allocation13] sm:$0xff]
      %v810 = vld [vmem:[#allocation15] sm:$0xff]
      %811 = xla_tuple %v809, %v810
      %v813 = vunpack.c.l.s4 839939668
      %v814 = vunpack.c.0.s8 %v813
      %v815 = vlaneseq
      %v816 = vshrl.u32 %v815, 7
      %v817 = vsub.s32 %v814, %v816
      %v818 = vrot.slane %v809, %v817
      %v820 = vunpack.c.l.s4 839939668
      %v821 = vunpack.c.0.s8 %v820
      %v822 = vlaneseq
      %v823 = vshrl.u32 %v822, 7
      %v824 = vsub.s32 %v821, %v823
      %v825 = vrot.slane %v810, %v824
      %826 = xla_tuple %v818, %v825
      %vm827 = vcmp.gt.s32.totalorder %v809, %v818
      %vm828 = vcmp.eq.s32.totalorder %v809, %v818
      %vm829 = vcmp.lt.s32.totalorder %v810, %v825
      %vm830 = vmand %vm828, %vm829
      %vm831 = vmor %vm827, %vm830
      %v832 = vlaneseq
      %v833 = vshrl.u32 %v832, 7
      %v834 = vand.u32 %v833, 4
      %vm835 = vcmp.ne.s32.totalorder %v834, 0
      %vm836 = vmxor %vm831, %vm835
      %v837 = vsel %vm836, %v809, %v818
      %v838 = vsel %vm836, %v810, %v825
      %839 = xla_tuple %v837, %v838
      %v841 = vunpack.c.l.s4 1417023538
      %v842 = vunpack.c.0.s8 %v841
      %v843 = vlaneseq
      %v844 = vshrl.u32 %v843, 7
      %v845 = vsub.s32 %v842, %v844
      %v846 = vrot.slane %v837, %v845
      %v848 = vunpack.c.l.s4 1417023538
      %v849 = vunpack.c.0.s8 %v848
      %v850 = vlaneseq
      %v851 = vshrl.u32 %v850, 7
      %v852 = vsub.s32 %v849, %v851
      %v853 = vrot.slane %v838, %v852
      %854 = xla_tuple %v846, %v853
      %vm855 = vcmp.gt.s32.totalorder %v837, %v846
      %vm856 = vcmp.eq.s32.totalorder %v837, %v846
      %vm857 = vcmp.lt.s32.totalorder %v838, %v853
      %vm858 = vmand %vm856, %vm857
      %vm859 = vmor %vm855, %vm858
      %v860 = vlaneseq
      %v861 = vshrl.u32 %v860, 7
      %v862 = vand.u32 %v861, 2
      %vm863 = vcmp.ne.s32.totalorder %v862, 0
      %vm864 = vmxor %vm859, %vm863
      %v865 = vsel %vm864, %v837, %v846
      %v866 = vsel %vm864, %v838, %v853
      %867 = xla_tuple %v865, %v866
      %v869 = vunpack.c.l.s4 1732584193
      %v870 = vunpack.c.0.s8 %v869
      %v871 = vlaneseq
      %v872 = vshrl.u32 %v871, 7
      %v873 = vsub.s32 %v870, %v872
      %v874 = vrot.slane %v865, %v873
      %v876 = vunpack.c.l.s4 1732584193
      %v877 = vunpack.c.0.s8 %v876
      %v878 = vlaneseq
      %v879 = vshrl.u32 %v878, 7
      %v880 = vsub.s32 %v877, %v879
      %v881 = vrot.slane %v866, %v880
      %882 = xla_tuple %v874, %v881
      %vm883 = vcmp.gt.s32.totalorder %v865, %v874
      %vm884 = vcmp.eq.s32.totalorder %v865, %v874
      %vm885 = vcmp.lt.s32.totalorder %v866, %v881
      %vm886 = vmand %vm884, %vm885
      %vm887 = vmor %vm883, %vm886
      %v888 = vlaneseq
      %v889 = vshrl.u32 %v888, 7
      %v890 = vand.u32 %v889, 1
      %vm891 = vcmp.ne.s32.totalorder %v890, 0
      %vm892 = vmxor %vm887, %vm891
      %v893 = vsel %vm892, %v865, %v874
      %v894 = vsel %vm892, %v866, %v881
      %895 = xla_tuple %v893, %v894
      %896 = vst [vmem:[#allocation13] sm:$0xff] %v893
      %897 = vst [vmem:[#allocation15] sm:$0xff] %v894
      %898 = xla_tuple %896, %897
    %v899 = vld [vmem:[#allocation12] sm:$0xff]
    %vm900 = vcmp.lt.s32.totalorder %v899, 0
    %v901 = vsub.s32 2147483647, %v899
    %v902 = vsel %vm900, %v901, %v899
    %903 = vst [vmem:[#allocation12] sm:$0xff] %v902
    %v904 = vld [vmem:[#allocation12] sm:$0xff]
    %905 = vxpose.xlu0.b32.start.end [1/1] (short) %v904, 128
    %v906 = vpop.trf.xlu0
    %v907 = vpop.trf.xlu0
    %v908 = vpop.trf.xlu0
    %v909 = vpop.trf.xlu0
    %v910 = vpop.trf.xlu0
    %v911 = vpop.trf.xlu0
    %v912 = vpop.trf.xlu0
    %v913 = vpop.trf.xlu0
    %v914 = vpop.trf.xlu0
    %v915 = vpop.trf.xlu0
    %v916 = vpop.trf.xlu0
    %v917 = vpop.trf.xlu0
    %v918 = vpop.trf.xlu0
    %v919 = vpop.trf.xlu0
    %v920 = vpop.trf.xlu0
    %v921 = vpop.trf.xlu0
    %922 = vst [vmem:[#allocation7] sm:$0xff] %v906
    %v923 = vld [vmem:[#allocation14] sm:$0xff]
    %924 = vxpose.xlu0.b32.start.end [1/1] (short) %v923, 128
    %v925 = vpop.trf.xlu0
    %v926 = vpop.trf.xlu0
    %v927 = vpop.trf.xlu0
    %v928 = vpop.trf.xlu0
    %v929 = vpop.trf.xlu0
    %v930 = vpop.trf.xlu0
    %v931 = vpop.trf.xlu0
    %v932 = vpop.trf.xlu0
    %v933 = vpop.trf.xlu0
    %v934 = vpop.trf.xlu0
    %v935 = vpop.trf.xlu0
    %v936 = vpop.trf.xlu0
    %v937 = vpop.trf.xlu0
    %v938 = vpop.trf.xlu0
    %v939 = vpop.trf.xlu0
    %v940 = vpop.trf.xlu0
    %941 = vst [vmem:[#allocation10] sm:$0xff] %v925
    %s943 = sshllo.u32 0, 2
    %v945 = vld [vmem:[#allocation7] sm:%s943]
    %s946 = sshllo.u32 0, 2
    %947 = vst [vmem:[#allocation8] sm:%s946] %v945
    %s949 = sshllo.u32 0, 2
    %v951 = vld [vmem:[#allocation10] sm:%s949]
    %s952 = sshllo.u32 0, 2
    %953 = vst [vmem:[#allocation11] sm:%s952] %v951
    %s955 = ssub.s32 32, 32
    %956 = vsyncadd [#allocation9], %s955
    %s958 = sshll.u32 [#allocation8], 4
    %s959 = int_to_ptr.vmem [resolvable:$true] %s958
    %961 = dma.vmem_to_hbm [thread:$0]  %s959, 32, %s1, [#allocation9]
    // Predicated region
    $region40: #{custom-call} parent=1 // pred_check
      _
    $region41: #{custom-call} parent=1 // pred_check_branch
      %963 = sbr.rel (0) target = $region43
    $region42: #{custom-call} parent=1 // pred_region
      // Predicated region
      $region44: #{custom-call} parent=42 // pred_check
        _
      $region45: #{custom-call} parent=42 // pred_check_branch
        %965 = sbr.rel target = $region47
      $region46: #{custom-call} parent=42 // pred_region
        // Predicated region
        $region59: #{custom-call} parent=46 // pred_check
          _
        $region60: #{custom-call} parent=46 // pred_check_branch
          %980 = sbr.rel (0) target = $region62
        $region61: #{custom-call} parent=46 // pred_region
          loop: start=0, step=1, limit=1
          $region63: #{custom-call} parent=61 // loop_pre_header
            _
          $region64: #{custom-call} parent=61 // loop_header
            %s983 = sphi 0, %s987
            %p984 = scmp.ge.s32.totalorder %s983, 1
            %s988 = sphi [#allocation11], [#allocation11]
            %s989 = sphi %s2, %s2
          $region65: #{custom-call} parent=61 // loop_header_branch
            %986 = sbr.rel (%p984) target = $region69
          $region66: #{custom-call} parent=61 // loop_body
            %v990 = vld [vmem:[%s988] sm:$0x3]
            %991 = vst [vmem:[%s989] sm:$0x3] %v990
          $region67: #{custom-call} parent=61 // loop_footer
            %s987 = sadd.s32 1, %s983
          $region68: #{custom-call} parent=61 // loop_footer_branch
            %982 = sbr.rel target = $region64
          $region69: #{custom-call} parent=61 // loop_exit
            _
        $region62: #{custom-call} parent=46 // pred_fallthru
          _
      $region47: #{custom-call} parent=42 // pred_fallthru
        _
      // Predicated region
      $region48: #{custom-call} parent=42 // pred_check
        _
      $region49: #{custom-call} parent=42 // pred_check_branch
        %967 = sbr.rel (0) target = $region51
      $region50: #{custom-call} parent=42 // pred_region
        loop: start=0, step=1, limit=1
        $region52: #{custom-call} parent=50 // loop_pre_header
          _
        $region53: #{custom-call} parent=50 // loop_header
          %s970 = sphi 0, %s974
          %p971 = scmp.ge.s32.totalorder %s970, 1
          %s975 = sphi [#allocation11], [#allocation11]
          %s976 = sphi %s2, %s2
        $region54: #{custom-call} parent=50 // loop_header_branch
          %973 = sbr.rel (%p971) target = $region58
        $region55: #{custom-call} parent=50 // loop_body
          %v977 = vld [vmem:[%s975] sm:$0x3]
          %978 = vst [vmem:[%s976] sm:$0x3] %v977
        $region56: #{custom-call} parent=50 // loop_footer
          %s974 = sadd.s32 1, %s970
        $region57: #{custom-call} parent=50 // loop_footer_branch
          %969 = sbr.rel target = $region53
        $region58: #{custom-call} parent=50 // loop_exit
          _
      $region51: #{custom-call} parent=42 // pred_fallthru
        _
    $region43: #{custom-call} parent=1 // pred_fallthru
      _
    %992 = vnop
    %993 = dma.done [#allocation9], 32
    %994 = vsyncpa [#allocation9], 1

// kernel: generalized_rcnn_forward.4
$region0: #{generalized_rcnn_forward.4}
  #allocation0 [shape = 'u32[]', space=smem, size = 0x4, offset = 0x4, fixed_abs, tag = 'smem constant byte address 0x4 - core index']
  #allocation1 [shape = 'u32[144,128]{1,0:T(1,128)}', space=vmem, size = 0x12000, scoped, tag = 'internal scratch']
  #allocation2 [shape = 'f32[256,128]{1,0:T(8,128)}', space=vmem, size = 0x20000, scoped, tag = 'scratch operand']
  %s0 = inlined_call_operand.vmem [shape: bf16[2,288,16], index: 0, kind: input, shape index: {}]
  %s1 = inlined_call_operand.vmem [shape: bf16[3,16,128], index: 1, kind: input, shape index: {}]
  %s2 = inlined_call_operand.vmem [shape: f32[1,128], index: 2, kind: input, shape index: {}]
  %s3 = inlined_call_operand.vmem [shape: bf16[2,256,128], index: 3, kind: output, shape index: {}]
  %s4 = sld [smem:[#allocation0]]
  $region45: #{generalized_rcnn_forward.4} parent=0
    _
  %s6 = ssub.s32 1, %s4
  %s7 = scalar_select 0, %s6, %s4
  loop: start=0, step=1, limit=4
  $region2: #{generalized_rcnn_forward.4} parent=0 // loop_pre_header
    _
  $region3: #{generalized_rcnn_forward.4} parent=0 // loop_header
    %s9 = sphi 0, %s13
    %p10 = scmp.ge.s32.totalorder %s9, 4
    %s16 = sphi 0, %s28
    %s17 = sphi 0, %s24
    %s18 = sphi 0, %s16
    %s19 = sphi 0, %s17
    %s20 = sphi 0, %s18
    %s21 = sphi 0, %s19
    %s33 = sphi 0, %s35
    %s36 = sphi 0, %s33
    %s37 = sphi 0, %s36
    %s53 = sphi 0, %s37
    %s57 = sphi 0, %s57
    %s59 = sphi 0, %s57
    %s60 = sphi 0, %s59
    %s74 = sphi 0, %s60
    %s78 = sphi 0, %s78
    %s80 = sphi 0, %s78
    %s81 = sphi 0, %s80
    %s95 = sphi 0, %s81
    %s103 = sphi 0, %s105
    %s106 = sphi 0, %s103
    %s107 = sphi 0, %s106
    %s123 = sphi 0, %s107
  $region4: #{generalized_rcnn_forward.4} parent=0 // loop_header_branch
    %12 = sbr.rel (%p10) target = $region8
  $region5: #{generalized_rcnn_forward.4} parent=0 // loop_body
    %s14 = ssub.s32 %s9, 1
    %s15 = ssub.s32 %s9, 2
    %s22 = sadd.s32 1, %s17
    %p23 = scmp.ge.s32.totalorder %s22, 1
    %s24 = scalar_select %p23, 0, %s22
    %s25 = sadd.s32 1, %s16
    %s26 = scalar_select %p23, %s25, %s16
    %p27 = scmp.ge.s32.totalorder %s26, 2
    %s28 = scalar_select %p27, 0, %s26
    %s29 = sadd.s32 %s16, %s17
    %s30 = sadd.s32 %s28, %s24
    %s31 = ssub.s32 %s29, %s30
    %p32 = scmp.eq.s32.totalorder %s31, 0
    %s34 = sadd.s32 %s33, 1
    %s35 = scalar_select %p32, %s33, %s34
    %p38 = pneg %p32
    %p39 = scmp.eq.s32.totalorder %s9, 1
    %p40 = por %p38, %p39
    %p41 = scmp.ne.s32.totalorder %s33, %s36
    %p42 = scmp.eq.s32.totalorder %s9, 0
    %p43 = por %p41, %p42
    %p44 = scmp.ne.s32.totalorder %s33, %s36
    %p45 = scmp.eq.s32.totalorder %s14, 1
    %p46 = por %p44, %p45
    %p47 = scmp.ne.s32.totalorder %s36, %s37
    %p48 = scmp.eq.s32.totalorder %s14, 0
    %p49 = por %p47, %p48
    %p50 = scmp.ne.s32.totalorder %s36, %s37
    %p51 = scmp.eq.s32.totalorder %s15, 1
    %p52 = por %p50, %p51
    %p54 = scmp.ne.s32.totalorder %s37, %s53
    %p55 = scmp.eq.s32.totalorder %s15, 0
    %p56 = por %p54, %p55
    %s58 = sadd.s32 %s57, 1
    %p61 = scmp.eq.s32.totalorder %s9, 1
    %p62 = scmp.ne.s32.totalorder %s57, %s59
    %p63 = scmp.eq.s32.totalorder %s9, 0
    %p64 = por %p62, %p63
    %p65 = scmp.ne.s32.totalorder %s57, %s59
    %p66 = scmp.eq.s32.totalorder %s14, 1
    %p67 = por %p65, %p66
    %p68 = scmp.ne.s32.totalorder %s59, %s60
    %p69 = scmp.eq.s32.totalorder %s14, 0
    %p70 = por %p68, %p69
    %p71 = scmp.ne.s32.totalorder %s59, %s60
    %p72 = scmp.eq.s32.totalorder %s15, 1
    %p73 = por %p71, %p72
    %p75 = scmp.ne.s32.totalorder %s60, %s74
    %p76 = scmp.eq.s32.totalorder %s15, 0
    %p77 = por %p75, %p76
    %s79 = sadd.s32 %s78, 1
    %p82 = scmp.eq.s32.totalorder %s9, 1
    %p83 = scmp.ne.s32.totalorder %s78, %s80
    %p84 = scmp.eq.s32.totalorder %s9, 0
    %p85 = por %p83, %p84
    %p86 = scmp.ne.s32.totalorder %s78, %s80
    %p87 = scmp.eq.s32.totalorder %s14, 1
    %p88 = por %p86, %p87
    %p89 = scmp.ne.s32.totalorder %s80, %s81
    %p90 = scmp.eq.s32.totalorder %s14, 0
    %p91 = por %p89, %p90
    %p92 = scmp.ne.s32.totalorder %s80, %s81
    %p93 = scmp.eq.s32.totalorder %s15, 1
    %p94 = por %p92, %p93
    %p96 = scmp.ne.s32.totalorder %s81, %s95
    %p97 = scmp.eq.s32.totalorder %s15, 0
    %p98 = por %p96, %p97
    %s99 = ssub.s32 %s16, %s28
    %s100 = ssub.s32 %s17, %s24
    %s101 = sor.u32 %s99, %s100
    %p102 = scmp.eq.s32.totalorder %s101, 0
    %s104 = sadd.s32 %s103, 1
    %s105 = scalar_select %p102, %s103, %s104
    %p108 = pneg %p102
    %p109 = scmp.eq.s32.totalorder %s9, 1
    %p110 = por %p108, %p109
    %p111 = scmp.ne.s32.totalorder %s103, %s106
    %p112 = scmp.eq.s32.totalorder %s9, 0
    %p113 = por %p111, %p112
    %p114 = scmp.ne.s32.totalorder %s103, %s106
    %p115 = scmp.eq.s32.totalorder %s14, 1
    %p116 = por %p114, %p115
    %p117 = scmp.ne.s32.totalorder %s106, %s107
    %p118 = scmp.eq.s32.totalorder %s14, 0
    %p119 = por %p117, %p118
    %p120 = scmp.ne.s32.totalorder %s106, %s107
    %p121 = scmp.eq.s32.totalorder %s15, 1
    %p122 = por %p120, %p121
    %p124 = scmp.ne.s32.totalorder %s107, %s123
    %p125 = scmp.eq.s32.totalorder %s15, 0
    %p126 = por %p124, %p125
    %p127 = scmp.le.s32.totalorder 1, %s9
    %p128 = scmp.lt.s32.totalorder %s9, 3
    %p129 = pnand %p127, %p128
    %p130 = pneg %p129
    // Predicated region
    $region9: #{generalized_rcnn_forward.4} parent=5 // pred_check
      _
    $region10: #{generalized_rcnn_forward.4} parent=5 // pred_check_branch
      %132 = sbr.rel (%p129) target = $region12
    $region11: #{generalized_rcnn_forward.4} parent=5 // pred_region
      %s133 = ssub.s32 %s9, 1
      // Predicated region
      $region13: #{generalized_rcnn_forward.4} parent=11 // pred_check
        %p134 = pneg %p70
      $region14: #{generalized_rcnn_forward.4} parent=11 // pred_check_branch
        %136 = sbr.rel (%p134) target = $region16
      $region15: #{generalized_rcnn_forward.4} parent=11 // pred_region
        _
      $region16: #{generalized_rcnn_forward.4} parent=11 // pred_fallthru
        _
      // Predicated region
      $region17: #{generalized_rcnn_forward.4} parent=11 // pred_check
        %p137 = pneg %p91
      $region18: #{generalized_rcnn_forward.4} parent=11 // pred_check_branch
        %139 = sbr.rel (%p137) target = $region20
      $region19: #{generalized_rcnn_forward.4} parent=11 // pred_region
        _
      $region20: #{generalized_rcnn_forward.4} parent=11 // pred_fallthru
        _
    $region12: #{generalized_rcnn_forward.4} parent=5 // pred_fallthru
      _
    %p140 = scmp.lt.s32.totalorder %s9, 2
    // Predicated region
    $region21: #{generalized_rcnn_forward.4} parent=5 // pred_check
      %p141 = pneg %p140
    $region22: #{generalized_rcnn_forward.4} parent=5 // pred_check_branch
      %143 = sbr.rel (%p141) target = $region24
    $region23: #{generalized_rcnn_forward.4} parent=5 // pred_region
      // Predicated region
      $region25: #{generalized_rcnn_forward.4} parent=23 // pred_check
        %p144 = pneg %p43
      $region26: #{generalized_rcnn_forward.4} parent=23 // pred_check_branch
        %146 = sbr.rel (%p144) target = $region28
      $region27: #{generalized_rcnn_forward.4} parent=23 // pred_region
        %s147 = sadd.s32 %s16, %s17
        %p148 = scmp.lt.s32.totalorder %s147, 1
        %s149 = scalar_select %p148, %s147, 1
        %s150 = smul.addr %s149, 36
        %s151 = smul.addr %s150, 4
        %s152 = scalar_lea.vmem %s0, %s151
        %s153 = sadd.s32 %s16, %s17
      $region28: #{generalized_rcnn_forward.4} parent=23 // pred_fallthru
        _
    $region24: #{generalized_rcnn_forward.4} parent=5 // pred_fallthru
      _
    %p154 = scmp.le.s32.totalorder 1, %s9
    %p155 = scmp.lt.s32.totalorder %s9, 3
    %p156 = pnand %p154, %p155
    %p157 = pneg %p156
    // Predicated region
    $region29: #{generalized_rcnn_forward.4} parent=5 // pred_check
      _
    $region30: #{generalized_rcnn_forward.4} parent=5 // pred_check_branch
      %159 = sbr.rel (%p156) target = $region32
    $region31: #{generalized_rcnn_forward.4} parent=5 // pred_region
      %s160 = ssub.s32 %s9, 1
      %s161 = sadd.s32 %s18, %s19
      %p162 = scmp.lt.s32.totalorder %s161, 1
      %s163 = scalar_select %p162, %s161, 1
      %s164 = smul.addr %s163, 36
      %s165 = smul.addr %s164, 4
      %s166 = scalar_lea.vmem %s0, %s165
      %p167 = pneg %p49
      %p168 = pneg %p46
      %p169 = pneg %p70
      %p170 = pneg %p67
      %p171 = pneg %p91
      %p172 = pneg %p88
      %p173 = pneg %p119
      %p174 = pneg %p116
      %s175 = smul.u32 32, %s19
      %p176 = scmp.lt.s32.totalorder %s18, 1
      %s177 = scalar_select %p176, %s18, 1
      %p178 = scmp.lt.s32.totalorder %s175, 31
      %s179 = scalar_select %p178, %s175, 31
      %s180 = smul.addr %s177, 32
      %s181 = sadd.s32 %s179, %s180
      %s182 = smul.addr %s181, 4
      %s183 = scalar_lea.vmem %s3, %s182
      %s184 = sadd.s32 %s18, %s19
      %p185 = scmp.lt.s32.totalorder %s184, 1
      %s186 = scalar_select %p185, %s184, 1
      %s187 = smul.addr %s186, 36
      %s188 = smul.addr %s187, 4
      %s189 = scalar_lea.vmem %s0, %s188
      %s190 = sadd.s32 %s18, %s19
      %s191 = smul.u32 32, %s19
      %p192 = scmp.lt.s32.totalorder %s18, 1
      %s193 = scalar_select %p192, %s18, 1
      %p194 = scmp.lt.s32.totalorder %s191, 31
      %s195 = scalar_select %p194, %s191, 31
      %s196 = smul.addr %s193, 32
      %s197 = sadd.s32 %s195, %s196
      %s198 = smul.addr %s197, 4
      %s199 = scalar_lea.vmem %s3, %s198
      %s200 = smul.u32 32, %s19
      %v202 = vld [vmem:[%s189] sm:$0xf]
      %v203 = vld [vmem:[%s189 + $0x4] sm:$0xf]
      %v204 = vld [vmem:[%s189 + $0x8] sm:$0xf]
      %v205 = vld [vmem:[%s189 + $0xc] sm:$0xf]
      %v206 = vld [vmem:[%s189 + $0x10] sm:$0xf]
      %v207 = vld [vmem:[%s189 + $0x14] sm:$0xf]
      %v208 = vld [vmem:[%s189 + $0x18] sm:$0xf]
      %v209 = vld [vmem:[%s189 + $0x1c] sm:$0xf]
      %v210 = vld [vmem:[%s189 + $0x20] sm:$0xf]
      %v211 = vld [vmem:[%s189 + $0x24] sm:$0xf]
      %v212 = vld [vmem:[%s189 + $0x28] sm:$0xf]
      %v213 = vld [vmem:[%s189 + $0x2c] sm:$0xf]
      %v214 = vld [vmem:[%s189 + $0x30] sm:$0xf]
      %v215 = vld [vmem:[%s189 + $0x34] sm:$0xf]
      %v216 = vld [vmem:[%s189 + $0x38] sm:$0xf]
      %v217 = vld [vmem:[%s189 + $0x3c] sm:$0xf]
      %v218 = vld [vmem:[%s189 + $0x40] sm:$0xf]
      %v219 = vld [vmem:[%s189 + $0x44] sm:$0xf]
      %v220 = vld [vmem:[%s189 + $0x48] sm:$0xf]
      %v221 = vld [vmem:[%s189 + $0x4c] sm:$0xf]
      %v222 = vld [vmem:[%s189 + $0x50] sm:$0xf]
      %v223 = vld [vmem:[%s189 + $0x54] sm:$0xf]
      %v224 = vld [vmem:[%s189 + $0x58] sm:$0xf]
      %v225 = vld [vmem:[%s189 + $0x5c] sm:$0xf]
      %v226 = vld [vmem:[%s189 + $0x60] sm:$0xf]
      %v227 = vld [vmem:[%s189 + $0x64] sm:$0xf]
      %v228 = vld [vmem:[%s189 + $0x68] sm:$0xf]
      %v229 = vld [vmem:[%s189 + $0x6c] sm:$0xf]
      %v230 = vld [vmem:[%s189 + $0x70] sm:$0xf]
      %v231 = vld [vmem:[%s189 + $0x74] sm:$0xf]
      %v232 = vld [vmem:[%s189 + $0x78] sm:$0xf]
      %v233 = vld [vmem:[%s189 + $0x7c] sm:$0xf]
      %v234 = vld [vmem:[%s1] sm:$0xf]
      %v235 = vld [vmem:[%s1 + $0x4] sm:$0xf]
      %v268 = vunpack.c.l.b16 %v202
      %v269 = vunpack.c.l.b16 %v203
      %v270 = vunpack.c.l.b16 %v204
      %v271 = vunpack.c.l.b16 %v205
      %v272 = vunpack.c.l.b16 %v206
      %v273 = vunpack.c.l.b16 %v207
      %v274 = vunpack.c.l.b16 %v208
      %v275 = vunpack.c.l.b16 %v209
      %v276 = vunpack.c.l.b16 %v210
      %v277 = vunpack.c.l.b16 %v211
      %v278 = vunpack.c.l.b16 %v212
      %v279 = vunpack.c.l.b16 %v213
      %v280 = vunpack.c.l.b16 %v214
      %v281 = vunpack.c.l.b16 %v215
      %v282 = vunpack.c.l.b16 %v216
      %v283 = vunpack.c.l.b16 %v217
      %v284 = vunpack.c.l.b16 %v218
      %v285 = vunpack.c.l.b16 %v219
      %v286 = vunpack.c.l.b16 %v220
      %v287 = vunpack.c.l.b16 %v221
      %v288 = vunpack.c.l.b16 %v222
      %v289 = vunpack.c.l.b16 %v223
      %v290 = vunpack.c.l.b16 %v224
      %v291 = vunpack.c.l.b16 %v225
      %v292 = vunpack.c.l.b16 %v226
      %v293 = vunpack.c.l.b16 %v227
      %v294 = vunpack.c.l.b16 %v228
      %v295 = vunpack.c.l.b16 %v229
      %v296 = vunpack.c.l.b16 %v230
      %v297 = vunpack.c.l.b16 %v231
      %v298 = vunpack.c.l.b16 %v232
      %v299 = vunpack.c.l.b16 %v233
      %v300 = vpack.c.b16 %v269, %v268
      %v301 = vpack.c.b16 %v271, %v270
      %v302 = vpack.c.b16 %v273, %v272
      %v303 = vpack.c.b16 %v275, %v274
      %v304 = vpack.c.b16 %v277, %v276
      %v305 = vpack.c.b16 %v279, %v278
      %v306 = vpack.c.b16 %v281, %v280
      %v307 = vpack.c.b16 %v283, %v282
      %v308 = vpack.c.b16 %v285, %v284
      %v309 = vpack.c.b16 %v287, %v286
      %v310 = vpack.c.b16 %v289, %v288
      %v311 = vpack.c.b16 %v291, %v290
      %v312 = vpack.c.b16 %v293, %v292
      %v313 = vpack.c.b16 %v295, %v294
      %v314 = vpack.c.b16 %v297, %v296
      %v315 = vpack.c.b16 %v299, %v298
      %v318 = vunpack.c.l.b16 %v234
      %v319 = vunpack.c.l.b16 %v235
      %v320 = vpack.c.b16 %v319, %v318
      %vm322 = vcmask 130048
      %v324 = vsel %vm322, %v300, 0
      %v327 = vsel %vm322, %v301, 0
      %v330 = vsel %vm322, %v302, 0
      %v333 = vsel %vm322, %v303, 0
      %v336 = vsel %vm322, %v304, 0
      %v339 = vsel %vm322, %v305, 0
      %v342 = vsel %vm322, %v306, 0
      %v345 = vsel %vm322, %v307, 0
      %v348 = vsel %vm322, %v308, 0
      %v351 = vsel %vm322, %v309, 0
      %v354 = vsel %vm322, %v310, 0
      %v357 = vsel %vm322, %v311, 0
      %v360 = vsel %vm322, %v312, 0
      %v363 = vsel %vm322, %v313, 0
      %v366 = vsel %vm322, %v314, 0
      %v369 = vsel %vm322, %v315, 0
      %371 = vmatprep.subr.bf16.mxu0 0
      %372 = vmatpush1.bf16.msra.mxu0 %v320
      %373 = vmatprep.subr.bf16.mxu0 0
      %374 = vmatpush1.bf16.msra.mxu0 0
      %375 = vmatprep.subr.bf16.mxu0 0
      %376 = vmatpush1.bf16.msra.mxu0 0
      %377 = vmatprep.subr.bf16.mxu0 0
      %378 = vmatpush1.bf16.msra.mxu0 0
      %379 = vmatprep.subr.bf16.mxu0 0
      %380 = vmatpush1.bf16.msra.mxu0 0
      %381 = vmatprep.subr.bf16.mxu0 0
      %382 = vmatpush1.bf16.msra.mxu0 0
      %383 = vmatprep.subr.bf16.mxu0 0
      %384 = vmatpush1.bf16.msra.mxu0 0
      %385 = vmatprep.subr.bf16.mxu0 0
      %386 = vmatpush1.bf16.msra.mxu0 0
      %387 = vmatprep.subr.bf16.mxu0 0
      %388 = vmatpush1.bf16.msra.mxu0 0
      %389 = vmatprep.subr.bf16.mxu0 0
      %390 = vmatpush1.bf16.msra.mxu0 0
      %391 = vmatprep.subr.bf16.mxu0 0
      %392 = vmatpush1.bf16.msra.mxu0 0
      %393 = vmatprep.subr.bf16.mxu0 0
      %394 = vmatpush1.bf16.msra.mxu0 0
      %395 = vmatprep.subr.bf16.mxu0 0
      %396 = vmatpush1.bf16.msra.mxu0 0
      %397 = vmatprep.subr.bf16.mxu0 0
      %398 = vmatpush1.bf16.msra.mxu0 0
      %399 = vmatprep.subr.bf16.mxu0 0
      %400 = vmatpush1.bf16.msra.mxu0 0
      %401 = vmatprep.subr.bf16.mxu0 0
      %402 = vmatpush1.bf16.msra.mxu0 0
      %403 = vmatprep.mubr.bf16.mxu0 0
      %404 = vmatmul.mubr.bf16.gmra.mrb[0].mxu0 %v324
      %v405 = vpop.f32.mrb[0].mxu0
      %v406 = vadd.f32 0.0, %v405
      %v407 = vpop.f32.mrb[0].mxu0
      %v408 = vpop.f32.mrb[0].mxu0
      %v409 = vadd.f32 0.0, %v408
      %v410 = vpop.f32.mrb[0].mxu0
      %411 = vmatprep.mubr.bf16.mxu0 0
      %412 = vmatmul.mubr.bf16.gmra.mrb[0].mxu0 %v327
      %v413 = vpop.f32.mrb[0].mxu0
      %v414 = vadd.f32 0.0, %v413
      %v415 = vpop.f32.mrb[0].mxu0
      %v416 = vpop.f32.mrb[0].mxu0
      %v417 = vadd.f32 0.0, %v416
      %v418 = vpop.f32.mrb[0].mxu0
      %419 = vmatprep.mubr.bf16.mxu0 0
      %420 = vmatmul.mubr.bf16.gmra.mrb[0].mxu0 %v330
      %v421 = vpop.f32.mrb[0].mxu0
      %v422 = vadd.f32 0.0, %v421
      %v423 = vpop.f32.mrb[0].mxu0
      %v424 = vpop.f32.mrb[0].mxu0
      %v425 = vadd.f32 0.0, %v424
      %v426 = vpop.f32.mrb[0].mxu0
      %427 = vmatprep.mubr.bf16.mxu0 0
      %428 = vmatmul.mubr.bf16.gmra.mrb[0].mxu0 %v333
      %v429 = vpop.f32.mrb[0].mxu0
      %v430 = vadd.f32 0.0, %v429
      %v431 = vpop.f32.mrb[0].mxu0
      %v432 = vpop.f32.mrb[0].mxu0
      %v433 = vadd.f32 0.0, %v432
      %v434 = vpop.f32.mrb[0].mxu0
      %435 = vmatprep.mubr.bf16.mxu0 0
      %436 = vmatmul.mubr.bf16.gmra.mrb[0].mxu0 %v336
      %v437 = vpop.f32.mrb[0].mxu0
      %v438 = vadd.f32 0.0, %v437
      %v439 = vpop.f32.mrb[0].mxu0
      %v440 = vpop.f32.mrb[0].mxu0
      %v441 = vadd.f32 0.0, %v440
      %v442 = vpop.f32.mrb[0].mxu0
      %443 = vmatprep.mubr.bf16.mxu0 0
      %444 = vmatmul.mubr.bf16.gmra.mrb[0].mxu0 %v339
      %v445 = vpop.f32.mrb[0].mxu0
      %v446 = vadd.f32 0.0, %v445
      %v447 = vpop.f32.mrb[0].mxu0
      %v448 = vpop.f32.mrb[0].mxu0
      %v449 = vadd.f32 0.0, %v448
      %v450 = vpop.f32.mrb[0].mxu0
      %451 = vmatprep.mubr.bf16.mxu0 0
      %452 = vmatmul.mubr.bf16.gmra.mrb[0].mxu0 %v342
      %v453 = vpop.f32.mrb[0].mxu0
      %v454 = vadd.f32 0.0, %v453
      %v455 = vpop.f32.mrb[0].mxu0
      %v456 = vpop.f32.mrb[0].mxu0
      %v457 = vadd.f32 0.0, %v456
      %v458 = vpop.f32.mrb[0].mxu0
      %459 = vmatprep.mubr.bf16.mxu0 0
      %460 = vmatmul.mubr.bf16.gmra.mrb[0].mxu0 %v345
      %v461 = vpop.f32.mrb[0].mxu0
      %v462 = vadd.f32 0.0, %v461
      %v463 = vpop.f32.mrb[0].mxu0
      %v464 = vpop.f32.mrb[0].mxu0
      %v465 = vadd.f32 0.0, %v464
      %v466 = vpop.f32.mrb[0].mxu0
      %467 = vmatprep.mubr.bf16.mxu0 0
      %468 = vmatmul.mubr.bf16.gmra.mrb[0].mxu0 %v348
      %v469 = vpop.f32.mrb[0].mxu0
      %v470 = vadd.f32 0.0, %v469
      %v471 = vpop.f32.mrb[0].mxu0
      %v472 = vpop.f32.mrb[0].mxu0
      %v473 = vadd.f32 0.0, %v472
      %v474 = vpop.f32.mrb[0].mxu0
      %475 = vmatprep.mubr.bf16.mxu0 0
      %476 = vmatmul.mubr.bf16.gmra.mrb[0].mxu0 %v351
      %v477 = vpop.f32.mrb[0].mxu0
      %v478 = vadd.f32 0.0, %v477
      %v479 = vpop.f32.mrb[0].mxu0
      %v480 = vpop.f32.mrb[0].mxu0
      %v481 = vadd.f32 0.0, %v480
      %v482 = vpop.f32.mrb[0].mxu0
      %483 = vmatprep.mubr.bf16.mxu0 0
      %484 = vmatmul.mubr.bf16.gmra.mrb[0].mxu0 %v354
      %v485 = vpop.f32.mrb[0].mxu0
      %v486 = vadd.f32 0.0, %v485
      %v487 = vpop.f32.mrb[0].mxu0
      %v488 = vpop.f32.mrb[0].mxu0
      %v489 = vadd.f32 0.0, %v488
      %v490 = vpop.f32.mrb[0].mxu0
      %491 = vmatprep.mubr.bf16.mxu0 0
      %492 = vmatmul.mubr.bf16.gmra.mrb[0].mxu0 %v357
      %v493 = vpop.f32.mrb[0].mxu0
      %v494 = vadd.f32 0.0, %v493
      %v495 = vpop.f32.mrb[0].mxu0
      %v496 = vpop.f32.mrb[0].mxu0
      %v497 = vadd.f32 0.0, %v496
      %v498 = vpop.f32.mrb[0].mxu0
      %499 = vmatprep.mubr.bf16.mxu0 0
      %500 = vmatmul.mubr.bf16.gmra.mrb[0].mxu0 %v360
      %v501 = vpop.f32.mrb[0].mxu0
      %v502 = vadd.f32 0.0, %v501
      %v503 = vpop.f32.mrb[0].mxu0
      %v504 = vpop.f32.mrb[0].mxu0
      %v505 = vadd.f32 0.0, %v504
      %v506 = vpop.f32.mrb[0].mxu0
      %507 = vmatprep.mubr.bf16.mxu0 0
      %508 = vmatmul.mubr.bf16.gmra.mrb[0].mxu0 %v363
      %v509 = vpop.f32.mrb[0].mxu0
      %v510 = vadd.f32 0.0, %v509
      %v511 = vpop.f32.mrb[0].mxu0
      %v512 = vpop.f32.mrb[0].mxu0
      %v513 = vadd.f32 0.0, %v512
      %v514 = vpop.f32.mrb[0].mxu0
      %515 = vmatprep.mubr.bf16.mxu0 0
      %516 = vmatmul.mubr.bf16.gmra.mrb[0].mxu0 %v366
      %v517 = vpop.f32.mrb[0].mxu0
      %v518 = vadd.f32 0.0, %v517
      %v519 = vpop.f32.mrb[0].mxu0
      %v520 = vpop.f32.mrb[0].mxu0
      %v521 = vadd.f32 0.0, %v520
      %v522 = vpop.f32.mrb[0].mxu0
      %523 = vmatprep.mubr.bf16.mxu0 0
      %524 = vmatmul.mubr.bf16.gmra.mrb[0].mxu0 %v369
      %v525 = vpop.f32.mrb[0].mxu0
      %v526 = vadd.f32 0.0, %v525
      %v527 = vpop.f32.mrb[0].mxu0
      %v528 = vpop.f32.mrb[0].mxu0
      %v529 = vadd.f32 0.0, %v528
      %v530 = vpop.f32.mrb[0].mxu0
      %531 = vdwg.mxu0
      %532 = vst [vmem:[#allocation2] sm:$0xff] %v406
      %533 = vst [vmem:[#allocation2 + $0x8] sm:$0xff] %v409
      %534 = vst [vmem:[#allocation2 + $0x10] sm:$0xff] %v414
      %535 = vst [vmem:[#allocation2 + $0x18] sm:$0xff] %v417
      %536 = vst [vmem:[#allocation2 + $0x20] sm:$0xff] %v422
      %537 = vst [vmem:[#allocation2 + $0x28] sm:$0xff] %v425
      %538 = vst [vmem:[#allocation2 + $0x30] sm:$0xff] %v430
      %539 = vst [vmem:[#allocation2 + $0x38] sm:$0xff] %v433
      %540 = vst [vmem:[#allocation2 + $0x40] sm:$0xff] %v438
      %541 = vst [vmem:[#allocation2 + $0x48] sm:$0xff] %v441
      %542 = vst [vmem:[#allocation2 + $0x50] sm:$0xff] %v446
      %543 = vst [vmem:[#allocation2 + $0x58] sm:$0xff] %v449
      %544 = vst [vmem:[#allocation2 + $0x60] sm:$0xff] %v454
      %545 = vst [vmem:[#allocation2 + $0x68] sm:$0xff] %v457
      %546 = vst [vmem:[#allocation2 + $0x70] sm:$0xff] %v462
      %547 = vst [vmem:[#allocation2 + $0x78] sm:$0xff] %v465
      %548 = vst [vmem:[#allocation2 + $0x80] sm:$0xff] %v470
      %549 = vst [vmem:[#allocation2 + $0x88] sm:$0xff] %v473
      %550 = vst [vmem:[#allocation2 + $0x90] sm:$0xff] %v478
      %551 = vst [vmem:[#allocation2 + $0x98] sm:$0xff] %v481
      %552 = vst [vmem:[#allocation2 + $0xa0] sm:$0xff] %v486
      %553 = vst [vmem:[#allocation2 + $0xa8] sm:$0xff] %v489
      %554 = vst [vmem:[#allocation2 + $0xb0] sm:$0xff] %v494
      %555 = vst [vmem:[#allocation2 + $0xb8] sm:$0xff] %v497
      %556 = vst [vmem:[#allocation2 + $0xc0] sm:$0xff] %v502
      %557 = vst [vmem:[#allocation2 + $0xc8] sm:$0xff] %v505
      %558 = vst [vmem:[#allocation2 + $0xd0] sm:$0xff] %v510
      %559 = vst [vmem:[#allocation2 + $0xd8] sm:$0xff] %v513
      %560 = vst [vmem:[#allocation2 + $0xe0] sm:$0xff] %v518
      %561 = vst [vmem:[#allocation2 + $0xe8] sm:$0xff] %v521
      %562 = vst [vmem:[#allocation2 + $0xf0] sm:$0xff] %v526
      %563 = vst [vmem:[#allocation2 + $0xf8] sm:$0xff] %v529
      %v564 = vld [vmem:[%s189 + $0x8] sm:$0xf]
      %v565 = vld [vmem:[%s189 + $0xc] sm:$0xf]
      %v566 = vld [vmem:[%s189 + $0x10] sm:$0xf]
      %v567 = vld [vmem:[%s189 + $0x14] sm:$0xf]
      %v568 = vld [vmem:[%s189 + $0x18] sm:$0xf]
      %v569 = vld [vmem:[%s189 + $0x1c] sm:$0xf]
      %v570 = vld [vmem:[%s189 + $0x20] sm:$0xf]
      %v571 = vld [vmem:[%s189 + $0x24] sm:$0xf]
      %v572 = vld [vmem:[%s189 + $0x28] sm:$0xf]
      %v573 = vld [vmem:[%s189 + $0x2c] sm:$0xf]
      %v574 = vld [vmem:[%s189 + $0x30] sm:$0xf]
      %v575 = vld [vmem:[%s189 + $0x34] sm:$0xf]
      %v576 = vld [vmem:[%s189 + $0x38] sm:$0xf]
      %v577 = vld [vmem:[%s189 + $0x3c] sm:$0xf]
      %v578 = vld [vmem:[%s189 + $0x40] sm:$0xf]
      %v579 = vld [vmem:[%s189 + $0x44] sm:$0xf]
      %v580 = vld [vmem:[%s189 + $0x48] sm:$0xf]
      %v581 = vld [vmem:[%s189 + $0x4c] sm:$0xf]
      %v582 = vld [vmem:[%s189 + $0x50] sm:$0xf]
      %v583 = vld [vmem:[%s189 + $0x54] sm:$0xf]
      %v584 = vld [vmem:[%s189 + $0x58] sm:$0xf]
      %v585 = vld [vmem:[%s189 + $0x5c] sm:$0xf]
      %v586 = vld [vmem:[%s189 + $0x60] sm:$0xf]
      %v587 = vld [vmem:[%s189 + $0x64] sm:$0xf]
      %v588 = vld [vmem:[%s189 + $0x68] sm:$0xf]
      %v589 = vld [vmem:[%s189 + $0x6c] sm:$0xf]
      %v590 = vld [vmem:[%s189 + $0x70] sm:$0xf]
      %v591 = vld [vmem:[%s189 + $0x74] sm:$0xf]
      %v592 = vld [vmem:[%s189 + $0x78] sm:$0xf]
      %v593 = vld [vmem:[%s189 + $0x7c] sm:$0xf]
      %v594 = vld [vmem:[%s189 + $0x80] sm:$0xf]
      %v595 = vld [vmem:[%s189 + $0x84] sm:$0xf]
      %s596 = scalar_lea.vmem %s1, 8
      %v597 = vld [vmem:[%s596] sm:$0xf]
      %v598 = vld [vmem:[%s596 + $0x4] sm:$0xf]
      %v631 = vunpack.c.l.b16 %v564
      %v632 = vunpack.c.l.b16 %v565
      %v633 = vunpack.c.l.b16 %v566
      %v634 = vunpack.c.l.b16 %v567
      %v635 = vunpack.c.l.b16 %v568
      %v636 = vunpack.c.l.b16 %v569
      %v637 = vunpack.c.l.b16 %v570
      %v638 = vunpack.c.l.b16 %v571
      %v639 = vunpack.c.l.b16 %v572
      %v640 = vunpack.c.l.b16 %v573
      %v641 = vunpack.c.l.b16 %v574
      %v642 = vunpack.c.l.b16 %v575
      %v643 = vunpack.c.l.b16 %v576
      %v644 = vunpack.c.l.b16 %v577
      %v645 = vunpack.c.l.b16 %v578
      %v646 = vunpack.c.l.b16 %v579
      %v647 = vunpack.c.l.b16 %v580
      %v648 = vunpack.c.l.b16 %v581
      %v649 = vunpack.c.l.b16 %v582
      %v650 = vunpack.c.l.b16 %v583
      %v651 = vunpack.c.l.b16 %v584
      %v652 = vunpack.c.l.b16 %v585
      %v653 = vunpack.c.l.b16 %v586
      %v654 = vunpack.c.l.b16 %v587
      %v655 = vunpack.c.l.b16 %v588
      %v656 = vunpack.c.l.b16 %v589
      %v657 = vunpack.c.l.b16 %v590
      %v658 = vunpack.c.l.b16 %v591
      %v659 = vunpack.c.l.b16 %v592
      %v660 = vunpack.c.l.b16 %v593
      %v661 = vunpack.c.l.b16 %v594
      %v662 = vunpack.c.l.b16 %v595
      %v663 = vpack.c.b16 %v632, %v631
      %v664 = vpack.c.b16 %v634, %v633
      %v665 = vpack.c.b16 %v636, %v635
      %v666 = vpack.c.b16 %v638, %v637
      %v667 = vpack.c.b16 %v640, %v639
      %v668 = vpack.c.b16 %v642, %v641
      %v669 = vpack.c.b16 %v644, %v643
      %v670 = vpack.c.b16 %v646, %v645
      %v671 = vpack.c.b16 %v648, %v647
      %v672 = vpack.c.b16 %v650, %v649
      %v673 = vpack.c.b16 %v652, %v651
      %v674 = vpack.c.b16 %v654, %v653
      %v675 = vpack.c.b16 %v656, %v655
      %v676 = vpack.c.b16 %v658, %v657
      %v677 = vpack.c.b16 %v660, %v659
      %v678 = vpack.c.b16 %v662, %v661
      %v681 = vunpack.c.l.b16 %v597
      %v682 = vunpack.c.l.b16 %v598
      %v683 = vpack.c.b16 %v682, %v681
      %v686 = vsel %vm322, %v663, 0
      %v689 = vsel %vm322, %v664, 0
      %v692 = vsel %vm322, %v665, 0
      %v695 = vsel %vm322, %v666, 0
      %v698 = vsel %vm322, %v667, 0
      %v701 = vsel %vm322, %v668, 0
      %v704 = vsel %vm322, %v669, 0
      %v707 = vsel %vm322, %v670, 0
      %v710 = vsel %vm322, %v671, 0
      %v713 = vsel %vm322, %v672, 0
      %v716 = vsel %vm322, %v673, 0
      %v719 = vsel %vm322, %v674, 0
      %v722 = vsel %vm322, %v675, 0
      %v725 = vsel %vm322, %v676, 0
      %v728 = vsel %vm322, %v677, 0
      %v731 = vsel %vm322, %v678, 0
      %733 = vmatprep.subr.bf16.mxu0 0
      %734 = vmatpush1.bf16.msra.mxu0 %v683
      %735 = vmatprep.subr.bf16.mxu0 0
      %736 = vmatpush1.bf16.msra.mxu0 0
      %737 = vmatprep.subr.bf16.mxu0 0
      %738 = vmatpush1.bf16.msra.mxu0 0
      %739 = vmatprep.subr.bf16.mxu0 0
      %740 = vmatpush1.bf16.msra.mxu0 0
      %741 = vmatprep.subr.bf16.mxu0 0
      %742 = vmatpush1.bf16.msra.mxu0 0
      %743 = vmatprep.subr.bf16.mxu0 0
      %744 = vmatpush1.bf16.msra.mxu0 0
      %745 = vmatprep.subr.bf16.mxu0 0
      %746 = vmatpush1.bf16.msra.mxu0 0
      %747 = vmatprep.subr.bf16.mxu0 0
      %748 = vmatpush1.bf16.msra.mxu0 0
      %749 = vmatprep.subr.bf16.mxu0 0
      %750 = vmatpush1.bf16.msra.mxu0 0
      %751 = vmatprep.subr.bf16.mxu0 0
      %752 = vmatpush1.bf16.msra.mxu0 0
      %753 = vmatprep.subr.bf16.mxu0 0
      %754 = vmatpush1.bf16.msra.mxu0 0
      %755 = vmatprep.subr.bf16.mxu0 0
      %756 = vmatpush1.bf16.msra.mxu0 0
      %757 = vmatprep.subr.bf16.mxu0 0
      %758 = vmatpush1.bf16.msra.mxu0 0
      %759 = vmatprep.subr.bf16.mxu0 0
      %760 = vmatpush1.bf16.msra.mxu0 0
      %761 = vmatprep.subr.bf16.mxu0 0
      %762 = vmatpush1.bf16.msra.mxu0 0
      %763 = vmatprep.subr.bf16.mxu0 0
      %764 = vmatpush1.bf16.msra.mxu0 0
      %765 = vmatprep.mubr.bf16.mxu0 0
      %766 = vmatmul.mubr.bf16.gmra.mrb[0].mxu0 %v686
      %v767 = vpop.f32.mrb[0].mxu0
      %v768 = vadd.f32 0.0, %v767
      %v769 = vpop.f32.mrb[0].mxu0
      %v770 = vpop.f32.mrb[0].mxu0
      %v771 = vadd.f32 0.0, %v770
      %v772 = vpop.f32.mrb[0].mxu0
      %773 = vmatprep.mubr.bf16.mxu0 0
      %774 = vmatmul.mubr.bf16.gmra.mrb[0].mxu0 %v689
      %v775 = vpop.f32.mrb[0].mxu0
      %v776 = vadd.f32 0.0, %v775
      %v777 = vpop.f32.mrb[0].mxu0
      %v778 = vpop.f32.mrb[0].mxu0
      %v779 = vadd.f32 0.0, %v778
      %v780 = vpop.f32.mrb[0].mxu0
      %781 = vmatprep.mubr.bf16.mxu0 0
      %782 = vmatmul.mubr.bf16.gmra.mrb[0].mxu0 %v692
      %v783 = vpop.f32.mrb[0].mxu0
      %v784 = vadd.f32 0.0, %v783
      %v785 = vpop.f32.mrb[0].mxu0
      %v786 = vpop.f32.mrb[0].mxu0
      %v787 = vadd.f32 0.0, %v786
      %v788 = vpop.f32.mrb[0].mxu0
      %789 = vmatprep.mubr.bf16.mxu0 0
      %790 = vmatmul.mubr.bf16.gmra.mrb[0].mxu0 %v695
      %v791 = vpop.f32.mrb[0].mxu0
      %v792 = vadd.f32 0.0, %v791
      %v793 = vpop.f32.mrb[0].mxu0
      %v794 = vpop.f32.mrb[0].mxu0
      %v795 = vadd.f32 0.0, %v794
      %v796 = vpop.f32.mrb[0].mxu0
      %797 = vmatprep.mubr.bf16.mxu0 0
      %798 = vmatmul.mubr.bf16.gmra.mrb[0].mxu0 %v698
      %v799 = vpop.f32.mrb[0].mxu0
      %v800 = vadd.f32 0.0, %v799
      %v801 = vpop.f32.mrb[0].mxu0
      %v802 = vpop.f32.mrb[0].mxu0
      %v803 = vadd.f32 0.0, %v802
      %v804 = vpop.f32.mrb[0].mxu0
      %805 = vmatprep.mubr.bf16.mxu0 0
      %806 = vmatmul.mubr.bf16.gmra.mrb[0].mxu0 %v701
      %v807 = vpop.f32.mrb[0].mxu0
      %v808 = vadd.f32 0.0, %v807
      %v809 = vpop.f32.mrb[0].mxu0
      %v810 = vpop.f32.mrb[0].mxu0
      %v811 = vadd.f32 0.0, %v810
      %v812 = vpop.f32.mrb[0].mxu0
      %813 = vmatprep.mubr.bf16.mxu0 0
      %814 = vmatmul.mubr.bf16.gmra.mrb[0].mxu0 %v704
      %v815 = vpop.f32.mrb[0].mxu0
      %v816 = vadd.f32 0.0, %v815
      %v817 = vpop.f32.mrb[0].mxu0
      %v818 = vpop.f32.mrb[0].mxu0
      %v819 = vadd.f32 0.0, %v818
      %v820 = vpop.f32.mrb[0].mxu0
      %821 = vmatprep.mubr.bf16.mxu0 0
      %822 = vmatmul.mubr.bf16.gmra.mrb[0].mxu0 %v707
      %v823 = vpop.f32.mrb[0].mxu0
      %v824 = vadd.f32 0.0, %v823
      %v825 = vpop.f32.mrb[0].mxu0
      %v826 = vpop.f32.mrb[0].mxu0
      %v827 = vadd.f32 0.0, %v826
      %v828 = vpop.f32.mrb[0].mxu0
      %829 = vmatprep.mubr.bf16.mxu0 0
      %830 = vmatmul.mubr.bf16.gmra.mrb[0].mxu0 %v710
      %v831 = vpop.f32.mrb[0].mxu0
      %v832 = vadd.f32 0.0, %v831
      %v833 = vpop.f32.mrb[0].mxu0
      %v834 = vpop.f32.mrb[0].mxu0
      %v835 = vadd.f32 0.0, %v834
      %v836 = vpop.f32.mrb[0].mxu0
      %837 = vmatprep.mubr.bf16.mxu0 0
      %838 = vmatmul.mubr.bf16.gmra.mrb[0].mxu0 %v713
      %v839 = vpop.f32.mrb[0].mxu0
      %v840 = vadd.f32 0.0, %v839
      %v841 = vpop.f32.mrb[0].mxu0
      %v842 = vpop.f32.mrb[0].mxu0
      %v843 = vadd.f32 0.0, %v842
      %v844 = vpop.f32.mrb[0].mxu0
      %845 = vmatprep.mubr.bf16.mxu0 0
      %846 = vmatmul.mubr.bf16.gmra.mrb[0].mxu0 %v716
      %v847 = vpop.f32.mrb[0].mxu0
      %v848 = vadd.f32 0.0, %v847
      %v849 = vpop.f32.mrb[0].mxu0
      %v850 = vpop.f32.mrb[0].mxu0
      %v851 = vadd.f32 0.0, %v850
      %v852 = vpop.f32.mrb[0].mxu0
      %853 = vmatprep.mubr.bf16.mxu0 0
      %854 = vmatmul.mubr.bf16.gmra.mrb[0].mxu0 %v719
      %v855 = vpop.f32.mrb[0].mxu0
      %v856 = vadd.f32 0.0, %v855
      %v857 = vpop.f32.mrb[0].mxu0
      %v858 = vpop.f32.mrb[0].mxu0
      %v859 = vadd.f32 0.0, %v858
      %v860 = vpop.f32.mrb[0].mxu0
      %861 = vmatprep.mubr.bf16.mxu0 0
      %862 = vmatmul.mubr.bf16.gmra.mrb[0].mxu0 %v722
      %v863 = vpop.f32.mrb[0].mxu0
      %v864 = vadd.f32 0.0, %v863
      %v865 = vpop.f32.mrb[0].mxu0
      %v866 = vpop.f32.mrb[0].mxu0
      %v867 = vadd.f32 0.0, %v866
      %v868 = vpop.f32.mrb[0].mxu0
      %869 = vmatprep.mubr.bf16.mxu0 0
      %870 = vmatmul.mubr.bf16.gmra.mrb[0].mxu0 %v725
      %v871 = vpop.f32.mrb[0].mxu0
      %v872 = vadd.f32 0.0, %v871
      %v873 = vpop.f32.mrb[0].mxu0
      %v874 = vpop.f32.mrb[0].mxu0
      %v875 = vadd.f32 0.0, %v874
      %v876 = vpop.f32.mrb[0].mxu0
      %877 = vmatprep.mubr.bf16.mxu0 0
      %878 = vmatmul.mubr.bf16.gmra.mrb[0].mxu0 %v728
      %v879 = vpop.f32.mrb[0].mxu0
      %v880 = vadd.f32 0.0, %v879
      %v881 = vpop.f32.mrb[0].mxu0
      %v882 = vpop.f32.mrb[0].mxu0
      %v883 = vadd.f32 0.0, %v882
      %v884 = vpop.f32.mrb[0].mxu0
      %885 = vmatprep.mubr.bf16.mxu0 0
      %886 = vmatmul.mubr.bf16.gmra.mrb[0].mxu0 %v731
      %v887 = vpop.f32.mrb[0].mxu0
      %v888 = vadd.f32 0.0, %v887
      %v889 = vpop.f32.mrb[0].mxu0
      %v890 = vpop.f32.mrb[0].mxu0
      %v891 = vadd.f32 0.0, %v890
      %v892 = vpop.f32.mrb[0].mxu0
      %893 = vdwg.mxu0
      %v894 = vld [vmem:[#allocation2] sm:$0xff]
      %v895 = vld [vmem:[#allocation2 + $0x8] sm:$0xff]
      %v896 = vld [vmem:[#allocation2 + $0x10] sm:$0xff]
      %v897 = vld [vmem:[#allocation2 + $0x18] sm:$0xff]
      %v898 = vld [vmem:[#allocation2 + $0x20] sm:$0xff]
      %v899 = vld [vmem:[#allocation2 + $0x28] sm:$0xff]
      %v900 = vld [vmem:[#allocation2 + $0x30] sm:$0xff]
      %v901 = vld [vmem:[#allocation2 + $0x38] sm:$0xff]
      %v902 = vld [vmem:[#allocation2 + $0x40] sm:$0xff]
      %v903 = vld [vmem:[#allocation2 + $0x48] sm:$0xff]
      %v904 = vld [vmem:[#allocation2 + $0x50] sm:$0xff]
      %v905 = vld [vmem:[#allocation2 + $0x58] sm:$0xff]
      %v906 = vld [vmem:[#allocation2 + $0x60] sm:$0xff]
      %v907 = vld [vmem:[#allocation2 + $0x68] sm:$0xff]
      %v908 = vld [vmem:[#allocation2 + $0x70] sm:$0xff]
      %v909 = vld [vmem:[#allocation2 + $0x78] sm:$0xff]
      %v910 = vld [vmem:[#allocation2 + $0x80] sm:$0xff]
      %v911 = vld [vmem:[#allocation2 + $0x88] sm:$0xff]
      %v912 = vld [vmem:[#allocation2 + $0x90] sm:$0xff]
      %v913 = vld [vmem:[#allocation2 + $0x98] sm:$0xff]
      %v914 = vld [vmem:[#allocation2 + $0xa0] sm:$0xff]
      %v915 = vld [vmem:[#allocation2 + $0xa8] sm:$0xff]
      %v916 = vld [vmem:[#allocation2 + $0xb0] sm:$0xff]
      %v917 = vld [vmem:[#allocation2 + $0xb8] sm:$0xff]
      %v918 = vld [vmem:[#allocation2 + $0xc0] sm:$0xff]
      %v919 = vld [vmem:[#allocation2 + $0xc8] sm:$0xff]
      %v920 = vld [vmem:[#allocation2 + $0xd0] sm:$0xff]
      %v921 = vld [vmem:[#allocation2 + $0xd8] sm:$0xff]
      %v922 = vld [vmem:[#allocation2 + $0xe0] sm:$0xff]
      %v923 = vld [vmem:[#allocation2 + $0xe8] sm:$0xff]
      %v924 = vld [vmem:[#allocation2 + $0xf0] sm:$0xff]
      %v925 = vld [vmem:[#allocation2 + $0xf8] sm:$0xff]
      %v926 = vadd.f32 %v894, %v768
      %v927 = vadd.f32 %v895, %v771
      %v928 = vadd.f32 %v896, %v776
      %v929 = vadd.f32 %v897, %v779
      %v930 = vadd.f32 %v898, %v784
      %v931 = vadd.f32 %v899, %v787
      %v932 = vadd.f32 %v900, %v792
      %v933 = vadd.f32 %v901, %v795
      %v934 = vadd.f32 %v902, %v800
      %v935 = vadd.f32 %v903, %v803
      %v936 = vadd.f32 %v904, %v808
      %v937 = vadd.f32 %v905, %v811
      %v938 = vadd.f32 %v906, %v816
      %v939 = vadd.f32 %v907, %v819
      %v940 = vadd.f32 %v908, %v824
      %v941 = vadd.f32 %v909, %v827
      %v942 = vadd.f32 %v910, %v832
      %v943 = vadd.f32 %v911, %v835
      %v944 = vadd.f32 %v912, %v840
      %v945 = vadd.f32 %v913, %v843
      %v946 = vadd.f32 %v914, %v848
      %v947 = vadd.f32 %v915, %v851
      %v948 = vadd.f32 %v916, %v856
      %v949 = vadd.f32 %v917, %v859
      %v950 = vadd.f32 %v918, %v864
      %v951 = vadd.f32 %v919, %v867
      %v952 = vadd.f32 %v920, %v872
      %v953 = vadd.f32 %v921, %v875
      %v954 = vadd.f32 %v922, %v880
      %v955 = vadd.f32 %v923, %v883
      %v956 = vadd.f32 %v924, %v888
      %v957 = vadd.f32 %v925, %v891
      %958 = vst [vmem:[#allocation2] sm:$0xff] %v926
      %959 = vst [vmem:[#allocation2 + $0x8] sm:$0xff] %v927
      %960 = vst [vmem:[#allocation2 + $0x10] sm:$0xff] %v928
      %961 = vst [vmem:[#allocation2 + $0x18] sm:$0xff] %v929
      %962 = vst [vmem:[#allocation2 + $0x20] sm:$0xff] %v930
      %963 = vst [vmem:[#allocation2 + $0x28] sm:$0xff] %v931
      %964 = vst [vmem:[#allocation2 + $0x30] sm:$0xff] %v932
      %965 = vst [vmem:[#allocation2 + $0x38] sm:$0xff] %v933
      %966 = vst [vmem:[#allocation2 + $0x40] sm:$0xff] %v934
      %967 = vst [vmem:[#allocation2 + $0x48] sm:$0xff] %v935
      %968 = vst [vmem:[#allocation2 + $0x50] sm:$0xff] %v936
      %969 = vst [vmem:[#allocation2 + $0x58] sm:$0xff] %v937
      %970 = vst [vmem:[#allocation2 + $0x60] sm:$0xff] %v938
      %971 = vst [vmem:[#allocation2 + $0x68] sm:$0xff] %v939
      %972 = vst [vmem:[#allocation2 + $0x70] sm:$0xff] %v940
      %973 = vst [vmem:[#allocation2 + $0x78] sm:$0xff] %v941
      %974 = vst [vmem:[#allocation2 + $0x80] sm:$0xff] %v942
      %975 = vst [vmem:[#allocation2 + $0x88] sm:$0xff] %v943
      %976 = vst [vmem:[#allocation2 + $0x90] sm:$0xff] %v944
      %977 = vst [vmem:[#allocation2 + $0x98] sm:$0xff] %v945
      %978 = vst [vmem:[#allocation2 + $0xa0] sm:$0xff] %v946
      %979 = vst [vmem:[#allocation2 + $0xa8] sm:$0xff] %v947
      %980 = vst [vmem:[#allocation2 + $0xb0] sm:$0xff] %v948
      %981 = vst [vmem:[#allocation2 + $0xb8] sm:$0xff] %v949
      %982 = vst [vmem:[#allocation2 + $0xc0] sm:$0xff] %v950
      %983 = vst [vmem:[#allocation2 + $0xc8] sm:$0xff] %v951
      %984 = vst [vmem:[#allocation2 + $0xd0] sm:$0xff] %v952
      %985 = vst [vmem:[#allocation2 + $0xd8] sm:$0xff] %v953
      %986 = vst [vmem:[#allocation2 + $0xe0] sm:$0xff] %v954
      %987 = vst [vmem:[#allocation2 + $0xe8] sm:$0xff] %v955
      %988 = vst [vmem:[#allocation2 + $0xf0] sm:$0xff] %v956
      %989 = vst [vmem:[#allocation2 + $0xf8] sm:$0xff] %v957
      %v990 = vld [vmem:[%s189 + $0x10] sm:$0xf]
      %v991 = vld [vmem:[%s189 + $0x14] sm:$0xf]
      %v992 = vld [vmem:[%s189 + $0x18] sm:$0xf]
      %v993 = vld [vmem:[%s189 + $0x1c] sm:$0xf]
      %v994 = vld [vmem:[%s189 + $0x20] sm:$0xf]
      %v995 = vld [vmem:[%s189 + $0x24] sm:$0xf]
      %v996 = vld [vmem:[%s189 + $0x28] sm:$0xf]
      %v997 = vld [vmem:[%s189 + $0x2c] sm:$0xf]
      %v998 = vld [vmem:[%s189 + $0x30] sm:$0xf]
      %v999 = vld [vmem:[%s189 + $0x34] sm:$0xf]
      %v1000 = vld [vmem:[%s189 + $0x38] sm:$0xf]
      %v1001 = vld [vmem:[%s189 + $0x3c] sm:$0xf]
      %v1002 = vld [vmem:[%s189 + $0x40] sm:$0xf]
      %v1003 = vld [vmem:[%s189 + $0x44] sm:$0xf]
      %v1004 = vld [vmem:[%s189 + $0x48] sm:$0xf]
      %v1005 = vld [vmem:[%s189 + $0x4c] sm:$0xf]
      %v1006 = vld [vmem:[%s189 + $0x50] sm:$0xf]
      %v1007 = vld [vmem:[%s189 + $0x54] sm:$0xf]
      %v1008 = vld [vmem:[%s189 + $0x58] sm:$0xf]
      %v1009 = vld [vmem:[%s189 + $0x5c] sm:$0xf]
      %v1010 = vld [vmem:[%s189 + $0x60] sm:$0xf]
      %v1011 = vld [vmem:[%s189 + $0x64] sm:$0xf]
      %v1012 = vld [vmem:[%s189 + $0x68] sm:$0xf]
      %v1013 = vld [vmem:[%s189 + $0x6c] sm:$0xf]
      %v1014 = vld [vmem:[%s189 + $0x70] sm:$0xf]
      %v1015 = vld [vmem:[%s189 + $0x74] sm:$0xf]
      %v1016 = vld [vmem:[%s189 + $0x78] sm:$0xf]
      %v1017 = vld [vmem:[%s189 + $0x7c] sm:$0xf]
      %v1018 = vld [vmem:[%s189 + $0x80] sm:$0xf]
      %v1019 = vld [vmem:[%s189 + $0x84] sm:$0xf]
      %v1020 = vld [vmem:[%s189 + $0x88] sm:$0xf]
      %v1021 = vld [vmem:[%s189 + $0x8c] sm:$0xf]
      %s1022 = scalar_lea.vmem %s1, 16
      %v1023 = vld [vmem:[%s1022] sm:$0xf]
      %v1024 = vld [vmem:[%s1022 + $0x4] sm:$0xf]
      %v1057 = vunpack.c.l.b16 %v990
      %v1058 = vunpack.c.l.b16 %v991
      %v1059 = vunpack.c.l.b16 %v992
      %v1060 = vunpack.c.l.b16 %v993
      %v1061 = vunpack.c.l.b16 %v994
      %v1062 = vunpack.c.l.b16 %v995
      %v1063 = vunpack.c.l.b16 %v996
      %v1064 = vunpack.c.l.b16 %v997
      %v1065 = vunpack.c.l.b16 %v998
      %v1066 = vunpack.c.l.b16 %v999
      %v1067 = vunpack.c.l.b16 %v1000
      %v1068 = vunpack.c.l.b16 %v1001
      %v1069 = vunpack.c.l.b16 %v1002
      %v1070 = vunpack.c.l.b16 %v1003
      %v1071 = vunpack.c.l.b16 %v1004
      %v1072 = vunpack.c.l.b16 %v1005
      %v1073 = vunpack.c.l.b16 %v1006
      %v1074 = vunpack.c.l.b16 %v1007
      %v1075 = vunpack.c.l.b16 %v1008
      %v1076 = vunpack.c.l.b16 %v1009
      %v1077 = vunpack.c.l.b16 %v1010
      %v1078 = vunpack.c.l.b16 %v1011
      %v1079 = vunpack.c.l.b16 %v1012
      %v1080 = vunpack.c.l.b16 %v1013
      %v1081 = vunpack.c.l.b16 %v1014
      %v1082 = vunpack.c.l.b16 %v1015
      %v1083 = vunpack.c.l.b16 %v1016
      %v1084 = vunpack.c.l.b16 %v1017
      %v1085 = vunpack.c.l.b16 %v1018
      %v1086 = vunpack.c.l.b16 %v1019
      %v1087 = vunpack.c.l.b16 %v1020
      %v1088 = vunpack.c.l.b16 %v1021
      %v1089 = vpack.c.b16 %v1058, %v1057
      %v1090 = vpack.c.b16 %v1060, %v1059
      %v1091 = vpack.c.b16 %v1062, %v1061
      %v1092 = vpack.c.b16 %v1064, %v1063
      %v1093 = vpack.c.b16 %v1066, %v1065
      %v1094 = vpack.c.b16 %v1068, %v1067
      %v1095 = vpack.c.b16 %v1070, %v1069
      %v1096 = vpack.c.b16 %v1072, %v1071
      %v1097 = vpack.c.b16 %v1074, %v1073
      %v1098 = vpack.c.b16 %v1076, %v1075
      %v1099 = vpack.c.b16 %v1078, %v1077
      %v1100 = vpack.c.b16 %v1080, %v1079
      %v1101 = vpack.c.b16 %v1082, %v1081
      %v1102 = vpack.c.b16 %v1084, %v1083
      %v1103 = vpack.c.b16 %v1086, %v1085
      %v1104 = vpack.c.b16 %v1088, %v1087
      %v1107 = vunpack.c.l.b16 %v1023
      %v1108 = vunpack.c.l.b16 %v1024
      %v1109 = vpack.c.b16 %v1108, %v1107
      %v1112 = vsel %vm322, %v1089, 0
      %v1115 = vsel %vm322, %v1090, 0
      %v1118 = vsel %vm322, %v1091, 0
      %v1121 = vsel %vm322, %v1092, 0
      %v1124 = vsel %vm322, %v1093, 0
      %v1127 = vsel %vm322, %v1094, 0
      %v1130 = vsel %vm322, %v1095, 0
      %v1133 = vsel %vm322, %v1096, 0
      %v1136 = vsel %vm322, %v1097, 0
      %v1139 = vsel %vm322, %v1098, 0
      %v1142 = vsel %vm322, %v1099, 0
      %v1145 = vsel %vm322, %v1100, 0
      %v1148 = vsel %vm322, %v1101, 0
      %v1151 = vsel %vm322, %v1102, 0
      %v1154 = vsel %vm322, %v1103, 0
      %v1157 = vsel %vm322, %v1104, 0
      %1159 = vmatprep.subr.bf16.mxu0 0
      %1160 = vmatpush1.bf16.msra.mxu0 %v1109
      %1161 = vmatprep.subr.bf16.mxu0 0
      %1162 = vmatpush1.bf16.msra.mxu0 0
      %1163 = vmatprep.subr.bf16.mxu0 0
      %1164 = vmatpush1.bf16.msra.mxu0 0
      %1165 = vmatprep.subr.bf16.mxu0 0
      %1166 = vmatpush1.bf16.msra.mxu0 0
      %1167 = vmatprep.subr.bf16.mxu0 0
      %1168 = vmatpush1.bf16.msra.mxu0 0
      %1169 = vmatprep.subr.bf16.mxu0 0
      %1170 = vmatpush1.bf16.msra.mxu0 0
      %1171 = vmatprep.subr.bf16.mxu0 0
      %1172 = vmatpush1.bf16.msra.mxu0 0
      %1173 = vmatprep.subr.bf16.mxu0 0
      %1174 = vmatpush1.bf16.msra.mxu0 0
      %1175 = vmatprep.subr.bf16.mxu0 0
      %1176 = vmatpush1.bf16.msra.mxu0 0
      %1177 = vmatprep.subr.bf16.mxu0 0
      %1178 = vmatpush1.bf16.msra.mxu0 0
      %1179 = vmatprep.subr.bf16.mxu0 0
      %1180 = vmatpush1.bf16.msra.mxu0 0
      %1181 = vmatprep.subr.bf16.mxu0 0
      %1182 = vmatpush1.bf16.msra.mxu0 0
      %1183 = vmatprep.subr.bf16.mxu0 0
      %1184 = vmatpush1.bf16.msra.mxu0 0
      %1185 = vmatprep.subr.bf16.mxu0 0
      %1186 = vmatpush1.bf16.msra.mxu0 0
      %1187 = vmatprep.subr.bf16.mxu0 0
      %1188 = vmatpush1.bf16.msra.mxu0 0
      %1189 = vmatprep.subr.bf16.mxu0 0
      %1190 = vmatpush1.bf16.msra.mxu0 0
      %1191 = vmatprep.mubr.bf16.mxu0 0
      %1192 = vmatmul.mubr.bf16.gmra.mrb[0].mxu0 %v1112
      %v1193 = vpop.f32.mrb[0].mxu0
      %v1194 = vadd.f32 0.0, %v1193
      %v1195 = vpop.f32.mrb[0].mxu0
      %v1196 = vpop.f32.mrb[0].mxu0
      %v1197 = vadd.f32 0.0, %v1196
      %v1198 = vpop.f32.mrb[0].mxu0
      %1199 = vmatprep.mubr.bf16.mxu0 0
      %1200 = vmatmul.mubr.bf16.gmra.mrb[0].mxu0 %v1115
      %v1201 = vpop.f32.mrb[0].mxu0
      %v1202 = vadd.f32 0.0, %v1201
      %v1203 = vpop.f32.mrb[0].mxu0
      %v1204 = vpop.f32.mrb[0].mxu0
      %v1205 = vadd.f32 0.0, %v1204
      %v1206 = vpop.f32.mrb[0].mxu0
      %1207 = vmatprep.mubr.bf16.mxu0 0
      %1208 = vmatmul.mubr.bf16.gmra.mrb[0].mxu0 %v1118
      %v1209 = vpop.f32.mrb[0].mxu0
      %v1210 = vadd.f32 0.0, %v1209
      %v1211 = vpop.f32.mrb[0].mxu0
      %v1212 = vpop.f32.mrb[0].mxu0
      %v1213 = vadd.f32 0.0, %v1212
      %v1214 = vpop.f32.mrb[0].mxu0
      %1215 = vmatprep.mubr.bf16.mxu0 0
      %1216 = vmatmul.mubr.bf16.gmra.mrb[0].mxu0 %v1121
      %v1217 = vpop.f32.mrb[0].mxu0
      %v1218 = vadd.f32 0.0, %v1217
      %v1219 = vpop.f32.mrb[0].mxu0
      %v1220 = vpop.f32.mrb[0].mxu0
      %v1221 = vadd.f32 0.0, %v1220
      %v1222 = vpop.f32.mrb[0].mxu0
      %1223 = vmatprep.mubr.bf16.mxu0 0
      %1224 = vmatmul.mubr.bf16.gmra.mrb[0].mxu0 %v1124
      %v1225 = vpop.f32.mrb[0].mxu0
      %v1226 = vadd.f32 0.0, %v1225
      %v1227 = vpop.f32.mrb[0].mxu0
      %v1228 = vpop.f32.mrb[0].mxu0
      %v1229 = vadd.f32 0.0, %v1228
      %v1230 = vpop.f32.mrb[0].mxu0
      %1231 = vmatprep.mubr.bf16.mxu0 0
      %1232 = vmatmul.mubr.bf16.gmra.mrb[0].mxu0 %v1127
      %v1233 = vpop.f32.mrb[0].mxu0
      %v1234 = vadd.f32 0.0, %v1233
      %v1235 = vpop.f32.mrb[0].mxu0
      %v1236 = vpop.f32.mrb[0].mxu0
      %v1237 = vadd.f32 0.0, %v1236
      %v1238 = vpop.f32.mrb[0].mxu0
      %1239 = vmatprep.mubr.bf16.mxu0 0
      %1240 = vmatmul.mubr.bf16.gmra.mrb[0].mxu0 %v1130
      %v1241 = vpop.f32.mrb[0].mxu0
      %v1242 = vadd.f32 0.0, %v1241
      %v1243 = vpop.f32.mrb[0].mxu0
      %v1244 = vpop.f32.mrb[0].mxu0
      %v1245 = vadd.f32 0.0, %v1244
      %v1246 = vpop.f32.mrb[0].mxu0
      %1247 = vmatprep.mubr.bf16.mxu0 0
      %1248 = vmatmul.mubr.bf16.gmra.mrb[0].mxu0 %v1133
      %v1249 = vpop.f32.mrb[0].mxu0
      %v1250 = vadd.f32 0.0, %v1249
      %v1251 = vpop.f32.mrb[0].mxu0
      %v1252 = vpop.f32.mrb[0].mxu0
      %v1253 = vadd.f32 0.0, %v1252
      %v1254 = vpop.f32.mrb[0].mxu0
      %1255 = vmatprep.mubr.bf16.mxu0 0
      %1256 = vmatmul.mubr.bf16.gmra.mrb[0].mxu0 %v1136
      %v1257 = vpop.f32.mrb[0].mxu0
      %v1258 = vadd.f32 0.0, %v1257
      %v1259 = vpop.f32.mrb[0].mxu0
      %v1260 = vpop.f32.mrb[0].mxu0
      %v1261 = vadd.f32 0.0, %v1260
      %v1262 = vpop.f32.mrb[0].mxu0
      %1263 = vmatprep.mubr.bf16.mxu0 0
      %1264 = vmatmul.mubr.bf16.gmra.mrb[0].mxu0 %v1139
      %v1265 = vpop.f32.mrb[0].mxu0
      %v1266 = vadd.f32 0.0, %v1265
      %v1267 = vpop.f32.mrb[0].mxu0
      %v1268 = vpop.f32.mrb[0].mxu0
      %v1269 = vadd.f32 0.0, %v1268
      %v1270 = vpop.f32.mrb[0].mxu0
      %1271 = vmatprep.mubr.bf16.mxu0 0
      %1272 = vmatmul.mubr.bf16.gmra.mrb[0].mxu0 %v1142
      %v1273 = vpop.f32.mrb[0].mxu0
      %v1274 = vadd.f32 0.0, %v1273
      %v1275 = vpop.f32.mrb[0].mxu0
      %v1276 = vpop.f32.mrb[0].mxu0
      %v1277 = vadd.f32 0.0, %v1276
      %v1278 = vpop.f32.mrb[0].mxu0
      %1279 = vmatprep.mubr.bf16.mxu0 0
      %1280 = vmatmul.mubr.bf16.gmra.mrb[0].mxu0 %v1145
      %v1281 = vpop.f32.mrb[0].mxu0
      %v1282 = vadd.f32 0.0, %v1281
      %v1283 = vpop.f32.mrb[0].mxu0
      %v1284 = vpop.f32.mrb[0].mxu0
      %v1285 = vadd.f32 0.0, %v1284
      %v1286 = vpop.f32.mrb[0].mxu0
      %1287 = vmatprep.mubr.bf16.mxu0 0
      %1288 = vmatmul.mubr.bf16.gmra.mrb[0].mxu0 %v1148
      %v1289 = vpop.f32.mrb[0].mxu0
      %v1290 = vadd.f32 0.0, %v1289
      %v1291 = vpop.f32.mrb[0].mxu0
      %v1292 = vpop.f32.mrb[0].mxu0
      %v1293 = vadd.f32 0.0, %v1292
      %v1294 = vpop.f32.mrb[0].mxu0
      %1295 = vmatprep.mubr.bf16.mxu0 0
      %1296 = vmatmul.mubr.bf16.gmra.mrb[0].mxu0 %v1151
      %v1297 = vpop.f32.mrb[0].mxu0
      %v1298 = vadd.f32 0.0, %v1297
      %v1299 = vpop.f32.mrb[0].mxu0
      %v1300 = vpop.f32.mrb[0].mxu0
      %v1301 = vadd.f32 0.0, %v1300
      %v1302 = vpop.f32.mrb[0].mxu0
      %1303 = vmatprep.mubr.bf16.mxu0 0
      %1304 = vmatmul.mubr.bf16.gmra.mrb[0].mxu0 %v1154
      %v1305 = vpop.f32.mrb[0].mxu0
      %v1306 = vadd.f32 0.0, %v1305
      %v1307 = vpop.f32.mrb[0].mxu0
      %v1308 = vpop.f32.mrb[0].mxu0
      %v1309 = vadd.f32 0.0, %v1308
      %v1310 = vpop.f32.mrb[0].mxu0
      %1311 = vmatprep.mubr.bf16.mxu0 0
      %1312 = vmatmul.mubr.bf16.gmra.mrb[0].mxu0 %v1157
      %v1313 = vpop.f32.mrb[0].mxu0
      %v1314 = vadd.f32 0.0, %v1313
      %v1315 = vpop.f32.mrb[0].mxu0
      %v1316 = vpop.f32.mrb[0].mxu0
      %v1317 = vadd.f32 0.0, %v1316
      %v1318 = vpop.f32.mrb[0].mxu0
      %1319 = vdwg.mxu0
      %v1320 = vld [vmem:[#allocation2] sm:$0xff]
      %v1321 = vld [vmem:[#allocation2 + $0x8] sm:$0xff]
      %v1322 = vld [vmem:[#allocation2 + $0x10] sm:$0xff]
      %v1323 = vld [vmem:[#allocation2 + $0x18] sm:$0xff]
      %v1324 = vld [vmem:[#allocation2 + $0x20] sm:$0xff]
      %v1325 = vld [vmem:[#allocation2 + $0x28] sm:$0xff]
      %v1326 = vld [vmem:[#allocation2 + $0x30] sm:$0xff]
      %v1327 = vld [vmem:[#allocation2 + $0x38] sm:$0xff]
      %v1328 = vld [vmem:[#allocation2 + $0x40] sm:$0xff]
      %v1329 = vld [vmem:[#allocation2 + $0x48] sm:$0xff]
      %v1330 = vld [vmem:[#allocation2 + $0x50] sm:$0xff]
      %v1331 = vld [vmem:[#allocation2 + $0x58] sm:$0xff]
      %v1332 = vld [vmem:[#allocation2 + $0x60] sm:$0xff]
      %v1333 = vld [vmem:[#allocation2 + $0x68] sm:$0xff]
      %v1334 = vld [vmem:[#allocation2 + $0x70] sm:$0xff]
      %v1335 = vld [vmem:[#allocation2 + $0x78] sm:$0xff]
      %v1336 = vld [vmem:[#allocation2 + $0x80] sm:$0xff]
      %v1337 = vld [vmem:[#allocation2 + $0x88] sm:$0xff]
      %v1338 = vld [vmem:[#allocation2 + $0x90] sm:$0xff]
      %v1339 = vld [vmem:[#allocation2 + $0x98] sm:$0xff]
      %v1340 = vld [vmem:[#allocation2 + $0xa0] sm:$0xff]
      %v1341 = vld [vmem:[#allocation2 + $0xa8] sm:$0xff]
      %v1342 = vld [vmem:[#allocation2 + $0xb0] sm:$0xff]
      %v1343 = vld [vmem:[#allocation2 + $0xb8] sm:$0xff]
      %v1344 = vld [vmem:[#allocation2 + $0xc0] sm:$0xff]
      %v1345 = vld [vmem:[#allocation2 + $0xc8] sm:$0xff]
      %v1346 = vld [vmem:[#allocation2 + $0xd0] sm:$0xff]
      %v1347 = vld [vmem:[#allocation2 + $0xd8] sm:$0xff]
      %v1348 = vld [vmem:[#allocation2 + $0xe0] sm:$0xff]
      %v1349 = vld [vmem:[#allocation2 + $0xe8] sm:$0xff]
      %v1350 = vld [vmem:[#allocation2 + $0xf0] sm:$0xff]
      %v1351 = vld [vmem:[#allocation2 + $0xf8] sm:$0xff]
      %v1352 = vadd.f32 %v1320, %v1194
      %v1353 = vadd.f32 %v1321, %v1197
      %v1354 = vadd.f32 %v1322, %v1202
      %v1355 = vadd.f32 %v1323, %v1205
      %v1356 = vadd.f32 %v1324, %v1210
      %v1357 = vadd.f32 %v1325, %v1213
      %v1358 = vadd.f32 %v1326, %v1218
      %v1359 = vadd.f32 %v1327, %v1221
      %v1360 = vadd.f32 %v1328, %v1226
      %v1361 = vadd.f32 %v1329, %v1229
      %v1362 = vadd.f32 %v1330, %v1234
      %v1363 = vadd.f32 %v1331, %v1237
      %v1364 = vadd.f32 %v1332, %v1242
      %v1365 = vadd.f32 %v1333, %v1245
      %v1366 = vadd.f32 %v1334, %v1250
      %v1367 = vadd.f32 %v1335, %v1253
      %v1368 = vadd.f32 %v1336, %v1258
      %v1369 = vadd.f32 %v1337, %v1261
      %v1370 = vadd.f32 %v1338, %v1266
      %v1371 = vadd.f32 %v1339, %v1269
      %v1372 = vadd.f32 %v1340, %v1274
      %v1373 = vadd.f32 %v1341, %v1277
      %v1374 = vadd.f32 %v1342, %v1282
      %v1375 = vadd.f32 %v1343, %v1285
      %v1376 = vadd.f32 %v1344, %v1290
      %v1377 = vadd.f32 %v1345, %v1293
      %v1378 = vadd.f32 %v1346, %v1298
      %v1379 = vadd.f32 %v1347, %v1301
      %v1380 = vadd.f32 %v1348, %v1306
      %v1381 = vadd.f32 %v1349, %v1309
      %v1382 = vadd.f32 %v1350, %v1314
      %v1383 = vadd.f32 %v1351, %v1317
      %1384 = vst [vmem:[#allocation2] sm:$0xff] %v1352
      %1385 = vst [vmem:[#allocation2 + $0x8] sm:$0xff] %v1353
      %1386 = vst [vmem:[#allocation2 + $0x10] sm:$0xff] %v1354
      %1387 = vst [vmem:[#allocation2 + $0x18] sm:$0xff] %v1355
      %1388 = vst [vmem:[#allocation2 + $0x20] sm:$0xff] %v1356
      %1389 = vst [vmem:[#allocation2 + $0x28] sm:$0xff] %v1357
      %1390 = vst [vmem:[#allocation2 + $0x30] sm:$0xff] %v1358
      %1391 = vst [vmem:[#allocation2 + $0x38] sm:$0xff] %v1359
      %1392 = vst [vmem:[#allocation2 + $0x40] sm:$0xff] %v1360
      %1393 = vst [vmem:[#allocation2 + $0x48] sm:$0xff] %v1361
      %1394 = vst [vmem:[#allocation2 + $0x50] sm:$0xff] %v1362
      %1395 = vst [vmem:[#allocation2 + $0x58] sm:$0xff] %v1363
      %1396 = vst [vmem:[#allocation2 + $0x60] sm:$0xff] %v1364
      %1397 = vst [vmem:[#allocation2 + $0x68] sm:$0xff] %v1365
      %1398 = vst [vmem:[#allocation2 + $0x70] sm:$0xff] %v1366
      %1399 = vst [vmem:[#allocation2 + $0x78] sm:$0xff] %v1367
      %1400 = vst [vmem:[#allocation2 + $0x80] sm:$0xff] %v1368
      %1401 = vst [vmem:[#allocation2 + $0x88] sm:$0xff] %v1369
      %1402 = vst [vmem:[#allocation2 + $0x90] sm:$0xff] %v1370
      %1403 = vst [vmem:[#allocation2 + $0x98] sm:$0xff] %v1371
      %1404 = vst [vmem:[#allocation2 + $0xa0] sm:$0xff] %v1372
      %1405 = vst [vmem:[#allocation2 + $0xa8] sm:$0xff] %v1373
      %1406 = vst [vmem:[#allocation2 + $0xb0] sm:$0xff] %v1374
      %1407 = vst [vmem:[#allocation2 + $0xb8] sm:$0xff] %v1375
      %1408 = vst [vmem:[#allocation2 + $0xc0] sm:$0xff] %v1376
      %1409 = vst [vmem:[#allocation2 + $0xc8] sm:$0xff] %v1377
      %1410 = vst [vmem:[#allocation2 + $0xd0] sm:$0xff] %v1378
      %1411 = vst [vmem:[#allocation2 + $0xd8] sm:$0xff] %v1379
      %1412 = vst [vmem:[#allocation2 + $0xe0] sm:$0xff] %v1380
      %1413 = vst [vmem:[#allocation2 + $0xe8] sm:$0xff] %v1381
      %1414 = vst [vmem:[#allocation2 + $0xf0] sm:$0xff] %v1382
      %1415 = vst [vmem:[#allocation2 + $0xf8] sm:$0xff] %v1383
      %v1416 = vld [vmem:[#allocation2] sm:$0xff]
      %v1417 = vld [vmem:[#allocation2 + $0x8] sm:$0xff]
      %v1418 = vld [vmem:[#allocation2 + $0x10] sm:$0xff]
      %v1419 = vld [vmem:[#allocation2 + $0x18] sm:$0xff]
      %v1420 = vld [vmem:[#allocation2 + $0x20] sm:$0xff]
      %v1421 = vld [vmem:[#allocation2 + $0x28] sm:$0xff]
      %v1422 = vld [vmem:[#allocation2 + $0x30] sm:$0xff]
      %v1423 = vld [vmem:[#allocation2 + $0x38] sm:$0xff]
      %v1424 = vld [vmem:[#allocation2 + $0x40] sm:$0xff]
      %v1425 = vld [vmem:[#allocation2 + $0x48] sm:$0xff]
      %v1426 = vld [vmem:[#allocation2 + $0x50] sm:$0xff]
      %v1427 = vld [vmem:[#allocation2 + $0x58] sm:$0xff]
      %v1428 = vld [vmem:[#allocation2 + $0x60] sm:$0xff]
      %v1429 = vld [vmem:[#allocation2 + $0x68] sm:$0xff]
      %v1430 = vld [vmem:[#allocation2 + $0x70] sm:$0xff]
      %v1431 = vld [vmem:[#allocation2 + $0x78] sm:$0xff]
      %v1432 = vld [vmem:[#allocation2 + $0x80] sm:$0xff]
      %v1433 = vld [vmem:[#allocation2 + $0x88] sm:$0xff]
      %v1434 = vld [vmem:[#allocation2 + $0x90] sm:$0xff]
      %v1435 = vld [vmem:[#allocation2 + $0x98] sm:$0xff]
      %v1436 = vld [vmem:[#allocation2 + $0xa0] sm:$0xff]
      %v1437 = vld [vmem:[#allocation2 + $0xa8] sm:$0xff]
      %v1438 = vld [vmem:[#allocation2 + $0xb0] sm:$0xff]
      %v1439 = vld [vmem:[#allocation2 + $0xb8] sm:$0xff]
      %v1440 = vld [vmem:[#allocation2 + $0xc0] sm:$0xff]
      %v1441 = vld [vmem:[#allocation2 + $0xc8] sm:$0xff]
      %v1442 = vld [vmem:[#allocation2 + $0xd0] sm:$0xff]
      %v1443 = vld [vmem:[#allocation2 + $0xd8] sm:$0xff]
      %v1444 = vld [vmem:[#allocation2 + $0xe0] sm:$0xff]
      %v1445 = vld [vmem:[#allocation2 + $0xe8] sm:$0xff]
      %v1446 = vld [vmem:[#allocation2 + $0xf0] sm:$0xff]
      %v1447 = vld [vmem:[#allocation2 + $0xf8] sm:$0xff]
      %v1448 = vld [vmem:[%s2] sm:$0x1]
      %v1450 = vlaneseq
      %v1451 = vshrl.u32 %v1450, 7
      %v1452 = vsub.s32 0, %v1451
      %v1453 = vrot.slane %v1448, %v1452
      %v1455 = vadd.f32 %v1416, %v1453
      %v1456 = vadd.f32 %v1417, %v1453
      %v1457 = vadd.f32 %v1418, %v1453
      %v1458 = vadd.f32 %v1419, %v1453
      %v1459 = vadd.f32 %v1420, %v1453
      %v1460 = vadd.f32 %v1421, %v1453
      %v1461 = vadd.f32 %v1422, %v1453
      %v1462 = vadd.f32 %v1423, %v1453
      %v1463 = vadd.f32 %v1424, %v1453
      %v1464 = vadd.f32 %v1425, %v1453
      %v1465 = vadd.f32 %v1426, %v1453
      %v1466 = vadd.f32 %v1427, %v1453
      %v1467 = vadd.f32 %v1428, %v1453
      %v1468 = vadd.f32 %v1429, %v1453
      %v1469 = vadd.f32 %v1430, %v1453
      %v1470 = vadd.f32 %v1431, %v1453
      %v1471 = vadd.f32 %v1432, %v1453
      %v1472 = vadd.f32 %v1433, %v1453
      %v1473 = vadd.f32 %v1434, %v1453
      %v1474 = vadd.f32 %v1435, %v1453
      %v1475 = vadd.f32 %v1436, %v1453
      %v1476 = vadd.f32 %v1437, %v1453
      %v1477 = vadd.f32 %v1438, %v1453
      %v1478 = vadd.f32 %v1439, %v1453
      %v1479 = vadd.f32 %v1440, %v1453
      %v1480 = vadd.f32 %v1441, %v1453
      %v1481 = vadd.f32 %v1442, %v1453
      %v1482 = vadd.f32 %v1443, %v1453
      %v1483 = vadd.f32 %v1444, %v1453
      %v1484 = vadd.f32 %v1445, %v1453
      %v1485 = vadd.f32 %v1446, %v1453
      %v1486 = vadd.f32 %v1447, %v1453
      %v1487 = vmax.f32 %v1455, 0.0
      %v1488 = vmax.f32 %v1456, 0.0
      %v1489 = vmax.f32 %v1457, 0.0
      %v1490 = vmax.f32 %v1458, 0.0
      %v1491 = vmax.f32 %v1459, 0.0
      %v1492 = vmax.f32 %v1460, 0.0
      %v1493 = vmax.f32 %v1461, 0.0
      %v1494 = vmax.f32 %v1462, 0.0
      %v1495 = vmax.f32 %v1463, 0.0
      %v1496 = vmax.f32 %v1464, 0.0
      %v1497 = vmax.f32 %v1465, 0.0
      %v1498 = vmax.f32 %v1466, 0.0
      %v1499 = vmax.f32 %v1467, 0.0
      %v1500 = vmax.f32 %v1468, 0.0
      %v1501 = vmax.f32 %v1469, 0.0
      %v1502 = vmax.f32 %v1470, 0.0
      %v1503 = vmax.f32 %v1471, 0.0
      %v1504 = vmax.f32 %v1472, 0.0
      %v1505 = vmax.f32 %v1473, 0.0
      %v1506 = vmax.f32 %v1474, 0.0
      %v1507 = vmax.f32 %v1475, 0.0
      %v1508 = vmax.f32 %v1476, 0.0
      %v1509 = vmax.f32 %v1477, 0.0
      %v1510 = vmax.f32 %v1478, 0.0
      %v1511 = vmax.f32 %v1479, 0.0
      %v1512 = vmax.f32 %v1480, 0.0
      %v1513 = vmax.f32 %v1481, 0.0
      %v1514 = vmax.f32 %v1482, 0.0
      %v1515 = vmax.f32 %v1483, 0.0
      %v1516 = vmax.f32 %v1484, 0.0
      %v1517 = vmax.f32 %v1485, 0.0
      %v1518 = vmax.f32 %v1486, 0.0
      %v1519 = vpack.c.bf16 %v1488, %v1487
      %v1520 = vpack.c.bf16 %v1490, %v1489
      %v1521 = vpack.c.bf16 %v1492, %v1491
      %v1522 = vpack.c.bf16 %v1494, %v1493
      %v1523 = vpack.c.bf16 %v1496, %v1495
      %v1524 = vpack.c.bf16 %v1498, %v1497
      %v1525 = vpack.c.bf16 %v1500, %v1499
      %v1526 = vpack.c.bf16 %v1502, %v1501
      %v1527 = vpack.c.bf16 %v1504, %v1503
      %v1528 = vpack.c.bf16 %v1506, %v1505
      %v1529 = vpack.c.bf16 %v1508, %v1507
      %v1530 = vpack.c.bf16 %v1510, %v1509
      %v1531 = vpack.c.bf16 %v1512, %v1511
      %v1532 = vpack.c.bf16 %v1514, %v1513
      %v1533 = vpack.c.bf16 %v1516, %v1515
      %v1534 = vpack.c.bf16 %v1518, %v1517
      %v1551 = vunpack.c.l.b16 %v1519
      %v1552 = vunpack.c.h.b16 %v1519
      %v1553 = vunpack.c.l.b16 %v1520
      %v1554 = vunpack.c.h.b16 %v1520
      %v1555 = vunpack.c.l.b16 %v1521
      %v1556 = vunpack.c.h.b16 %v1521
      %v1557 = vunpack.c.l.b16 %v1522
      %v1558 = vunpack.c.h.b16 %v1522
      %v1559 = vunpack.c.l.b16 %v1523
      %v1560 = vunpack.c.h.b16 %v1523
      %v1561 = vunpack.c.l.b16 %v1524
      %v1562 = vunpack.c.h.b16 %v1524
      %v1563 = vunpack.c.l.b16 %v1525
      %v1564 = vunpack.c.h.b16 %v1525
      %v1565 = vunpack.c.l.b16 %v1526
      %v1566 = vunpack.c.h.b16 %v1526
      %v1567 = vunpack.c.l.b16 %v1527
      %v1568 = vunpack.c.h.b16 %v1527
      %v1569 = vunpack.c.l.b16 %v1528
      %v1570 = vunpack.c.h.b16 %v1528
      %v1571 = vunpack.c.l.b16 %v1529
      %v1572 = vunpack.c.h.b16 %v1529
      %v1573 = vunpack.c.l.b16 %v1530
      %v1574 = vunpack.c.h.b16 %v1530
      %v1575 = vunpack.c.l.b16 %v1531
      %v1576 = vunpack.c.h.b16 %v1531
      %v1577 = vunpack.c.l.b16 %v1532
      %v1578 = vunpack.c.h.b16 %v1532
      %v1579 = vunpack.c.l.b16 %v1533
      %v1580 = vunpack.c.h.b16 %v1533
      %v1581 = vunpack.c.l.b16 %v1534
      %v1582 = vunpack.c.h.b16 %v1534
      %v1583 = vpack.c.b16 %v1551, %v1551
      %v1584 = vpack.c.b16 %v1552, %v1552
      %v1585 = vpack.c.b16 %v1553, %v1553
      %v1586 = vpack.c.b16 %v1554, %v1554
      %v1587 = vpack.c.b16 %v1555, %v1555
      %v1588 = vpack.c.b16 %v1556, %v1556
      %v1589 = vpack.c.b16 %v1557, %v1557
      %v1590 = vpack.c.b16 %v1558, %v1558
      %v1591 = vpack.c.b16 %v1559, %v1559
      %v1592 = vpack.c.b16 %v1560, %v1560
      %v1593 = vpack.c.b16 %v1561, %v1561
      %v1594 = vpack.c.b16 %v1562, %v1562
      %v1595 = vpack.c.b16 %v1563, %v1563
      %v1596 = vpack.c.b16 %v1564, %v1564
      %v1597 = vpack.c.b16 %v1565, %v1565
      %v1598 = vpack.c.b16 %v1566, %v1566
      %v1599 = vpack.c.b16 %v1567, %v1567
      %v1600 = vpack.c.b16 %v1568, %v1568
      %v1601 = vpack.c.b16 %v1569, %v1569
      %v1602 = vpack.c.b16 %v1570, %v1570
      %v1603 = vpack.c.b16 %v1571, %v1571
      %v1604 = vpack.c.b16 %v1572, %v1572
      %v1605 = vpack.c.b16 %v1573, %v1573
      %v1606 = vpack.c.b16 %v1574, %v1574
      %v1607 = vpack.c.b16 %v1575, %v1575
      %v1608 = vpack.c.b16 %v1576, %v1576
      %v1609 = vpack.c.b16 %v1577, %v1577
      %v1610 = vpack.c.b16 %v1578, %v1578
      %v1611 = vpack.c.b16 %v1579, %v1579
      %v1612 = vpack.c.b16 %v1580, %v1580
      %v1613 = vpack.c.b16 %v1581, %v1581
      %v1614 = vpack.c.b16 %v1582, %v1582
      %1647 = vst [vmem:[%s199] sm:$0xf] %v1583
      %1648 = vst [vmem:[%s199 + $0x4] sm:$0xf] %v1584
      %1649 = vst [vmem:[%s199 + $0x8] sm:$0xf] %v1585
      %1650 = vst [vmem:[%s199 + $0xc] sm:$0xf] %v1586
      %1651 = vst [vmem:[%s199 + $0x10] sm:$0xf] %v1587
      %1652 = vst [vmem:[%s199 + $0x14] sm:$0xf] %v1588
      %1653 = vst [vmem:[%s199 + $0x18] sm:$0xf] %v1589
      %1654 = vst [vmem:[%s199 + $0x1c] sm:$0xf] %v1590
      %1655 = vst [vmem:[%s199 + $0x20] sm:$0xf] %v1591
      %1656 = vst [vmem:[%s199 + $0x24] sm:$0xf] %v1592
      %1657 = vst [vmem:[%s199 + $0x28] sm:$0xf] %v1593
      %1658 = vst [vmem:[%s199 + $0x2c] sm:$0xf] %v1594
      %1659 = vst [vmem:[%s199 + $0x30] sm:$0xf] %v1595
      %1660 = vst [vmem:[%s199 + $0x34] sm:$0xf] %v1596
      %1661 = vst [vmem:[%s199 + $0x38] sm:$0xf] %v1597
      %1662 = vst [vmem:[%s199 + $0x3c] sm:$0xf] %v1598
      %1663 = vst [vmem:[%s199 + $0x40] sm:$0xf] %v1599
      %1664 = vst [vmem:[%s199 + $0x44] sm:$0xf] %v1600
      %1665 = vst [vmem:[%s199 + $0x48] sm:$0xf] %v1601
      %1666 = vst [vmem:[%s199 + $0x4c] sm:$0xf] %v1602
      %1667 = vst [vmem:[%s199 + $0x50] sm:$0xf] %v1603
      %1668 = vst [vmem:[%s199 + $0x54] sm:$0xf] %v1604
      %1669 = vst [vmem:[%s199 + $0x58] sm:$0xf] %v1605
      %1670 = vst [vmem:[%s199 + $0x5c] sm:$0xf] %v1606
      %1671 = vst [vmem:[%s199 + $0x60] sm:$0xf] %v1607
      %1672 = vst [vmem:[%s199 + $0x64] sm:$0xf] %v1608
      %1673 = vst [vmem:[%s199 + $0x68] sm:$0xf] %v1609
      %1674 = vst [vmem:[%s199 + $0x6c] sm:$0xf] %v1610
      %1675 = vst [vmem:[%s199 + $0x70] sm:$0xf] %v1611
      %1676 = vst [vmem:[%s199 + $0x74] sm:$0xf] %v1612
      %1677 = vst [vmem:[%s199 + $0x78] sm:$0xf] %v1613
      %1678 = vst [vmem:[%s199 + $0x7c] sm:$0xf] %v1614
      %s1679 = smul.u32 32, %s19
      %p1680 = scmp.lt.s32.totalorder %s18, 1
      %s1681 = scalar_select %p1680, %s18, 1
      %p1682 = scmp.lt.s32.totalorder %s1679, 31
      %s1683 = scalar_select %p1682, %s1679, 31
      %s1684 = smul.addr %s1681, 32
      %s1685 = sadd.s32 %s1683, %s1684
      %s1686 = smul.addr %s1685, 4
      %s1687 = scalar_lea.vmem %s3, %s1686
      // Predicated region
      $region33: #{generalized_rcnn_forward.4} parent=31 // pred_check
        %p1688 = pneg %p116
      $region34: #{generalized_rcnn_forward.4} parent=31 // pred_check_branch
        %1690 = sbr.rel (%p1688) target = $region36
      $region35: #{generalized_rcnn_forward.4} parent=31 // pred_region
        %s1691 = smul.u32 32, %s19
      $region36: #{generalized_rcnn_forward.4} parent=31 // pred_fallthru
        _
    $region32: #{generalized_rcnn_forward.4} parent=5 // pred_fallthru
      _
    %p1692 = scmp.le.s32.totalorder 2, %s9
    // Predicated region
    $region37: #{generalized_rcnn_forward.4} parent=5 // pred_check
      %p1693 = pneg %p1692
    $region38: #{generalized_rcnn_forward.4} parent=5 // pred_check_branch
      %1695 = sbr.rel (%p1693) target = $region40
    $region39: #{generalized_rcnn_forward.4} parent=5 // pred_region
      %s1696 = ssub.s32 %s9, 2
      // Predicated region
      $region41: #{generalized_rcnn_forward.4} parent=39 // pred_check
        %p1697 = pneg %p122
      $region42: #{generalized_rcnn_forward.4} parent=39 // pred_check_branch
        %1699 = sbr.rel (%p1697) target = $region44
      $region43: #{generalized_rcnn_forward.4} parent=39 // pred_region
        %s1700 = smul.u32 32, %s21
        %p1701 = scmp.lt.s32.totalorder %s20, 1
        %s1702 = scalar_select %p1701, %s20, 1
        %p1703 = scmp.lt.s32.totalorder %s1700, 31
        %s1704 = scalar_select %p1703, %s1700, 31
        %s1705 = smul.addr %s1702, 32
        %s1706 = sadd.s32 %s1704, %s1705
        %s1707 = smul.addr %s1706, 4
        %s1708 = scalar_lea.vmem %s3, %s1707
      $region44: #{generalized_rcnn_forward.4} parent=39 // pred_fallthru
        _
    $region40: #{generalized_rcnn_forward.4} parent=5 // pred_fallthru
      _
  $region6: #{generalized_rcnn_forward.4} parent=0 // loop_footer
    %s13 = sadd.s32 1, %s9
  $region7: #{generalized_rcnn_forward.4} parent=0 // loop_footer_branch
    %8 = sbr.rel target = $region3
  $region8: #{generalized_rcnn_forward.4} parent=0 // loop_exit
    _

// kernel: generalized_rcnn_forward.5
$region0: #{generalized_rcnn_forward.5}
  #allocation0 [shape = 'u32[]', space=smem, size = 0x4, offset = 0x4, fixed_abs, tag = 'smem constant byte address 0x4 - core index']
  #allocation1 [shape = 'u32[144,128]{1,0:T(1,128)}', space=vmem, size = 0x12000, scoped, tag = 'internal scratch']
  #allocation2 [shape = 'f32[256,128]{1,0:T(8,128)}', space=vmem, size = 0x20000, scoped, tag = 'scratch operand']
  %s0 = inlined_call_operand.vmem [shape: bf16[2,288,384], index: 0, kind: input, shape index: {}]
  %s1 = inlined_call_operand.vmem [shape: bf16[3,384,128], index: 1, kind: input, shape index: {}]
  %s2 = inlined_call_operand.vmem [shape: f32[1,128], index: 2, kind: input, shape index: {}]
  %s3 = inlined_call_operand.vmem [shape: bf16[128,16], index: 3, kind: input, shape index: {}]
  %s4 = inlined_call_operand.vmem [shape: f32[1,16], index: 4, kind: input, shape index: {}]
  %s5 = inlined_call_operand.vmem [shape: f32[2,256,16], index: 5, kind: output, shape index: {}]
  %s6 = sld [smem:[#allocation0]]
  $region53: #{generalized_rcnn_forward.5} parent=0
    _
  %s8 = ssub.s32 1, %s6
  %s9 = scalar_select 0, %s8, %s6
  loop: start=0, step=1, limit=4
  $region2: #{generalized_rcnn_forward.5} parent=0 // loop_pre_header
    _
  $region3: #{generalized_rcnn_forward.5} parent=0 // loop_header
    %s11 = sphi 0, %s15
    %p12 = scmp.ge.s32.totalorder %s11, 4
    %s18 = sphi 0, %s30
    %s19 = sphi 0, %s26
    %s20 = sphi 0, %s18
    %s21 = sphi 0, %s19
    %s22 = sphi 0, %s20
    %s23 = sphi 0, %s21
    %s35 = sphi 0, %s37
    %s38 = sphi 0, %s35
    %s39 = sphi 0, %s38
    %s55 = sphi 0, %s39
    %s59 = sphi 0, %s59
    %s61 = sphi 0, %s59
    %s62 = sphi 0, %s61
    %s76 = sphi 0, %s62
    %s80 = sphi 0, %s80
    %s82 = sphi 0, %s80
    %s83 = sphi 0, %s82
    %s97 = sphi 0, %s83
    %s101 = sphi 0, %s101
    %s103 = sphi 0, %s101
    %s104 = sphi 0, %s103
    %s118 = sphi 0, %s104
    %s122 = sphi 0, %s122
    %s124 = sphi 0, %s122
    %s125 = sphi 0, %s124
    %s139 = sphi 0, %s125
    %s147 = sphi 0, %s149
    %s150 = sphi 0, %s147
    %s151 = sphi 0, %s150
    %s167 = sphi 0, %s151
  $region4: #{generalized_rcnn_forward.5} parent=0 // loop_header_branch
    %14 = sbr.rel (%p12) target = $region8
  $region5: #{generalized_rcnn_forward.5} parent=0 // loop_body
    %s16 = ssub.s32 %s11, 1
    %s17 = ssub.s32 %s11, 2
    %s24 = sadd.s32 1, %s19
    %p25 = scmp.ge.s32.totalorder %s24, 1
    %s26 = scalar_select %p25, 0, %s24
    %s27 = sadd.s32 1, %s18
    %s28 = scalar_select %p25, %s27, %s18
    %p29 = scmp.ge.s32.totalorder %s28, 2
    %s30 = scalar_select %p29, 0, %s28
    %s31 = sadd.s32 %s18, %s19
    %s32 = sadd.s32 %s30, %s26
    %s33 = ssub.s32 %s31, %s32
    %p34 = scmp.eq.s32.totalorder %s33, 0
    %s36 = sadd.s32 %s35, 1
    %s37 = scalar_select %p34, %s35, %s36
    %p40 = pneg %p34
    %p41 = scmp.eq.s32.totalorder %s11, 1
    %p42 = por %p40, %p41
    %p43 = scmp.ne.s32.totalorder %s35, %s38
    %p44 = scmp.eq.s32.totalorder %s11, 0
    %p45 = por %p43, %p44
    %p46 = scmp.ne.s32.totalorder %s35, %s38
    %p47 = scmp.eq.s32.totalorder %s16, 1
    %p48 = por %p46, %p47
    %p49 = scmp.ne.s32.totalorder %s38, %s39
    %p50 = scmp.eq.s32.totalorder %s16, 0
    %p51 = por %p49, %p50
    %p52 = scmp.ne.s32.totalorder %s38, %s39
    %p53 = scmp.eq.s32.totalorder %s17, 1
    %p54 = por %p52, %p53
    %p56 = scmp.ne.s32.totalorder %s39, %s55
    %p57 = scmp.eq.s32.totalorder %s17, 0
    %p58 = por %p56, %p57
    %s60 = sadd.s32 %s59, 1
    %p63 = scmp.eq.s32.totalorder %s11, 1
    %p64 = scmp.ne.s32.totalorder %s59, %s61
    %p65 = scmp.eq.s32.totalorder %s11, 0
    %p66 = por %p64, %p65
    %p67 = scmp.ne.s32.totalorder %s59, %s61
    %p68 = scmp.eq.s32.totalorder %s16, 1
    %p69 = por %p67, %p68
    %p70 = scmp.ne.s32.totalorder %s61, %s62
    %p71 = scmp.eq.s32.totalorder %s16, 0
    %p72 = por %p70, %p71
    %p73 = scmp.ne.s32.totalorder %s61, %s62
    %p74 = scmp.eq.s32.totalorder %s17, 1
    %p75 = por %p73, %p74
    %p77 = scmp.ne.s32.totalorder %s62, %s76
    %p78 = scmp.eq.s32.totalorder %s17, 0
    %p79 = por %p77, %p78
    %s81 = sadd.s32 %s80, 1
    %p84 = scmp.eq.s32.totalorder %s11, 1
    %p85 = scmp.ne.s32.totalorder %s80, %s82
    %p86 = scmp.eq.s32.totalorder %s11, 0
    %p87 = por %p85, %p86
    %p88 = scmp.ne.s32.totalorder %s80, %s82
    %p89 = scmp.eq.s32.totalorder %s16, 1
    %p90 = por %p88, %p89
    %p91 = scmp.ne.s32.totalorder %s82, %s83
    %p92 = scmp.eq.s32.totalorder %s16, 0
    %p93 = por %p91, %p92
    %p94 = scmp.ne.s32.totalorder %s82, %s83
    %p95 = scmp.eq.s32.totalorder %s17, 1
    %p96 = por %p94, %p95
    %p98 = scmp.ne.s32.totalorder %s83, %s97
    %p99 = scmp.eq.s32.totalorder %s17, 0
    %p100 = por %p98, %p99
    %s102 = sadd.s32 %s101, 1
    %p105 = scmp.eq.s32.totalorder %s11, 1
    %p106 = scmp.ne.s32.totalorder %s101, %s103
    %p107 = scmp.eq.s32.totalorder %s11, 0
    %p108 = por %p106, %p107
    %p109 = scmp.ne.s32.totalorder %s101, %s103
    %p110 = scmp.eq.s32.totalorder %s16, 1
    %p111 = por %p109, %p110
    %p112 = scmp.ne.s32.totalorder %s103, %s104
    %p113 = scmp.eq.s32.totalorder %s16, 0
    %p114 = por %p112, %p113
    %p115 = scmp.ne.s32.totalorder %s103, %s104
    %p116 = scmp.eq.s32.totalorder %s17, 1
    %p117 = por %p115, %p116
    %p119 = scmp.ne.s32.totalorder %s104, %s118
    %p120 = scmp.eq.s32.totalorder %s17, 0
    %p121 = por %p119, %p120
    %s123 = sadd.s32 %s122, 1
    %p126 = scmp.eq.s32.totalorder %s11, 1
    %p127 = scmp.ne.s32.totalorder %s122, %s124
    %p128 = scmp.eq.s32.totalorder %s11, 0
    %p129 = por %p127, %p128
    %p130 = scmp.ne.s32.totalorder %s122, %s124
    %p131 = scmp.eq.s32.totalorder %s16, 1
    %p132 = por %p130, %p131
    %p133 = scmp.ne.s32.totalorder %s124, %s125
    %p134 = scmp.eq.s32.totalorder %s16, 0
    %p135 = por %p133, %p134
    %p136 = scmp.ne.s32.totalorder %s124, %s125
    %p137 = scmp.eq.s32.totalorder %s17, 1
    %p138 = por %p136, %p137
    %p140 = scmp.ne.s32.totalorder %s125, %s139
    %p141 = scmp.eq.s32.totalorder %s17, 0
    %p142 = por %p140, %p141
    %s143 = ssub.s32 %s18, %s30
    %s144 = ssub.s32 %s19, %s26
    %s145 = sor.u32 %s143, %s144
    %p146 = scmp.eq.s32.totalorder %s145, 0
    %s148 = sadd.s32 %s147, 1
    %s149 = scalar_select %p146, %s147, %s148
    %p152 = pneg %p146
    %p153 = scmp.eq.s32.totalorder %s11, 1
    %p154 = por %p152, %p153
    %p155 = scmp.ne.s32.totalorder %s147, %s150
    %p156 = scmp.eq.s32.totalorder %s11, 0
    %p157 = por %p155, %p156
    %p158 = scmp.ne.s32.totalorder %s147, %s150
    %p159 = scmp.eq.s32.totalorder %s16, 1
    %p160 = por %p158, %p159
    %p161 = scmp.ne.s32.totalorder %s150, %s151
    %p162 = scmp.eq.s32.totalorder %s16, 0
    %p163 = por %p161, %p162
    %p164 = scmp.ne.s32.totalorder %s150, %s151
    %p165 = scmp.eq.s32.totalorder %s17, 1
    %p166 = por %p164, %p165
    %p168 = scmp.ne.s32.totalorder %s151, %s167
    %p169 = scmp.eq.s32.totalorder %s17, 0
    %p170 = por %p168, %p169
    %p171 = scmp.le.s32.totalorder 1, %s11
    %p172 = scmp.lt.s32.totalorder %s11, 3
    %p173 = pnand %p171, %p172
    %p174 = pneg %p173
    // Predicated region
    $region9: #{generalized_rcnn_forward.5} parent=5 // pred_check
      _
    $region10: #{generalized_rcnn_forward.5} parent=5 // pred_check_branch
      %176 = sbr.rel (%p173) target = $region12
    $region11: #{generalized_rcnn_forward.5} parent=5 // pred_region
      %s177 = ssub.s32 %s11, 1
      // Predicated region
      $region13: #{generalized_rcnn_forward.5} parent=11 // pred_check
        %p178 = pneg %p72
      $region14: #{generalized_rcnn_forward.5} parent=11 // pred_check_branch
        %180 = sbr.rel (%p178) target = $region16
      $region15: #{generalized_rcnn_forward.5} parent=11 // pred_region
        _
      $region16: #{generalized_rcnn_forward.5} parent=11 // pred_fallthru
        _
      // Predicated region
      $region17: #{generalized_rcnn_forward.5} parent=11 // pred_check
        %p181 = pneg %p93
      $region18: #{generalized_rcnn_forward.5} parent=11 // pred_check_branch
        %183 = sbr.rel (%p181) target = $region20
      $region19: #{generalized_rcnn_forward.5} parent=11 // pred_region
        _
      $region20: #{generalized_rcnn_forward.5} parent=11 // pred_fallthru
        _
      // Predicated region
      $region21: #{generalized_rcnn_forward.5} parent=11 // pred_check
        %p184 = pneg %p114
      $region22: #{generalized_rcnn_forward.5} parent=11 // pred_check_branch
        %186 = sbr.rel (%p184) target = $region24
      $region23: #{generalized_rcnn_forward.5} parent=11 // pred_region
        _
      $region24: #{generalized_rcnn_forward.5} parent=11 // pred_fallthru
        _
      // Predicated region
      $region25: #{generalized_rcnn_forward.5} parent=11 // pred_check
        %p187 = pneg %p135
      $region26: #{generalized_rcnn_forward.5} parent=11 // pred_check_branch
        %189 = sbr.rel (%p187) target = $region28
      $region27: #{generalized_rcnn_forward.5} parent=11 // pred_region
        _
      $region28: #{generalized_rcnn_forward.5} parent=11 // pred_fallthru
        _
    $region12: #{generalized_rcnn_forward.5} parent=5 // pred_fallthru
      _
    %p190 = scmp.lt.s32.totalorder %s11, 2
    // Predicated region
    $region29: #{generalized_rcnn_forward.5} parent=5 // pred_check
      %p191 = pneg %p190
    $region30: #{generalized_rcnn_forward.5} parent=5 // pred_check_branch
      %193 = sbr.rel (%p191) target = $region32
    $region31: #{generalized_rcnn_forward.5} parent=5 // pred_region
      // Predicated region
      $region33: #{generalized_rcnn_forward.5} parent=31 // pred_check
        %p194 = pneg %p45
      $region34: #{generalized_rcnn_forward.5} parent=31 // pred_check_branch
        %196 = sbr.rel (%p194) target = $region36
      $region35: #{generalized_rcnn_forward.5} parent=31 // pred_region
        %s197 = sadd.s32 %s18, %s19
        %p198 = scmp.lt.s32.totalorder %s197, 1
        %s199 = scalar_select %p198, %s197, 1
        %s200 = smul.addr %s199, 108
        %s201 = smul.addr %s200, 4
        %s202 = scalar_lea.vmem %s0, %s201
        %s203 = sadd.s32 %s18, %s19
      $region36: #{generalized_rcnn_forward.5} parent=31 // pred_fallthru
        _
    $region32: #{generalized_rcnn_forward.5} parent=5 // pred_fallthru
      _
    %p204 = scmp.le.s32.totalorder 1, %s11
    %p205 = scmp.lt.s32.totalorder %s11, 3
    %p206 = pnand %p204, %p205
    %p207 = pneg %p206
    // Predicated region
    $region37: #{generalized_rcnn_forward.5} parent=5 // pred_check
      _
    $region38: #{generalized_rcnn_forward.5} parent=5 // pred_check_branch
      %209 = sbr.rel (%p206) target = $region40
    $region39: #{generalized_rcnn_forward.5} parent=5 // pred_region
      %s210 = ssub.s32 %s11, 1
      %s211 = sadd.s32 %s20, %s21
      %p212 = scmp.lt.s32.totalorder %s211, 1
      %s213 = scalar_select %p212, %s211, 1
      %s214 = smul.addr %s213, 108
      %s215 = smul.addr %s214, 4
      %s216 = scalar_lea.vmem %s0, %s215
      %p217 = pneg %p51
      %p218 = pneg %p48
      %p219 = pneg %p72
      %p220 = pneg %p69
      %p221 = pneg %p93
      %p222 = pneg %p90
      %p223 = pneg %p114
      %p224 = pneg %p111
      %p225 = pneg %p135
      %p226 = pneg %p132
      %p227 = pneg %p163
      %p228 = pneg %p160
      %s229 = smul.u32 32, %s21
      %p230 = scmp.lt.s32.totalorder %s20, 1
      %s231 = scalar_select %p230, %s20, 1
      %p232 = scmp.lt.s32.totalorder %s229, 31
      %s233 = scalar_select %p232, %s229, 31
      %s234 = smul.addr %s231, 32
      %s235 = sadd.s32 %s233, %s234
      %s236 = smul.addr %s235, 8
      %s237 = scalar_lea.vmem %s5, %s236
      %s238 = sadd.s32 %s20, %s21
      %p239 = scmp.lt.s32.totalorder %s238, 1
      %s240 = scalar_select %p239, %s238, 1
      %s241 = smul.addr %s240, 108
      %s242 = smul.addr %s241, 4
      %s243 = scalar_lea.vmem %s0, %s242
      %s244 = sadd.s32 %s20, %s21
      %s245 = smul.u32 32, %s21
      %p246 = scmp.lt.s32.totalorder %s20, 1
      %s247 = scalar_select %p246, %s20, 1
      %p248 = scmp.lt.s32.totalorder %s245, 31
      %s249 = scalar_select %p248, %s245, 31
      %s250 = smul.addr %s247, 32
      %s251 = sadd.s32 %s249, %s250
      %s252 = smul.addr %s251, 8
      %s253 = scalar_lea.vmem %s5, %s252
      %s254 = smul.u32 32, %s21
      %v256 = vld [vmem:[%s243] sm:$0xff]
      %v257 = vld [vmem:[%s243 + $0x8] sm:$0xf]
      %v258 = vld [vmem:[%s243 + $0xc] sm:$0xff]
      %v259 = vld [vmem:[%s243 + $0x14] sm:$0xf]
      %v260 = vld [vmem:[%s243 + $0x18] sm:$0xff]
      %v261 = vld [vmem:[%s243 + $0x20] sm:$0xf]
      %v262 = vld [vmem:[%s243 + $0x24] sm:$0xff]
      %v263 = vld [vmem:[%s243 + $0x2c] sm:$0xf]
      %v264 = vld [vmem:[%s243 + $0x30] sm:$0xff]
      %v265 = vld [vmem:[%s243 + $0x38] sm:$0xf]
      %v266 = vld [vmem:[%s243 + $0x3c] sm:$0xff]
      %v267 = vld [vmem:[%s243 + $0x44] sm:$0xf]
      %v268 = vld [vmem:[%s243 + $0x48] sm:$0xff]
      %v269 = vld [vmem:[%s243 + $0x50] sm:$0xf]
      %v270 = vld [vmem:[%s243 + $0x54] sm:$0xff]
      %v271 = vld [vmem:[%s243 + $0x5c] sm:$0xf]
      %v272 = vld [vmem:[%s243 + $0x60] sm:$0xff]
      %v273 = vld [vmem:[%s243 + $0x68] sm:$0xf]
      %v274 = vld [vmem:[%s243 + $0x6c] sm:$0xff]
      %v275 = vld [vmem:[%s243 + $0x74] sm:$0xf]
      %v276 = vld [vmem:[%s243 + $0x78] sm:$0xff]
      %v277 = vld [vmem:[%s243 + $0x80] sm:$0xf]
      %v278 = vld [vmem:[%s243 + $0x84] sm:$0xff]
      %v279 = vld [vmem:[%s243 + $0x8c] sm:$0xf]
      %v280 = vld [vmem:[%s243 + $0x90] sm:$0xff]
      %v281 = vld [vmem:[%s243 + $0x98] sm:$0xf]
      %v282 = vld [vmem:[%s243 + $0x9c] sm:$0xff]
      %v283 = vld [vmem:[%s243 + $0xa4] sm:$0xf]
      %v284 = vld [vmem:[%s243 + $0xa8] sm:$0xff]
      %v285 = vld [vmem:[%s243 + $0xb0] sm:$0xf]
      %v286 = vld [vmem:[%s243 + $0xb4] sm:$0xff]
      %v287 = vld [vmem:[%s243 + $0xbc] sm:$0xf]
      %v288 = vld [vmem:[%s243 + $0xc0] sm:$0xff]
      %v289 = vld [vmem:[%s243 + $0xc8] sm:$0xf]
      %v290 = vld [vmem:[%s243 + $0xcc] sm:$0xff]
      %v291 = vld [vmem:[%s243 + $0xd4] sm:$0xf]
      %v292 = vld [vmem:[%s243 + $0xd8] sm:$0xff]
      %v293 = vld [vmem:[%s243 + $0xe0] sm:$0xf]
      %v294 = vld [vmem:[%s243 + $0xe4] sm:$0xff]
      %v295 = vld [vmem:[%s243 + $0xec] sm:$0xf]
      %v296 = vld [vmem:[%s243 + $0xf0] sm:$0xff]
      %v297 = vld [vmem:[%s243 + $0xf8] sm:$0xf]
      %v298 = vld [vmem:[%s243 + $0xfc] sm:$0xff]
      %v299 = vld [vmem:[%s243 + $0x104] sm:$0xf]
      %v300 = vld [vmem:[%s243 + $0x108] sm:$0xff]
      %v301 = vld [vmem:[%s243 + $0x110] sm:$0xf]
      %v302 = vld [vmem:[%s243 + $0x114] sm:$0xff]
      %v303 = vld [vmem:[%s243 + $0x11c] sm:$0xf]
      %v304 = vld [vmem:[%s243 + $0x120] sm:$0xff]
      %v305 = vld [vmem:[%s243 + $0x128] sm:$0xf]
      %v306 = vld [vmem:[%s243 + $0x12c] sm:$0xff]
      %v307 = vld [vmem:[%s243 + $0x134] sm:$0xf]
      %v308 = vld [vmem:[%s243 + $0x138] sm:$0xff]
      %v309 = vld [vmem:[%s243 + $0x140] sm:$0xf]
      %v310 = vld [vmem:[%s243 + $0x144] sm:$0xff]
      %v311 = vld [vmem:[%s243 + $0x14c] sm:$0xf]
      %v312 = vld [vmem:[%s243 + $0x150] sm:$0xff]
      %v313 = vld [vmem:[%s243 + $0x158] sm:$0xf]
      %v314 = vld [vmem:[%s243 + $0x15c] sm:$0xff]
      %v315 = vld [vmem:[%s243 + $0x164] sm:$0xf]
      %v316 = vld [vmem:[%s243 + $0x168] sm:$0xff]
      %v317 = vld [vmem:[%s243 + $0x170] sm:$0xf]
      %v318 = vld [vmem:[%s243 + $0x174] sm:$0xff]
      %v319 = vld [vmem:[%s243 + $0x17c] sm:$0xf]
      %v320 = vld [vmem:[%s1] sm:$0xf]
      %v321 = vld [vmem:[%s1 + $0x4] sm:$0xf]
      %v322 = vld [vmem:[%s1 + $0x8] sm:$0xf]
      %v323 = vld [vmem:[%s1 + $0xc] sm:$0xf]
      %v324 = vld [vmem:[%s1 + $0x10] sm:$0xf]
      %v325 = vld [vmem:[%s1 + $0x14] sm:$0xf]
      %v326 = vld [vmem:[%s1 + $0x18] sm:$0xf]
      %v327 = vld [vmem:[%s1 + $0x1c] sm:$0xf]
      %v328 = vld [vmem:[%s1 + $0x20] sm:$0xf]
      %v329 = vld [vmem:[%s1 + $0x24] sm:$0xf]
      %v330 = vld [vmem:[%s1 + $0x28] sm:$0xf]
      %v331 = vld [vmem:[%s1 + $0x2c] sm:$0xf]
      %v332 = vld [vmem:[%s1 + $0x30] sm:$0xf]
      %v333 = vld [vmem:[%s1 + $0x34] sm:$0xf]
      %v334 = vld [vmem:[%s1 + $0x38] sm:$0xf]
      %v335 = vld [vmem:[%s1 + $0x3c] sm:$0xf]
      %v336 = vld [vmem:[%s1 + $0x40] sm:$0xf]
      %v337 = vld [vmem:[%s1 + $0x44] sm:$0xf]
      %v338 = vld [vmem:[%s1 + $0x48] sm:$0xf]
      %v339 = vld [vmem:[%s1 + $0x4c] sm:$0xf]
      %v340 = vld [vmem:[%s1 + $0x50] sm:$0xf]
      %v341 = vld [vmem:[%s1 + $0x54] sm:$0xf]
      %v342 = vld [vmem:[%s1 + $0x58] sm:$0xf]
      %v343 = vld [vmem:[%s1 + $0x5c] sm:$0xf]
      %v344 = vld [vmem:[%s1 + $0x60] sm:$0xf]
      %v345 = vld [vmem:[%s1 + $0x64] sm:$0xf]
      %v346 = vld [vmem:[%s1 + $0x68] sm:$0xf]
      %v347 = vld [vmem:[%s1 + $0x6c] sm:$0xf]
      %v348 = vld [vmem:[%s1 + $0x70] sm:$0xf]
      %v349 = vld [vmem:[%s1 + $0x74] sm:$0xf]
      %v350 = vld [vmem:[%s1 + $0x78] sm:$0xf]
      %v351 = vld [vmem:[%s1 + $0x7c] sm:$0xf]
      %v352 = vld [vmem:[%s1 + $0x80] sm:$0xf]
      %v353 = vld [vmem:[%s1 + $0x84] sm:$0xf]
      %v354 = vld [vmem:[%s1 + $0x88] sm:$0xf]
      %v355 = vld [vmem:[%s1 + $0x8c] sm:$0xf]
      %v356 = vld [vmem:[%s1 + $0x90] sm:$0xf]
      %v357 = vld [vmem:[%s1 + $0x94] sm:$0xf]
      %v358 = vld [vmem:[%s1 + $0x98] sm:$0xf]
      %v359 = vld [vmem:[%s1 + $0x9c] sm:$0xf]
      %v360 = vld [vmem:[%s1 + $0xa0] sm:$0xf]
      %v361 = vld [vmem:[%s1 + $0xa4] sm:$0xf]
      %v362 = vld [vmem:[%s1 + $0xa8] sm:$0xf]
      %v363 = vld [vmem:[%s1 + $0xac] sm:$0xf]
      %v364 = vld [vmem:[%s1 + $0xb0] sm:$0xf]
      %v365 = vld [vmem:[%s1 + $0xb4] sm:$0xf]
      %v366 = vld [vmem:[%s1 + $0xb8] sm:$0xf]
      %v367 = vld [vmem:[%s1 + $0xbc] sm:$0xf]
      %v432 = vunpack.c.l.b16 %v256
      %v433 = vunpack.c.h.b16 %v256
      %v434 = vunpack.c.l.b16 %v257
      %v435 = vunpack.c.l.b16 %v258
      %v436 = vunpack.c.h.b16 %v258
      %v437 = vunpack.c.l.b16 %v259
      %v438 = vunpack.c.l.b16 %v260
      %v439 = vunpack.c.h.b16 %v260
      %v440 = vunpack.c.l.b16 %v261
      %v441 = vunpack.c.l.b16 %v262
      %v442 = vunpack.c.h.b16 %v262
      %v443 = vunpack.c.l.b16 %v263
      %v444 = vunpack.c.l.b16 %v264
      %v445 = vunpack.c.h.b16 %v264
      %v446 = vunpack.c.l.b16 %v265
      %v447 = vunpack.c.l.b16 %v266
      %v448 = vunpack.c.h.b16 %v266
      %v449 = vunpack.c.l.b16 %v267
      %v450 = vunpack.c.l.b16 %v268
      %v451 = vunpack.c.h.b16 %v268
      %v452 = vunpack.c.l.b16 %v269
      %v453 = vunpack.c.l.b16 %v270
      %v454 = vunpack.c.h.b16 %v270
      %v455 = vunpack.c.l.b16 %v271
      %v456 = vunpack.c.l.b16 %v272
      %v457 = vunpack.c.h.b16 %v272
      %v458 = vunpack.c.l.b16 %v273
      %v459 = vunpack.c.l.b16 %v274
      %v460 = vunpack.c.h.b16 %v274
      %v461 = vunpack.c.l.b16 %v275
      %v462 = vunpack.c.l.b16 %v276
      %v463 = vunpack.c.h.b16 %v276
      %v464 = vunpack.c.l.b16 %v277
      %v465 = vunpack.c.l.b16 %v278
      %v466 = vunpack.c.h.b16 %v278
      %v467 = vunpack.c.l.b16 %v279
      %v468 = vunpack.c.l.b16 %v280
      %v469 = vunpack.c.h.b16 %v280
      %v470 = vunpack.c.l.b16 %v281
      %v471 = vunpack.c.l.b16 %v282
      %v472 = vunpack.c.h.b16 %v282
      %v473 = vunpack.c.l.b16 %v283
      %v474 = vunpack.c.l.b16 %v284
      %v475 = vunpack.c.h.b16 %v284
      %v476 = vunpack.c.l.b16 %v285
      %v477 = vunpack.c.l.b16 %v286
      %v478 = vunpack.c.h.b16 %v286
      %v479 = vunpack.c.l.b16 %v287
      %v480 = vunpack.c.l.b16 %v288
      %v481 = vunpack.c.h.b16 %v288
      %v482 = vunpack.c.l.b16 %v289
      %v483 = vunpack.c.l.b16 %v290
      %v484 = vunpack.c.h.b16 %v290
      %v485 = vunpack.c.l.b16 %v291
      %v486 = vunpack.c.l.b16 %v292
      %v487 = vunpack.c.h.b16 %v292
      %v488 = vunpack.c.l.b16 %v293
      %v489 = vunpack.c.l.b16 %v294
      %v490 = vunpack.c.h.b16 %v294
      %v491 = vunpack.c.l.b16 %v295
      %v492 = vunpack.c.l.b16 %v296
      %v493 = vunpack.c.h.b16 %v296
      %v494 = vunpack.c.l.b16 %v297
      %v495 = vunpack.c.l.b16 %v298
      %v496 = vunpack.c.h.b16 %v298
      %v497 = vunpack.c.l.b16 %v299
      %v498 = vunpack.c.l.b16 %v300
      %v499 = vunpack.c.h.b16 %v300
      %v500 = vunpack.c.l.b16 %v301
      %v501 = vunpack.c.l.b16 %v302
      %v502 = vunpack.c.h.b16 %v302
      %v503 = vunpack.c.l.b16 %v303
      %v504 = vunpack.c.l.b16 %v304
      %v505 = vunpack.c.h.b16 %v304
      %v506 = vunpack.c.l.b16 %v305
      %v507 = vunpack.c.l.b16 %v306
      %v508 = vunpack.c.h.b16 %v306
      %v509 = vunpack.c.l.b16 %v307
      %v510 = vunpack.c.l.b16 %v308
      %v511 = vunpack.c.h.b16 %v308
      %v512 = vunpack.c.l.b16 %v309
      %v513 = vunpack.c.l.b16 %v310
      %v514 = vunpack.c.h.b16 %v310
      %v515 = vunpack.c.l.b16 %v311
      %v516 = vunpack.c.l.b16 %v312
      %v517 = vunpack.c.h.b16 %v312
      %v518 = vunpack.c.l.b16 %v313
      %v519 = vunpack.c.l.b16 %v314
      %v520 = vunpack.c.h.b16 %v314
      %v521 = vunpack.c.l.b16 %v315
      %v522 = vunpack.c.l.b16 %v316
      %v523 = vunpack.c.h.b16 %v316
      %v524 = vunpack.c.l.b16 %v317
      %v525 = vunpack.c.l.b16 %v318
      %v526 = vunpack.c.h.b16 %v318
      %v527 = vunpack.c.l.b16 %v319
      %v528 = vpack.c.b16 %v435, %v432
      %v529 = vpack.c.b16 %v436, %v433
      %v530 = vpack.c.b16 %v437, %v434
      %v531 = vpack.c.b16 %v441, %v438
      %v532 = vpack.c.b16 %v442, %v439
      %v533 = vpack.c.b16 %v443, %v440
      %v534 = vpack.c.b16 %v447, %v444
      %v535 = vpack.c.b16 %v448, %v445
      %v536 = vpack.c.b16 %v449, %v446
      %v537 = vpack.c.b16 %v453, %v450
      %v538 = vpack.c.b16 %v454, %v451
      %v539 = vpack.c.b16 %v455, %v452
      %v540 = vpack.c.b16 %v459, %v456
      %v541 = vpack.c.b16 %v460, %v457
      %v542 = vpack.c.b16 %v461, %v458
      %v543 = vpack.c.b16 %v465, %v462
      %v544 = vpack.c.b16 %v466, %v463
      %v545 = vpack.c.b16 %v467, %v464
      %v546 = vpack.c.b16 %v471, %v468
      %v547 = vpack.c.b16 %v472, %v469
      %v548 = vpack.c.b16 %v473, %v470
      %v549 = vpack.c.b16 %v477, %v474
      %v550 = vpack.c.b16 %v478, %v475
      %v551 = vpack.c.b16 %v479, %v476
      %v552 = vpack.c.b16 %v483, %v480
      %v553 = vpack.c.b16 %v484, %v481
      %v554 = vpack.c.b16 %v485, %v482
      %v555 = vpack.c.b16 %v489, %v486
      %v556 = vpack.c.b16 %v490, %v487
      %v557 = vpack.c.b16 %v491, %v488
      %v558 = vpack.c.b16 %v495, %v492
      %v559 = vpack.c.b16 %v496, %v493
      %v560 = vpack.c.b16 %v497, %v494
      %v561 = vpack.c.b16 %v501, %v498
      %v562 = vpack.c.b16 %v502, %v499
      %v563 = vpack.c.b16 %v503, %v500
      %v564 = vpack.c.b16 %v507, %v504
      %v565 = vpack.c.b16 %v508, %v505
      %v566 = vpack.c.b16 %v509, %v506
      %v567 = vpack.c.b16 %v513, %v510
      %v568 = vpack.c.b16 %v514, %v511
      %v569 = vpack.c.b16 %v515, %v512
      %v570 = vpack.c.b16 %v519, %v516
      %v571 = vpack.c.b16 %v520, %v517
      %v572 = vpack.c.b16 %v521, %v518
      %v573 = vpack.c.b16 %v525, %v522
      %v574 = vpack.c.b16 %v526, %v523
      %v575 = vpack.c.b16 %v527, %v524
      %v672 = vunpack.c.l.b16 %v320
      %v673 = vunpack.c.l.b16 %v321
      %v674 = vunpack.c.l.b16 %v322
      %v675 = vunpack.c.l.b16 %v323
      %v676 = vunpack.c.l.b16 %v324
      %v677 = vunpack.c.l.b16 %v325
      %v678 = vunpack.c.l.b16 %v326
      %v679 = vunpack.c.l.b16 %v327
      %v680 = vunpack.c.l.b16 %v328
      %v681 = vunpack.c.l.b16 %v329
      %v682 = vunpack.c.l.b16 %v330
      %v683 = vunpack.c.l.b16 %v331
      %v684 = vunpack.c.l.b16 %v332
      %v685 = vunpack.c.l.b16 %v333
      %v686 = vunpack.c.l.b16 %v334
      %v687 = vunpack.c.l.b16 %v335
      %v688 = vunpack.c.l.b16 %v336
      %v689 = vunpack.c.l.b16 %v337
      %v690 = vunpack.c.l.b16 %v338
      %v691 = vunpack.c.l.b16 %v339
      %v692 = vunpack.c.l.b16 %v340
      %v693 = vunpack.c.l.b16 %v341
      %v694 = vunpack.c.l.b16 %v342
      %v695 = vunpack.c.l.b16 %v343
      %v696 = vunpack.c.l.b16 %v344
      %v697 = vunpack.c.l.b16 %v345
      %v698 = vunpack.c.l.b16 %v346
      %v699 = vunpack.c.l.b16 %v347
      %v700 = vunpack.c.l.b16 %v348
      %v701 = vunpack.c.l.b16 %v349
      %v702 = vunpack.c.l.b16 %v350
      %v703 = vunpack.c.l.b16 %v351
      %v704 = vunpack.c.l.b16 %v352
      %v705 = vunpack.c.l.b16 %v353
      %v706 = vunpack.c.l.b16 %v354
      %v707 = vunpack.c.l.b16 %v355
      %v708 = vunpack.c.l.b16 %v356
      %v709 = vunpack.c.l.b16 %v357
      %v710 = vunpack.c.l.b16 %v358
      %v711 = vunpack.c.l.b16 %v359
      %v712 = vunpack.c.l.b16 %v360
      %v713 = vunpack.c.l.b16 %v361
      %v714 = vunpack.c.l.b16 %v362
      %v715 = vunpack.c.l.b16 %v363
      %v716 = vunpack.c.l.b16 %v364
      %v717 = vunpack.c.l.b16 %v365
      %v718 = vunpack.c.l.b16 %v366
      %v719 = vunpack.c.l.b16 %v367
      %v720 = vpack.c.b16 %v673, %v672
      %v721 = vpack.c.b16 %v675, %v674
      %v722 = vpack.c.b16 %v677, %v676
      %v723 = vpack.c.b16 %v679, %v678
      %v724 = vpack.c.b16 %v681, %v680
      %v725 = vpack.c.b16 %v683, %v682
      %v726 = vpack.c.b16 %v685, %v684
      %v727 = vpack.c.b16 %v687, %v686
      %v728 = vpack.c.b16 %v689, %v688
      %v729 = vpack.c.b16 %v691, %v690
      %v730 = vpack.c.b16 %v693, %v692
      %v731 = vpack.c.b16 %v695, %v694
      %v732 = vpack.c.b16 %v697, %v696
      %v733 = vpack.c.b16 %v699, %v698
      %v734 = vpack.c.b16 %v701, %v700
      %v735 = vpack.c.b16 %v703, %v702
      %v736 = vpack.c.b16 %v705, %v704
      %v737 = vpack.c.b16 %v707, %v706
      %v738 = vpack.c.b16 %v709, %v708
      %v739 = vpack.c.b16 %v711, %v710
      %v740 = vpack.c.b16 %v713, %v712
      %v741 = vpack.c.b16 %v715, %v714
      %v742 = vpack.c.b16 %v717, %v716
      %v743 = vpack.c.b16 %v719, %v718
      %768 = vmatprep.subr.bf16.mxu0 0
      %769 = vmatpush1.bf16.msra.mxu0 %v720
      %770 = vmatprep.subr.bf16.mxu0 0
      %771 = vmatpush1.bf16.msra.mxu0 %v721
      %772 = vmatprep.subr.bf16.mxu0 0
      %773 = vmatpush1.bf16.msra.mxu0 %v722
      %774 = vmatprep.subr.bf16.mxu0 0
      %775 = vmatpush1.bf16.msra.mxu0 %v723
      %776 = vmatprep.subr.bf16.mxu0 0
      %777 = vmatpush1.bf16.msra.mxu0 %v724
      %778 = vmatprep.subr.bf16.mxu0 0
      %779 = vmatpush1.bf16.msra.mxu0 %v725
      %780 = vmatprep.subr.bf16.mxu0 0
      %781 = vmatpush1.bf16.msra.mxu0 %v726
      %782 = vmatprep.subr.bf16.mxu0 0
      %783 = vmatpush1.bf16.msra.mxu0 %v727
      %784 = vmatprep.subr.bf16.mxu0 0
      %785 = vmatpush1.bf16.msra.mxu0 %v728
      %786 = vmatprep.subr.bf16.mxu0 0
      %787 = vmatpush1.bf16.msra.mxu0 %v729
      %788 = vmatprep.subr.bf16.mxu0 0
      %789 = vmatpush1.bf16.msra.mxu0 %v730
      %790 = vmatprep.subr.bf16.mxu0 0
      %791 = vmatpush1.bf16.msra.mxu0 %v731
      %792 = vmatprep.subr.bf16.mxu0 0
      %793 = vmatpush1.bf16.msra.mxu0 %v732
      %794 = vmatprep.subr.bf16.mxu0 0
      %795 = vmatpush1.bf16.msra.mxu0 %v733
      %796 = vmatprep.subr.bf16.mxu0 0
      %797 = vmatpush1.bf16.msra.mxu0 %v734
      %798 = vmatprep.subr.bf16.mxu0 0
      %799 = vmatpush1.bf16.msra.mxu0 %v735
      %800 = vmatprep.mubr.bf16.mxu0 %v529
      %801 = vmatmul.mubr.bf16.gmra.mrb[0].mxu0 %v528
      %v802 = vpop.f32.mrb[0].mxu0
      %v803 = vadd.f32 0.0, %v802
      %v804 = vpop.f32.mrb[0].mxu0
      %v805 = vpop.f32.mrb[0].mxu0
      %v806 = vadd.f32 0.0, %v805
      %v807 = vpop.f32.mrb[0].mxu0
      %808 = vmatprep.mubr.bf16.mxu0 %v532
      %809 = vmatmul.mubr.bf16.gmra.mrb[0].mxu0 %v531
      %v810 = vpop.f32.mrb[0].mxu0
      %v811 = vadd.f32 0.0, %v810
      %v812 = vpop.f32.mrb[0].mxu0
      %v813 = vpop.f32.mrb[0].mxu0
      %v814 = vadd.f32 0.0, %v813
      %v815 = vpop.f32.mrb[0].mxu0
      %816 = vmatprep.mubr.bf16.mxu0 %v535
      %817 = vmatmul.mubr.bf16.gmra.mrb[0].mxu0 %v534
      %v818 = vpop.f32.mrb[0].mxu0
      %v819 = vadd.f32 0.0, %v818
      %v820 = vpop.f32.mrb[0].mxu0
      %v821 = vpop.f32.mrb[0].mxu0
      %v822 = vadd.f32 0.0, %v821
      %v823 = vpop.f32.mrb[0].mxu0
      %824 = vmatprep.mubr.bf16.mxu0 %v538
      %825 = vmatmul.mubr.bf16.gmra.mrb[0].mxu0 %v537
      %v826 = vpop.f32.mrb[0].mxu0
      %v827 = vadd.f32 0.0, %v826
      %v828 = vpop.f32.mrb[0].mxu0
      %v829 = vpop.f32.mrb[0].mxu0
      %v830 = vadd.f32 0.0, %v829
      %v831 = vpop.f32.mrb[0].mxu0
      %832 = vmatprep.mubr.bf16.mxu0 %v541
      %833 = vmatmul.mubr.bf16.gmra.mrb[0].mxu0 %v540
      %v834 = vpop.f32.mrb[0].mxu0
      %v835 = vadd.f32 0.0, %v834
      %v836 = vpop.f32.mrb[0].mxu0
      %v837 = vpop.f32.mrb[0].mxu0
      %v838 = vadd.f32 0.0, %v837
      %v839 = vpop.f32.mrb[0].mxu0
      %840 = vmatprep.mubr.bf16.mxu0 %v544
      %841 = vmatmul.mubr.bf16.gmra.mrb[0].mxu0 %v543
      %v842 = vpop.f32.mrb[0].mxu0
      %v843 = vadd.f32 0.0, %v842
      %v844 = vpop.f32.mrb[0].mxu0
      %v845 = vpop.f32.mrb[0].mxu0
      %v846 = vadd.f32 0.0, %v845
      %v847 = vpop.f32.mrb[0].mxu0
      %848 = vmatprep.mubr.bf16.mxu0 %v547
      %849 = vmatmul.mubr.bf16.gmra.mrb[0].mxu0 %v546
      %v850 = vpop.f32.mrb[0].mxu0
      %v851 = vadd.f32 0.0, %v850
      %v852 = vpop.f32.mrb[0].mxu0
      %v853 = vpop.f32.mrb[0].mxu0
      %v854 = vadd.f32 0.0, %v853
      %v855 = vpop.f32.mrb[0].mxu0
      %856 = vmatprep.mubr.bf16.mxu0 %v550
      %857 = vmatmul.mubr.bf16.gmra.mrb[0].mxu0 %v549
      %v858 = vpop.f32.mrb[0].mxu0
      %v859 = vadd.f32 0.0, %v858
      %v860 = vpop.f32.mrb[0].mxu0
      %v861 = vpop.f32.mrb[0].mxu0
      %v862 = vadd.f32 0.0, %v861
      %v863 = vpop.f32.mrb[0].mxu0
      %864 = vmatprep.mubr.bf16.mxu0 %v553
      %865 = vmatmul.mubr.bf16.gmra.mrb[0].mxu0 %v552
      %v866 = vpop.f32.mrb[0].mxu0
      %v867 = vadd.f32 0.0, %v866
      %v868 = vpop.f32.mrb[0].mxu0
      %v869 = vpop.f32.mrb[0].mxu0
      %v870 = vadd.f32 0.0, %v869
      %v871 = vpop.f32.mrb[0].mxu0
      %872 = vmatprep.mubr.bf16.mxu0 %v556
      %873 = vmatmul.mubr.bf16.gmra.mrb[0].mxu0 %v555
      %v874 = vpop.f32.mrb[0].mxu0
      %v875 = vadd.f32 0.0, %v874
      %v876 = vpop.f32.mrb[0].mxu0
      %v877 = vpop.f32.mrb[0].mxu0
      %v878 = vadd.f32 0.0, %v877
      %v879 = vpop.f32.mrb[0].mxu0
      %880 = vmatprep.mubr.bf16.mxu0 %v559
      %881 = vmatmul.mubr.bf16.gmra.mrb[0].mxu0 %v558
      %v882 = vpop.f32.mrb[0].mxu0
      %v883 = vadd.f32 0.0, %v882
      %v884 = vpop.f32.mrb[0].mxu0
      %v885 = vpop.f32.mrb[0].mxu0
      %v886 = vadd.f32 0.0, %v885
      %v887 = vpop.f32.mrb[0].mxu0
      %888 = vmatprep.mubr.bf16.mxu0 %v562
      %889 = vmatmul.mubr.bf16.gmra.mrb[0].mxu0 %v561
      %v890 = vpop.f32.mrb[0].mxu0
      %v891 = vadd.f32 0.0, %v890
      %v892 = vpop.f32.mrb[0].mxu0
      %v893 = vpop.f32.mrb[0].mxu0
      %v894 = vadd.f32 0.0, %v893
      %v895 = vpop.f32.mrb[0].mxu0
      %896 = vmatprep.mubr.bf16.mxu0 %v565
      %897 = vmatmul.mubr.bf16.gmra.mrb[0].mxu0 %v564
      %v898 = vpop.f32.mrb[0].mxu0
      %v899 = vadd.f32 0.0, %v898
      %v900 = vpop.f32.mrb[0].mxu0
      %v901 = vpop.f32.mrb[0].mxu0
      %v902 = vadd.f32 0.0, %v901
      %v903 = vpop.f32.mrb[0].mxu0
      %904 = vmatprep.mubr.bf16.mxu0 %v568
      %905 = vmatmul.mubr.bf16.gmra.mrb[0].mxu0 %v567
      %v906 = vpop.f32.mrb[0].mxu0
      %v907 = vadd.f32 0.0, %v906
      %v908 = vpop.f32.mrb[0].mxu0
      %v909 = vpop.f32.mrb[0].mxu0
      %v910 = vadd.f32 0.0, %v909
      %v911 = vpop.f32.mrb[0].mxu0
      %912 = vmatprep.mubr.bf16.mxu0 %v571
      %913 = vmatmul.mubr.bf16.gmra.mrb[0].mxu0 %v570
      %v914 = vpop.f32.mrb[0].mxu0
      %v915 = vadd.f32 0.0, %v914
      %v916 = vpop.f32.mrb[0].mxu0
      %v917 = vpop.f32.mrb[0].mxu0
      %v918 = vadd.f32 0.0, %v917
      %v919 = vpop.f32.mrb[0].mxu0
      %920 = vmatprep.mubr.bf16.mxu0 %v574
      %921 = vmatmul.mubr.bf16.gmra.mrb[0].mxu0 %v573
      %v922 = vpop.f32.mrb[0].mxu0
      %v923 = vadd.f32 0.0, %v922
      %v924 = vpop.f32.mrb[0].mxu0
      %v925 = vpop.f32.mrb[0].mxu0
      %v926 = vadd.f32 0.0, %v925
      %v927 = vpop.f32.mrb[0].mxu0
      %928 = vdwg.mxu0
      %929 = vmatprep.subr.bf16.mxu0 0
      %930 = vmatpush1.bf16.msra.mxu0 %v736
      %931 = vmatprep.subr.bf16.mxu0 0
      %932 = vmatpush1.bf16.msra.mxu0 %v737
      %933 = vmatprep.subr.bf16.mxu0 0
      %934 = vmatpush1.bf16.msra.mxu0 %v738
      %935 = vmatprep.subr.bf16.mxu0 0
      %936 = vmatpush1.bf16.msra.mxu0 %v739
      %937 = vmatprep.subr.bf16.mxu0 0
      %938 = vmatpush1.bf16.msra.mxu0 %v740
      %939 = vmatprep.subr.bf16.mxu0 0
      %940 = vmatpush1.bf16.msra.mxu0 %v741
      %941 = vmatprep.subr.bf16.mxu0 0
      %942 = vmatpush1.bf16.msra.mxu0 %v742
      %943 = vmatprep.subr.bf16.mxu0 0
      %944 = vmatpush1.bf16.msra.mxu0 %v743
      %945 = vmatprep.subr.bf16.mxu0 0
      %946 = vmatpush1.bf16.msra.mxu0 0
      %947 = vmatprep.subr.bf16.mxu0 0
      %948 = vmatpush1.bf16.msra.mxu0 0
      %949 = vmatprep.subr.bf16.mxu0 0
      %950 = vmatpush1.bf16.msra.mxu0 0
      %951 = vmatprep.subr.bf16.mxu0 0
      %952 = vmatpush1.bf16.msra.mxu0 0
      %953 = vmatprep.subr.bf16.mxu0 0
      %954 = vmatpush1.bf16.msra.mxu0 0
      %955 = vmatprep.subr.bf16.mxu0 0
      %956 = vmatpush1.bf16.msra.mxu0 0
      %957 = vmatprep.subr.bf16.mxu0 0
      %958 = vmatpush1.bf16.msra.mxu0 0
      %959 = vmatprep.subr.bf16.mxu0 0
      %960 = vmatpush1.bf16.msra.mxu0 0
      %961 = vmatprep.mubr.bf16.mxu0 0
      %962 = vmatmul.mubr.bf16.gmra.mrb[0].mxu0 %v530
      %v963 = vpop.f32.mrb[0].mxu0
      %v964 = vadd.f32 %v803, %v963
      %v965 = vpop.f32.mrb[0].mxu0
      %v966 = vpop.f32.mrb[0].mxu0
      %v967 = vadd.f32 %v806, %v966
      %v968 = vpop.f32.mrb[0].mxu0
      %969 = vmatprep.mubr.bf16.mxu0 0
      %970 = vmatmul.mubr.bf16.gmra.mrb[0].mxu0 %v533
      %v971 = vpop.f32.mrb[0].mxu0
      %v972 = vadd.f32 %v811, %v971
      %v973 = vpop.f32.mrb[0].mxu0
      %v974 = vpop.f32.mrb[0].mxu0
      %v975 = vadd.f32 %v814, %v974
      %v976 = vpop.f32.mrb[0].mxu0
      %977 = vmatprep.mubr.bf16.mxu0 0
      %978 = vmatmul.mubr.bf16.gmra.mrb[0].mxu0 %v536
      %v979 = vpop.f32.mrb[0].mxu0
      %v980 = vadd.f32 %v819, %v979
      %v981 = vpop.f32.mrb[0].mxu0
      %v982 = vpop.f32.mrb[0].mxu0
      %v983 = vadd.f32 %v822, %v982
      %v984 = vpop.f32.mrb[0].mxu0
      %985 = vmatprep.mubr.bf16.mxu0 0
      %986 = vmatmul.mubr.bf16.gmra.mrb[0].mxu0 %v539
      %v987 = vpop.f32.mrb[0].mxu0
      %v988 = vadd.f32 %v827, %v987
      %v989 = vpop.f32.mrb[0].mxu0
      %v990 = vpop.f32.mrb[0].mxu0
      %v991 = vadd.f32 %v830, %v990
      %v992 = vpop.f32.mrb[0].mxu0
      %993 = vmatprep.mubr.bf16.mxu0 0
      %994 = vmatmul.mubr.bf16.gmra.mrb[0].mxu0 %v542
      %v995 = vpop.f32.mrb[0].mxu0
      %v996 = vadd.f32 %v835, %v995
      %v997 = vpop.f32.mrb[0].mxu0
      %v998 = vpop.f32.mrb[0].mxu0
      %v999 = vadd.f32 %v838, %v998
      %v1000 = vpop.f32.mrb[0].mxu0
      %1001 = vmatprep.mubr.bf16.mxu0 0
      %1002 = vmatmul.mubr.bf16.gmra.mrb[0].mxu0 %v545
      %v1003 = vpop.f32.mrb[0].mxu0
      %v1004 = vadd.f32 %v843, %v1003
      %v1005 = vpop.f32.mrb[0].mxu0
      %v1006 = vpop.f32.mrb[0].mxu0
      %v1007 = vadd.f32 %v846, %v1006
      %v1008 = vpop.f32.mrb[0].mxu0
      %1009 = vmatprep.mubr.bf16.mxu0 0
      %1010 = vmatmul.mubr.bf16.gmra.mrb[0].mxu0 %v548
      %v1011 = vpop.f32.mrb[0].mxu0
      %v1012 = vadd.f32 %v851, %v1011
      %v1013 = vpop.f32.mrb[0].mxu0
      %v1014 = vpop.f32.mrb[0].mxu0
      %v1015 = vadd.f32 %v854, %v1014
      %v1016 = vpop.f32.mrb[0].mxu0
      %1017 = vmatprep.mubr.bf16.mxu0 0
      %1018 = vmatmul.mubr.bf16.gmra.mrb[0].mxu0 %v551
      %v1019 = vpop.f32.mrb[0].mxu0
      %v1020 = vadd.f32 %v859, %v1019
      %v1021 = vpop.f32.mrb[0].mxu0
      %v1022 = vpop.f32.mrb[0].mxu0
      %v1023 = vadd.f32 %v862, %v1022
      %v1024 = vpop.f32.mrb[0].mxu0
      %1025 = vmatprep.mubr.bf16.mxu0 0
      %1026 = vmatmul.mubr.bf16.gmra.mrb[0].mxu0 %v554
      %v1027 = vpop.f32.mrb[0].mxu0
      %v1028 = vadd.f32 %v867, %v1027
      %v1029 = vpop.f32.mrb[0].mxu0
      %v1030 = vpop.f32.mrb[0].mxu0
      %v1031 = vadd.f32 %v870, %v1030
      %v1032 = vpop.f32.mrb[0].mxu0
      %1033 = vmatprep.mubr.bf16.mxu0 0
      %1034 = vmatmul.mubr.bf16.gmra.mrb[0].mxu0 %v557
      %v1035 = vpop.f32.mrb[0].mxu0
      %v1036 = vadd.f32 %v875, %v1035
      %v1037 = vpop.f32.mrb[0].mxu0
      %v1038 = vpop.f32.mrb[0].mxu0
      %v1039 = vadd.f32 %v878, %v1038
      %v1040 = vpop.f32.mrb[0].mxu0
      %1041 = vmatprep.mubr.bf16.mxu0 0
      %1042 = vmatmul.mubr.bf16.gmra.mrb[0].mxu0 %v560
      %v1043 = vpop.f32.mrb[0].mxu0
      %v1044 = vadd.f32 %v883, %v1043
      %v1045 = vpop.f32.mrb[0].mxu0
      %v1046 = vpop.f32.mrb[0].mxu0
      %v1047 = vadd.f32 %v886, %v1046
      %v1048 = vpop.f32.mrb[0].mxu0
      %1049 = vmatprep.mubr.bf16.mxu0 0
      %1050 = vmatmul.mubr.bf16.gmra.mrb[0].mxu0 %v563
      %v1051 = vpop.f32.mrb[0].mxu0
      %v1052 = vadd.f32 %v891, %v1051
      %v1053 = vpop.f32.mrb[0].mxu0
      %v1054 = vpop.f32.mrb[0].mxu0
      %v1055 = vadd.f32 %v894, %v1054
      %v1056 = vpop.f32.mrb[0].mxu0
      %1057 = vmatprep.mubr.bf16.mxu0 0
      %1058 = vmatmul.mubr.bf16.gmra.mrb[0].mxu0 %v566
      %v1059 = vpop.f32.mrb[0].mxu0
      %v1060 = vadd.f32 %v899, %v1059
      %v1061 = vpop.f32.mrb[0].mxu0
      %v1062 = vpop.f32.mrb[0].mxu0
      %v1063 = vadd.f32 %v902, %v1062
      %v1064 = vpop.f32.mrb[0].mxu0
      %1065 = vmatprep.mubr.bf16.mxu0 0
      %1066 = vmatmul.mubr.bf16.gmra.mrb[0].mxu0 %v569
      %v1067 = vpop.f32.mrb[0].mxu0
      %v1068 = vadd.f32 %v907, %v1067
      %v1069 = vpop.f32.mrb[0].mxu0
      %v1070 = vpop.f32.mrb[0].mxu0
      %v1071 = vadd.f32 %v910, %v1070
      %v1072 = vpop.f32.mrb[0].mxu0
      %1073 = vmatprep.mubr.bf16.mxu0 0
      %1074 = vmatmul.mubr.bf16.gmra.mrb[0].mxu0 %v572
      %v1075 = vpop.f32.mrb[0].mxu0
      %v1076 = vadd.f32 %v915, %v1075
      %v1077 = vpop.f32.mrb[0].mxu0
      %v1078 = vpop.f32.mrb[0].mxu0
      %v1079 = vadd.f32 %v918, %v1078
      %v1080 = vpop.f32.mrb[0].mxu0
      %1081 = vmatprep.mubr.bf16.mxu0 0
      %1082 = vmatmul.mubr.bf16.gmra.mrb[0].mxu0 %v575
      %v1083 = vpop.f32.mrb[0].mxu0
      %v1084 = vadd.f32 %v923, %v1083
      %v1085 = vpop.f32.mrb[0].mxu0
      %v1086 = vpop.f32.mrb[0].mxu0
      %v1087 = vadd.f32 %v926, %v1086
      %v1088 = vpop.f32.mrb[0].mxu0
      %1089 = vdwg.mxu0
      %1090 = vst [vmem:[#allocation2] sm:$0xff] %v964
      %1091 = vst [vmem:[#allocation2 + $0x8] sm:$0xff] %v967
      %1092 = vst [vmem:[#allocation2 + $0x10] sm:$0xff] %v972
      %1093 = vst [vmem:[#allocation2 + $0x18] sm:$0xff] %v975
      %1094 = vst [vmem:[#allocation2 + $0x20] sm:$0xff] %v980
      %1095 = vst [vmem:[#allocation2 + $0x28] sm:$0xff] %v983
      %1096 = vst [vmem:[#allocation2 + $0x30] sm:$0xff] %v988
      %1097 = vst [vmem:[#allocation2 + $0x38] sm:$0xff] %v991
      %1098 = vst [vmem:[#allocation2 + $0x40] sm:$0xff] %v996
      %1099 = vst [vmem:[#allocation2 + $0x48] sm:$0xff] %v999
      %1100 = vst [vmem:[#allocation2 + $0x50] sm:$0xff] %v1004
      %1101 = vst [vmem:[#allocation2 + $0x58] sm:$0xff] %v1007
      %1102 = vst [vmem:[#allocation2 + $0x60] sm:$0xff] %v1012
      %1103 = vst [vmem:[#allocation2 + $0x68] sm:$0xff] %v1015
      %1104 = vst [vmem:[#allocation2 + $0x70] sm:$0xff] %v1020
      %1105 = vst [vmem:[#allocation2 + $0x78] sm:$0xff] %v1023
      %1106 = vst [vmem:[#allocation2 + $0x80] sm:$0xff] %v1028
      %1107 = vst [vmem:[#allocation2 + $0x88] sm:$0xff] %v1031
      %1108 = vst [vmem:[#allocation2 + $0x90] sm:$0xff] %v1036
      %1109 = vst [vmem:[#allocation2 + $0x98] sm:$0xff] %v1039
      %1110 = vst [vmem:[#allocation2 + $0xa0] sm:$0xff] %v1044
      %1111 = vst [vmem:[#allocation2 + $0xa8] sm:$0xff] %v1047
      %1112 = vst [vmem:[#allocation2 + $0xb0] sm:$0xff] %v1052
      %1113 = vst [vmem:[#allocation2 + $0xb8] sm:$0xff] %v1055
      %1114 = vst [vmem:[#allocation2 + $0xc0] sm:$0xff] %v1060
      %1115 = vst [vmem:[#allocation2 + $0xc8] sm:$0xff] %v1063
      %1116 = vst [vmem:[#allocation2 + $0xd0] sm:$0xff] %v1068
      %1117 = vst [vmem:[#allocation2 + $0xd8] sm:$0xff] %v1071
      %1118 = vst [vmem:[#allocation2 + $0xe0] sm:$0xff] %v1076
      %1119 = vst [vmem:[#allocation2 + $0xe8] sm:$0xff] %v1079
      %1120 = vst [vmem:[#allocation2 + $0xf0] sm:$0xff] %v1084
      %1121 = vst [vmem:[#allocation2 + $0xf8] sm:$0xff] %v1087
      %v1122 = vld [vmem:[%s243 + $0x18] sm:$0xff]
      %v1123 = vld [vmem:[%s243 + $0x20] sm:$0xf]
      %v1124 = vld [vmem:[%s243 + $0x24] sm:$0xff]
      %v1125 = vld [vmem:[%s243 + $0x2c] sm:$0xf]
      %v1126 = vld [vmem:[%s243 + $0x30] sm:$0xff]
      %v1127 = vld [vmem:[%s243 + $0x38] sm:$0xf]
      %v1128 = vld [vmem:[%s243 + $0x3c] sm:$0xff]
      %v1129 = vld [vmem:[%s243 + $0x44] sm:$0xf]
      %v1130 = vld [vmem:[%s243 + $0x48] sm:$0xff]
      %v1131 = vld [vmem:[%s243 + $0x50] sm:$0xf]
      %v1132 = vld [vmem:[%s243 + $0x54] sm:$0xff]
      %v1133 = vld [vmem:[%s243 + $0x5c] sm:$0xf]
      %v1134 = vld [vmem:[%s243 + $0x60] sm:$0xff]
      %v1135 = vld [vmem:[%s243 + $0x68] sm:$0xf]
      %v1136 = vld [vmem:[%s243 + $0x6c] sm:$0xff]
      %v1137 = vld [vmem:[%s243 + $0x74] sm:$0xf]
      %v1138 = vld [vmem:[%s243 + $0x78] sm:$0xff]
      %v1139 = vld [vmem:[%s243 + $0x80] sm:$0xf]
      %v1140 = vld [vmem:[%s243 + $0x84] sm:$0xff]
      %v1141 = vld [vmem:[%s243 + $0x8c] sm:$0xf]
      %v1142 = vld [vmem:[%s243 + $0x90] sm:$0xff]
      %v1143 = vld [vmem:[%s243 + $0x98] sm:$0xf]
      %v1144 = vld [vmem:[%s243 + $0x9c] sm:$0xff]
      %v1145 = vld [vmem:[%s243 + $0xa4] sm:$0xf]
      %v1146 = vld [vmem:[%s243 + $0xa8] sm:$0xff]
      %v1147 = vld [vmem:[%s243 + $0xb0] sm:$0xf]
      %v1148 = vld [vmem:[%s243 + $0xb4] sm:$0xff]
      %v1149 = vld [vmem:[%s243 + $0xbc] sm:$0xf]
      %v1150 = vld [vmem:[%s243 + $0xc0] sm:$0xff]
      %v1151 = vld [vmem:[%s243 + $0xc8] sm:$0xf]
      %v1152 = vld [vmem:[%s243 + $0xcc] sm:$0xff]
      %v1153 = vld [vmem:[%s243 + $0xd4] sm:$0xf]
      %v1154 = vld [vmem:[%s243 + $0xd8] sm:$0xff]
      %v1155 = vld [vmem:[%s243 + $0xe0] sm:$0xf]
      %v1156 = vld [vmem:[%s243 + $0xe4] sm:$0xff]
      %v1157 = vld [vmem:[%s243 + $0xec] sm:$0xf]
      %v1158 = vld [vmem:[%s243 + $0xf0] sm:$0xff]
      %v1159 = vld [vmem:[%s243 + $0xf8] sm:$0xf]
      %v1160 = vld [vmem:[%s243 + $0xfc] sm:$0xff]
      %v1161 = vld [vmem:[%s243 + $0x104] sm:$0xf]
      %v1162 = vld [vmem:[%s243 + $0x108] sm:$0xff]
      %v1163 = vld [vmem:[%s243 + $0x110] sm:$0xf]
      %v1164 = vld [vmem:[%s243 + $0x114] sm:$0xff]
      %v1165 = vld [vmem:[%s243 + $0x11c] sm:$0xf]
      %v1166 = vld [vmem:[%s243 + $0x120] sm:$0xff]
      %v1167 = vld [vmem:[%s243 + $0x128] sm:$0xf]
      %v1168 = vld [vmem:[%s243 + $0x12c] sm:$0xff]
      %v1169 = vld [vmem:[%s243 + $0x134] sm:$0xf]
      %v1170 = vld [vmem:[%s243 + $0x138] sm:$0xff]
      %v1171 = vld [vmem:[%s243 + $0x140] sm:$0xf]
      %v1172 = vld [vmem:[%s243 + $0x144] sm:$0xff]
      %v1173 = vld [vmem:[%s243 + $0x14c] sm:$0xf]
      %v1174 = vld [vmem:[%s243 + $0x150] sm:$0xff]
      %v1175 = vld [vmem:[%s243 + $0x158] sm:$0xf]
      %v1176 = vld [vmem:[%s243 + $0x15c] sm:$0xff]
      %v1177 = vld [vmem:[%s243 + $0x164] sm:$0xf]
      %v1178 = vld [vmem:[%s243 + $0x168] sm:$0xff]
      %v1179 = vld [vmem:[%s243 + $0x170] sm:$0xf]
      %v1180 = vld [vmem:[%s243 + $0x174] sm:$0xff]
      %v1181 = vld [vmem:[%s243 + $0x17c] sm:$0xf]
      %v1182 = vld [vmem:[%s243 + $0x180] sm:$0xff]
      %v1183 = vld [vmem:[%s243 + $0x188] sm:$0xf]
      %v1184 = vld [vmem:[%s243 + $0x18c] sm:$0xff]
      %v1185 = vld [vmem:[%s243 + $0x194] sm:$0xf]
      %s1186 = scalar_lea.vmem %s1, 192
      %v1187 = vld [vmem:[%s1186] sm:$0xf]
      %v1188 = vld [vmem:[%s1186 + $0x4] sm:$0xf]
      %v1189 = vld [vmem:[%s1186 + $0x8] sm:$0xf]
      %v1190 = vld [vmem:[%s1186 + $0xc] sm:$0xf]
      %v1191 = vld [vmem:[%s1186 + $0x10] sm:$0xf]
      %v1192 = vld [vmem:[%s1186 + $0x14] sm:$0xf]
      %v1193 = vld [vmem:[%s1186 + $0x18] sm:$0xf]
      %v1194 = vld [vmem:[%s1186 + $0x1c] sm:$0xf]
      %v1195 = vld [vmem:[%s1186 + $0x20] sm:$0xf]
      %v1196 = vld [vmem:[%s1186 + $0x24] sm:$0xf]
      %v1197 = vld [vmem:[%s1186 + $0x28] sm:$0xf]
      %v1198 = vld [vmem:[%s1186 + $0x2c] sm:$0xf]
      %v1199 = vld [vmem:[%s1186 + $0x30] sm:$0xf]
      %v1200 = vld [vmem:[%s1186 + $0x34] sm:$0xf]
      %v1201 = vld [vmem:[%s1186 + $0x38] sm:$0xf]
      %v1202 = vld [vmem:[%s1186 + $0x3c] sm:$0xf]
      %v1203 = vld [vmem:[%s1186 + $0x40] sm:$0xf]
      %v1204 = vld [vmem:[%s1186 + $0x44] sm:$0xf]
      %v1205 = vld [vmem:[%s1186 + $0x48] sm:$0xf]
      %v1206 = vld [vmem:[%s1186 + $0x4c] sm:$0xf]
      %v1207 = vld [vmem:[%s1186 + $0x50] sm:$0xf]
      %v1208 = vld [vmem:[%s1186 + $0x54] sm:$0xf]
      %v1209 = vld [vmem:[%s1186 + $0x58] sm:$0xf]
      %v1210 = vld [vmem:[%s1186 + $0x5c] sm:$0xf]
      %v1211 = vld [vmem:[%s1186 + $0x60] sm:$0xf]
      %v1212 = vld [vmem:[%s1186 + $0x64] sm:$0xf]
      %v1213 = vld [vmem:[%s1186 + $0x68] sm:$0xf]
      %v1214 = vld [vmem:[%s1186 + $0x6c] sm:$0xf]
      %v1215 = vld [vmem:[%s1186 + $0x70] sm:$0xf]
      %v1216 = vld [vmem:[%s1186 + $0x74] sm:$0xf]
      %v1217 = vld [vmem:[%s1186 + $0x78] sm:$0xf]
      %v1218 = vld [vmem:[%s1186 + $0x7c] sm:$0xf]
      %v1219 = vld [vmem:[%s1186 + $0x80] sm:$0xf]
      %v1220 = vld [vmem:[%s1186 + $0x84] sm:$0xf]
      %v1221 = vld [vmem:[%s1186 + $0x88] sm:$0xf]
      %v1222 = vld [vmem:[%s1186 + $0x8c] sm:$0xf]
      %v1223 = vld [vmem:[%s1186 + $0x90] sm:$0xf]
      %v1224 = vld [vmem:[%s1186 + $0x94] sm:$0xf]
      %v1225 = vld [vmem:[%s1186 + $0x98] sm:$0xf]
      %v1226 = vld [vmem:[%s1186 + $0x9c] sm:$0xf]
      %v1227 = vld [vmem:[%s1186 + $0xa0] sm:$0xf]
      %v1228 = vld [vmem:[%s1186 + $0xa4] sm:$0xf]
      %v1229 = vld [vmem:[%s1186 + $0xa8] sm:$0xf]
      %v1230 = vld [vmem:[%s1186 + $0xac] sm:$0xf]
      %v1231 = vld [vmem:[%s1186 + $0xb0] sm:$0xf]
      %v1232 = vld [vmem:[%s1186 + $0xb4] sm:$0xf]
      %v1233 = vld [vmem:[%s1186 + $0xb8] sm:$0xf]
      %v1234 = vld [vmem:[%s1186 + $0xbc] sm:$0xf]
      %v1299 = vunpack.c.l.b16 %v1122
      %v1300 = vunpack.c.h.b16 %v1122
      %v1301 = vunpack.c.l.b16 %v1123
      %v1302 = vunpack.c.l.b16 %v1124
      %v1303 = vunpack.c.h.b16 %v1124
      %v1304 = vunpack.c.l.b16 %v1125
      %v1305 = vunpack.c.l.b16 %v1126
      %v1306 = vunpack.c.h.b16 %v1126
      %v1307 = vunpack.c.l.b16 %v1127
      %v1308 = vunpack.c.l.b16 %v1128
      %v1309 = vunpack.c.h.b16 %v1128
      %v1310 = vunpack.c.l.b16 %v1129
      %v1311 = vunpack.c.l.b16 %v1130
      %v1312 = vunpack.c.h.b16 %v1130
      %v1313 = vunpack.c.l.b16 %v1131
      %v1314 = vunpack.c.l.b16 %v1132
      %v1315 = vunpack.c.h.b16 %v1132
      %v1316 = vunpack.c.l.b16 %v1133
      %v1317 = vunpack.c.l.b16 %v1134
      %v1318 = vunpack.c.h.b16 %v1134
      %v1319 = vunpack.c.l.b16 %v1135
      %v1320 = vunpack.c.l.b16 %v1136
      %v1321 = vunpack.c.h.b16 %v1136
      %v1322 = vunpack.c.l.b16 %v1137
      %v1323 = vunpack.c.l.b16 %v1138
      %v1324 = vunpack.c.h.b16 %v1138
      %v1325 = vunpack.c.l.b16 %v1139
      %v1326 = vunpack.c.l.b16 %v1140
      %v1327 = vunpack.c.h.b16 %v1140
      %v1328 = vunpack.c.l.b16 %v1141
      %v1329 = vunpack.c.l.b16 %v1142
      %v1330 = vunpack.c.h.b16 %v1142
      %v1331 = vunpack.c.l.b16 %v1143
      %v1332 = vunpack.c.l.b16 %v1144
      %v1333 = vunpack.c.h.b16 %v1144
      %v1334 = vunpack.c.l.b16 %v1145
      %v1335 = vunpack.c.l.b16 %v1146
      %v1336 = vunpack.c.h.b16 %v1146
      %v1337 = vunpack.c.l.b16 %v1147
      %v1338 = vunpack.c.l.b16 %v1148
      %v1339 = vunpack.c.h.b16 %v1148
      %v1340 = vunpack.c.l.b16 %v1149
      %v1341 = vunpack.c.l.b16 %v1150
      %v1342 = vunpack.c.h.b16 %v1150
      %v1343 = vunpack.c.l.b16 %v1151
      %v1344 = vunpack.c.l.b16 %v1152
      %v1345 = vunpack.c.h.b16 %v1152
      %v1346 = vunpack.c.l.b16 %v1153
      %v1347 = vunpack.c.l.b16 %v1154
      %v1348 = vunpack.c.h.b16 %v1154
      %v1349 = vunpack.c.l.b16 %v1155
      %v1350 = vunpack.c.l.b16 %v1156
      %v1351 = vunpack.c.h.b16 %v1156
      %v1352 = vunpack.c.l.b16 %v1157
      %v1353 = vunpack.c.l.b16 %v1158
      %v1354 = vunpack.c.h.b16 %v1158
      %v1355 = vunpack.c.l.b16 %v1159
      %v1356 = vunpack.c.l.b16 %v1160
      %v1357 = vunpack.c.h.b16 %v1160
      %v1358 = vunpack.c.l.b16 %v1161
      %v1359 = vunpack.c.l.b16 %v1162
      %v1360 = vunpack.c.h.b16 %v1162
      %v1361 = vunpack.c.l.b16 %v1163
      %v1362 = vunpack.c.l.b16 %v1164
      %v1363 = vunpack.c.h.b16 %v1164
      %v1364 = vunpack.c.l.b16 %v1165
      %v1365 = vunpack.c.l.b16 %v1166
      %v1366 = vunpack.c.h.b16 %v1166
      %v1367 = vunpack.c.l.b16 %v1167
      %v1368 = vunpack.c.l.b16 %v1168
      %v1369 = vunpack.c.h.b16 %v1168
      %v1370 = vunpack.c.l.b16 %v1169
      %v1371 = vunpack.c.l.b16 %v1170
      %v1372 = vunpack.c.h.b16 %v1170
      %v1373 = vunpack.c.l.b16 %v1171
      %v1374 = vunpack.c.l.b16 %v1172
      %v1375 = vunpack.c.h.b16 %v1172
      %v1376 = vunpack.c.l.b16 %v1173
      %v1377 = vunpack.c.l.b16 %v1174
      %v1378 = vunpack.c.h.b16 %v1174
      %v1379 = vunpack.c.l.b16 %v1175
      %v1380 = vunpack.c.l.b16 %v1176
      %v1381 = vunpack.c.h.b16 %v1176
      %v1382 = vunpack.c.l.b16 %v1177
      %v1383 = vunpack.c.l.b16 %v1178
      %v1384 = vunpack.c.h.b16 %v1178
      %v1385 = vunpack.c.l.b16 %v1179
      %v1386 = vunpack.c.l.b16 %v1180
      %v1387 = vunpack.c.h.b16 %v1180
      %v1388 = vunpack.c.l.b16 %v1181
      %v1389 = vunpack.c.l.b16 %v1182
      %v1390 = vunpack.c.h.b16 %v1182
      %v1391 = vunpack.c.l.b16 %v1183
      %v1392 = vunpack.c.l.b16 %v1184
      %v1393 = vunpack.c.h.b16 %v1184
      %v1394 = vunpack.c.l.b16 %v1185
      %v1395 = vpack.c.b16 %v1302, %v1299
      %v1396 = vpack.c.b16 %v1303, %v1300
      %v1397 = vpack.c.b16 %v1304, %v1301
      %v1398 = vpack.c.b16 %v1308, %v1305
      %v1399 = vpack.c.b16 %v1309, %v1306
      %v1400 = vpack.c.b16 %v1310, %v1307
      %v1401 = vpack.c.b16 %v1314, %v1311
      %v1402 = vpack.c.b16 %v1315, %v1312
      %v1403 = vpack.c.b16 %v1316, %v1313
      %v1404 = vpack.c.b16 %v1320, %v1317
      %v1405 = vpack.c.b16 %v1321, %v1318
      %v1406 = vpack.c.b16 %v1322, %v1319
      %v1407 = vpack.c.b16 %v1326, %v1323
      %v1408 = vpack.c.b16 %v1327, %v1324
      %v1409 = vpack.c.b16 %v1328, %v1325
      %v1410 = vpack.c.b16 %v1332, %v1329
      %v1411 = vpack.c.b16 %v1333, %v1330
      %v1412 = vpack.c.b16 %v1334, %v1331
      %v1413 = vpack.c.b16 %v1338, %v1335
      %v1414 = vpack.c.b16 %v1339, %v1336
      %v1415 = vpack.c.b16 %v1340, %v1337
      %v1416 = vpack.c.b16 %v1344, %v1341
      %v1417 = vpack.c.b16 %v1345, %v1342
      %v1418 = vpack.c.b16 %v1346, %v1343
      %v1419 = vpack.c.b16 %v1350, %v1347
      %v1420 = vpack.c.b16 %v1351, %v1348
      %v1421 = vpack.c.b16 %v1352, %v1349
      %v1422 = vpack.c.b16 %v1356, %v1353
      %v1423 = vpack.c.b16 %v1357, %v1354
      %v1424 = vpack.c.b16 %v1358, %v1355
      %v1425 = vpack.c.b16 %v1362, %v1359
      %v1426 = vpack.c.b16 %v1363, %v1360
      %v1427 = vpack.c.b16 %v1364, %v1361
      %v1428 = vpack.c.b16 %v1368, %v1365
      %v1429 = vpack.c.b16 %v1369, %v1366
      %v1430 = vpack.c.b16 %v1370, %v1367
      %v1431 = vpack.c.b16 %v1374, %v1371
      %v1432 = vpack.c.b16 %v1375, %v1372
      %v1433 = vpack.c.b16 %v1376, %v1373
      %v1434 = vpack.c.b16 %v1380, %v1377
      %v1435 = vpack.c.b16 %v1381, %v1378
      %v1436 = vpack.c.b16 %v1382, %v1379
      %v1437 = vpack.c.b16 %v1386, %v1383
      %v1438 = vpack.c.b16 %v1387, %v1384
      %v1439 = vpack.c.b16 %v1388, %v1385
      %v1440 = vpack.c.b16 %v1392, %v1389
      %v1441 = vpack.c.b16 %v1393, %v1390
      %v1442 = vpack.c.b16 %v1394, %v1391
      %v1539 = vunpack.c.l.b16 %v1187
      %v1540 = vunpack.c.l.b16 %v1188
      %v1541 = vunpack.c.l.b16 %v1189
      %v1542 = vunpack.c.l.b16 %v1190
      %v1543 = vunpack.c.l.b16 %v1191
      %v1544 = vunpack.c.l.b16 %v1192
      %v1545 = vunpack.c.l.b16 %v1193
      %v1546 = vunpack.c.l.b16 %v1194
      %v1547 = vunpack.c.l.b16 %v1195
      %v1548 = vunpack.c.l.b16 %v1196
      %v1549 = vunpack.c.l.b16 %v1197
      %v1550 = vunpack.c.l.b16 %v1198
      %v1551 = vunpack.c.l.b16 %v1199
      %v1552 = vunpack.c.l.b16 %v1200
      %v1553 = vunpack.c.l.b16 %v1201
      %v1554 = vunpack.c.l.b16 %v1202
      %v1555 = vunpack.c.l.b16 %v1203
      %v1556 = vunpack.c.l.b16 %v1204
      %v1557 = vunpack.c.l.b16 %v1205
      %v1558 = vunpack.c.l.b16 %v1206
      %v1559 = vunpack.c.l.b16 %v1207
      %v1560 = vunpack.c.l.b16 %v1208
      %v1561 = vunpack.c.l.b16 %v1209
      %v1562 = vunpack.c.l.b16 %v1210
      %v1563 = vunpack.c.l.b16 %v1211
      %v1564 = vunpack.c.l.b16 %v1212
      %v1565 = vunpack.c.l.b16 %v1213
      %v1566 = vunpack.c.l.b16 %v1214
      %v1567 = vunpack.c.l.b16 %v1215
      %v1568 = vunpack.c.l.b16 %v1216
      %v1569 = vunpack.c.l.b16 %v1217
      %v1570 = vunpack.c.l.b16 %v1218
      %v1571 = vunpack.c.l.b16 %v1219
      %v1572 = vunpack.c.l.b16 %v1220
      %v1573 = vunpack.c.l.b16 %v1221
      %v1574 = vunpack.c.l.b16 %v1222
      %v1575 = vunpack.c.l.b16 %v1223
      %v1576 = vunpack.c.l.b16 %v1224
      %v1577 = vunpack.c.l.b16 %v1225
      %v1578 = vunpack.c.l.b16 %v1226
      %v1579 = vunpack.c.l.b16 %v1227
      %v1580 = vunpack.c.l.b16 %v1228
      %v1581 = vunpack.c.l.b16 %v1229
      %v1582 = vunpack.c.l.b16 %v1230
      %v1583 = vunpack.c.l.b16 %v1231
      %v1584 = vunpack.c.l.b16 %v1232
      %v1585 = vunpack.c.l.b16 %v1233
      %v1586 = vunpack.c.l.b16 %v1234
      %v1587 = vpack.c.b16 %v1540, %v1539
      %v1588 = vpack.c.b16 %v1542, %v1541
      %v1589 = vpack.c.b16 %v1544, %v1543
      %v1590 = vpack.c.b16 %v1546, %v1545
      %v1591 = vpack.c.b16 %v1548, %v1547
      %v1592 = vpack.c.b16 %v1550, %v1549
      %v1593 = vpack.c.b16 %v1552, %v1551
      %v1594 = vpack.c.b16 %v1554, %v1553
      %v1595 = vpack.c.b16 %v1556, %v1555
      %v1596 = vpack.c.b16 %v1558, %v1557
      %v1597 = vpack.c.b16 %v1560, %v1559
      %v1598 = vpack.c.b16 %v1562, %v1561
      %v1599 = vpack.c.b16 %v1564, %v1563
      %v1600 = vpack.c.b16 %v1566, %v1565
      %v1601 = vpack.c.b16 %v1568, %v1567
      %v1602 = vpack.c.b16 %v1570, %v1569
      %v1603 = vpack.c.b16 %v1572, %v1571
      %v1604 = vpack.c.b16 %v1574, %v1573
      %v1605 = vpack.c.b16 %v1576, %v1575
      %v1606 = vpack.c.b16 %v1578, %v1577
      %v1607 = vpack.c.b16 %v1580, %v1579
      %v1608 = vpack.c.b16 %v1582, %v1581
      %v1609 = vpack.c.b16 %v1584, %v1583
      %v1610 = vpack.c.b16 %v1586, %v1585
      %1635 = vmatprep.subr.bf16.mxu0 0
      %1636 = vmatpush1.bf16.msra.mxu0 %v1587
      %1637 = vmatprep.subr.bf16.mxu0 0
      %1638 = vmatpush1.bf16.msra.mxu0 %v1588
      %1639 = vmatprep.subr.bf16.mxu0 0
      %1640 = vmatpush1.bf16.msra.mxu0 %v1589
      %1641 = vmatprep.subr.bf16.mxu0 0
      %1642 = vmatpush1.bf16.msra.mxu0 %v1590
      %1643 = vmatprep.subr.bf16.mxu0 0
      %1644 = vmatpush1.bf16.msra.mxu0 %v1591
      %1645 = vmatprep.subr.bf16.mxu0 0
      %1646 = vmatpush1.bf16.msra.mxu0 %v1592
      %1647 = vmatprep.subr.bf16.mxu0 0
      %1648 = vmatpush1.bf16.msra.mxu0 %v1593
      %1649 = vmatprep.subr.bf16.mxu0 0
      %1650 = vmatpush1.bf16.msra.mxu0 %v1594
      %1651 = vmatprep.subr.bf16.mxu0 0
      %1652 = vmatpush1.bf16.msra.mxu0 %v1595
      %1653 = vmatprep.subr.bf16.mxu0 0
      %1654 = vmatpush1.bf16.msra.mxu0 %v1596
      %1655 = vmatprep.subr.bf16.mxu0 0
      %1656 = vmatpush1.bf16.msra.mxu0 %v1597
      %1657 = vmatprep.subr.bf16.mxu0 0
      %1658 = vmatpush1.bf16.msra.mxu0 %v1598
      %1659 = vmatprep.subr.bf16.mxu0 0
      %1660 = vmatpush1.bf16.msra.mxu0 %v1599
      %1661 = vmatprep.subr.bf16.mxu0 0
      %1662 = vmatpush1.bf16.msra.mxu0 %v1600
      %1663 = vmatprep.subr.bf16.mxu0 0
      %1664 = vmatpush1.bf16.msra.mxu0 %v1601
      %1665 = vmatprep.subr.bf16.mxu0 0
      %1666 = vmatpush1.bf16.msra.mxu0 %v1602
      %1667 = vmatprep.mubr.bf16.mxu0 %v1396
      %1668 = vmatmul.mubr.bf16.gmra.mrb[0].mxu0 %v1395
      %v1669 = vpop.f32.mrb[0].mxu0
      %v1670 = vadd.f32 0.0, %v1669
      %v1671 = vpop.f32.mrb[0].mxu0
      %v1672 = vpop.f32.mrb[0].mxu0
      %v1673 = vadd.f32 0.0, %v1672
      %v1674 = vpop.f32.mrb[0].mxu0
      %1675 = vmatprep.mubr.bf16.mxu0 %v1399
      %1676 = vmatmul.mubr.bf16.gmra.mrb[0].mxu0 %v1398
      %v1677 = vpop.f32.mrb[0].mxu0
      %v1678 = vadd.f32 0.0, %v1677
      %v1679 = vpop.f32.mrb[0].mxu0
      %v1680 = vpop.f32.mrb[0].mxu0
      %v1681 = vadd.f32 0.0, %v1680
      %v1682 = vpop.f32.mrb[0].mxu0
      %1683 = vmatprep.mubr.bf16.mxu0 %v1402
      %1684 = vmatmul.mubr.bf16.gmra.mrb[0].mxu0 %v1401
      %v1685 = vpop.f32.mrb[0].mxu0
      %v1686 = vadd.f32 0.0, %v1685
      %v1687 = vpop.f32.mrb[0].mxu0
      %v1688 = vpop.f32.mrb[0].mxu0
      %v1689 = vadd.f32 0.0, %v1688
      %v1690 = vpop.f32.mrb[0].mxu0
      %1691 = vmatprep.mubr.bf16.mxu0 %v1405
      %1692 = vmatmul.mubr.bf16.gmra.mrb[0].mxu0 %v1404
      %v1693 = vpop.f32.mrb[0].mxu0
      %v1694 = vadd.f32 0.0, %v1693
      %v1695 = vpop.f32.mrb[0].mxu0
      %v1696 = vpop.f32.mrb[0].mxu0
      %v1697 = vadd.f32 0.0, %v1696
      %v1698 = vpop.f32.mrb[0].mxu0
      %1699 = vmatprep.mubr.bf16.mxu0 %v1408
      %1700 = vmatmul.mubr.bf16.gmra.mrb[0].mxu0 %v1407
      %v1701 = vpop.f32.mrb[0].mxu0
      %v1702 = vadd.f32 0.0, %v1701
      %v1703 = vpop.f32.mrb[0].mxu0
      %v1704 = vpop.f32.mrb[0].mxu0
      %v1705 = vadd.f32 0.0, %v1704
      %v1706 = vpop.f32.mrb[0].mxu0
      %1707 = vmatprep.mubr.bf16.mxu0 %v1411
      %1708 = vmatmul.mubr.bf16.gmra.mrb[0].mxu0 %v1410
      %v1709 = vpop.f32.mrb[0].mxu0
      %v1710 = vadd.f32 0.0, %v1709
      %v1711 = vpop.f32.mrb[0].mxu0
      %v1712 = vpop.f32.mrb[0].mxu0
      %v1713 = vadd.f32 0.0, %v1712
      %v1714 = vpop.f32.mrb[0].mxu0
      %1715 = vmatprep.mubr.bf16.mxu0 %v1414
      %1716 = vmatmul.mubr.bf16.gmra.mrb[0].mxu0 %v1413
      %v1717 = vpop.f32.mrb[0].mxu0
      %v1718 = vadd.f32 0.0, %v1717
      %v1719 = vpop.f32.mrb[0].mxu0
      %v1720 = vpop.f32.mrb[0].mxu0
      %v1721 = vadd.f32 0.0, %v1720
      %v1722 = vpop.f32.mrb[0].mxu0
      %1723 = vmatprep.mubr.bf16.mxu0 %v1417
      %1724 = vmatmul.mubr.bf16.gmra.mrb[0].mxu0 %v1416
      %v1725 = vpop.f32.mrb[0].mxu0
      %v1726 = vadd.f32 0.0, %v1725
      %v1727 = vpop.f32.mrb[0].mxu0
      %v1728 = vpop.f32.mrb[0].mxu0
      %v1729 = vadd.f32 0.0, %v1728
      %v1730 = vpop.f32.mrb[0].mxu0
      %1731 = vmatprep.mubr.bf16.mxu0 %v1420
      %1732 = vmatmul.mubr.bf16.gmra.mrb[0].mxu0 %v1419
      %v1733 = vpop.f32.mrb[0].mxu0
      %v1734 = vadd.f32 0.0, %v1733
      %v1735 = vpop.f32.mrb[0].mxu0
      %v1736 = vpop.f32.mrb[0].mxu0
      %v1737 = vadd.f32 0.0, %v1736
      %v1738 = vpop.f32.mrb[0].mxu0
      %1739 = vmatprep.mubr.bf16.mxu0 %v1423
      %1740 = vmatmul.mubr.bf16.gmra.mrb[0].mxu0 %v1422
      %v1741 = vpop.f32.mrb[0].mxu0
      %v1742 = vadd.f32 0.0, %v1741
      %v1743 = vpop.f32.mrb[0].mxu0
      %v1744 = vpop.f32.mrb[0].mxu0
      %v1745 = vadd.f32 0.0, %v1744
      %v1746 = vpop.f32.mrb[0].mxu0
      %1747 = vmatprep.mubr.bf16.mxu0 %v1426
      %1748 = vmatmul.mubr.bf16.gmra.mrb[0].mxu0 %v1425
      %v1749 = vpop.f32.mrb[0].mxu0
      %v1750 = vadd.f32 0.0, %v1749
      %v1751 = vpop.f32.mrb[0].mxu0
      %v1752 = vpop.f32.mrb[0].mxu0
      %v1753 = vadd.f32 0.0, %v1752
      %v1754 = vpop.f32.mrb[0].mxu0
      %1755 = vmatprep.mubr.bf16.mxu0 %v1429
      %1756 = vmatmul.mubr.bf16.gmra.mrb[0].mxu0 %v1428
      %v1757 = vpop.f32.mrb[0].mxu0
      %v1758 = vadd.f32 0.0, %v1757
      %v1759 = vpop.f32.mrb[0].mxu0
      %v1760 = vpop.f32.mrb[0].mxu0
      %v1761 = vadd.f32 0.0, %v1760
      %v1762 = vpop.f32.mrb[0].mxu0
      %1763 = vmatprep.mubr.bf16.mxu0 %v1432
      %1764 = vmatmul.mubr.bf16.gmra.mrb[0].mxu0 %v1431
      %v1765 = vpop.f32.mrb[0].mxu0
      %v1766 = vadd.f32 0.0, %v1765
      %v1767 = vpop.f32.mrb[0].mxu0
      %v1768 = vpop.f32.mrb[0].mxu0
      %v1769 = vadd.f32 0.0, %v1768
      %v1770 = vpop.f32.mrb[0].mxu0
      %1771 = vmatprep.mubr.bf16.mxu0 %v1435
      %1772 = vmatmul.mubr.bf16.gmra.mrb[0].mxu0 %v1434
      %v1773 = vpop.f32.mrb[0].mxu0
      %v1774 = vadd.f32 0.0, %v1773
      %v1775 = vpop.f32.mrb[0].mxu0
      %v1776 = vpop.f32.mrb[0].mxu0
      %v1777 = vadd.f32 0.0, %v1776
      %v1778 = vpop.f32.mrb[0].mxu0
      %1779 = vmatprep.mubr.bf16.mxu0 %v1438
      %1780 = vmatmul.mubr.bf16.gmra.mrb[0].mxu0 %v1437
      %v1781 = vpop.f32.mrb[0].mxu0
      %v1782 = vadd.f32 0.0, %v1781
      %v1783 = vpop.f32.mrb[0].mxu0
      %v1784 = vpop.f32.mrb[0].mxu0
      %v1785 = vadd.f32 0.0, %v1784
      %v1786 = vpop.f32.mrb[0].mxu0
      %1787 = vmatprep.mubr.bf16.mxu0 %v1441
      %1788 = vmatmul.mubr.bf16.gmra.mrb[0].mxu0 %v1440
      %v1789 = vpop.f32.mrb[0].mxu0
      %v1790 = vadd.f32 0.0, %v1789
      %v1791 = vpop.f32.mrb[0].mxu0
      %v1792 = vpop.f32.mrb[0].mxu0
      %v1793 = vadd.f32 0.0, %v1792
      %v1794 = vpop.f32.mrb[0].mxu0
      %1795 = vdwg.mxu0
      %1796 = vmatprep.subr.bf16.mxu0 0
      %1797 = vmatpush1.bf16.msra.mxu0 %v1603
      %1798 = vmatprep.subr.bf16.mxu0 0
      %1799 = vmatpush1.bf16.msra.mxu0 %v1604
      %1800 = vmatprep.subr.bf16.mxu0 0
      %1801 = vmatpush1.bf16.msra.mxu0 %v1605
      %1802 = vmatprep.subr.bf16.mxu0 0
      %1803 = vmatpush1.bf16.msra.mxu0 %v1606
      %1804 = vmatprep.subr.bf16.mxu0 0
      %1805 = vmatpush1.bf16.msra.mxu0 %v1607
      %1806 = vmatprep.subr.bf16.mxu0 0
      %1807 = vmatpush1.bf16.msra.mxu0 %v1608
      %1808 = vmatprep.subr.bf16.mxu0 0
      %1809 = vmatpush1.bf16.msra.mxu0 %v1609
      %1810 = vmatprep.subr.bf16.mxu0 0
      %1811 = vmatpush1.bf16.msra.mxu0 %v1610
      %1812 = vmatprep.subr.bf16.mxu0 0
      %1813 = vmatpush1.bf16.msra.mxu0 0
      %1814 = vmatprep.subr.bf16.mxu0 0
      %1815 = vmatpush1.bf16.msra.mxu0 0
      %1816 = vmatprep.subr.bf16.mxu0 0
      %1817 = vmatpush1.bf16.msra.mxu0 0
      %1818 = vmatprep.subr.bf16.mxu0 0
      %1819 = vmatpush1.bf16.msra.mxu0 0
      %1820 = vmatprep.subr.bf16.mxu0 0
      %1821 = vmatpush1.bf16.msra.mxu0 0
      %1822 = vmatprep.subr.bf16.mxu0 0
      %1823 = vmatpush1.bf16.msra.mxu0 0
      %1824 = vmatprep.subr.bf16.mxu0 0
      %1825 = vmatpush1.bf16.msra.mxu0 0
      %1826 = vmatprep.subr.bf16.mxu0 0
      %1827 = vmatpush1.bf16.msra.mxu0 0
      %1828 = vmatprep.mubr.bf16.mxu0 0
      %1829 = vmatmul.mubr.bf16.gmra.mrb[0].mxu0 %v1397
      %v1830 = vpop.f32.mrb[0].mxu0
      %v1831 = vadd.f32 %v1670, %v1830
      %v1832 = vpop.f32.mrb[0].mxu0
      %v1833 = vpop.f32.mrb[0].mxu0
      %v1834 = vadd.f32 %v1673, %v1833
      %v1835 = vpop.f32.mrb[0].mxu0
      %1836 = vmatprep.mubr.bf16.mxu0 0
      %1837 = vmatmul.mubr.bf16.gmra.mrb[0].mxu0 %v1400
      %v1838 = vpop.f32.mrb[0].mxu0
      %v1839 = vadd.f32 %v1678, %v1838
      %v1840 = vpop.f32.mrb[0].mxu0
      %v1841 = vpop.f32.mrb[0].mxu0
      %v1842 = vadd.f32 %v1681, %v1841
      %v1843 = vpop.f32.mrb[0].mxu0
      %1844 = vmatprep.mubr.bf16.mxu0 0
      %1845 = vmatmul.mubr.bf16.gmra.mrb[0].mxu0 %v1403
      %v1846 = vpop.f32.mrb[0].mxu0
      %v1847 = vadd.f32 %v1686, %v1846
      %v1848 = vpop.f32.mrb[0].mxu0
      %v1849 = vpop.f32.mrb[0].mxu0
      %v1850 = vadd.f32 %v1689, %v1849
      %v1851 = vpop.f32.mrb[0].mxu0
      %1852 = vmatprep.mubr.bf16.mxu0 0
      %1853 = vmatmul.mubr.bf16.gmra.mrb[0].mxu0 %v1406
      %v1854 = vpop.f32.mrb[0].mxu0
      %v1855 = vadd.f32 %v1694, %v1854
      %v1856 = vpop.f32.mrb[0].mxu0
      %v1857 = vpop.f32.mrb[0].mxu0
      %v1858 = vadd.f32 %v1697, %v1857
      %v1859 = vpop.f32.mrb[0].mxu0
      %1860 = vmatprep.mubr.bf16.mxu0 0
      %1861 = vmatmul.mubr.bf16.gmra.mrb[0].mxu0 %v1409
      %v1862 = vpop.f32.mrb[0].mxu0
      %v1863 = vadd.f32 %v1702, %v1862
      %v1864 = vpop.f32.mrb[0].mxu0
      %v1865 = vpop.f32.mrb[0].mxu0
      %v1866 = vadd.f32 %v1705, %v1865
      %v1867 = vpop.f32.mrb[0].mxu0
      %1868 = vmatprep.mubr.bf16.mxu0 0
      %1869 = vmatmul.mubr.bf16.gmra.mrb[0].mxu0 %v1412
      %v1870 = vpop.f32.mrb[0].mxu0
      %v1871 = vadd.f32 %v1710, %v1870
      %v1872 = vpop.f32.mrb[0].mxu0
      %v1873 = vpop.f32.mrb[0].mxu0
      %v1874 = vadd.f32 %v1713, %v1873
      %v1875 = vpop.f32.mrb[0].mxu0
      %1876 = vmatprep.mubr.bf16.mxu0 0
      %1877 = vmatmul.mubr.bf16.gmra.mrb[0].mxu0 %v1415
      %v1878 = vpop.f32.mrb[0].mxu0
      %v1879 = vadd.f32 %v1718, %v1878
      %v1880 = vpop.f32.mrb[0].mxu0
      %v1881 = vpop.f32.mrb[0].mxu0
      %v1882 = vadd.f32 %v1721, %v1881
      %v1883 = vpop.f32.mrb[0].mxu0
      %1884 = vmatprep.mubr.bf16.mxu0 0
      %1885 = vmatmul.mubr.bf16.gmra.mrb[0].mxu0 %v1418
      %v1886 = vpop.f32.mrb[0].mxu0
      %v1887 = vadd.f32 %v1726, %v1886
      %v1888 = vpop.f32.mrb[0].mxu0
      %v1889 = vpop.f32.mrb[0].mxu0
      %v1890 = vadd.f32 %v1729, %v1889
      %v1891 = vpop.f32.mrb[0].mxu0
      %1892 = vmatprep.mubr.bf16.mxu0 0
      %1893 = vmatmul.mubr.bf16.gmra.mrb[0].mxu0 %v1421
      %v1894 = vpop.f32.mrb[0].mxu0
      %v1895 = vadd.f32 %v1734, %v1894
      %v1896 = vpop.f32.mrb[0].mxu0
      %v1897 = vpop.f32.mrb[0].mxu0
      %v1898 = vadd.f32 %v1737, %v1897
      %v1899 = vpop.f32.mrb[0].mxu0
      %1900 = vmatprep.mubr.bf16.mxu0 0
      %1901 = vmatmul.mubr.bf16.gmra.mrb[0].mxu0 %v1424
      %v1902 = vpop.f32.mrb[0].mxu0
      %v1903 = vadd.f32 %v1742, %v1902
      %v1904 = vpop.f32.mrb[0].mxu0
      %v1905 = vpop.f32.mrb[0].mxu0
      %v1906 = vadd.f32 %v1745, %v1905
      %v1907 = vpop.f32.mrb[0].mxu0
      %1908 = vmatprep.mubr.bf16.mxu0 0
      %1909 = vmatmul.mubr.bf16.gmra.mrb[0].mxu0 %v1427
      %v1910 = vpop.f32.mrb[0].mxu0
      %v1911 = vadd.f32 %v1750, %v1910
      %v1912 = vpop.f32.mrb[0].mxu0
      %v1913 = vpop.f32.mrb[0].mxu0
      %v1914 = vadd.f32 %v1753, %v1913
      %v1915 = vpop.f32.mrb[0].mxu0
      %1916 = vmatprep.mubr.bf16.mxu0 0
      %1917 = vmatmul.mubr.bf16.gmra.mrb[0].mxu0 %v1430
      %v1918 = vpop.f32.mrb[0].mxu0
      %v1919 = vadd.f32 %v1758, %v1918
      %v1920 = vpop.f32.mrb[0].mxu0
      %v1921 = vpop.f32.mrb[0].mxu0
      %v1922 = vadd.f32 %v1761, %v1921
      %v1923 = vpop.f32.mrb[0].mxu0
      %1924 = vmatprep.mubr.bf16.mxu0 0
      %1925 = vmatmul.mubr.bf16.gmra.mrb[0].mxu0 %v1433
      %v1926 = vpop.f32.mrb[0].mxu0
      %v1927 = vadd.f32 %v1766, %v1926
      %v1928 = vpop.f32.mrb[0].mxu0
      %v1929 = vpop.f32.mrb[0].mxu0
      %v1930 = vadd.f32 %v1769, %v1929
      %v1931 = vpop.f32.mrb[0].mxu0
      %1932 = vmatprep.mubr.bf16.mxu0 0
      %1933 = vmatmul.mubr.bf16.gmra.mrb[0].mxu0 %v1436
      %v1934 = vpop.f32.mrb[0].mxu0
      %v1935 = vadd.f32 %v1774, %v1934
      %v1936 = vpop.f32.mrb[0].mxu0
      %v1937 = vpop.f32.mrb[0].mxu0
      %v1938 = vadd.f32 %v1777, %v1937
      %v1939 = vpop.f32.mrb[0].mxu0
      %1940 = vmatprep.mubr.bf16.mxu0 0
      %1941 = vmatmul.mubr.bf16.gmra.mrb[0].mxu0 %v1439
      %v1942 = vpop.f32.mrb[0].mxu0
      %v1943 = vadd.f32 %v1782, %v1942
      %v1944 = vpop.f32.mrb[0].mxu0
      %v1945 = vpop.f32.mrb[0].mxu0
      %v1946 = vadd.f32 %v1785, %v1945
      %v1947 = vpop.f32.mrb[0].mxu0
      %1948 = vmatprep.mubr.bf16.mxu0 0
      %1949 = vmatmul.mubr.bf16.gmra.mrb[0].mxu0 %v1442
      %v1950 = vpop.f32.mrb[0].mxu0
      %v1951 = vadd.f32 %v1790, %v1950
      %v1952 = vpop.f32.mrb[0].mxu0
      %v1953 = vpop.f32.mrb[0].mxu0
      %v1954 = vadd.f32 %v1793, %v1953
      %v1955 = vpop.f32.mrb[0].mxu0
      %1956 = vdwg.mxu0
      %v1957 = vld [vmem:[#allocation2] sm:$0xff]
      %v1958 = vld [vmem:[#allocation2 + $0x8] sm:$0xff]
      %v1959 = vld [vmem:[#allocation2 + $0x10] sm:$0xff]
      %v1960 = vld [vmem:[#allocation2 + $0x18] sm:$0xff]
      %v1961 = vld [vmem:[#allocation2 + $0x20] sm:$0xff]
      %v1962 = vld [vmem:[#allocation2 + $0x28] sm:$0xff]
      %v1963 = vld [vmem:[#allocation2 + $0x30] sm:$0xff]
      %v1964 = vld [vmem:[#allocation2 + $0x38] sm:$0xff]
      %v1965 = vld [vmem:[#allocation2 + $0x40] sm:$0xff]
      %v1966 = vld [vmem:[#allocation2 + $0x48] sm:$0xff]
      %v1967 = vld [vmem:[#allocation2 + $0x50] sm:$0xff]
      %v1968 = vld [vmem:[#allocation2 + $0x58] sm:$0xff]
      %v1969 = vld [vmem:[#allocation2 + $0x60] sm:$0xff]
      %v1970 = vld [vmem:[#allocation2 + $0x68] sm:$0xff]
      %v1971 = vld [vmem:[#allocation2 + $0x70] sm:$0xff]
      %v1972 = vld [vmem:[#allocation2 + $0x78] sm:$0xff]
      %v1973 = vld [vmem:[#allocation2 + $0x80] sm:$0xff]
      %v1974 = vld [vmem:[#allocation2 + $0x88] sm:$0xff]
      %v1975 = vld [vmem:[#allocation2 + $0x90] sm:$0xff]
      %v1976 = vld [vmem:[#allocation2 + $0x98] sm:$0xff]
      %v1977 = vld [vmem:[#allocation2 + $0xa0] sm:$0xff]
      %v1978 = vld [vmem:[#allocation2 + $0xa8] sm:$0xff]
      %v1979 = vld [vmem:[#allocation2 + $0xb0] sm:$0xff]
      %v1980 = vld [vmem:[#allocation2 + $0xb8] sm:$0xff]
      %v1981 = vld [vmem:[#allocation2 + $0xc0] sm:$0xff]
      %v1982 = vld [vmem:[#allocation2 + $0xc8] sm:$0xff]
      %v1983 = vld [vmem:[#allocation2 + $0xd0] sm:$0xff]
      %v1984 = vld [vmem:[#allocation2 + $0xd8] sm:$0xff]
      %v1985 = vld [vmem:[#allocation2 + $0xe0] sm:$0xff]
      %v1986 = vld [vmem:[#allocation2 + $0xe8] sm:$0xff]
      %v1987 = vld [vmem:[#allocation2 + $0xf0] sm:$0xff]
      %v1988 = vld [vmem:[#allocation2 + $0xf8] sm:$0xff]
      %v1989 = vadd.f32 %v1957, %v1831
      %v1990 = vadd.f32 %v1958, %v1834
      %v1991 = vadd.f32 %v1959, %v1839
      %v1992 = vadd.f32 %v1960, %v1842
      %v1993 = vadd.f32 %v1961, %v1847
      %v1994 = vadd.f32 %v1962, %v1850
      %v1995 = vadd.f32 %v1963, %v1855
      %v1996 = vadd.f32 %v1964, %v1858
      %v1997 = vadd.f32 %v1965, %v1863
      %v1998 = vadd.f32 %v1966, %v1866
      %v1999 = vadd.f32 %v1967, %v1871
      %v2000 = vadd.f32 %v1968, %v1874
      %v2001 = vadd.f32 %v1969, %v1879
      %v2002 = vadd.f32 %v1970, %v1882
      %v2003 = vadd.f32 %v1971, %v1887
      %v2004 = vadd.f32 %v1972, %v1890
      %v2005 = vadd.f32 %v1973, %v1895
      %v2006 = vadd.f32 %v1974, %v1898
      %v2007 = vadd.f32 %v1975, %v1903
      %v2008 = vadd.f32 %v1976, %v1906
      %v2009 = vadd.f32 %v1977, %v1911
      %v2010 = vadd.f32 %v1978, %v1914
      %v2011 = vadd.f32 %v1979, %v1919
      %v2012 = vadd.f32 %v1980, %v1922
      %v2013 = vadd.f32 %v1981, %v1927
      %v2014 = vadd.f32 %v1982, %v1930
      %v2015 = vadd.f32 %v1983, %v1935
      %v2016 = vadd.f32 %v1984, %v1938
      %v2017 = vadd.f32 %v1985, %v1943
      %v2018 = vadd.f32 %v1986, %v1946
      %v2019 = vadd.f32 %v1987, %v1951
      %v2020 = vadd.f32 %v1988, %v1954
      %2021 = vst [vmem:[#allocation2] sm:$0xff] %v1989
      %2022 = vst [vmem:[#allocation2 + $0x8] sm:$0xff] %v1990
      %2023 = vst [vmem:[#allocation2 + $0x10] sm:$0xff] %v1991
      %2024 = vst [vmem:[#allocation2 + $0x18] sm:$0xff] %v1992
      %2025 = vst [vmem:[#allocation2 + $0x20] sm:$0xff] %v1993
      %2026 = vst [vmem:[#allocation2 + $0x28] sm:$0xff] %v1994
      %2027 = vst [vmem:[#allocation2 + $0x30] sm:$0xff] %v1995
      %2028 = vst [vmem:[#allocation2 + $0x38] sm:$0xff] %v1996
      %2029 = vst [vmem:[#allocation2 + $0x40] sm:$0xff] %v1997
      %2030 = vst [vmem:[#allocation2 + $0x48] sm:$0xff] %v1998
      %2031 = vst [vmem:[#allocation2 + $0x50] sm:$0xff] %v1999
      %2032 = vst [vmem:[#allocation2 + $0x58] sm:$0xff] %v2000
      %2033 = vst [vmem:[#allocation2 + $0x60] sm:$0xff] %v2001
      %2034 = vst [vmem:[#allocation2 + $0x68] sm:$0xff] %v2002
      %2035 = vst [vmem:[#allocation2 + $0x70] sm:$0xff] %v2003
      %2036 = vst [vmem:[#allocation2 + $0x78] sm:$0xff] %v2004
      %2037 = vst [vmem:[#allocation2 + $0x80] sm:$0xff] %v2005
      %2038 = vst [vmem:[#allocation2 + $0x88] sm:$0xff] %v2006
      %2039 = vst [vmem:[#allocation2 + $0x90] sm:$0xff] %v2007
      %2040 = vst [vmem:[#allocation2 + $0x98] sm:$0xff] %v2008
      %2041 = vst [vmem:[#allocation2 + $0xa0] sm:$0xff] %v2009
      %2042 = vst [vmem:[#allocation2 + $0xa8] sm:$0xff] %v2010
      %2043 = vst [vmem:[#allocation2 + $0xb0] sm:$0xff] %v2011
      %2044 = vst [vmem:[#allocation2 + $0xb8] sm:$0xff] %v2012
      %2045 = vst [vmem:[#allocation2 + $0xc0] sm:$0xff] %v2013
      %2046 = vst [vmem:[#allocation2 + $0xc8] sm:$0xff] %v2014
      %2047 = vst [vmem:[#allocation2 + $0xd0] sm:$0xff] %v2015
      %2048 = vst [vmem:[#allocation2 + $0xd8] sm:$0xff] %v2016
      %2049 = vst [vmem:[#allocation2 + $0xe0] sm:$0xff] %v2017
      %2050 = vst [vmem:[#allocation2 + $0xe8] sm:$0xff] %v2018
      %2051 = vst [vmem:[#allocation2 + $0xf0] sm:$0xff] %v2019
      %2052 = vst [vmem:[#allocation2 + $0xf8] sm:$0xff] %v2020
      %v2053 = vld [vmem:[%s243 + $0x30] sm:$0xff]
      %v2054 = vld [vmem:[%s243 + $0x38] sm:$0xf]
      %v2055 = vld [vmem:[%s243 + $0x3c] sm:$0xff]
      %v2056 = vld [vmem:[%s243 + $0x44] sm:$0xf]
      %v2057 = vld [vmem:[%s243 + $0x48] sm:$0xff]
      %v2058 = vld [vmem:[%s243 + $0x50] sm:$0xf]
      %v2059 = vld [vmem:[%s243 + $0x54] sm:$0xff]
      %v2060 = vld [vmem:[%s243 + $0x5c] sm:$0xf]
      %v2061 = vld [vmem:[%s243 + $0x60] sm:$0xff]
      %v2062 = vld [vmem:[%s243 + $0x68] sm:$0xf]
      %v2063 = vld [vmem:[%s243 + $0x6c] sm:$0xff]
      %v2064 = vld [vmem:[%s243 + $0x74] sm:$0xf]
      %v2065 = vld [vmem:[%s243 + $0x78] sm:$0xff]
      %v2066 = vld [vmem:[%s243 + $0x80] sm:$0xf]
      %v2067 = vld [vmem:[%s243 + $0x84] sm:$0xff]
      %v2068 = vld [vmem:[%s243 + $0x8c] sm:$0xf]
      %v2069 = vld [vmem:[%s243 + $0x90] sm:$0xff]
      %v2070 = vld [vmem:[%s243 + $0x98] sm:$0xf]
      %v2071 = vld [vmem:[%s243 + $0x9c] sm:$0xff]
      %v2072 = vld [vmem:[%s243 + $0xa4] sm:$0xf]
      %v2073 = vld [vmem:[%s243 + $0xa8] sm:$0xff]
      %v2074 = vld [vmem:[%s243 + $0xb0] sm:$0xf]
      %v2075 = vld [vmem:[%s243 + $0xb4] sm:$0xff]
      %v2076 = vld [vmem:[%s243 + $0xbc] sm:$0xf]
      %v2077 = vld [vmem:[%s243 + $0xc0] sm:$0xff]
      %v2078 = vld [vmem:[%s243 + $0xc8] sm:$0xf]
      %v2079 = vld [vmem:[%s243 + $0xcc] sm:$0xff]
      %v2080 = vld [vmem:[%s243 + $0xd4] sm:$0xf]
      %v2081 = vld [vmem:[%s243 + $0xd8] sm:$0xff]
      %v2082 = vld [vmem:[%s243 + $0xe0] sm:$0xf]
      %v2083 = vld [vmem:[%s243 + $0xe4] sm:$0xff]
      %v2084 = vld [vmem:[%s243 + $0xec] sm:$0xf]
      %v2085 = vld [vmem:[%s243 + $0xf0] sm:$0xff]
      %v2086 = vld [vmem:[%s243 + $0xf8] sm:$0xf]
      %v2087 = vld [vmem:[%s243 + $0xfc] sm:$0xff]
      %v2088 = vld [vmem:[%s243 + $0x104] sm:$0xf]
      %v2089 = vld [vmem:[%s243 + $0x108] sm:$0xff]
      %v2090 = vld [vmem:[%s243 + $0x110] sm:$0xf]
      %v2091 = vld [vmem:[%s243 + $0x114] sm:$0xff]
      %v2092 = vld [vmem:[%s243 + $0x11c] sm:$0xf]
      %v2093 = vld [vmem:[%s243 + $0x120] sm:$0xff]
      %v2094 = vld [vmem:[%s243 + $0x128] sm:$0xf]
      %v2095 = vld [vmem:[%s243 + $0x12c] sm:$0xff]
      %v2096 = vld [vmem:[%s243 + $0x134] sm:$0xf]
      %v2097 = vld [vmem:[%s243 + $0x138] sm:$0xff]
      %v2098 = vld [vmem:[%s243 + $0x140] sm:$0xf]
      %v2099 = vld [vmem:[%s243 + $0x144] sm:$0xff]
      %v2100 = vld [vmem:[%s243 + $0x14c] sm:$0xf]
      %v2101 = vld [vmem:[%s243 + $0x150] sm:$0xff]
      %v2102 = vld [vmem:[%s243 + $0x158] sm:$0xf]
      %v2103 = vld [vmem:[%s243 + $0x15c] sm:$0xff]
      %v2104 = vld [vmem:[%s243 + $0x164] sm:$0xf]
      %v2105 = vld [vmem:[%s243 + $0x168] sm:$0xff]
      %v2106 = vld [vmem:[%s243 + $0x170] sm:$0xf]
      %v2107 = vld [vmem:[%s243 + $0x174] sm:$0xff]
      %v2108 = vld [vmem:[%s243 + $0x17c] sm:$0xf]
      %v2109 = vld [vmem:[%s243 + $0x180] sm:$0xff]
      %v2110 = vld [vmem:[%s243 + $0x188] sm:$0xf]
      %v2111 = vld [vmem:[%s243 + $0x18c] sm:$0xff]
      %v2112 = vld [vmem:[%s243 + $0x194] sm:$0xf]
      %v2113 = vld [vmem:[%s243 + $0x198] sm:$0xff]
      %v2114 = vld [vmem:[%s243 + $0x1a0] sm:$0xf]
      %v2115 = vld [vmem:[%s243 + $0x1a4] sm:$0xff]
      %v2116 = vld [vmem:[%s243 + $0x1ac] sm:$0xf]
      %s2117 = scalar_lea.vmem %s1, 384
      %v2118 = vld [vmem:[%s2117] sm:$0xf]
      %v2119 = vld [vmem:[%s2117 + $0x4] sm:$0xf]
      %v2120 = vld [vmem:[%s2117 + $0x8] sm:$0xf]
      %v2121 = vld [vmem:[%s2117 + $0xc] sm:$0xf]
      %v2122 = vld [vmem:[%s2117 + $0x10] sm:$0xf]
      %v2123 = vld [vmem:[%s2117 + $0x14] sm:$0xf]
      %v2124 = vld [vmem:[%s2117 + $0x18] sm:$0xf]
      %v2125 = vld [vmem:[%s2117 + $0x1c] sm:$0xf]
      %v2126 = vld [vmem:[%s2117 + $0x20] sm:$0xf]
      %v2127 = vld [vmem:[%s2117 + $0x24] sm:$0xf]
      %v2128 = vld [vmem:[%s2117 + $0x28] sm:$0xf]
      %v2129 = vld [vmem:[%s2117 + $0x2c] sm:$0xf]
      %v2130 = vld [vmem:[%s2117 + $0x30] sm:$0xf]
      %v2131 = vld [vmem:[%s2117 + $0x34] sm:$0xf]
      %v2132 = vld [vmem:[%s2117 + $0x38] sm:$0xf]
      %v2133 = vld [vmem:[%s2117 + $0x3c] sm:$0xf]
      %v2134 = vld [vmem:[%s2117 + $0x40] sm:$0xf]
      %v2135 = vld [vmem:[%s2117 + $0x44] sm:$0xf]
      %v2136 = vld [vmem:[%s2117 + $0x48] sm:$0xf]
      %v2137 = vld [vmem:[%s2117 + $0x4c] sm:$0xf]
      %v2138 = vld [vmem:[%s2117 + $0x50] sm:$0xf]
      %v2139 = vld [vmem:[%s2117 + $0x54] sm:$0xf]
      %v2140 = vld [vmem:[%s2117 + $0x58] sm:$0xf]
      %v2141 = vld [vmem:[%s2117 + $0x5c] sm:$0xf]
      %v2142 = vld [vmem:[%s2117 + $0x60] sm:$0xf]
      %v2143 = vld [vmem:[%s2117 + $0x64] sm:$0xf]
      %v2144 = vld [vmem:[%s2117 + $0x68] sm:$0xf]
      %v2145 = vld [vmem:[%s2117 + $0x6c] sm:$0xf]
      %v2146 = vld [vmem:[%s2117 + $0x70] sm:$0xf]
      %v2147 = vld [vmem:[%s2117 + $0x74] sm:$0xf]
      %v2148 = vld [vmem:[%s2117 + $0x78] sm:$0xf]
      %v2149 = vld [vmem:[%s2117 + $0x7c] sm:$0xf]
      %v2150 = vld [vmem:[%s2117 + $0x80] sm:$0xf]
      %v2151 = vld [vmem:[%s2117 + $0x84] sm:$0xf]
      %v2152 = vld [vmem:[%s2117 + $0x88] sm:$0xf]
      %v2153 = vld [vmem:[%s2117 + $0x8c] sm:$0xf]
      %v2154 = vld [vmem:[%s2117 + $0x90] sm:$0xf]
      %v2155 = vld [vmem:[%s2117 + $0x94] sm:$0xf]
      %v2156 = vld [vmem:[%s2117 + $0x98] sm:$0xf]
      %v2157 = vld [vmem:[%s2117 + $0x9c] sm:$0xf]
      %v2158 = vld [vmem:[%s2117 + $0xa0] sm:$0xf]
      %v2159 = vld [vmem:[%s2117 + $0xa4] sm:$0xf]
      %v2160 = vld [vmem:[%s2117 + $0xa8] sm:$0xf]
      %v2161 = vld [vmem:[%s2117 + $0xac] sm:$0xf]
      %v2162 = vld [vmem:[%s2117 + $0xb0] sm:$0xf]
      %v2163 = vld [vmem:[%s2117 + $0xb4] sm:$0xf]
      %v2164 = vld [vmem:[%s2117 + $0xb8] sm:$0xf]
      %v2165 = vld [vmem:[%s2117 + $0xbc] sm:$0xf]
      %v2230 = vunpack.c.l.b16 %v2053
      %v2231 = vunpack.c.h.b16 %v2053
      %v2232 = vunpack.c.l.b16 %v2054
      %v2233 = vunpack.c.l.b16 %v2055
      %v2234 = vunpack.c.h.b16 %v2055
      %v2235 = vunpack.c.l.b16 %v2056
      %v2236 = vunpack.c.l.b16 %v2057
      %v2237 = vunpack.c.h.b16 %v2057
      %v2238 = vunpack.c.l.b16 %v2058
      %v2239 = vunpack.c.l.b16 %v2059
      %v2240 = vunpack.c.h.b16 %v2059
      %v2241 = vunpack.c.l.b16 %v2060
      %v2242 = vunpack.c.l.b16 %v2061
      %v2243 = vunpack.c.h.b16 %v2061
      %v2244 = vunpack.c.l.b16 %v2062
      %v2245 = vunpack.c.l.b16 %v2063
      %v2246 = vunpack.c.h.b16 %v2063
      %v2247 = vunpack.c.l.b16 %v2064
      %v2248 = vunpack.c.l.b16 %v2065
      %v2249 = vunpack.c.h.b16 %v2065
      %v2250 = vunpack.c.l.b16 %v2066
      %v2251 = vunpack.c.l.b16 %v2067
      %v2252 = vunpack.c.h.b16 %v2067
      %v2253 = vunpack.c.l.b16 %v2068
      %v2254 = vunpack.c.l.b16 %v2069
      %v2255 = vunpack.c.h.b16 %v2069
      %v2256 = vunpack.c.l.b16 %v2070
      %v2257 = vunpack.c.l.b16 %v2071
      %v2258 = vunpack.c.h.b16 %v2071
      %v2259 = vunpack.c.l.b16 %v2072
      %v2260 = vunpack.c.l.b16 %v2073
      %v2261 = vunpack.c.h.b16 %v2073
      %v2262 = vunpack.c.l.b16 %v2074
      %v2263 = vunpack.c.l.b16 %v2075
      %v2264 = vunpack.c.h.b16 %v2075
      %v2265 = vunpack.c.l.b16 %v2076
      %v2266 = vunpack.c.l.b16 %v2077
      %v2267 = vunpack.c.h.b16 %v2077
      %v2268 = vunpack.c.l.b16 %v2078
      %v2269 = vunpack.c.l.b16 %v2079
      %v2270 = vunpack.c.h.b16 %v2079
      %v2271 = vunpack.c.l.b16 %v2080
      %v2272 = vunpack.c.l.b16 %v2081
      %v2273 = vunpack.c.h.b16 %v2081
      %v2274 = vunpack.c.l.b16 %v2082
      %v2275 = vunpack.c.l.b16 %v2083
      %v2276 = vunpack.c.h.b16 %v2083
      %v2277 = vunpack.c.l.b16 %v2084
      %v2278 = vunpack.c.l.b16 %v2085
      %v2279 = vunpack.c.h.b16 %v2085
      %v2280 = vunpack.c.l.b16 %v2086
      %v2281 = vunpack.c.l.b16 %v2087
      %v2282 = vunpack.c.h.b16 %v2087
      %v2283 = vunpack.c.l.b16 %v2088
      %v2284 = vunpack.c.l.b16 %v2089
      %v2285 = vunpack.c.h.b16 %v2089
      %v2286 = vunpack.c.l.b16 %v2090
      %v2287 = vunpack.c.l.b16 %v2091
      %v2288 = vunpack.c.h.b16 %v2091
      %v2289 = vunpack.c.l.b16 %v2092
      %v2290 = vunpack.c.l.b16 %v2093
      %v2291 = vunpack.c.h.b16 %v2093
      %v2292 = vunpack.c.l.b16 %v2094
      %v2293 = vunpack.c.l.b16 %v2095
      %v2294 = vunpack.c.h.b16 %v2095
      %v2295 = vunpack.c.l.b16 %v2096
      %v2296 = vunpack.c.l.b16 %v2097
      %v2297 = vunpack.c.h.b16 %v2097
      %v2298 = vunpack.c.l.b16 %v2098
      %v2299 = vunpack.c.l.b16 %v2099
      %v2300 = vunpack.c.h.b16 %v2099
      %v2301 = vunpack.c.l.b16 %v2100
      %v2302 = vunpack.c.l.b16 %v2101
      %v2303 = vunpack.c.h.b16 %v2101
      %v2304 = vunpack.c.l.b16 %v2102
      %v2305 = vunpack.c.l.b16 %v2103
      %v2306 = vunpack.c.h.b16 %v2103
      %v2307 = vunpack.c.l.b16 %v2104
      %v2308 = vunpack.c.l.b16 %v2105
      %v2309 = vunpack.c.h.b16 %v2105
      %v2310 = vunpack.c.l.b16 %v2106
      %v2311 = vunpack.c.l.b16 %v2107
      %v2312 = vunpack.c.h.b16 %v2107
      %v2313 = vunpack.c.l.b16 %v2108
      %v2314 = vunpack.c.l.b16 %v2109
      %v2315 = vunpack.c.h.b16 %v2109
      %v2316 = vunpack.c.l.b16 %v2110
      %v2317 = vunpack.c.l.b16 %v2111
      %v2318 = vunpack.c.h.b16 %v2111
      %v2319 = vunpack.c.l.b16 %v2112
      %v2320 = vunpack.c.l.b16 %v2113
      %v2321 = vunpack.c.h.b16 %v2113
      %v2322 = vunpack.c.l.b16 %v2114
      %v2323 = vunpack.c.l.b16 %v2115
      %v2324 = vunpack.c.h.b16 %v2115
      %v2325 = vunpack.c.l.b16 %v2116
      %v2326 = vpack.c.b16 %v2233, %v2230
      %v2327 = vpack.c.b16 %v2234, %v2231
      %v2328 = vpack.c.b16 %v2235, %v2232
      %v2329 = vpack.c.b16 %v2239, %v2236
      %v2330 = vpack.c.b16 %v2240, %v2237
      %v2331 = vpack.c.b16 %v2241, %v2238
      %v2332 = vpack.c.b16 %v2245, %v2242
      %v2333 = vpack.c.b16 %v2246, %v2243
      %v2334 = vpack.c.b16 %v2247, %v2244
      %v2335 = vpack.c.b16 %v2251, %v2248
      %v2336 = vpack.c.b16 %v2252, %v2249
      %v2337 = vpack.c.b16 %v2253, %v2250
      %v2338 = vpack.c.b16 %v2257, %v2254
      %v2339 = vpack.c.b16 %v2258, %v2255
      %v2340 = vpack.c.b16 %v2259, %v2256
      %v2341 = vpack.c.b16 %v2263, %v2260
      %v2342 = vpack.c.b16 %v2264, %v2261
      %v2343 = vpack.c.b16 %v2265, %v2262
      %v2344 = vpack.c.b16 %v2269, %v2266
      %v2345 = vpack.c.b16 %v2270, %v2267
      %v2346 = vpack.c.b16 %v2271, %v2268
      %v2347 = vpack.c.b16 %v2275, %v2272
      %v2348 = vpack.c.b16 %v2276, %v2273
      %v2349 = vpack.c.b16 %v2277, %v2274
      %v2350 = vpack.c.b16 %v2281, %v2278
      %v2351 = vpack.c.b16 %v2282, %v2279
      %v2352 = vpack.c.b16 %v2283, %v2280
      %v2353 = vpack.c.b16 %v2287, %v2284
      %v2354 = vpack.c.b16 %v2288, %v2285
      %v2355 = vpack.c.b16 %v2289, %v2286
      %v2356 = vpack.c.b16 %v2293, %v2290
      %v2357 = vpack.c.b16 %v2294, %v2291
      %v2358 = vpack.c.b16 %v2295, %v2292
      %v2359 = vpack.c.b16 %v2299, %v2296
      %v2360 = vpack.c.b16 %v2300, %v2297
      %v2361 = vpack.c.b16 %v2301, %v2298
      %v2362 = vpack.c.b16 %v2305, %v2302
      %v2363 = vpack.c.b16 %v2306, %v2303
      %v2364 = vpack.c.b16 %v2307, %v2304
      %v2365 = vpack.c.b16 %v2311, %v2308
      %v2366 = vpack.c.b16 %v2312, %v2309
      %v2367 = vpack.c.b16 %v2313, %v2310
      %v2368 = vpack.c.b16 %v2317, %v2314
      %v2369 = vpack.c.b16 %v2318, %v2315
      %v2370 = vpack.c.b16 %v2319, %v2316
      %v2371 = vpack.c.b16 %v2323, %v2320
      %v2372 = vpack.c.b16 %v2324, %v2321
      %v2373 = vpack.c.b16 %v2325, %v2322
      %v2470 = vunpack.c.l.b16 %v2118
      %v2471 = vunpack.c.l.b16 %v2119
      %v2472 = vunpack.c.l.b16 %v2120
      %v2473 = vunpack.c.l.b16 %v2121
      %v2474 = vunpack.c.l.b16 %v2122
      %v2475 = vunpack.c.l.b16 %v2123
      %v2476 = vunpack.c.l.b16 %v2124
      %v2477 = vunpack.c.l.b16 %v2125
      %v2478 = vunpack.c.l.b16 %v2126
      %v2479 = vunpack.c.l.b16 %v2127
      %v2480 = vunpack.c.l.b16 %v2128
      %v2481 = vunpack.c.l.b16 %v2129
      %v2482 = vunpack.c.l.b16 %v2130
      %v2483 = vunpack.c.l.b16 %v2131
      %v2484 = vunpack.c.l.b16 %v2132
      %v2485 = vunpack.c.l.b16 %v2133
      %v2486 = vunpack.c.l.b16 %v2134
      %v2487 = vunpack.c.l.b16 %v2135
      %v2488 = vunpack.c.l.b16 %v2136
      %v2489 = vunpack.c.l.b16 %v2137
      %v2490 = vunpack.c.l.b16 %v2138
      %v2491 = vunpack.c.l.b16 %v2139
      %v2492 = vunpack.c.l.b16 %v2140
      %v2493 = vunpack.c.l.b16 %v2141
      %v2494 = vunpack.c.l.b16 %v2142
      %v2495 = vunpack.c.l.b16 %v2143
      %v2496 = vunpack.c.l.b16 %v2144
      %v2497 = vunpack.c.l.b16 %v2145
      %v2498 = vunpack.c.l.b16 %v2146
      %v2499 = vunpack.c.l.b16 %v2147
      %v2500 = vunpack.c.l.b16 %v2148
      %v2501 = vunpack.c.l.b16 %v2149
      %v2502 = vunpack.c.l.b16 %v2150
      %v2503 = vunpack.c.l.b16 %v2151
      %v2504 = vunpack.c.l.b16 %v2152
      %v2505 = vunpack.c.l.b16 %v2153
      %v2506 = vunpack.c.l.b16 %v2154
      %v2507 = vunpack.c.l.b16 %v2155
      %v2508 = vunpack.c.l.b16 %v2156
      %v2509 = vunpack.c.l.b16 %v2157
      %v2510 = vunpack.c.l.b16 %v2158
      %v2511 = vunpack.c.l.b16 %v2159
      %v2512 = vunpack.c.l.b16 %v2160
      %v2513 = vunpack.c.l.b16 %v2161
      %v2514 = vunpack.c.l.b16 %v2162
      %v2515 = vunpack.c.l.b16 %v2163
      %v2516 = vunpack.c.l.b16 %v2164
      %v2517 = vunpack.c.l.b16 %v2165
      %v2518 = vpack.c.b16 %v2471, %v2470
      %v2519 = vpack.c.b16 %v2473, %v2472
      %v2520 = vpack.c.b16 %v2475, %v2474
      %v2521 = vpack.c.b16 %v2477, %v2476
      %v2522 = vpack.c.b16 %v2479, %v2478
      %v2523 = vpack.c.b16 %v2481, %v2480
      %v2524 = vpack.c.b16 %v2483, %v2482
      %v2525 = vpack.c.b16 %v2485, %v2484
      %v2526 = vpack.c.b16 %v2487, %v2486
      %v2527 = vpack.c.b16 %v2489, %v2488
      %v2528 = vpack.c.b16 %v2491, %v2490
      %v2529 = vpack.c.b16 %v2493, %v2492
      %v2530 = vpack.c.b16 %v2495, %v2494
      %v2531 = vpack.c.b16 %v2497, %v2496
      %v2532 = vpack.c.b16 %v2499, %v2498
      %v2533 = vpack.c.b16 %v2501, %v2500
      %v2534 = vpack.c.b16 %v2503, %v2502
      %v2535 = vpack.c.b16 %v2505, %v2504
      %v2536 = vpack.c.b16 %v2507, %v2506
      %v2537 = vpack.c.b16 %v2509, %v2508
      %v2538 = vpack.c.b16 %v2511, %v2510
      %v2539 = vpack.c.b16 %v2513, %v2512
      %v2540 = vpack.c.b16 %v2515, %v2514
      %v2541 = vpack.c.b16 %v2517, %v2516
      %2566 = vmatprep.subr.bf16.mxu0 0
      %2567 = vmatpush1.bf16.msra.mxu0 %v2518
      %2568 = vmatprep.subr.bf16.mxu0 0
      %2569 = vmatpush1.bf16.msra.mxu0 %v2519
      %2570 = vmatprep.subr.bf16.mxu0 0
      %2571 = vmatpush1.bf16.msra.mxu0 %v2520
      %2572 = vmatprep.subr.bf16.mxu0 0
      %2573 = vmatpush1.bf16.msra.mxu0 %v2521
      %2574 = vmatprep.subr.bf16.mxu0 0
      %2575 = vmatpush1.bf16.msra.mxu0 %v2522
      %2576 = vmatprep.subr.bf16.mxu0 0
      %2577 = vmatpush1.bf16.msra.mxu0 %v2523
      %2578 = vmatprep.subr.bf16.mxu0 0
      %2579 = vmatpush1.bf16.msra.mxu0 %v2524
      %2580 = vmatprep.subr.bf16.mxu0 0
      %2581 = vmatpush1.bf16.msra.mxu0 %v2525
      %2582 = vmatprep.subr.bf16.mxu0 0
      %2583 = vmatpush1.bf16.msra.mxu0 %v2526
      %2584 = vmatprep.subr.bf16.mxu0 0
      %2585 = vmatpush1.bf16.msra.mxu0 %v2527
      %2586 = vmatprep.subr.bf16.mxu0 0
      %2587 = vmatpush1.bf16.msra.mxu0 %v2528
      %2588 = vmatprep.subr.bf16.mxu0 0
      %2589 = vmatpush1.bf16.msra.mxu0 %v2529
      %2590 = vmatprep.subr.bf16.mxu0 0
      %2591 = vmatpush1.bf16.msra.mxu0 %v2530
      %2592 = vmatprep.subr.bf16.mxu0 0
      %2593 = vmatpush1.bf16.msra.mxu0 %v2531
      %2594 = vmatprep.subr.bf16.mxu0 0
      %2595 = vmatpush1.bf16.msra.mxu0 %v2532
      %2596 = vmatprep.subr.bf16.mxu0 0
      %2597 = vmatpush1.bf16.msra.mxu0 %v2533
      %2598 = vmatprep.mubr.bf16.mxu0 %v2327
      %2599 = vmatmul.mubr.bf16.gmra.mrb[0].mxu0 %v2326
      %v2600 = vpop.f32.mrb[0].mxu0
      %v2601 = vadd.f32 0.0, %v2600
      %v2602 = vpop.f32.mrb[0].mxu0
      %v2603 = vpop.f32.mrb[0].mxu0
      %v2604 = vadd.f32 0.0, %v2603
      %v2605 = vpop.f32.mrb[0].mxu0
      %2606 = vmatprep.mubr.bf16.mxu0 %v2330
      %2607 = vmatmul.mubr.bf16.gmra.mrb[0].mxu0 %v2329
      %v2608 = vpop.f32.mrb[0].mxu0
      %v2609 = vadd.f32 0.0, %v2608
      %v2610 = vpop.f32.mrb[0].mxu0
      %v2611 = vpop.f32.mrb[0].mxu0
      %v2612 = vadd.f32 0.0, %v2611
      %v2613 = vpop.f32.mrb[0].mxu0
      %2614 = vmatprep.mubr.bf16.mxu0 %v2333
      %2615 = vmatmul.mubr.bf16.gmra.mrb[0].mxu0 %v2332
      %v2616 = vpop.f32.mrb[0].mxu0
      %v2617 = vadd.f32 0.0, %v2616
      %v2618 = vpop.f32.mrb[0].mxu0
      %v2619 = vpop.f32.mrb[0].mxu0
      %v2620 = vadd.f32 0.0, %v2619
      %v2621 = vpop.f32.mrb[0].mxu0
      %2622 = vmatprep.mubr.bf16.mxu0 %v2336
      %2623 = vmatmul.mubr.bf16.gmra.mrb[0].mxu0 %v2335
      %v2624 = vpop.f32.mrb[0].mxu0
      %v2625 = vadd.f32 0.0, %v2624
      %v2626 = vpop.f32.mrb[0].mxu0
      %v2627 = vpop.f32.mrb[0].mxu0
      %v2628 = vadd.f32 0.0, %v2627
      %v2629 = vpop.f32.mrb[0].mxu0
      %2630 = vmatprep.mubr.bf16.mxu0 %v2339
      %2631 = vmatmul.mubr.bf16.gmra.mrb[0].mxu0 %v2338
      %v2632 = vpop.f32.mrb[0].mxu0
      %v2633 = vadd.f32 0.0, %v2632
      %v2634 = vpop.f32.mrb[0].mxu0
      %v2635 = vpop.f32.mrb[0].mxu0
      %v2636 = vadd.f32 0.0, %v2635
      %v2637 = vpop.f32.mrb[0].mxu0
      %2638 = vmatprep.mubr.bf16.mxu0 %v2342
      %2639 = vmatmul.mubr.bf16.gmra.mrb[0].mxu0 %v2341
      %v2640 = vpop.f32.mrb[0].mxu0
      %v2641 = vadd.f32 0.0, %v2640
      %v2642 = vpop.f32.mrb[0].mxu0
      %v2643 = vpop.f32.mrb[0].mxu0
      %v2644 = vadd.f32 0.0, %v2643
      %v2645 = vpop.f32.mrb[0].mxu0
      %2646 = vmatprep.mubr.bf16.mxu0 %v2345
      %2647 = vmatmul.mubr.bf16.gmra.mrb[0].mxu0 %v2344
      %v2648 = vpop.f32.mrb[0].mxu0
      %v2649 = vadd.f32 0.0, %v2648
      %v2650 = vpop.f32.mrb[0].mxu0
      %v2651 = vpop.f32.mrb[0].mxu0
      %v2652 = vadd.f32 0.0, %v2651
      %v2653 = vpop.f32.mrb[0].mxu0
      %2654 = vmatprep.mubr.bf16.mxu0 %v2348
      %2655 = vmatmul.mubr.bf16.gmra.mrb[0].mxu0 %v2347
      %v2656 = vpop.f32.mrb[0].mxu0
      %v2657 = vadd.f32 0.0, %v2656
      %v2658 = vpop.f32.mrb[0].mxu0
      %v2659 = vpop.f32.mrb[0].mxu0
      %v2660 = vadd.f32 0.0, %v2659
      %v2661 = vpop.f32.mrb[0].mxu0
      %2662 = vmatprep.mubr.bf16.mxu0 %v2351
      %2663 = vmatmul.mubr.bf16.gmra.mrb[0].mxu0 %v2350
      %v2664 = vpop.f32.mrb[0].mxu0
      %v2665 = vadd.f32 0.0, %v2664
      %v2666 = vpop.f32.mrb[0].mxu0
      %v2667 = vpop.f32.mrb[0].mxu0
      %v2668 = vadd.f32 0.0, %v2667
      %v2669 = vpop.f32.mrb[0].mxu0
      %2670 = vmatprep.mubr.bf16.mxu0 %v2354
      %2671 = vmatmul.mubr.bf16.gmra.mrb[0].mxu0 %v2353
      %v2672 = vpop.f32.mrb[0].mxu0
      %v2673 = vadd.f32 0.0, %v2672
      %v2674 = vpop.f32.mrb[0].mxu0
      %v2675 = vpop.f32.mrb[0].mxu0
      %v2676 = vadd.f32 0.0, %v2675
      %v2677 = vpop.f32.mrb[0].mxu0
      %2678 = vmatprep.mubr.bf16.mxu0 %v2357
      %2679 = vmatmul.mubr.bf16.gmra.mrb[0].mxu0 %v2356
      %v2680 = vpop.f32.mrb[0].mxu0
      %v2681 = vadd.f32 0.0, %v2680
      %v2682 = vpop.f32.mrb[0].mxu0
      %v2683 = vpop.f32.mrb[0].mxu0
      %v2684 = vadd.f32 0.0, %v2683
      %v2685 = vpop.f32.mrb[0].mxu0
      %2686 = vmatprep.mubr.bf16.mxu0 %v2360
      %2687 = vmatmul.mubr.bf16.gmra.mrb[0].mxu0 %v2359
      %v2688 = vpop.f32.mrb[0].mxu0
      %v2689 = vadd.f32 0.0, %v2688
      %v2690 = vpop.f32.mrb[0].mxu0
      %v2691 = vpop.f32.mrb[0].mxu0
      %v2692 = vadd.f32 0.0, %v2691
      %v2693 = vpop.f32.mrb[0].mxu0
      %2694 = vmatprep.mubr.bf16.mxu0 %v2363
      %2695 = vmatmul.mubr.bf16.gmra.mrb[0].mxu0 %v2362
      %v2696 = vpop.f32.mrb[0].mxu0
      %v2697 = vadd.f32 0.0, %v2696
      %v2698 = vpop.f32.mrb[0].mxu0
      %v2699 = vpop.f32.mrb[0].mxu0
      %v2700 = vadd.f32 0.0, %v2699
      %v2701 = vpop.f32.mrb[0].mxu0
      %2702 = vmatprep.mubr.bf16.mxu0 %v2366
      %2703 = vmatmul.mubr.bf16.gmra.mrb[0].mxu0 %v2365
      %v2704 = vpop.f32.mrb[0].mxu0
      %v2705 = vadd.f32 0.0, %v2704
      %v2706 = vpop.f32.mrb[0].mxu0
      %v2707 = vpop.f32.mrb[0].mxu0
      %v2708 = vadd.f32 0.0, %v2707
      %v2709 = vpop.f32.mrb[0].mxu0
      %2710 = vmatprep.mubr.bf16.mxu0 %v2369
      %2711 = vmatmul.mubr.bf16.gmra.mrb[0].mxu0 %v2368
      %v2712 = vpop.f32.mrb[0].mxu0
      %v2713 = vadd.f32 0.0, %v2712
      %v2714 = vpop.f32.mrb[0].mxu0
      %v2715 = vpop.f32.mrb[0].mxu0
      %v2716 = vadd.f32 0.0, %v2715
      %v2717 = vpop.f32.mrb[0].mxu0
      %2718 = vmatprep.mubr.bf16.mxu0 %v2372
      %2719 = vmatmul.mubr.bf16.gmra.mrb[0].mxu0 %v2371
      %v2720 = vpop.f32.mrb[0].mxu0
      %v2721 = vadd.f32 0.0, %v2720
      %v2722 = vpop.f32.mrb[0].mxu0
      %v2723 = vpop.f32.mrb[0].mxu0
      %v2724 = vadd.f32 0.0, %v2723
      %v2725 = vpop.f32.mrb[0].mxu0
      %2726 = vdwg.mxu0
      %2727 = vmatprep.subr.bf16.mxu0 0
      %2728 = vmatpush1.bf16.msra.mxu0 %v2534
      %2729 = vmatprep.subr.bf16.mxu0 0
      %2730 = vmatpush1.bf16.msra.mxu0 %v2535
      %2731 = vmatprep.subr.bf16.mxu0 0
      %2732 = vmatpush1.bf16.msra.mxu0 %v2536
      %2733 = vmatprep.subr.bf16.mxu0 0
      %2734 = vmatpush1.bf16.msra.mxu0 %v2537
      %2735 = vmatprep.subr.bf16.mxu0 0
      %2736 = vmatpush1.bf16.msra.mxu0 %v2538
      %2737 = vmatprep.subr.bf16.mxu0 0
      %2738 = vmatpush1.bf16.msra.mxu0 %v2539
      %2739 = vmatprep.subr.bf16.mxu0 0
      %2740 = vmatpush1.bf16.msra.mxu0 %v2540
      %2741 = vmatprep.subr.bf16.mxu0 0
      %2742 = vmatpush1.bf16.msra.mxu0 %v2541
      %2743 = vmatprep.subr.bf16.mxu0 0
      %2744 = vmatpush1.bf16.msra.mxu0 0
      %2745 = vmatprep.subr.bf16.mxu0 0
      %2746 = vmatpush1.bf16.msra.mxu0 0
      %2747 = vmatprep.subr.bf16.mxu0 0
      %2748 = vmatpush1.bf16.msra.mxu0 0
      %2749 = vmatprep.subr.bf16.mxu0 0
      %2750 = vmatpush1.bf16.msra.mxu0 0
      %2751 = vmatprep.subr.bf16.mxu0 0
      %2752 = vmatpush1.bf16.msra.mxu0 0
      %2753 = vmatprep.subr.bf16.mxu0 0
      %2754 = vmatpush1.bf16.msra.mxu0 0
      %2755 = vmatprep.subr.bf16.mxu0 0
      %2756 = vmatpush1.bf16.msra.mxu0 0
      %2757 = vmatprep.subr.bf16.mxu0 0
      %2758 = vmatpush1.bf16.msra.mxu0 0
      %2759 = vmatprep.mubr.bf16.mxu0 0
      %2760 = vmatmul.mubr.bf16.gmra.mrb[0].mxu0 %v2328
      %v2761 = vpop.f32.mrb[0].mxu0
      %v2762 = vadd.f32 %v2601, %v2761
      %v2763 = vpop.f32.mrb[0].mxu0
      %v2764 = vpop.f32.mrb[0].mxu0
      %v2765 = vadd.f32 %v2604, %v2764
      %v2766 = vpop.f32.mrb[0].mxu0
      %2767 = vmatprep.mubr.bf16.mxu0 0
      %2768 = vmatmul.mubr.bf16.gmra.mrb[0].mxu0 %v2331
      %v2769 = vpop.f32.mrb[0].mxu0
      %v2770 = vadd.f32 %v2609, %v2769
      %v2771 = vpop.f32.mrb[0].mxu0
      %v2772 = vpop.f32.mrb[0].mxu0
      %v2773 = vadd.f32 %v2612, %v2772
      %v2774 = vpop.f32.mrb[0].mxu0
      %2775 = vmatprep.mubr.bf16.mxu0 0
      %2776 = vmatmul.mubr.bf16.gmra.mrb[0].mxu0 %v2334
      %v2777 = vpop.f32.mrb[0].mxu0
      %v2778 = vadd.f32 %v2617, %v2777
      %v2779 = vpop.f32.mrb[0].mxu0
      %v2780 = vpop.f32.mrb[0].mxu0
      %v2781 = vadd.f32 %v2620, %v2780
      %v2782 = vpop.f32.mrb[0].mxu0
      %2783 = vmatprep.mubr.bf16.mxu0 0
      %2784 = vmatmul.mubr.bf16.gmra.mrb[0].mxu0 %v2337
      %v2785 = vpop.f32.mrb[0].mxu0
      %v2786 = vadd.f32 %v2625, %v2785
      %v2787 = vpop.f32.mrb[0].mxu0
      %v2788 = vpop.f32.mrb[0].mxu0
      %v2789 = vadd.f32 %v2628, %v2788
      %v2790 = vpop.f32.mrb[0].mxu0
      %2791 = vmatprep.mubr.bf16.mxu0 0
      %2792 = vmatmul.mubr.bf16.gmra.mrb[0].mxu0 %v2340
      %v2793 = vpop.f32.mrb[0].mxu0
      %v2794 = vadd.f32 %v2633, %v2793
      %v2795 = vpop.f32.mrb[0].mxu0
      %v2796 = vpop.f32.mrb[0].mxu0
      %v2797 = vadd.f32 %v2636, %v2796
      %v2798 = vpop.f32.mrb[0].mxu0
      %2799 = vmatprep.mubr.bf16.mxu0 0
      %2800 = vmatmul.mubr.bf16.gmra.mrb[0].mxu0 %v2343
      %v2801 = vpop.f32.mrb[0].mxu0
      %v2802 = vadd.f32 %v2641, %v2801
      %v2803 = vpop.f32.mrb[0].mxu0
      %v2804 = vpop.f32.mrb[0].mxu0
      %v2805 = vadd.f32 %v2644, %v2804
      %v2806 = vpop.f32.mrb[0].mxu0
      %2807 = vmatprep.mubr.bf16.mxu0 0
      %2808 = vmatmul.mubr.bf16.gmra.mrb[0].mxu0 %v2346
      %v2809 = vpop.f32.mrb[0].mxu0
      %v2810 = vadd.f32 %v2649, %v2809
      %v2811 = vpop.f32.mrb[0].mxu0
      %v2812 = vpop.f32.mrb[0].mxu0
      %v2813 = vadd.f32 %v2652, %v2812
      %v2814 = vpop.f32.mrb[0].mxu0
      %2815 = vmatprep.mubr.bf16.mxu0 0
      %2816 = vmatmul.mubr.bf16.gmra.mrb[0].mxu0 %v2349
      %v2817 = vpop.f32.mrb[0].mxu0
      %v2818 = vadd.f32 %v2657, %v2817
      %v2819 = vpop.f32.mrb[0].mxu0
      %v2820 = vpop.f32.mrb[0].mxu0
      %v2821 = vadd.f32 %v2660, %v2820
      %v2822 = vpop.f32.mrb[0].mxu0
      %2823 = vmatprep.mubr.bf16.mxu0 0
      %2824 = vmatmul.mubr.bf16.gmra.mrb[0].mxu0 %v2352
      %v2825 = vpop.f32.mrb[0].mxu0
      %v2826 = vadd.f32 %v2665, %v2825
      %v2827 = vpop.f32.mrb[0].mxu0
      %v2828 = vpop.f32.mrb[0].mxu0
      %v2829 = vadd.f32 %v2668, %v2828
      %v2830 = vpop.f32.mrb[0].mxu0
      %2831 = vmatprep.mubr.bf16.mxu0 0
      %2832 = vmatmul.mubr.bf16.gmra.mrb[0].mxu0 %v2355
      %v2833 = vpop.f32.mrb[0].mxu0
      %v2834 = vadd.f32 %v2673, %v2833
      %v2835 = vpop.f32.mrb[0].mxu0
      %v2836 = vpop.f32.mrb[0].mxu0
      %v2837 = vadd.f32 %v2676, %v2836
      %v2838 = vpop.f32.mrb[0].mxu0
      %2839 = vmatprep.mubr.bf16.mxu0 0
      %2840 = vmatmul.mubr.bf16.gmra.mrb[0].mxu0 %v2358
      %v2841 = vpop.f32.mrb[0].mxu0
      %v2842 = vadd.f32 %v2681, %v2841
      %v2843 = vpop.f32.mrb[0].mxu0
      %v2844 = vpop.f32.mrb[0].mxu0
      %v2845 = vadd.f32 %v2684, %v2844
      %v2846 = vpop.f32.mrb[0].mxu0
      %2847 = vmatprep.mubr.bf16.mxu0 0
      %2848 = vmatmul.mubr.bf16.gmra.mrb[0].mxu0 %v2361
      %v2849 = vpop.f32.mrb[0].mxu0
      %v2850 = vadd.f32 %v2689, %v2849
      %v2851 = vpop.f32.mrb[0].mxu0
      %v2852 = vpop.f32.mrb[0].mxu0
      %v2853 = vadd.f32 %v2692, %v2852
      %v2854 = vpop.f32.mrb[0].mxu0
      %2855 = vmatprep.mubr.bf16.mxu0 0
      %2856 = vmatmul.mubr.bf16.gmra.mrb[0].mxu0 %v2364
      %v2857 = vpop.f32.mrb[0].mxu0
      %v2858 = vadd.f32 %v2697, %v2857
      %v2859 = vpop.f32.mrb[0].mxu0
      %v2860 = vpop.f32.mrb[0].mxu0
      %v2861 = vadd.f32 %v2700, %v2860
      %v2862 = vpop.f32.mrb[0].mxu0
      %2863 = vmatprep.mubr.bf16.mxu0 0
      %2864 = vmatmul.mubr.bf16.gmra.mrb[0].mxu0 %v2367
      %v2865 = vpop.f32.mrb[0].mxu0
      %v2866 = vadd.f32 %v2705, %v2865
      %v2867 = vpop.f32.mrb[0].mxu0
      %v2868 = vpop.f32.mrb[0].mxu0
      %v2869 = vadd.f32 %v2708, %v2868
      %v2870 = vpop.f32.mrb[0].mxu0
      %2871 = vmatprep.mubr.bf16.mxu0 0
      %2872 = vmatmul.mubr.bf16.gmra.mrb[0].mxu0 %v2370
      %v2873 = vpop.f32.mrb[0].mxu0
      %v2874 = vadd.f32 %v2713, %v2873
      %v2875 = vpop.f32.mrb[0].mxu0
      %v2876 = vpop.f32.mrb[0].mxu0
      %v2877 = vadd.f32 %v2716, %v2876
      %v2878 = vpop.f32.mrb[0].mxu0
      %2879 = vmatprep.mubr.bf16.mxu0 0
      %2880 = vmatmul.mubr.bf16.gmra.mrb[0].mxu0 %v2373
      %v2881 = vpop.f32.mrb[0].mxu0
      %v2882 = vadd.f32 %v2721, %v2881
      %v2883 = vpop.f32.mrb[0].mxu0
      %v2884 = vpop.f32.mrb[0].mxu0
      %v2885 = vadd.f32 %v2724, %v2884
      %v2886 = vpop.f32.mrb[0].mxu0
      %2887 = vdwg.mxu0
      %v2888 = vld [vmem:[#allocation2] sm:$0xff]
      %v2889 = vld [vmem:[#allocation2 + $0x8] sm:$0xff]
      %v2890 = vld [vmem:[#allocation2 + $0x10] sm:$0xff]
      %v2891 = vld [vmem:[#allocation2 + $0x18] sm:$0xff]
      %v2892 = vld [vmem:[#allocation2 + $0x20] sm:$0xff]
      %v2893 = vld [vmem:[#allocation2 + $0x28] sm:$0xff]
      %v2894 = vld [vmem:[#allocation2 + $0x30] sm:$0xff]
      %v2895 = vld [vmem:[#allocation2 + $0x38] sm:$0xff]
      %v2896 = vld [vmem:[#allocation2 + $0x40] sm:$0xff]
      %v2897 = vld [vmem:[#allocation2 + $0x48] sm:$0xff]
      %v2898 = vld [vmem:[#allocation2 + $0x50] sm:$0xff]
      %v2899 = vld [vmem:[#allocation2 + $0x58] sm:$0xff]
      %v2900 = vld [vmem:[#allocation2 + $0x60] sm:$0xff]
      %v2901 = vld [vmem:[#allocation2 + $0x68] sm:$0xff]
      %v2902 = vld [vmem:[#allocation2 + $0x70] sm:$0xff]
      %v2903 = vld [vmem:[#allocation2 + $0x78] sm:$0xff]
      %v2904 = vld [vmem:[#allocation2 + $0x80] sm:$0xff]
      %v2905 = vld [vmem:[#allocation2 + $0x88] sm:$0xff]
      %v2906 = vld [vmem:[#allocation2 + $0x90] sm:$0xff]
      %v2907 = vld [vmem:[#allocation2 + $0x98] sm:$0xff]
      %v2908 = vld [vmem:[#allocation2 + $0xa0] sm:$0xff]
      %v2909 = vld [vmem:[#allocation2 + $0xa8] sm:$0xff]
      %v2910 = vld [vmem:[#allocation2 + $0xb0] sm:$0xff]
      %v2911 = vld [vmem:[#allocation2 + $0xb8] sm:$0xff]
      %v2912 = vld [vmem:[#allocation2 + $0xc0] sm:$0xff]
      %v2913 = vld [vmem:[#allocation2 + $0xc8] sm:$0xff]
      %v2914 = vld [vmem:[#allocation2 + $0xd0] sm:$0xff]
      %v2915 = vld [vmem:[#allocation2 + $0xd8] sm:$0xff]
      %v2916 = vld [vmem:[#allocation2 + $0xe0] sm:$0xff]
      %v2917 = vld [vmem:[#allocation2 + $0xe8] sm:$0xff]
      %v2918 = vld [vmem:[#allocation2 + $0xf0] sm:$0xff]
      %v2919 = vld [vmem:[#allocation2 + $0xf8] sm:$0xff]
      %v2920 = vadd.f32 %v2888, %v2762
      %v2921 = vadd.f32 %v2889, %v2765
      %v2922 = vadd.f32 %v2890, %v2770
      %v2923 = vadd.f32 %v2891, %v2773
      %v2924 = vadd.f32 %v2892, %v2778
      %v2925 = vadd.f32 %v2893, %v2781
      %v2926 = vadd.f32 %v2894, %v2786
      %v2927 = vadd.f32 %v2895, %v2789
      %v2928 = vadd.f32 %v2896, %v2794
      %v2929 = vadd.f32 %v2897, %v2797
      %v2930 = vadd.f32 %v2898, %v2802
      %v2931 = vadd.f32 %v2899, %v2805
      %v2932 = vadd.f32 %v2900, %v2810
      %v2933 = vadd.f32 %v2901, %v2813
      %v2934 = vadd.f32 %v2902, %v2818
      %v2935 = vadd.f32 %v2903, %v2821
      %v2936 = vadd.f32 %v2904, %v2826
      %v2937 = vadd.f32 %v2905, %v2829
      %v2938 = vadd.f32 %v2906, %v2834
      %v2939 = vadd.f32 %v2907, %v2837
      %v2940 = vadd.f32 %v2908, %v2842
      %v2941 = vadd.f32 %v2909, %v2845
      %v2942 = vadd.f32 %v2910, %v2850
      %v2943 = vadd.f32 %v2911, %v2853
      %v2944 = vadd.f32 %v2912, %v2858
      %v2945 = vadd.f32 %v2913, %v2861
      %v2946 = vadd.f32 %v2914, %v2866
      %v2947 = vadd.f32 %v2915, %v2869
      %v2948 = vadd.f32 %v2916, %v2874
      %v2949 = vadd.f32 %v2917, %v2877
      %v2950 = vadd.f32 %v2918, %v2882
      %v2951 = vadd.f32 %v2919, %v2885
      %2952 = vst [vmem:[#allocation2] sm:$0xff] %v2920
      %2953 = vst [vmem:[#allocation2 + $0x8] sm:$0xff] %v2921
      %2954 = vst [vmem:[#allocation2 + $0x10] sm:$0xff] %v2922
      %2955 = vst [vmem:[#allocation2 + $0x18] sm:$0xff] %v2923
      %2956 = vst [vmem:[#allocation2 + $0x20] sm:$0xff] %v2924
      %2957 = vst [vmem:[#allocation2 + $0x28] sm:$0xff] %v2925
      %2958 = vst [vmem:[#allocation2 + $0x30] sm:$0xff] %v2926
      %2959 = vst [vmem:[#allocation2 + $0x38] sm:$0xff] %v2927
      %2960 = vst [vmem:[#allocation2 + $0x40] sm:$0xff] %v2928
      %2961 = vst [vmem:[#allocation2 + $0x48] sm:$0xff] %v2929
      %2962 = vst [vmem:[#allocation2 + $0x50] sm:$0xff] %v2930
      %2963 = vst [vmem:[#allocation2 + $0x58] sm:$0xff] %v2931
      %2964 = vst [vmem:[#allocation2 + $0x60] sm:$0xff] %v2932
      %2965 = vst [vmem:[#allocation2 + $0x68] sm:$0xff] %v2933
      %2966 = vst [vmem:[#allocation2 + $0x70] sm:$0xff] %v2934
      %2967 = vst [vmem:[#allocation2 + $0x78] sm:$0xff] %v2935
      %2968 = vst [vmem:[#allocation2 + $0x80] sm:$0xff] %v2936
      %2969 = vst [vmem:[#allocation2 + $0x88] sm:$0xff] %v2937
      %2970 = vst [vmem:[#allocation2 + $0x90] sm:$0xff] %v2938
      %2971 = vst [vmem:[#allocation2 + $0x98] sm:$0xff] %v2939
      %2972 = vst [vmem:[#allocation2 + $0xa0] sm:$0xff] %v2940
      %2973 = vst [vmem:[#allocation2 + $0xa8] sm:$0xff] %v2941
      %2974 = vst [vmem:[#allocation2 + $0xb0] sm:$0xff] %v2942
      %2975 = vst [vmem:[#allocation2 + $0xb8] sm:$0xff] %v2943
      %2976 = vst [vmem:[#allocation2 + $0xc0] sm:$0xff] %v2944
      %2977 = vst [vmem:[#allocation2 + $0xc8] sm:$0xff] %v2945
      %2978 = vst [vmem:[#allocation2 + $0xd0] sm:$0xff] %v2946
      %2979 = vst [vmem:[#allocation2 + $0xd8] sm:$0xff] %v2947
      %2980 = vst [vmem:[#allocation2 + $0xe0] sm:$0xff] %v2948
      %2981 = vst [vmem:[#allocation2 + $0xe8] sm:$0xff] %v2949
      %2982 = vst [vmem:[#allocation2 + $0xf0] sm:$0xff] %v2950
      %2983 = vst [vmem:[#allocation2 + $0xf8] sm:$0xff] %v2951
      %v2984 = vld [vmem:[#allocation2] sm:$0xff]
      %v2985 = vld [vmem:[#allocation2 + $0x8] sm:$0xff]
      %v2986 = vld [vmem:[#allocation2 + $0x10] sm:$0xff]
      %v2987 = vld [vmem:[#allocation2 + $0x18] sm:$0xff]
      %v2988 = vld [vmem:[#allocation2 + $0x20] sm:$0xff]
      %v2989 = vld [vmem:[#allocation2 + $0x28] sm:$0xff]
      %v2990 = vld [vmem:[#allocation2 + $0x30] sm:$0xff]
      %v2991 = vld [vmem:[#allocation2 + $0x38] sm:$0xff]
      %v2992 = vld [vmem:[#allocation2 + $0x40] sm:$0xff]
      %v2993 = vld [vmem:[#allocation2 + $0x48] sm:$0xff]
      %v2994 = vld [vmem:[#allocation2 + $0x50] sm:$0xff]
      %v2995 = vld [vmem:[#allocation2 + $0x58] sm:$0xff]
      %v2996 = vld [vmem:[#allocation2 + $0x60] sm:$0xff]
      %v2997 = vld [vmem:[#allocation2 + $0x68] sm:$0xff]
      %v2998 = vld [vmem:[#allocation2 + $0x70] sm:$0xff]
      %v2999 = vld [vmem:[#allocation2 + $0x78] sm:$0xff]
      %v3000 = vld [vmem:[#allocation2 + $0x80] sm:$0xff]
      %v3001 = vld [vmem:[#allocation2 + $0x88] sm:$0xff]
      %v3002 = vld [vmem:[#allocation2 + $0x90] sm:$0xff]
      %v3003 = vld [vmem:[#allocation2 + $0x98] sm:$0xff]
      %v3004 = vld [vmem:[#allocation2 + $0xa0] sm:$0xff]
      %v3005 = vld [vmem:[#allocation2 + $0xa8] sm:$0xff]
      %v3006 = vld [vmem:[#allocation2 + $0xb0] sm:$0xff]
      %v3007 = vld [vmem:[#allocation2 + $0xb8] sm:$0xff]
      %v3008 = vld [vmem:[#allocation2 + $0xc0] sm:$0xff]
      %v3009 = vld [vmem:[#allocation2 + $0xc8] sm:$0xff]
      %v3010 = vld [vmem:[#allocation2 + $0xd0] sm:$0xff]
      %v3011 = vld [vmem:[#allocation2 + $0xd8] sm:$0xff]
      %v3012 = vld [vmem:[#allocation2 + $0xe0] sm:$0xff]
      %v3013 = vld [vmem:[#allocation2 + $0xe8] sm:$0xff]
      %v3014 = vld [vmem:[#allocation2 + $0xf0] sm:$0xff]
      %v3015 = vld [vmem:[#allocation2 + $0xf8] sm:$0xff]
      %v3016 = vld [vmem:[%s2] sm:$0x1]
      %v3018 = vlaneseq
      %v3019 = vshrl.u32 %v3018, 7
      %v3020 = vsub.s32 0, %v3019
      %v3021 = vrot.slane %v3016, %v3020
      %v3023 = vadd.f32 %v2984, %v3021
      %v3024 = vadd.f32 %v2985, %v3021
      %v3025 = vadd.f32 %v2986, %v3021
      %v3026 = vadd.f32 %v2987, %v3021
      %v3027 = vadd.f32 %v2988, %v3021
      %v3028 = vadd.f32 %v2989, %v3021
      %v3029 = vadd.f32 %v2990, %v3021
      %v3030 = vadd.f32 %v2991, %v3021
      %v3031 = vadd.f32 %v2992, %v3021
      %v3032 = vadd.f32 %v2993, %v3021
      %v3033 = vadd.f32 %v2994, %v3021
      %v3034 = vadd.f32 %v2995, %v3021
      %v3035 = vadd.f32 %v2996, %v3021
      %v3036 = vadd.f32 %v2997, %v3021
      %v3037 = vadd.f32 %v2998, %v3021
      %v3038 = vadd.f32 %v2999, %v3021
      %v3039 = vadd.f32 %v3000, %v3021
      %v3040 = vadd.f32 %v3001, %v3021
      %v3041 = vadd.f32 %v3002, %v3021
      %v3042 = vadd.f32 %v3003, %v3021
      %v3043 = vadd.f32 %v3004, %v3021
      %v3044 = vadd.f32 %v3005, %v3021
      %v3045 = vadd.f32 %v3006, %v3021
      %v3046 = vadd.f32 %v3007, %v3021
      %v3047 = vadd.f32 %v3008, %v3021
      %v3048 = vadd.f32 %v3009, %v3021
      %v3049 = vadd.f32 %v3010, %v3021
      %v3050 = vadd.f32 %v3011, %v3021
      %v3051 = vadd.f32 %v3012, %v3021
      %v3052 = vadd.f32 %v3013, %v3021
      %v3053 = vadd.f32 %v3014, %v3021
      %v3054 = vadd.f32 %v3015, %v3021
      %v3055 = vmax.f32 %v3023, 0.0
      %v3056 = vmax.f32 %v3024, 0.0
      %v3057 = vmax.f32 %v3025, 0.0
      %v3058 = vmax.f32 %v3026, 0.0
      %v3059 = vmax.f32 %v3027, 0.0
      %v3060 = vmax.f32 %v3028, 0.0
      %v3061 = vmax.f32 %v3029, 0.0
      %v3062 = vmax.f32 %v3030, 0.0
      %v3063 = vmax.f32 %v3031, 0.0
      %v3064 = vmax.f32 %v3032, 0.0
      %v3065 = vmax.f32 %v3033, 0.0
      %v3066 = vmax.f32 %v3034, 0.0
      %v3067 = vmax.f32 %v3035, 0.0
      %v3068 = vmax.f32 %v3036, 0.0
      %v3069 = vmax.f32 %v3037, 0.0
      %v3070 = vmax.f32 %v3038, 0.0
      %v3071 = vmax.f32 %v3039, 0.0
      %v3072 = vmax.f32 %v3040, 0.0
      %v3073 = vmax.f32 %v3041, 0.0
      %v3074 = vmax.f32 %v3042, 0.0
      %v3075 = vmax.f32 %v3043, 0.0
      %v3076 = vmax.f32 %v3044, 0.0
      %v3077 = vmax.f32 %v3045, 0.0
      %v3078 = vmax.f32 %v3046, 0.0
      %v3079 = vmax.f32 %v3047, 0.0
      %v3080 = vmax.f32 %v3048, 0.0
      %v3081 = vmax.f32 %v3049, 0.0
      %v3082 = vmax.f32 %v3050, 0.0
      %v3083 = vmax.f32 %v3051, 0.0
      %v3084 = vmax.f32 %v3052, 0.0
      %v3085 = vmax.f32 %v3053, 0.0
      %v3086 = vmax.f32 %v3054, 0.0
      %v3087 = vpack.c.bf16 %v3056, %v3055
      %v3088 = vpack.c.bf16 %v3058, %v3057
      %v3089 = vpack.c.bf16 %v3060, %v3059
      %v3090 = vpack.c.bf16 %v3062, %v3061
      %v3091 = vpack.c.bf16 %v3064, %v3063
      %v3092 = vpack.c.bf16 %v3066, %v3065
      %v3093 = vpack.c.bf16 %v3068, %v3067
      %v3094 = vpack.c.bf16 %v3070, %v3069
      %v3095 = vpack.c.bf16 %v3072, %v3071
      %v3096 = vpack.c.bf16 %v3074, %v3073
      %v3097 = vpack.c.bf16 %v3076, %v3075
      %v3098 = vpack.c.bf16 %v3078, %v3077
      %v3099 = vpack.c.bf16 %v3080, %v3079
      %v3100 = vpack.c.bf16 %v3082, %v3081
      %v3101 = vpack.c.bf16 %v3084, %v3083
      %v3102 = vpack.c.bf16 %v3086, %v3085
      %v3103 = vld [vmem:[%s3] sm:$0xf]
      %v3104 = vld [vmem:[%s3 + $0x4] sm:$0xf]
      %v3105 = vld [vmem:[%s3 + $0x8] sm:$0xf]
      %v3106 = vld [vmem:[%s3 + $0xc] sm:$0xf]
      %v3107 = vld [vmem:[%s3 + $0x10] sm:$0xf]
      %v3108 = vld [vmem:[%s3 + $0x14] sm:$0xf]
      %v3109 = vld [vmem:[%s3 + $0x18] sm:$0xf]
      %v3110 = vld [vmem:[%s3 + $0x1c] sm:$0xf]
      %v3111 = vld [vmem:[%s3 + $0x20] sm:$0xf]
      %v3112 = vld [vmem:[%s3 + $0x24] sm:$0xf]
      %v3113 = vld [vmem:[%s3 + $0x28] sm:$0xf]
      %v3114 = vld [vmem:[%s3 + $0x2c] sm:$0xf]
      %v3115 = vld [vmem:[%s3 + $0x30] sm:$0xf]
      %v3116 = vld [vmem:[%s3 + $0x34] sm:$0xf]
      %v3117 = vld [vmem:[%s3 + $0x38] sm:$0xf]
      %v3118 = vld [vmem:[%s3 + $0x3c] sm:$0xf]
      %v3119 = vld [vmem:[%s4] sm:$0x1]
      %v3121 = vlaneseq
      %v3122 = vshrl.u32 %v3121, 7
      %v3123 = vsub.s32 0, %v3122
      %v3124 = vrot.slane %v3119, %v3123
      %v3142 = vunpack.c.l.b16 %v3103
      %v3143 = vunpack.c.l.b16 %v3104
      %v3144 = vunpack.c.l.b16 %v3105
      %v3145 = vunpack.c.l.b16 %v3106
      %v3146 = vunpack.c.l.b16 %v3107
      %v3147 = vunpack.c.l.b16 %v3108
      %v3148 = vunpack.c.l.b16 %v3109
      %v3149 = vunpack.c.l.b16 %v3110
      %v3150 = vunpack.c.l.b16 %v3111
      %v3151 = vunpack.c.l.b16 %v3112
      %v3152 = vunpack.c.l.b16 %v3113
      %v3153 = vunpack.c.l.b16 %v3114
      %v3154 = vunpack.c.l.b16 %v3115
      %v3155 = vunpack.c.l.b16 %v3116
      %v3156 = vunpack.c.l.b16 %v3117
      %v3157 = vunpack.c.l.b16 %v3118
      %v3158 = vpack.c.b16 %v3143, %v3142
      %v3159 = vpack.c.b16 %v3145, %v3144
      %v3160 = vpack.c.b16 %v3147, %v3146
      %v3161 = vpack.c.b16 %v3149, %v3148
      %v3162 = vpack.c.b16 %v3151, %v3150
      %v3163 = vpack.c.b16 %v3153, %v3152
      %v3164 = vpack.c.b16 %v3155, %v3154
      %v3165 = vpack.c.b16 %v3157, %v3156
      %3174 = vmatprep.subr.bf16.mxu0 0
      %3175 = vmatpush1.bf16.msra.mxu0 %v3158
      %3176 = vmatprep.subr.bf16.mxu0 0
      %3177 = vmatpush1.bf16.msra.mxu0 %v3159
      %3178 = vmatprep.subr.bf16.mxu0 0
      %3179 = vmatpush1.bf16.msra.mxu0 %v3160
      %3180 = vmatprep.subr.bf16.mxu0 0
      %3181 = vmatpush1.bf16.msra.mxu0 %v3161
      %3182 = vmatprep.subr.bf16.mxu0 0
      %3183 = vmatpush1.bf16.msra.mxu0 %v3162
      %3184 = vmatprep.subr.bf16.mxu0 0
      %3185 = vmatpush1.bf16.msra.mxu0 %v3163
      %3186 = vmatprep.subr.bf16.mxu0 0
      %3187 = vmatpush1.bf16.msra.mxu0 %v3164
      %3188 = vmatprep.subr.bf16.mxu0 0
      %3189 = vmatpush1.bf16.msra.mxu0 %v3165
      %3190 = vmatprep.subr.bf16.mxu0 0
      %3191 = vmatpush1.bf16.msra.mxu0 0
      %3192 = vmatprep.subr.bf16.mxu0 0
      %3193 = vmatpush1.bf16.msra.mxu0 0
      %3194 = vmatprep.subr.bf16.mxu0 0
      %3195 = vmatpush1.bf16.msra.mxu0 0
      %3196 = vmatprep.subr.bf16.mxu0 0
      %3197 = vmatpush1.bf16.msra.mxu0 0
      %3198 = vmatprep.subr.bf16.mxu0 0
      %3199 = vmatpush1.bf16.msra.mxu0 0
      %3200 = vmatprep.subr.bf16.mxu0 0
      %3201 = vmatpush1.bf16.msra.mxu0 0
      %3202 = vmatprep.subr.bf16.mxu0 0
      %3203 = vmatpush1.bf16.msra.mxu0 0
      %3204 = vmatprep.subr.bf16.mxu0 0
      %3205 = vmatpush1.bf16.msra.mxu0 0
      %3206 = vmatprep.mubr.bf16.mxu0 0
      %3207 = vmatmul.mubr.bf16.gmra.mrb[0].mxu0 %v3087
      %v3208 = vpop.f32.mrb[0].mxu0
      %v3209 = vadd.f32 %v3124, %v3208
      %v3210 = vpop.f32.mrb[0].mxu0
      %v3211 = vpop.f32.mrb[0].mxu0
      %v3212 = vadd.f32 %v3124, %v3211
      %v3213 = vpop.f32.mrb[0].mxu0
      %3214 = vmatprep.mubr.bf16.mxu0 0
      %3215 = vmatmul.mubr.bf16.gmra.mrb[0].mxu0 %v3088
      %v3216 = vpop.f32.mrb[0].mxu0
      %v3217 = vadd.f32 %v3124, %v3216
      %v3218 = vpop.f32.mrb[0].mxu0
      %v3219 = vpop.f32.mrb[0].mxu0
      %v3220 = vadd.f32 %v3124, %v3219
      %v3221 = vpop.f32.mrb[0].mxu0
      %3222 = vmatprep.mubr.bf16.mxu0 0
      %3223 = vmatmul.mubr.bf16.gmra.mrb[0].mxu0 %v3089
      %v3224 = vpop.f32.mrb[0].mxu0
      %v3225 = vadd.f32 %v3124, %v3224
      %v3226 = vpop.f32.mrb[0].mxu0
      %v3227 = vpop.f32.mrb[0].mxu0
      %v3228 = vadd.f32 %v3124, %v3227
      %v3229 = vpop.f32.mrb[0].mxu0
      %3230 = vmatprep.mubr.bf16.mxu0 0
      %3231 = vmatmul.mubr.bf16.gmra.mrb[0].mxu0 %v3090
      %v3232 = vpop.f32.mrb[0].mxu0
      %v3233 = vadd.f32 %v3124, %v3232
      %v3234 = vpop.f32.mrb[0].mxu0
      %v3235 = vpop.f32.mrb[0].mxu0
      %v3236 = vadd.f32 %v3124, %v3235
      %v3237 = vpop.f32.mrb[0].mxu0
      %3238 = vmatprep.mubr.bf16.mxu0 0
      %3239 = vmatmul.mubr.bf16.gmra.mrb[0].mxu0 %v3091
      %v3240 = vpop.f32.mrb[0].mxu0
      %v3241 = vadd.f32 %v3124, %v3240
      %v3242 = vpop.f32.mrb[0].mxu0
      %v3243 = vpop.f32.mrb[0].mxu0
      %v3244 = vadd.f32 %v3124, %v3243
      %v3245 = vpop.f32.mrb[0].mxu0
      %3246 = vmatprep.mubr.bf16.mxu0 0
      %3247 = vmatmul.mubr.bf16.gmra.mrb[0].mxu0 %v3092
      %v3248 = vpop.f32.mrb[0].mxu0
      %v3249 = vadd.f32 %v3124, %v3248
      %v3250 = vpop.f32.mrb[0].mxu0
      %v3251 = vpop.f32.mrb[0].mxu0
      %v3252 = vadd.f32 %v3124, %v3251
      %v3253 = vpop.f32.mrb[0].mxu0
      %3254 = vmatprep.mubr.bf16.mxu0 0
      %3255 = vmatmul.mubr.bf16.gmra.mrb[0].mxu0 %v3093
      %v3256 = vpop.f32.mrb[0].mxu0
      %v3257 = vadd.f32 %v3124, %v3256
      %v3258 = vpop.f32.mrb[0].mxu0
      %v3259 = vpop.f32.mrb[0].mxu0
      %v3260 = vadd.f32 %v3124, %v3259
      %v3261 = vpop.f32.mrb[0].mxu0
      %3262 = vmatprep.mubr.bf16.mxu0 0
      %3263 = vmatmul.mubr.bf16.gmra.mrb[0].mxu0 %v3094
      %v3264 = vpop.f32.mrb[0].mxu0
      %v3265 = vadd.f32 %v3124, %v3264
      %v3266 = vpop.f32.mrb[0].mxu0
      %v3267 = vpop.f32.mrb[0].mxu0
      %v3268 = vadd.f32 %v3124, %v3267
      %v3269 = vpop.f32.mrb[0].mxu0
      %3270 = vmatprep.mubr.bf16.mxu0 0
      %3271 = vmatmul.mubr.bf16.gmra.mrb[0].mxu0 %v3095
      %v3272 = vpop.f32.mrb[0].mxu0
      %v3273 = vadd.f32 %v3124, %v3272
      %v3274 = vpop.f32.mrb[0].mxu0
      %v3275 = vpop.f32.mrb[0].mxu0
      %v3276 = vadd.f32 %v3124, %v3275
      %v3277 = vpop.f32.mrb[0].mxu0
      %3278 = vmatprep.mubr.bf16.mxu0 0
      %3279 = vmatmul.mubr.bf16.gmra.mrb[0].mxu0 %v3096
      %v3280 = vpop.f32.mrb[0].mxu0
      %v3281 = vadd.f32 %v3124, %v3280
      %v3282 = vpop.f32.mrb[0].mxu0
      %v3283 = vpop.f32.mrb[0].mxu0
      %v3284 = vadd.f32 %v3124, %v3283
      %v3285 = vpop.f32.mrb[0].mxu0
      %3286 = vmatprep.mubr.bf16.mxu0 0
      %3287 = vmatmul.mubr.bf16.gmra.mrb[0].mxu0 %v3097
      %v3288 = vpop.f32.mrb[0].mxu0
      %v3289 = vadd.f32 %v3124, %v3288
      %v3290 = vpop.f32.mrb[0].mxu0
      %v3291 = vpop.f32.mrb[0].mxu0
      %v3292 = vadd.f32 %v3124, %v3291
      %v3293 = vpop.f32.mrb[0].mxu0
      %3294 = vmatprep.mubr.bf16.mxu0 0
      %3295 = vmatmul.mubr.bf16.gmra.mrb[0].mxu0 %v3098
      %v3296 = vpop.f32.mrb[0].mxu0
      %v3297 = vadd.f32 %v3124, %v3296
      %v3298 = vpop.f32.mrb[0].mxu0
      %v3299 = vpop.f32.mrb[0].mxu0
      %v3300 = vadd.f32 %v3124, %v3299
      %v3301 = vpop.f32.mrb[0].mxu0
      %3302 = vmatprep.mubr.bf16.mxu0 0
      %3303 = vmatmul.mubr.bf16.gmra.mrb[0].mxu0 %v3099
      %v3304 = vpop.f32.mrb[0].mxu0
      %v3305 = vadd.f32 %v3124, %v3304
      %v3306 = vpop.f32.mrb[0].mxu0
      %v3307 = vpop.f32.mrb[0].mxu0
      %v3308 = vadd.f32 %v3124, %v3307
      %v3309 = vpop.f32.mrb[0].mxu0
      %3310 = vmatprep.mubr.bf16.mxu0 0
      %3311 = vmatmul.mubr.bf16.gmra.mrb[0].mxu0 %v3100
      %v3312 = vpop.f32.mrb[0].mxu0
      %v3313 = vadd.f32 %v3124, %v3312
      %v3314 = vpop.f32.mrb[0].mxu0
      %v3315 = vpop.f32.mrb[0].mxu0
      %v3316 = vadd.f32 %v3124, %v3315
      %v3317 = vpop.f32.mrb[0].mxu0
      %3318 = vmatprep.mubr.bf16.mxu0 0
      %3319 = vmatmul.mubr.bf16.gmra.mrb[0].mxu0 %v3101
      %v3320 = vpop.f32.mrb[0].mxu0
      %v3321 = vadd.f32 %v3124, %v3320
      %v3322 = vpop.f32.mrb[0].mxu0
      %v3323 = vpop.f32.mrb[0].mxu0
      %v3324 = vadd.f32 %v3124, %v3323
      %v3325 = vpop.f32.mrb[0].mxu0
      %3326 = vmatprep.mubr.bf16.mxu0 0
      %3327 = vmatmul.mubr.bf16.gmra.mrb[0].mxu0 %v3102
      %v3328 = vpop.f32.mrb[0].mxu0
      %v3329 = vadd.f32 %v3124, %v3328
      %v3330 = vpop.f32.mrb[0].mxu0
      %v3331 = vpop.f32.mrb[0].mxu0
      %v3332 = vadd.f32 %v3124, %v3331
      %v3333 = vpop.f32.mrb[0].mxu0
      %3334 = vdwg.mxu0
      %vm3335 = vcmask 130048
      %3336 = vst.msk [vmem:[%s253] sm:$0xff] %vm3335, %v3209
      %3337 = vst.msk [vmem:[%s253 + $0x8] sm:$0xff] %vm3335, %v3212
      %3338 = vst.msk [vmem:[%s253 + $0x10] sm:$0xff] %vm3335, %v3217
      %3339 = vst.msk [vmem:[%s253 + $0x18] sm:$0xff] %vm3335, %v3220
      %3340 = vst.msk [vmem:[%s253 + $0x20] sm:$0xff] %vm3335, %v3225
      %3341 = vst.msk [vmem:[%s253 + $0x28] sm:$0xff] %vm3335, %v3228
      %3342 = vst.msk [vmem:[%s253 + $0x30] sm:$0xff] %vm3335, %v3233
      %3343 = vst.msk [vmem:[%s253 + $0x38] sm:$0xff] %vm3335, %v3236
      %3344 = vst.msk [vmem:[%s253 + $0x40] sm:$0xff] %vm3335, %v3241
      %3345 = vst.msk [vmem:[%s253 + $0x48] sm:$0xff] %vm3335, %v3244
      %3346 = vst.msk [vmem:[%s253 + $0x50] sm:$0xff] %vm3335, %v3249
      %3347 = vst.msk [vmem:[%s253 + $0x58] sm:$0xff] %vm3335, %v3252
      %3348 = vst.msk [vmem:[%s253 + $0x60] sm:$0xff] %vm3335, %v3257
      %3349 = vst.msk [vmem:[%s253 + $0x68] sm:$0xff] %vm3335, %v3260
      %3350 = vst.msk [vmem:[%s253 + $0x70] sm:$0xff] %vm3335, %v3265
      %3351 = vst.msk [vmem:[%s253 + $0x78] sm:$0xff] %vm3335, %v3268
      %3352 = vst.msk [vmem:[%s253 + $0x80] sm:$0xff] %vm3335, %v3273
      %3353 = vst.msk [vmem:[%s253 + $0x88] sm:$0xff] %vm3335, %v3276
      %3354 = vst.msk [vmem:[%s253 + $0x90] sm:$0xff] %vm3335, %v3281
      %3355 = vst.msk [vmem:[%s253 + $0x98] sm:$0xff] %vm3335, %v3284
      %3356 = vst.msk [vmem:[%s253 + $0xa0] sm:$0xff] %vm3335, %v3289
      %3357 = vst.msk [vmem:[%s253 + $0xa8] sm:$0xff] %vm3335, %v3292
      %3358 = vst.msk [vmem:[%s253 + $0xb0] sm:$0xff] %vm3335, %v3297
      %3359 = vst.msk [vmem:[%s253 + $0xb8] sm:$0xff] %vm3335, %v3300
      %3360 = vst.msk [vmem:[%s253 + $0xc0] sm:$0xff] %vm3335, %v3305
      %3361 = vst.msk [vmem:[%s253 + $0xc8] sm:$0xff] %vm3335, %v3308
      %3362 = vst.msk [vmem:[%s253 + $0xd0] sm:$0xff] %vm3335, %v3313
      %3363 = vst.msk [vmem:[%s253 + $0xd8] sm:$0xff] %vm3335, %v3316
      %3364 = vst.msk [vmem:[%s253 + $0xe0] sm:$0xff] %vm3335, %v3321
      %3365 = vst.msk [vmem:[%s253 + $0xe8] sm:$0xff] %vm3335, %v3324
      %3366 = vst.msk [vmem:[%s253 + $0xf0] sm:$0xff] %vm3335, %v3329
      %3367 = vst.msk [vmem:[%s253 + $0xf8] sm:$0xff] %vm3335, %v3332
      %s3368 = smul.u32 32, %s21
      %p3369 = scmp.lt.s32.totalorder %s20, 1
      %s3370 = scalar_select %p3369, %s20, 1
      %p3371 = scmp.lt.s32.totalorder %s3368, 31
      %s3372 = scalar_select %p3371, %s3368, 31
      %s3373 = smul.addr %s3370, 32
      %s3374 = sadd.s32 %s3372, %s3373
      %s3375 = smul.addr %s3374, 8
      %s3376 = scalar_lea.vmem %s5, %s3375
      // Predicated region
      $region41: #{generalized_rcnn_forward.5} parent=39 // pred_check
        %p3377 = pneg %p160
      $region42: #{generalized_rcnn_forward.5} parent=39 // pred_check_branch
        %3379 = sbr.rel (%p3377) target = $region44
      $region43: #{generalized_rcnn_forward.5} parent=39 // pred_region
        %s3380 = smul.u32 32, %s21
      $region44: #{generalized_rcnn_forward.5} parent=39 // pred_fallthru
        _
    $region40: #{generalized_rcnn_forward.5} parent=5 // pred_fallthru
      _
    %p3381 = scmp.le.s32.totalorder 2, %s11
    // Predicated region
    $region45: #{generalized_rcnn_forward.5} parent=5 // pred_check
      %p3382 = pneg %p3381
    $region46: #{generalized_rcnn_forward.5} parent=5 // pred_check_branch
      %3384 = sbr.rel (%p3382) target = $region48
    $region47: #{generalized_rcnn_forward.5} parent=5 // pred_region
      %s3385 = ssub.s32 %s11, 2
      // Predicated region
      $region49: #{generalized_rcnn_forward.5} parent=47 // pred_check
        %p3386 = pneg %p166
      $region50: #{generalized_rcnn_forward.5} parent=47 // pred_check_branch
        %3388 = sbr.rel (%p3386) target = $region52
      $region51: #{generalized_rcnn_forward.5} parent=47 // pred_region
        %s3389 = smul.u32 32, %s23
        %p3390 = scmp.lt.s32.totalorder %s22, 1
        %s3391 = scalar_select %p3390, %s22, 1
        %p3392 = scmp.lt.s32.totalorder %s3389, 31
        %s3393 = scalar_select %p3392, %s3389, 31
        %s3394 = smul.addr %s3391, 32
        %s3395 = sadd.s32 %s3393, %s3394
        %s3396 = smul.addr %s3395, 8
        %s3397 = scalar_lea.vmem %s5, %s3396
      $region52: #{generalized_rcnn_forward.5} parent=47 // pred_fallthru
        _
    $region48: #{generalized_rcnn_forward.5} parent=5 // pred_fallthru
      _
  $region6: #{generalized_rcnn_forward.5} parent=0 // loop_footer
    %s15 = sadd.s32 1, %s11
  $region7: #{generalized_rcnn_forward.5} parent=0 // loop_footer_branch
    %10 = sbr.rel target = $region3
  $region8: #{generalized_rcnn_forward.5} parent=0 // loop_exit
    _

// kernel: squeeze.8
$region0: #{squeeze.8}
  %s0 = inlined_call_operand.vmem [shape: f32[16], index: 0, kind: input, shape index: {}]
  %s1 = inlined_call_operand.vmem [shape: f32[2,8], index: 1, kind: output, shape index: {}]
  $region1: #{squeeze.8} parent=0
    #allocation0 [shape = 'u8[4096]{0}', space=vmem, size = 0x1000, scoped, tag = 'scoped mem for output reshape']
    #allocation1 [shape = 'u8[4096]{0}', space=vmem, size = 0x1000, scoped, tag = 'scoped mem for input reshape']
    %s3 = sshllo.u32 0, 1
    %v4 = vld [vmem:[%s0] sm:%s3]
    %5 = vst [vmem:[#allocation1] sm:%s3] %v4
    %v6 = vld [vmem:[#allocation1] sm:$0x1]
    %vm7 = vcmask 64512
    %8 = vst.msk [vmem:[#allocation0] sm:$0x1] %vm7, %v6
    %v9 = vld [vmem:[#allocation1] sm:$0x1]
    %10 = vrot.lane.b32.xlu0 %v9, 120
    %v11 = vpop.permute.xlu0 %10
    %vm12 = vcmask 64512
    %s13 = scalar_lea.vmem [#allocation0], 1
    %14 = vst.msk [vmem:[%s13] sm:$0x1] %vm12, %v11
    %s16 = sshllo.u32 0, 2
    %v18 = vld [vmem:[#allocation0] sm:%s16]
    %s19 = sshllo.u32 0, 2
    %20 = vst [vmem:[%s1] sm:%s19] %v18

// kernel: squeeze.9
$region0: #{squeeze.9}
  %s0 = inlined_call_operand.vmem [shape: s32[16], index: 0, kind: input, shape index: {}]
  %s1 = inlined_call_operand.vmem [shape: s32[2,8], index: 1, kind: output, shape index: {}]
  $region1: #{squeeze.9} parent=0
    #allocation0 [shape = 'u8[4096]{0}', space=vmem, size = 0x1000, scoped, tag = 'scoped mem for output reshape']
    #allocation1 [shape = 'u8[4096]{0}', space=vmem, size = 0x1000, scoped, tag = 'scoped mem for input reshape']
    %s3 = sshllo.u32 0, 1
    %v4 = vld [vmem:[%s0] sm:%s3]
    %5 = vst [vmem:[#allocation1] sm:%s3] %v4
    %v6 = vld [vmem:[#allocation1] sm:$0x1]
    %vm7 = vcmask 64512
    %8 = vst.msk [vmem:[#allocation0] sm:$0x1] %vm7, %v6
    %v9 = vld [vmem:[#allocation1] sm:$0x1]
    %10 = vrot.lane.b32.xlu0 %v9, 120
    %v11 = vpop.permute.xlu0 %10
    %vm12 = vcmask 64512
    %s13 = scalar_lea.vmem [#allocation0], 1
    %14 = vst.msk [vmem:[%s13] sm:$0x1] %vm12, %v11
    %s16 = sshllo.u32 0, 2
    %v18 = vld [vmem:[#allocation0] sm:%s16]
    %s19 = sshllo.u32 0, 2
    %20 = vst [vmem:[%s1] sm:%s19] %v18

// kernel: generalized_rcnn_forward.6
$region0: #{generalized_rcnn_forward.6}
  #allocation0 [shape = 'u32[]', space=smem, size = 0x4, offset = 0x4, fixed_abs, tag = 'smem constant byte address 0x4 - core index']
  #allocation1 [shape = 'u32[144,128]{1,0:T(1,128)}', space=vmem, size = 0x12000, scoped, tag = 'internal scratch']
  #allocation2 [shape = 'f32[8,128]{1,0:T(8,128)}', space=vmem, size = 0x1000, scoped, tag = 'scratch operand']
  #allocation3 [shape = 'f32[8,1]{1,0:T(8,128)}', space=vmem, size = 0x1000, scoped, tag = 'scratch operand']
  %s0 = inlined_call_operand.vmem [shape: f32[2,8,4], index: 0, kind: input, shape index: {}]
  %s1 = inlined_call_operand.vmem [shape: f32[2,8,4], index: 1, kind: input, shape index: {}]
  %s2 = inlined_call_operand.vmem [shape: bf16[2,256,128], index: 2, kind: input, shape index: {}]
  %s3 = inlined_call_operand.vmem [shape: f32[1,256], index: 3, kind: input, shape index: {}]
  %s4 = inlined_call_operand.vmem [shape: f32[1,256], index: 4, kind: input, shape index: {}]
  %s5 = inlined_call_operand.vmem [shape: f32[2,8,4], index: 5, kind: output, shape index: {0}]
  %s6 = inlined_call_operand.vmem [shape: bf16[2,8,128], index: 6, kind: output, shape index: {1}]
  %7 = xla_tuple %s5, %s6
  %s8 = sld [smem:[#allocation0]]
  $region73: #{generalized_rcnn_forward.6} parent=0
    _
  %s10 = ssub.s32 1, %s8
  %s11 = scalar_select 0, %s10, %s8
  loop: start=0, step=1, limit=4
  $region2: #{generalized_rcnn_forward.6} parent=0 // loop_pre_header
    _
  $region3: #{generalized_rcnn_forward.6} parent=0 // loop_header
    %s13 = sphi 0, %s17
    %p14 = scmp.ge.s32.totalorder %s13, 4
    %s20 = sphi 0, %s32
    %s21 = sphi 0, %s28
    %s22 = sphi 0, %s20
    %s23 = sphi 0, %s21
    %s24 = sphi 0, %s22
    %s25 = sphi 0, %s23
    %s35 = sphi 0, %s37
    %s38 = sphi 0, %s35
    %s39 = sphi 0, %s38
    %s55 = sphi 0, %s39
    %s61 = sphi 0, %s63
    %s64 = sphi 0, %s61
    %s65 = sphi 0, %s64
    %s81 = sphi 0, %s65
    %s89 = sphi 0, %s91
    %s92 = sphi 0, %s89
    %s93 = sphi 0, %s92
    %s109 = sphi 0, %s93
    %s115 = sphi 0, %s117
    %s118 = sphi 0, %s115
    %s119 = sphi 0, %s118
    %s135 = sphi 0, %s119
    %s141 = sphi 0, %s143
    %s144 = sphi 0, %s141
    %s145 = sphi 0, %s144
    %s161 = sphi 0, %s145
    %s167 = sphi 0, %s169
    %s170 = sphi 0, %s167
    %s171 = sphi 0, %s170
    %s187 = sphi 0, %s171
    %s193 = sphi 0, %s195
    %s196 = sphi 0, %s193
    %s197 = sphi 0, %s196
    %s213 = sphi 0, %s197
  $region4: #{generalized_rcnn_forward.6} parent=0 // loop_header_branch
    %16 = sbr.rel (%p14) target = $region8
  $region5: #{generalized_rcnn_forward.6} parent=0 // loop_body
    %s18 = ssub.s32 %s13, 1
    %s19 = ssub.s32 %s13, 2
    %s26 = sadd.s32 1, %s21
    %p27 = scmp.ge.s32.totalorder %s26, 1
    %s28 = scalar_select %p27, 0, %s26
    %s29 = sadd.s32 1, %s20
    %s30 = scalar_select %p27, %s29, %s20
    %p31 = scmp.ge.s32.totalorder %s30, 2
    %s32 = scalar_select %p31, 0, %s30
    %s33 = ssub.s32 %s20, %s32
    %p34 = scmp.eq.s32.totalorder %s33, 0
    %s36 = sadd.s32 %s35, 1
    %s37 = scalar_select %p34, %s35, %s36
    %p40 = pneg %p34
    %p41 = scmp.eq.s32.totalorder %s13, 1
    %p42 = por %p40, %p41
    %p43 = scmp.ne.s32.totalorder %s35, %s38
    %p44 = scmp.eq.s32.totalorder %s13, 0
    %p45 = por %p43, %p44
    %p46 = scmp.ne.s32.totalorder %s35, %s38
    %p47 = scmp.eq.s32.totalorder %s18, 1
    %p48 = por %p46, %p47
    %p49 = scmp.ne.s32.totalorder %s38, %s39
    %p50 = scmp.eq.s32.totalorder %s18, 0
    %p51 = por %p49, %p50
    %p52 = scmp.ne.s32.totalorder %s38, %s39
    %p53 = scmp.eq.s32.totalorder %s19, 1
    %p54 = por %p52, %p53
    %p56 = scmp.ne.s32.totalorder %s39, %s55
    %p57 = scmp.eq.s32.totalorder %s19, 0
    %p58 = por %p56, %p57
    %s59 = ssub.s32 %s20, %s32
    %p60 = scmp.eq.s32.totalorder %s59, 0
    %s62 = sadd.s32 %s61, 1
    %s63 = scalar_select %p60, %s61, %s62
    %p66 = pneg %p60
    %p67 = scmp.eq.s32.totalorder %s13, 1
    %p68 = por %p66, %p67
    %p69 = scmp.ne.s32.totalorder %s61, %s64
    %p70 = scmp.eq.s32.totalorder %s13, 0
    %p71 = por %p69, %p70
    %p72 = scmp.ne.s32.totalorder %s61, %s64
    %p73 = scmp.eq.s32.totalorder %s18, 1
    %p74 = por %p72, %p73
    %p75 = scmp.ne.s32.totalorder %s64, %s65
    %p76 = scmp.eq.s32.totalorder %s18, 0
    %p77 = por %p75, %p76
    %p78 = scmp.ne.s32.totalorder %s64, %s65
    %p79 = scmp.eq.s32.totalorder %s19, 1
    %p80 = por %p78, %p79
    %p82 = scmp.ne.s32.totalorder %s65, %s81
    %p83 = scmp.eq.s32.totalorder %s19, 0
    %p84 = por %p82, %p83
    %s85 = ssub.s32 %s20, %s32
    %s86 = ssub.s32 %s21, %s28
    %s87 = sor.u32 %s85, %s86
    %p88 = scmp.eq.s32.totalorder %s87, 0
    %s90 = sadd.s32 %s89, 1
    %s91 = scalar_select %p88, %s89, %s90
    %p94 = pneg %p88
    %p95 = scmp.eq.s32.totalorder %s13, 1
    %p96 = por %p94, %p95
    %p97 = scmp.ne.s32.totalorder %s89, %s92
    %p98 = scmp.eq.s32.totalorder %s13, 0
    %p99 = por %p97, %p98
    %p100 = scmp.ne.s32.totalorder %s89, %s92
    %p101 = scmp.eq.s32.totalorder %s18, 1
    %p102 = por %p100, %p101
    %p103 = scmp.ne.s32.totalorder %s92, %s93
    %p104 = scmp.eq.s32.totalorder %s18, 0
    %p105 = por %p103, %p104
    %p106 = scmp.ne.s32.totalorder %s92, %s93
    %p107 = scmp.eq.s32.totalorder %s19, 1
    %p108 = por %p106, %p107
    %p110 = scmp.ne.s32.totalorder %s93, %s109
    %p111 = scmp.eq.s32.totalorder %s19, 0
    %p112 = por %p110, %p111
    %s113 = ssub.s32 %s21, %s28
    %p114 = scmp.eq.s32.totalorder %s113, 0
    %s116 = sadd.s32 %s115, 1
    %s117 = scalar_select %p114, %s115, %s116
    %p120 = pneg %p114
    %p121 = scmp.eq.s32.totalorder %s13, 1
    %p122 = por %p120, %p121
    %p123 = scmp.ne.s32.totalorder %s115, %s118
    %p124 = scmp.eq.s32.totalorder %s13, 0
    %p125 = por %p123, %p124
    %p126 = scmp.ne.s32.totalorder %s115, %s118
    %p127 = scmp.eq.s32.totalorder %s18, 1
    %p128 = por %p126, %p127
    %p129 = scmp.ne.s32.totalorder %s118, %s119
    %p130 = scmp.eq.s32.totalorder %s18, 0
    %p131 = por %p129, %p130
    %p132 = scmp.ne.s32.totalorder %s118, %s119
    %p133 = scmp.eq.s32.totalorder %s19, 1
    %p134 = por %p132, %p133
    %p136 = scmp.ne.s32.totalorder %s119, %s135
    %p137 = scmp.eq.s32.totalorder %s19, 0
    %p138 = por %p136, %p137
    %s139 = ssub.s32 %s21, %s28
    %p140 = scmp.eq.s32.totalorder %s139, 0
    %s142 = sadd.s32 %s141, 1
    %s143 = scalar_select %p140, %s141, %s142
    %p146 = pneg %p140
    %p147 = scmp.eq.s32.totalorder %s13, 1
    %p148 = por %p146, %p147
    %p149 = scmp.ne.s32.totalorder %s141, %s144
    %p150 = scmp.eq.s32.totalorder %s13, 0
    %p151 = por %p149, %p150
    %p152 = scmp.ne.s32.totalorder %s141, %s144
    %p153 = scmp.eq.s32.totalorder %s18, 1
    %p154 = por %p152, %p153
    %p155 = scmp.ne.s32.totalorder %s144, %s145
    %p156 = scmp.eq.s32.totalorder %s18, 0
    %p157 = por %p155, %p156
    %p158 = scmp.ne.s32.totalorder %s144, %s145
    %p159 = scmp.eq.s32.totalorder %s19, 1
    %p160 = por %p158, %p159
    %p162 = scmp.ne.s32.totalorder %s145, %s161
    %p163 = scmp.eq.s32.totalorder %s19, 0
    %p164 = por %p162, %p163
    %s165 = ssub.s32 %s20, %s32
    %p166 = scmp.eq.s32.totalorder %s165, 0
    %s168 = sadd.s32 %s167, 1
    %s169 = scalar_select %p166, %s167, %s168
    %p172 = pneg %p166
    %p173 = scmp.eq.s32.totalorder %s13, 1
    %p174 = por %p172, %p173
    %p175 = scmp.ne.s32.totalorder %s167, %s170
    %p176 = scmp.eq.s32.totalorder %s13, 0
    %p177 = por %p175, %p176
    %p178 = scmp.ne.s32.totalorder %s167, %s170
    %p179 = scmp.eq.s32.totalorder %s18, 1
    %p180 = por %p178, %p179
    %p181 = scmp.ne.s32.totalorder %s170, %s171
    %p182 = scmp.eq.s32.totalorder %s18, 0
    %p183 = por %p181, %p182
    %p184 = scmp.ne.s32.totalorder %s170, %s171
    %p185 = scmp.eq.s32.totalorder %s19, 1
    %p186 = por %p184, %p185
    %p188 = scmp.ne.s32.totalorder %s171, %s187
    %p189 = scmp.eq.s32.totalorder %s19, 0
    %p190 = por %p188, %p189
    %s191 = ssub.s32 %s20, %s32
    %p192 = scmp.eq.s32.totalorder %s191, 0
    %s194 = sadd.s32 %s193, 1
    %s195 = scalar_select %p192, %s193, %s194
    %p198 = pneg %p192
    %p199 = scmp.eq.s32.totalorder %s13, 1
    %p200 = por %p198, %p199
    %p201 = scmp.ne.s32.totalorder %s193, %s196
    %p202 = scmp.eq.s32.totalorder %s13, 0
    %p203 = por %p201, %p202
    %p204 = scmp.ne.s32.totalorder %s193, %s196
    %p205 = scmp.eq.s32.totalorder %s18, 1
    %p206 = por %p204, %p205
    %p207 = scmp.ne.s32.totalorder %s196, %s197
    %p208 = scmp.eq.s32.totalorder %s18, 0
    %p209 = por %p207, %p208
    %p210 = scmp.ne.s32.totalorder %s196, %s197
    %p211 = scmp.eq.s32.totalorder %s19, 1
    %p212 = por %p210, %p211
    %p214 = scmp.ne.s32.totalorder %s197, %s213
    %p215 = scmp.eq.s32.totalorder %s19, 0
    %p216 = por %p214, %p215
    %p217 = scmp.le.s32.totalorder 1, %s13
    %p218 = scmp.lt.s32.totalorder %s13, 3
    %p219 = pnand %p217, %p218
    %p220 = pneg %p219
    // Predicated region
    $region9: #{generalized_rcnn_forward.6} parent=5 // pred_check
      _
    $region10: #{generalized_rcnn_forward.6} parent=5 // pred_check_branch
      %222 = sbr.rel (%p219) target = $region12
    $region11: #{generalized_rcnn_forward.6} parent=5 // pred_region
      %s223 = ssub.s32 %s13, 1
      // Predicated region
      $region13: #{generalized_rcnn_forward.6} parent=11 // pred_check
        %p224 = pneg %p131
      $region14: #{generalized_rcnn_forward.6} parent=11 // pred_check_branch
        %226 = sbr.rel (%p224) target = $region16
      $region15: #{generalized_rcnn_forward.6} parent=11 // pred_region
        %s227 = smul.u32 2, %s23
        %p228 = scmp.lt.s32.totalorder %s227, 1
        %s229 = scalar_select %p228, %s227, 1
        %s230 = scalar_lea.vmem %s3, %s229
        %s231 = smul.u32 2, %s23
      $region16: #{generalized_rcnn_forward.6} parent=11 // pred_fallthru
        _
      // Predicated region
      $region17: #{generalized_rcnn_forward.6} parent=11 // pred_check
        %p232 = pneg %p157
      $region18: #{generalized_rcnn_forward.6} parent=11 // pred_check_branch
        %234 = sbr.rel (%p232) target = $region20
      $region19: #{generalized_rcnn_forward.6} parent=11 // pred_region
        %s235 = smul.u32 2, %s23
        %p236 = scmp.lt.s32.totalorder %s235, 1
        %s237 = scalar_select %p236, %s235, 1
        %s238 = scalar_lea.vmem %s4, %s237
        %s239 = smul.u32 2, %s23
      $region20: #{generalized_rcnn_forward.6} parent=11 // pred_fallthru
        _
    $region12: #{generalized_rcnn_forward.6} parent=5 // pred_fallthru
      _
    %p240 = scmp.lt.s32.totalorder %s13, 2
    // Predicated region
    $region21: #{generalized_rcnn_forward.6} parent=5 // pred_check
      %p241 = pneg %p240
    $region22: #{generalized_rcnn_forward.6} parent=5 // pred_check_branch
      %243 = sbr.rel (%p241) target = $region24
    $region23: #{generalized_rcnn_forward.6} parent=5 // pred_region
      // Predicated region
      $region25: #{generalized_rcnn_forward.6} parent=23 // pred_check
        %p244 = pneg %p45
      $region26: #{generalized_rcnn_forward.6} parent=23 // pred_check_branch
        %246 = sbr.rel (%p244) target = $region28
      $region27: #{generalized_rcnn_forward.6} parent=23 // pred_region
        %p247 = scmp.lt.s32.totalorder %s20, 1
        %s248 = scalar_select %p247, %s20, 1
        %s249 = smul.addr %s248, 8
        %s250 = scalar_lea.vmem %s0, %s249
      $region28: #{generalized_rcnn_forward.6} parent=23 // pred_fallthru
        _
      // Predicated region
      $region29: #{generalized_rcnn_forward.6} parent=23 // pred_check
        %p251 = pneg %p71
      $region30: #{generalized_rcnn_forward.6} parent=23 // pred_check_branch
        %253 = sbr.rel (%p251) target = $region32
      $region31: #{generalized_rcnn_forward.6} parent=23 // pred_region
        %p254 = scmp.lt.s32.totalorder %s20, 1
        %s255 = scalar_select %p254, %s20, 1
        %s256 = smul.addr %s255, 8
        %s257 = scalar_lea.vmem %s1, %s256
      $region32: #{generalized_rcnn_forward.6} parent=23 // pred_fallthru
        _
      // Predicated region
      $region33: #{generalized_rcnn_forward.6} parent=23 // pred_check
        %p258 = pneg %p99
      $region34: #{generalized_rcnn_forward.6} parent=23 // pred_check_branch
        %260 = sbr.rel (%p258) target = $region36
      $region35: #{generalized_rcnn_forward.6} parent=23 // pred_region
        %s261 = smul.u32 32, %s21
        %p262 = scmp.lt.s32.totalorder %s20, 1
        %s263 = scalar_select %p262, %s20, 1
        %p264 = scmp.lt.s32.totalorder %s261, 31
        %s265 = scalar_select %p264, %s261, 31
        %s266 = smul.addr %s263, 32
        %s267 = sadd.s32 %s265, %s266
        %s268 = smul.addr %s267, 4
        %s269 = scalar_lea.vmem %s2, %s268
        %s270 = smul.u32 32, %s21
      $region36: #{generalized_rcnn_forward.6} parent=23 // pred_fallthru
        _
    $region24: #{generalized_rcnn_forward.6} parent=5 // pred_fallthru
      _
    %p271 = scmp.le.s32.totalorder 1, %s13
    %p272 = scmp.lt.s32.totalorder %s13, 3
    %p273 = pnand %p271, %p272
    %p274 = pneg %p273
    // Predicated region
    $region37: #{generalized_rcnn_forward.6} parent=5 // pred_check
      _
    $region38: #{generalized_rcnn_forward.6} parent=5 // pred_check_branch
      %276 = sbr.rel (%p273) target = $region40
    $region39: #{generalized_rcnn_forward.6} parent=5 // pred_region
      %s277 = ssub.s32 %s13, 1
      %p278 = scmp.lt.s32.totalorder %s22, 1
      %s279 = scalar_select %p278, %s22, 1
      %s280 = smul.addr %s279, 8
      %s281 = scalar_lea.vmem %s0, %s280
      %p282 = pneg %p51
      %p283 = pneg %p48
      %p284 = scmp.lt.s32.totalorder %s22, 1
      %s285 = scalar_select %p284, %s22, 1
      %s286 = smul.addr %s285, 8
      %s287 = scalar_lea.vmem %s1, %s286
      %p288 = pneg %p77
      %p289 = pneg %p74
      %s290 = smul.u32 32, %s23
      %p291 = scmp.lt.s32.totalorder %s22, 1
      %s292 = scalar_select %p291, %s22, 1
      %p293 = scmp.lt.s32.totalorder %s290, 31
      %s294 = scalar_select %p293, %s290, 31
      %s295 = smul.addr %s292, 32
      %s296 = sadd.s32 %s294, %s295
      %s297 = smul.addr %s296, 4
      %s298 = scalar_lea.vmem %s2, %s297
      %p299 = pneg %p105
      %p300 = pneg %p102
      %s301 = smul.u32 2, %s23
      %p302 = scmp.lt.s32.totalorder %s301, 1
      %s303 = scalar_select %p302, %s301, 1
      %s304 = scalar_lea.vmem %s3, %s303
      %p305 = pneg %p131
      %p306 = pneg %p128
      %s307 = smul.u32 2, %s23
      %p308 = scmp.lt.s32.totalorder %s307, 1
      %s309 = scalar_select %p308, %s307, 1
      %s310 = scalar_lea.vmem %s4, %s309
      %p311 = pneg %p157
      %p312 = pneg %p154
      %p313 = pneg %p183
      %p314 = pneg %p180
      %p315 = scmp.lt.s32.totalorder %s22, 1
      %s316 = scalar_select %p315, %s22, 1
      %s317 = smul.addr %s316, 8
      %s318 = scalar_lea.vmem %s5, %s317
      %p319 = pneg %p209
      %p320 = pneg %p206
      %p321 = scmp.lt.s32.totalorder %s22, 1
      %s322 = scalar_select %p321, %s22, 1
      %s323 = smul.addr %s322, 4
      %s324 = scalar_lea.vmem %s6, %s323
      %p325 = scmp.lt.s32.totalorder %s22, 1
      %s326 = scalar_select %p325, %s22, 1
      %s327 = smul.addr %s326, 8
      %s328 = scalar_lea.vmem %s0, %s327
      %p329 = scmp.lt.s32.totalorder %s22, 1
      %s330 = scalar_select %p329, %s22, 1
      %s331 = smul.addr %s330, 8
      %s332 = scalar_lea.vmem %s1, %s331
      %s333 = smul.u32 32, %s23
      %p334 = scmp.lt.s32.totalorder %s22, 1
      %s335 = scalar_select %p334, %s22, 1
      %p336 = scmp.lt.s32.totalorder %s333, 31
      %s337 = scalar_select %p336, %s333, 31
      %s338 = smul.addr %s335, 32
      %s339 = sadd.s32 %s337, %s338
      %s340 = smul.addr %s339, 4
      %s341 = scalar_lea.vmem %s2, %s340
      %s342 = smul.u32 32, %s23
      %s343 = smul.u32 2, %s23
      %p344 = scmp.lt.s32.totalorder %s343, 1
      %s345 = scalar_select %p344, %s343, 1
      %s346 = scalar_lea.vmem %s3, %s345
      %s347 = smul.u32 2, %s23
      %s348 = smul.u32 2, %s23
      %p349 = scmp.lt.s32.totalorder %s348, 1
      %s350 = scalar_select %p349, %s348, 1
      %s351 = scalar_lea.vmem %s4, %s350
      %s352 = smul.u32 2, %s23
      %p353 = scmp.lt.s32.totalorder %s22, 1
      %s354 = scalar_select %p353, %s22, 1
      %s355 = smul.addr %s354, 8
      %s356 = scalar_lea.vmem %s5, %s355
      %p357 = scmp.lt.s32.totalorder %s22, 1
      %s358 = scalar_select %p357, %s22, 1
      %s359 = smul.addr %s358, 4
      %s360 = scalar_lea.vmem %s6, %s359
      %v362 = vld [vmem:[%s328] sm:$0xff]
      %v363 = vld [vmem:[%s332] sm:$0xff]
      %365 = vrot.lane.b32.xlu0 %v362, 2
      %v366 = vpop.permute.xlu0 %365
      %v368 = vsub.f32 %v362, %v366
      %v369 = vmul.f32 %v368, 0.5
      %371 = vrot.lane.b32.xlu0 %v369, 126
      %v372 = vpop.permute.xlu0 %371
      %v374 = vadd.f32 %v362, %v372
      %v375 = vmin.f32 %v363, 4.1351666
      %377 = vrot.lane.b32.xlu0 %v368, 126
      %v378 = vpop.permute.xlu0 %377
      %v380 = vmul.f32 %v363, %v378
      %v381 = vadd.f32 %v380, %v374
      %v382 = vmul.f32 %v375, 1.442695
      %v383 = vpow.pop %v382
      %v384 = vmul.f32 %v383, %v368
      %v385 = vmul.f32 %v384, 0.5
      %387 = vrot.lane.b32.xlu0 %v385, 126
      %v388 = vpop.permute.xlu0 %387
      %v390 = vsub.f32 %v381, %v388
      %v391 = vmax.f32 %v390, 0.0
      %v392 = vmin.f32 %v391, 16.0
      %v393 = vadd.f32 %v381, %v388
      %v394 = vmax.f32 %v393, 0.0
      %v395 = vmin.f32 %v394, 16.0
      %v396 = vld [vmem:[%s346] sm:$0x3]
      %v397 = vld [vmem:[%s351] sm:$0x3]
      %v399 = vlaneseq
      %v400 = vshrl.u32 %v399, 7
      %v401 = vsub.s32 0, %v400
      %v402 = vrot.slane %v396, %v401
      %v403 = vlaneseq
      %v404 = vshrl.u32 %v403, 7
      %v405 = vsub.s32 1, %v404
      %v406 = vrot.slane %v396, %v405
      %410 = vset.pattern.permute.xlu0 0
      %411 = vperm.xlu0 %410, %v392
      %v412 = vpop.permute.xlu0 %411
      %vm414 = vcmp.ge.f32.partialorder %v402, %v412
      %vm415 = vcmp.ge.f32.partialorder %v406, %v412
      %417 = vset.pattern.permute.xlu0 0
      %418 = vperm.xlu0 %417, %v395
      %v419 = vpop.permute.xlu0 %418
      %vm421 = vcmp.le.f32.partialorder %v402, %v419
      %vm422 = vcmp.le.f32.partialorder %v406, %v419
      %vm423 = vmand %vm414, %vm421
      %vm424 = vmand %vm415, %vm422
      %v426 = vlaneseq
      %v427 = vshrl.u32 %v426, 7
      %v428 = vsub.s32 0, %v427
      %v429 = vrot.slane %v397, %v428
      %v430 = vlaneseq
      %v431 = vshrl.u32 %v430, 7
      %v432 = vsub.s32 1, %v431
      %v433 = vrot.slane %v397, %v432
      %436 = vset.pattern.permute.xlu0 1
      %437 = vperm.xlu0 %436, %v392
      %v438 = vpop.permute.xlu0 %437
      %vm440 = vcmp.ge.f32.partialorder %v429, %v438
      %vm441 = vcmp.ge.f32.partialorder %v433, %v438
      %vm442 = vmand %vm423, %vm440
      %vm443 = vmand %vm424, %vm441
      %444 = vset.pattern.permute.xlu0 1
      %445 = vperm.xlu0 %444, %v395
      %v446 = vpop.permute.xlu0 %445
      %vm448 = vcmp.le.f32.partialorder %v429, %v446
      %vm449 = vcmp.le.f32.partialorder %v433, %v446
      %vm450 = vmand %vm442, %vm448
      %vm451 = vmand %vm443, %vm449
      %v452 = vsel %vm450, 1.0, 0.0
      %v453 = vsel %vm451, 1.0, 0.0
      %v454 = vadd.f32 %v452, %v453
      %455 = vadd.xlane.f32.xlu0 %v454
      %v456 = vpop.xlane.xlu0 %455
      %v457 = vpack.c.bf16 %v452, %v452
      %v458 = vpack.c.bf16 %v453, %v453
      %v459 = vld [vmem:[%s341] sm:$0xf]
      %v460 = vld [vmem:[%s341 + $0x4] sm:$0xf]
      %v461 = vld [vmem:[%s341 + $0x8] sm:$0xf]
      %v462 = vld [vmem:[%s341 + $0xc] sm:$0xf]
      %v463 = vld [vmem:[%s341 + $0x10] sm:$0xf]
      %v464 = vld [vmem:[%s341 + $0x14] sm:$0xf]
      %v465 = vld [vmem:[%s341 + $0x18] sm:$0xf]
      %v466 = vld [vmem:[%s341 + $0x1c] sm:$0xf]
      %v467 = vld [vmem:[%s341 + $0x20] sm:$0xf]
      %v468 = vld [vmem:[%s341 + $0x24] sm:$0xf]
      %v469 = vld [vmem:[%s341 + $0x28] sm:$0xf]
      %v470 = vld [vmem:[%s341 + $0x2c] sm:$0xf]
      %v471 = vld [vmem:[%s341 + $0x30] sm:$0xf]
      %v472 = vld [vmem:[%s341 + $0x34] sm:$0xf]
      %v473 = vld [vmem:[%s341 + $0x38] sm:$0xf]
      %v474 = vld [vmem:[%s341 + $0x3c] sm:$0xf]
      %v475 = vld [vmem:[%s341 + $0x40] sm:$0xf]
      %v476 = vld [vmem:[%s341 + $0x44] sm:$0xf]
      %v477 = vld [vmem:[%s341 + $0x48] sm:$0xf]
      %v478 = vld [vmem:[%s341 + $0x4c] sm:$0xf]
      %v479 = vld [vmem:[%s341 + $0x50] sm:$0xf]
      %v480 = vld [vmem:[%s341 + $0x54] sm:$0xf]
      %v481 = vld [vmem:[%s341 + $0x58] sm:$0xf]
      %v482 = vld [vmem:[%s341 + $0x5c] sm:$0xf]
      %v483 = vld [vmem:[%s341 + $0x60] sm:$0xf]
      %v484 = vld [vmem:[%s341 + $0x64] sm:$0xf]
      %v485 = vld [vmem:[%s341 + $0x68] sm:$0xf]
      %v486 = vld [vmem:[%s341 + $0x6c] sm:$0xf]
      %v487 = vld [vmem:[%s341 + $0x70] sm:$0xf]
      %v488 = vld [vmem:[%s341 + $0x74] sm:$0xf]
      %v489 = vld [vmem:[%s341 + $0x78] sm:$0xf]
      %v490 = vld [vmem:[%s341 + $0x7c] sm:$0xf]
      %v523 = vunpack.c.l.b16 %v459
      %v524 = vunpack.c.l.b16 %v460
      %v525 = vunpack.c.l.b16 %v461
      %v526 = vunpack.c.l.b16 %v462
      %v527 = vunpack.c.l.b16 %v463
      %v528 = vunpack.c.l.b16 %v464
      %v529 = vunpack.c.l.b16 %v465
      %v530 = vunpack.c.l.b16 %v466
      %v531 = vunpack.c.l.b16 %v467
      %v532 = vunpack.c.l.b16 %v468
      %v533 = vunpack.c.l.b16 %v469
      %v534 = vunpack.c.l.b16 %v470
      %v535 = vunpack.c.l.b16 %v471
      %v536 = vunpack.c.l.b16 %v472
      %v537 = vunpack.c.l.b16 %v473
      %v538 = vunpack.c.l.b16 %v474
      %v539 = vunpack.c.l.b16 %v475
      %v540 = vunpack.c.l.b16 %v476
      %v541 = vunpack.c.l.b16 %v477
      %v542 = vunpack.c.l.b16 %v478
      %v543 = vunpack.c.l.b16 %v479
      %v544 = vunpack.c.l.b16 %v480
      %v545 = vunpack.c.l.b16 %v481
      %v546 = vunpack.c.l.b16 %v482
      %v547 = vunpack.c.l.b16 %v483
      %v548 = vunpack.c.l.b16 %v484
      %v549 = vunpack.c.l.b16 %v485
      %v550 = vunpack.c.l.b16 %v486
      %v551 = vunpack.c.l.b16 %v487
      %v552 = vunpack.c.l.b16 %v488
      %v553 = vunpack.c.l.b16 %v489
      %v554 = vunpack.c.l.b16 %v490
      %v555 = vpack.c.b16 %v524, %v523
      %v556 = vpack.c.b16 %v526, %v525
      %v557 = vpack.c.b16 %v528, %v527
      %v558 = vpack.c.b16 %v530, %v529
      %v559 = vpack.c.b16 %v532, %v531
      %v560 = vpack.c.b16 %v534, %v533
      %v561 = vpack.c.b16 %v536, %v535
      %v562 = vpack.c.b16 %v538, %v537
      %v563 = vpack.c.b16 %v540, %v539
      %v564 = vpack.c.b16 %v542, %v541
      %v565 = vpack.c.b16 %v544, %v543
      %v566 = vpack.c.b16 %v546, %v545
      %v567 = vpack.c.b16 %v548, %v547
      %v568 = vpack.c.b16 %v550, %v549
      %v569 = vpack.c.b16 %v552, %v551
      %v570 = vpack.c.b16 %v554, %v553
      %587 = vmatprep.subr.bf16.mxu0 0
      %588 = vmatpush1.bf16.msra.mxu0 %v555
      %589 = vmatprep.subr.bf16.mxu0 0
      %590 = vmatpush1.bf16.msra.mxu0 %v556
      %591 = vmatprep.subr.bf16.mxu0 0
      %592 = vmatpush1.bf16.msra.mxu0 %v557
      %593 = vmatprep.subr.bf16.mxu0 0
      %594 = vmatpush1.bf16.msra.mxu0 %v558
      %595 = vmatprep.subr.bf16.mxu0 0
      %596 = vmatpush1.bf16.msra.mxu0 %v559
      %597 = vmatprep.subr.bf16.mxu0 0
      %598 = vmatpush1.bf16.msra.mxu0 %v560
      %599 = vmatprep.subr.bf16.mxu0 0
      %600 = vmatpush1.bf16.msra.mxu0 %v561
      %601 = vmatprep.subr.bf16.mxu0 0
      %602 = vmatpush1.bf16.msra.mxu0 %v562
      %603 = vmatprep.subr.bf16.mxu0 0
      %604 = vmatpush1.bf16.msra.mxu0 %v563
      %605 = vmatprep.subr.bf16.mxu0 0
      %606 = vmatpush1.bf16.msra.mxu0 %v564
      %607 = vmatprep.subr.bf16.mxu0 0
      %608 = vmatpush1.bf16.msra.mxu0 %v565
      %609 = vmatprep.subr.bf16.mxu0 0
      %610 = vmatpush1.bf16.msra.mxu0 %v566
      %611 = vmatprep.subr.bf16.mxu0 0
      %612 = vmatpush1.bf16.msra.mxu0 %v567
      %613 = vmatprep.subr.bf16.mxu0 0
      %614 = vmatpush1.bf16.msra.mxu0 %v568
      %615 = vmatprep.subr.bf16.mxu0 0
      %616 = vmatpush1.bf16.msra.mxu0 %v569
      %617 = vmatprep.subr.bf16.mxu0 0
      %618 = vmatpush1.bf16.msra.mxu0 %v570
      %619 = vmatprep.mubr.bf16.mxu0 %v458
      %620 = vmatmul.mubr.bf16.gmra.mrb[0].mxu0 %v457
      %v621 = vpop.f32.mrb[0].mxu0
      %v622 = vadd.f32 0.0, %v621
      %v623 = vpop.f32.mrb[0].mxu0
      %v624 = vpop.f32.mrb[0].mxu0
      %v625 = vpop.f32.mrb[0].mxu0
      %626 = vdwg.mxu0
      %p627 = scmp.eq.s32.totalorder %s23, 0
      // Predicated region
      $region41: #{generalized_rcnn_forward.6} parent=39 // pred_check
        %p628 = pneg %p627
      $region42: #{generalized_rcnn_forward.6} parent=39 // pred_check_branch
        %630 = sbr.rel (%p628) target = $region44
      $region43: #{generalized_rcnn_forward.6} parent=39 // pred_region
        %631 = vst [vmem:[#allocation2] sm:$0xff] %v622
        %vm632 = vcmask 7168
        %633 = vst.msk [vmem:[#allocation3] sm:$0xff] %vm632, %v456
      $region44: #{generalized_rcnn_forward.6} parent=39 // pred_fallthru
        _
      %p634 = scmp.gt.s32.totalorder %s23, 0
      // Predicated region
      $region45: #{generalized_rcnn_forward.6} parent=39 // pred_check
        %p635 = pneg %p634
      $region46: #{generalized_rcnn_forward.6} parent=39 // pred_check_branch
        %637 = sbr.rel (%p635) target = $region48
      $region47: #{generalized_rcnn_forward.6} parent=39 // pred_region
        %v638 = vld [vmem:[#allocation2] sm:$0xff]
        %v639 = vadd.f32 %v638, %v622
        %640 = vst [vmem:[#allocation2] sm:$0xff] %v639
        %v641 = vld [vmem:[#allocation3] sm:$0xff]
        %v642 = vadd.f32 %v641, %v456
        %vm643 = vcmask 7168
        %644 = vst.msk [vmem:[#allocation3] sm:$0xff] %vm643, %v642
      $region48: #{generalized_rcnn_forward.6} parent=39 // pred_fallthru
        _
      // Predicated region
      $region49: #{generalized_rcnn_forward.6} parent=39 // pred_check
        %p645 = pneg %p627
      $region50: #{generalized_rcnn_forward.6} parent=39 // pred_check_branch
        %647 = sbr.rel (%p645) target = $region52
      $region51: #{generalized_rcnn_forward.6} parent=39 // pred_region
        %648 = vrot.lane.b32.xlu0 %v395, 2
        %v649 = vpop.permute.xlu0 %648
        %vm651 = vcmask 15360
        %v652 = vsel %vm651, %v392, %v649
        %vm653 = vcmask 23552
        %v654 = vsel %vm653, %v652, %v649
        %vm655 = vcmask 31744
        %656 = vst.msk [vmem:[%s356] sm:$0xff] %vm655, %v654
        %v657 = vld [vmem:[#allocation3] sm:$0xff]
        %v658 = vmax.f32 %v657, 1.0
        %v659 = vld [vmem:[#allocation2] sm:$0xff]
        %v660 = vrcp.pop %v658
        %662 = vset.pattern.permute.xlu0 0
        %663 = vperm.xlu0 %662, %v660
        %v664 = vpop.permute.xlu0 %663
        %v666 = vmul.f32 %v659, %v664
        %v667 = vpack.c.bf16 %v666, %v666
        %668 = vst [vmem:[%s360] sm:$0xf] %v667
      $region52: #{generalized_rcnn_forward.6} parent=39 // pred_fallthru
        _
      %p669 = scmp.lt.s32.totalorder %s22, 1
      %s670 = scalar_select %p669, %s22, 1
      %s671 = smul.addr %s670, 8
      %s672 = scalar_lea.vmem %s5, %s671
      %p673 = scmp.lt.s32.totalorder %s22, 1
      %s674 = scalar_select %p673, %s22, 1
      %s675 = smul.addr %s674, 4
      %s676 = scalar_lea.vmem %s6, %s675
      // Predicated region
      $region53: #{generalized_rcnn_forward.6} parent=39 // pred_check
        %p677 = pneg %p180
      $region54: #{generalized_rcnn_forward.6} parent=39 // pred_check_branch
        %679 = sbr.rel (%p677) target = $region56
      $region55: #{generalized_rcnn_forward.6} parent=39 // pred_region
        _
      $region56: #{generalized_rcnn_forward.6} parent=39 // pred_fallthru
        _
      // Predicated region
      $region57: #{generalized_rcnn_forward.6} parent=39 // pred_check
        %p680 = pneg %p206
      $region58: #{generalized_rcnn_forward.6} parent=39 // pred_check_branch
        %682 = sbr.rel (%p680) target = $region60
      $region59: #{generalized_rcnn_forward.6} parent=39 // pred_region
        _
      $region60: #{generalized_rcnn_forward.6} parent=39 // pred_fallthru
        _
    $region40: #{generalized_rcnn_forward.6} parent=5 // pred_fallthru
      _
    %p683 = scmp.le.s32.totalorder 2, %s13
    // Predicated region
    $region61: #{generalized_rcnn_forward.6} parent=5 // pred_check
      %p684 = pneg %p683
    $region62: #{generalized_rcnn_forward.6} parent=5 // pred_check_branch
      %686 = sbr.rel (%p684) target = $region64
    $region63: #{generalized_rcnn_forward.6} parent=5 // pred_region
      %s687 = ssub.s32 %s13, 2
      // Predicated region
      $region65: #{generalized_rcnn_forward.6} parent=63 // pred_check
        %p688 = pneg %p186
      $region66: #{generalized_rcnn_forward.6} parent=63 // pred_check_branch
        %690 = sbr.rel (%p688) target = $region68
      $region67: #{generalized_rcnn_forward.6} parent=63 // pred_region
        %p691 = scmp.lt.s32.totalorder %s24, 1
        %s692 = scalar_select %p691, %s24, 1
        %s693 = smul.addr %s692, 8
        %s694 = scalar_lea.vmem %s5, %s693
      $region68: #{generalized_rcnn_forward.6} parent=63 // pred_fallthru
        _
      // Predicated region
      $region69: #{generalized_rcnn_forward.6} parent=63 // pred_check
        %p695 = pneg %p212
      $region70: #{generalized_rcnn_forward.6} parent=63 // pred_check_branch
        %697 = sbr.rel (%p695) target = $region72
      $region71: #{generalized_rcnn_forward.6} parent=63 // pred_region
        %p698 = scmp.lt.s32.totalorder %s24, 1
        %s699 = scalar_select %p698, %s24, 1
        %s700 = smul.addr %s699, 4
        %s701 = scalar_lea.vmem %s6, %s700
      $region72: #{generalized_rcnn_forward.6} parent=63 // pred_fallthru
        _
    $region64: #{generalized_rcnn_forward.6} parent=5 // pred_fallthru
      _
  $region6: #{generalized_rcnn_forward.6} parent=0 // loop_footer
    %s17 = sadd.s32 1, %s13
  $region7: #{generalized_rcnn_forward.6} parent=0 // loop_footer_branch
    %12 = sbr.rel target = $region3
  $region8: #{generalized_rcnn_forward.6} parent=0 // loop_exit
    _

// kernel: generalized_rcnn_forward.7
$region0: #{generalized_rcnn_forward.7}
  #allocation0 [shape = 'u32[]', space=smem, size = 0x4, offset = 0x4, fixed_abs, tag = 'smem constant byte address 0x4 - core index']
  #allocation1 [shape = 'u32[144,128]{1,0:T(1,128)}', space=vmem, size = 0x12000, scoped, tag = 'internal scratch']
  %s0 = inlined_call_operand.vmem [shape: bf16[16,128], index: 0, kind: input, shape index: {}]
  %s1 = inlined_call_operand.vmem [shape: f32[16,4], index: 1, kind: input, shape index: {}]
  %s2 = inlined_call_operand.vmem [shape: bf16[128,128], index: 2, kind: input, shape index: {}]
  %s3 = inlined_call_operand.vmem [shape: f32[1,128], index: 3, kind: input, shape index: {}]
  %s4 = inlined_call_operand.vmem [shape: bf16[128,128], index: 4, kind: input, shape index: {}]
  %s5 = inlined_call_operand.vmem [shape: f32[1,128], index: 5, kind: input, shape index: {}]
  %s6 = inlined_call_operand.vmem [shape: bf16[128,32], index: 6, kind: input, shape index: {}]
  %s7 = inlined_call_operand.vmem [shape: f32[1,32], index: 7, kind: input, shape index: {}]
  %s8 = inlined_call_operand.vmem [shape: f32[16,4], index: 8, kind: output, shape index: {0}]
  %s9 = inlined_call_operand.vmem [shape: f32[16,1], index: 9, kind: output, shape index: {1}]
  %s10 = inlined_call_operand.vmem [shape: s32[16,1], index: 10, kind: output, shape index: {2}]
  %11 = xla_tuple %s8, %s9, %s10
  %s12 = sld [smem:[#allocation0]]
  $region58: #{generalized_rcnn_forward.7} parent=0
    _
  %s14 = ssub.s32 1, %s12
  %s15 = scalar_select 0, %s14, %s12
  // Predicated region
  $region2: #{generalized_rcnn_forward.7} parent=0 // pred_check
    _
  $region3: #{generalized_rcnn_forward.7} parent=0 // pred_check_branch
    %17 = sbr.rel (0) target = $region5
  $region4: #{generalized_rcnn_forward.7} parent=0 // pred_region
    _
  $region5: #{generalized_rcnn_forward.7} parent=0 // pred_fallthru
    _
  // Predicated region
  $region6: #{generalized_rcnn_forward.7} parent=0 // pred_check
    _
  $region7: #{generalized_rcnn_forward.7} parent=0 // pred_check_branch
    %19 = sbr.rel (0) target = $region9
  $region8: #{generalized_rcnn_forward.7} parent=0 // pred_region
    _
  $region9: #{generalized_rcnn_forward.7} parent=0 // pred_fallthru
    _
  // Predicated region
  $region10: #{generalized_rcnn_forward.7} parent=0 // pred_check
    _
  $region11: #{generalized_rcnn_forward.7} parent=0 // pred_check_branch
    %21 = sbr.rel (0) target = $region13
  $region12: #{generalized_rcnn_forward.7} parent=0 // pred_region
    _
  $region13: #{generalized_rcnn_forward.7} parent=0 // pred_fallthru
    _
  // Predicated region
  $region14: #{generalized_rcnn_forward.7} parent=0 // pred_check
    _
  $region15: #{generalized_rcnn_forward.7} parent=0 // pred_check_branch
    %23 = sbr.rel (0) target = $region17
  $region16: #{generalized_rcnn_forward.7} parent=0 // pred_region
    _
  $region17: #{generalized_rcnn_forward.7} parent=0 // pred_fallthru
    _
  // Predicated region
  $region18: #{generalized_rcnn_forward.7} parent=0 // pred_check
    _
  $region19: #{generalized_rcnn_forward.7} parent=0 // pred_check_branch
    %25 = sbr.rel (0) target = $region21
  $region20: #{generalized_rcnn_forward.7} parent=0 // pred_region
    _
  $region21: #{generalized_rcnn_forward.7} parent=0 // pred_fallthru
    _
  // Predicated region
  $region22: #{generalized_rcnn_forward.7} parent=0 // pred_check
    _
  $region23: #{generalized_rcnn_forward.7} parent=0 // pred_check_branch
    %27 = sbr.rel (0) target = $region25
  $region24: #{generalized_rcnn_forward.7} parent=0 // pred_region
    _
  $region25: #{generalized_rcnn_forward.7} parent=0 // pred_fallthru
    _
  // Predicated region
  $region26: #{generalized_rcnn_forward.7} parent=0 // pred_check
    _
  $region27: #{generalized_rcnn_forward.7} parent=0 // pred_check_branch
    %29 = sbr.rel (0) target = $region29
  $region28: #{generalized_rcnn_forward.7} parent=0 // pred_region
    _
  $region29: #{generalized_rcnn_forward.7} parent=0 // pred_fallthru
    _
  // Predicated region
  $region30: #{generalized_rcnn_forward.7} parent=0 // pred_check
    _
  $region31: #{generalized_rcnn_forward.7} parent=0 // pred_check_branch
    %31 = sbr.rel (0) target = $region33
  $region32: #{generalized_rcnn_forward.7} parent=0 // pred_region
    _
  $region33: #{generalized_rcnn_forward.7} parent=0 // pred_fallthru
    _
  %v33 = vld [vmem:[%s0] sm:$0xf]
  %v34 = vld [vmem:[%s0 + $0x4] sm:$0xf]
  %v35 = vld [vmem:[%s2] sm:$0xf]
  %v36 = vld [vmem:[%s2 + $0x4] sm:$0xf]
  %v37 = vld [vmem:[%s2 + $0x8] sm:$0xf]
  %v38 = vld [vmem:[%s2 + $0xc] sm:$0xf]
  %v39 = vld [vmem:[%s2 + $0x10] sm:$0xf]
  %v40 = vld [vmem:[%s2 + $0x14] sm:$0xf]
  %v41 = vld [vmem:[%s2 + $0x18] sm:$0xf]
  %v42 = vld [vmem:[%s2 + $0x1c] sm:$0xf]
  %v43 = vld [vmem:[%s2 + $0x20] sm:$0xf]
  %v44 = vld [vmem:[%s2 + $0x24] sm:$0xf]
  %v45 = vld [vmem:[%s2 + $0x28] sm:$0xf]
  %v46 = vld [vmem:[%s2 + $0x2c] sm:$0xf]
  %v47 = vld [vmem:[%s2 + $0x30] sm:$0xf]
  %v48 = vld [vmem:[%s2 + $0x34] sm:$0xf]
  %v49 = vld [vmem:[%s2 + $0x38] sm:$0xf]
  %v50 = vld [vmem:[%s2 + $0x3c] sm:$0xf]
  %v51 = vld [vmem:[%s3] sm:$0x1]
  %v53 = vlaneseq
  %v54 = vshrl.u32 %v53, 7
  %v55 = vsub.s32 0, %v54
  %v56 = vrot.slane %v51, %v55
  %v60 = vunpack.c.l.b16 %v33
  %v61 = vunpack.c.l.b16 %v34
  %v62 = vpack.c.b16 %v61, %v60
  %v80 = vunpack.c.l.b16 %v35
  %v81 = vunpack.c.l.b16 %v36
  %v82 = vunpack.c.l.b16 %v37
  %v83 = vunpack.c.l.b16 %v38
  %v84 = vunpack.c.l.b16 %v39
  %v85 = vunpack.c.l.b16 %v40
  %v86 = vunpack.c.l.b16 %v41
  %v87 = vunpack.c.l.b16 %v42
  %v88 = vunpack.c.l.b16 %v43
  %v89 = vunpack.c.l.b16 %v44
  %v90 = vunpack.c.l.b16 %v45
  %v91 = vunpack.c.l.b16 %v46
  %v92 = vunpack.c.l.b16 %v47
  %v93 = vunpack.c.l.b16 %v48
  %v94 = vunpack.c.l.b16 %v49
  %v95 = vunpack.c.l.b16 %v50
  %v96 = vpack.c.b16 %v81, %v80
  %v97 = vpack.c.b16 %v83, %v82
  %v98 = vpack.c.b16 %v85, %v84
  %v99 = vpack.c.b16 %v87, %v86
  %v100 = vpack.c.b16 %v89, %v88
  %v101 = vpack.c.b16 %v91, %v90
  %v102 = vpack.c.b16 %v93, %v92
  %v103 = vpack.c.b16 %v95, %v94
  %112 = vmatprep.subr.bf16.mxu0 0
  %113 = vmatpush1.bf16.msra.mxu0 %v96
  %114 = vmatprep.subr.bf16.mxu0 0
  %115 = vmatpush1.bf16.msra.mxu0 %v97
  %116 = vmatprep.subr.bf16.mxu0 0
  %117 = vmatpush1.bf16.msra.mxu0 %v98
  %118 = vmatprep.subr.bf16.mxu0 0
  %119 = vmatpush1.bf16.msra.mxu0 %v99
  %120 = vmatprep.subr.bf16.mxu0 0
  %121 = vmatpush1.bf16.msra.mxu0 %v100
  %122 = vmatprep.subr.bf16.mxu0 0
  %123 = vmatpush1.bf16.msra.mxu0 %v101
  %124 = vmatprep.subr.bf16.mxu0 0
  %125 = vmatpush1.bf16.msra.mxu0 %v102
  %126 = vmatprep.subr.bf16.mxu0 0
  %127 = vmatpush1.bf16.msra.mxu0 %v103
  %128 = vmatprep.subr.bf16.mxu0 0
  %129 = vmatpush1.bf16.msra.mxu0 0
  %130 = vmatprep.subr.bf16.mxu0 0
  %131 = vmatpush1.bf16.msra.mxu0 0
  %132 = vmatprep.subr.bf16.mxu0 0
  %133 = vmatpush1.bf16.msra.mxu0 0
  %134 = vmatprep.subr.bf16.mxu0 0
  %135 = vmatpush1.bf16.msra.mxu0 0
  %136 = vmatprep.subr.bf16.mxu0 0
  %137 = vmatpush1.bf16.msra.mxu0 0
  %138 = vmatprep.subr.bf16.mxu0 0
  %139 = vmatpush1.bf16.msra.mxu0 0
  %140 = vmatprep.subr.bf16.mxu0 0
  %141 = vmatpush1.bf16.msra.mxu0 0
  %142 = vmatprep.subr.bf16.mxu0 0
  %143 = vmatpush1.bf16.msra.mxu0 0
  %144 = vmatprep.mubr.bf16.mxu0 0
  %145 = vmatmul.mubr.bf16.gmra.mrb[0].mxu0 %v62
  %v146 = vpop.f32.mrb[0].mxu0
  %v147 = vadd.f32 %v56, %v146
  %v148 = vpop.f32.mrb[0].mxu0
  %v149 = vpop.f32.mrb[0].mxu0
  %v150 = vadd.f32 %v56, %v149
  %v151 = vpop.f32.mrb[0].mxu0
  %152 = vdwg.mxu0
  %v153 = vmax.f32 %v147, 0.0
  %v154 = vmax.f32 %v150, 0.0
  %v155 = vpack.c.bf16 %v154, %v153
  %v156 = vld [vmem:[%s4] sm:$0xf]
  %v157 = vld [vmem:[%s4 + $0x4] sm:$0xf]
  %v158 = vld [vmem:[%s4 + $0x8] sm:$0xf]
  %v159 = vld [vmem:[%s4 + $0xc] sm:$0xf]
  %v160 = vld [vmem:[%s4 + $0x10] sm:$0xf]
  %v161 = vld [vmem:[%s4 + $0x14] sm:$0xf]
  %v162 = vld [vmem:[%s4 + $0x18] sm:$0xf]
  %v163 = vld [vmem:[%s4 + $0x1c] sm:$0xf]
  %v164 = vld [vmem:[%s4 + $0x20] sm:$0xf]
  %v165 = vld [vmem:[%s4 + $0x24] sm:$0xf]
  %v166 = vld [vmem:[%s4 + $0x28] sm:$0xf]
  %v167 = vld [vmem:[%s4 + $0x2c] sm:$0xf]
  %v168 = vld [vmem:[%s4 + $0x30] sm:$0xf]
  %v169 = vld [vmem:[%s4 + $0x34] sm:$0xf]
  %v170 = vld [vmem:[%s4 + $0x38] sm:$0xf]
  %v171 = vld [vmem:[%s4 + $0x3c] sm:$0xf]
  %v172 = vld [vmem:[%s5] sm:$0x1]
  %v174 = vlaneseq
  %v175 = vshrl.u32 %v174, 7
  %v176 = vsub.s32 0, %v175
  %v177 = vrot.slane %v172, %v176
  %v195 = vunpack.c.l.b16 %v156
  %v196 = vunpack.c.l.b16 %v157
  %v197 = vunpack.c.l.b16 %v158
  %v198 = vunpack.c.l.b16 %v159
  %v199 = vunpack.c.l.b16 %v160
  %v200 = vunpack.c.l.b16 %v161
  %v201 = vunpack.c.l.b16 %v162
  %v202 = vunpack.c.l.b16 %v163
  %v203 = vunpack.c.l.b16 %v164
  %v204 = vunpack.c.l.b16 %v165
  %v205 = vunpack.c.l.b16 %v166
  %v206 = vunpack.c.l.b16 %v167
  %v207 = vunpack.c.l.b16 %v168
  %v208 = vunpack.c.l.b16 %v169
  %v209 = vunpack.c.l.b16 %v170
  %v210 = vunpack.c.l.b16 %v171
  %v211 = vpack.c.b16 %v196, %v195
  %v212 = vpack.c.b16 %v198, %v197
  %v213 = vpack.c.b16 %v200, %v199
  %v214 = vpack.c.b16 %v202, %v201
  %v215 = vpack.c.b16 %v204, %v203
  %v216 = vpack.c.b16 %v206, %v205
  %v217 = vpack.c.b16 %v208, %v207
  %v218 = vpack.c.b16 %v210, %v209
  %227 = vmatprep.subr.bf16.mxu0 0
  %228 = vmatpush1.bf16.msra.mxu0 %v211
  %229 = vmatprep.subr.bf16.mxu0 0
  %230 = vmatpush1.bf16.msra.mxu0 %v212
  %231 = vmatprep.subr.bf16.mxu0 0
  %232 = vmatpush1.bf16.msra.mxu0 %v213
  %233 = vmatprep.subr.bf16.mxu0 0
  %234 = vmatpush1.bf16.msra.mxu0 %v214
  %235 = vmatprep.subr.bf16.mxu0 0
  %236 = vmatpush1.bf16.msra.mxu0 %v215
  %237 = vmatprep.subr.bf16.mxu0 0
  %238 = vmatpush1.bf16.msra.mxu0 %v216
  %239 = vmatprep.subr.bf16.mxu0 0
  %240 = vmatpush1.bf16.msra.mxu0 %v217
  %241 = vmatprep.subr.bf16.mxu0 0
  %242 = vmatpush1.bf16.msra.mxu0 %v218
  %243 = vmatprep.subr.bf16.mxu0 0
  %244 = vmatpush1.bf16.msra.mxu0 0
  %245 = vmatprep.subr.bf16.mxu0 0
  %246 = vmatpush1.bf16.msra.mxu0 0
  %247 = vmatprep.subr.bf16.mxu0 0
  %248 = vmatpush1.bf16.msra.mxu0 0
  %249 = vmatprep.subr.bf16.mxu0 0
  %250 = vmatpush1.bf16.msra.mxu0 0
  %251 = vmatprep.subr.bf16.mxu0 0
  %252 = vmatpush1.bf16.msra.mxu0 0
  %253 = vmatprep.subr.bf16.mxu0 0
  %254 = vmatpush1.bf16.msra.mxu0 0
  %255 = vmatprep.subr.bf16.mxu0 0
  %256 = vmatpush1.bf16.msra.mxu0 0
  %257 = vmatprep.subr.bf16.mxu0 0
  %258 = vmatpush1.bf16.msra.mxu0 0
  %259 = vmatprep.mubr.bf16.mxu0 0
  %260 = vmatmul.mubr.bf16.gmra.mrb[0].mxu0 %v155
  %v261 = vpop.f32.mrb[0].mxu0
  %v262 = vadd.f32 %v177, %v261
  %v263 = vpop.f32.mrb[0].mxu0
  %v264 = vpop.f32.mrb[0].mxu0
  %v265 = vadd.f32 %v177, %v264
  %v266 = vpop.f32.mrb[0].mxu0
  %267 = vdwg.mxu0
  %v268 = vmax.f32 %v262, 0.0
  %v269 = vmax.f32 %v265, 0.0
  %v270 = vpack.c.bf16 %v269, %v268
  %v271 = vld [vmem:[%s6] sm:$0xf]
  %v272 = vld [vmem:[%s6 + $0x4] sm:$0xf]
  %v273 = vld [vmem:[%s6 + $0x8] sm:$0xf]
  %v274 = vld [vmem:[%s6 + $0xc] sm:$0xf]
  %v275 = vld [vmem:[%s6 + $0x10] sm:$0xf]
  %v276 = vld [vmem:[%s6 + $0x14] sm:$0xf]
  %v277 = vld [vmem:[%s6 + $0x18] sm:$0xf]
  %v278 = vld [vmem:[%s6 + $0x1c] sm:$0xf]
  %v279 = vld [vmem:[%s6 + $0x20] sm:$0xf]
  %v280 = vld [vmem:[%s6 + $0x24] sm:$0xf]
  %v281 = vld [vmem:[%s6 + $0x28] sm:$0xf]
  %v282 = vld [vmem:[%s6 + $0x2c] sm:$0xf]
  %v283 = vld [vmem:[%s6 + $0x30] sm:$0xf]
  %v284 = vld [vmem:[%s6 + $0x34] sm:$0xf]
  %v285 = vld [vmem:[%s6 + $0x38] sm:$0xf]
  %v286 = vld [vmem:[%s6 + $0x3c] sm:$0xf]
  %v287 = vld [vmem:[%s7] sm:$0x1]
  %v289 = vlaneseq
  %v290 = vshrl.u32 %v289, 7
  %v291 = vsub.s32 0, %v290
  %v292 = vrot.slane %v287, %v291
  %v310 = vunpack.c.l.b16 %v271
  %v311 = vunpack.c.l.b16 %v272
  %v312 = vunpack.c.l.b16 %v273
  %v313 = vunpack.c.l.b16 %v274
  %v314 = vunpack.c.l.b16 %v275
  %v315 = vunpack.c.l.b16 %v276
  %v316 = vunpack.c.l.b16 %v277
  %v317 = vunpack.c.l.b16 %v278
  %v318 = vunpack.c.l.b16 %v279
  %v319 = vunpack.c.l.b16 %v280
  %v320 = vunpack.c.l.b16 %v281
  %v321 = vunpack.c.l.b16 %v282
  %v322 = vunpack.c.l.b16 %v283
  %v323 = vunpack.c.l.b16 %v284
  %v324 = vunpack.c.l.b16 %v285
  %v325 = vunpack.c.l.b16 %v286
  %v326 = vpack.c.b16 %v311, %v310
  %v327 = vpack.c.b16 %v313, %v312
  %v328 = vpack.c.b16 %v315, %v314
  %v329 = vpack.c.b16 %v317, %v316
  %v330 = vpack.c.b16 %v319, %v318
  %v331 = vpack.c.b16 %v321, %v320
  %v332 = vpack.c.b16 %v323, %v322
  %v333 = vpack.c.b16 %v325, %v324
  %342 = vmatprep.subr.bf16.mxu0 0
  %343 = vmatpush1.bf16.msra.mxu0 %v326
  %344 = vmatprep.subr.bf16.mxu0 0
  %345 = vmatpush1.bf16.msra.mxu0 %v327
  %346 = vmatprep.subr.bf16.mxu0 0
  %347 = vmatpush1.bf16.msra.mxu0 %v328
  %348 = vmatprep.subr.bf16.mxu0 0
  %349 = vmatpush1.bf16.msra.mxu0 %v329
  %350 = vmatprep.subr.bf16.mxu0 0
  %351 = vmatpush1.bf16.msra.mxu0 %v330
  %352 = vmatprep.subr.bf16.mxu0 0
  %353 = vmatpush1.bf16.msra.mxu0 %v331
  %354 = vmatprep.subr.bf16.mxu0 0
  %355 = vmatpush1.bf16.msra.mxu0 %v332
  %356 = vmatprep.subr.bf16.mxu0 0
  %357 = vmatpush1.bf16.msra.mxu0 %v333
  %358 = vmatprep.subr.bf16.mxu0 0
  %359 = vmatpush1.bf16.msra.mxu0 0
  %360 = vmatprep.subr.bf16.mxu0 0
  %361 = vmatpush1.bf16.msra.mxu0 0
  %362 = vmatprep.subr.bf16.mxu0 0
  %363 = vmatpush1.bf16.msra.mxu0 0
  %364 = vmatprep.subr.bf16.mxu0 0
  %365 = vmatpush1.bf16.msra.mxu0 0
  %366 = vmatprep.subr.bf16.mxu0 0
  %367 = vmatpush1.bf16.msra.mxu0 0
  %368 = vmatprep.subr.bf16.mxu0 0
  %369 = vmatpush1.bf16.msra.mxu0 0
  %370 = vmatprep.subr.bf16.mxu0 0
  %371 = vmatpush1.bf16.msra.mxu0 0
  %372 = vmatprep.subr.bf16.mxu0 0
  %373 = vmatpush1.bf16.msra.mxu0 0
  %374 = vmatprep.mubr.bf16.mxu0 0
  %375 = vmatmul.mubr.bf16.gmra.mrb[0].mxu0 %v270
  %v376 = vpop.f32.mrb[0].mxu0
  %v377 = vadd.f32 %v292, %v376
  %v378 = vpop.f32.mrb[0].mxu0
  %v379 = vpop.f32.mrb[0].mxu0
  %v380 = vadd.f32 %v292, %v379
  %v381 = vpop.f32.mrb[0].mxu0
  %382 = vdwg.mxu0
  %vm383 = vcmask 39936
  %v384 = vsel %vm383, %v377, -inf
  %385 = vmax.xlane.f32.xlu0 %v384
  %v386 = vpop.xlane.xlu0 %385
  %v387 = vsel %vm383, %v380, -inf
  %388 = vmax.xlane.f32.xlu0 %v387
  %v389 = vpop.xlane.xlu0 %388
  %v390 = vsub.f32 %v377, %v386
  %v391 = vsub.f32 %v380, %v389
  %v392 = vmul.f32 %v390, 1.442695
  %v393 = vpow.pop %v392
  %v394 = vmul.f32 %v391, 1.442695
  %v395 = vpow.pop %v394
  %v396 = vsel %vm383, %v393, 0.0
  %397 = vadd.xlane.f32.xlu0 %v396
  %v398 = vpop.xlane.xlu0 %397
  %v399 = vsel %vm383, %v395, 0.0
  %400 = vadd.xlane.f32.xlu0 %v399
  %v401 = vpop.xlane.xlu0 %400
  %v402 = vrcp.pop %v398
  %v403 = vmul.f32 %v393, %v402
  %v404 = vrcp.pop %v401
  %v405 = vmul.f32 %v395, %v404
  %vm406 = vcmask 39944
  %v407 = vsel %vm406, %v403, -inf
  %408 = vmax.xlane.f32.xlu0 %v407
  %v409 = vpop.xlane.xlu0 %408
  %v410 = vsel %vm406, %v405, -inf
  %411 = vmax.xlane.f32.xlu0 %v410
  %v412 = vpop.xlane.xlu0 %411
  %v413 = vlaneseq
  %v414 = vand.u32 %v413, 127
  %vm415 = vcmp.ge.f32.partialorder %v403, %v409
  %vm416 = vcmp.ge.f32.partialorder %v405, %v412
  %417 = vrot.lane.b32.xlu0 %v414, 1
  %v418 = vpop.permute.xlu0 %417
  %v419 = vsel %vm415, %v418, 3
  %v420 = vsel %vm416, %v418, 3
  %v421 = vsel %vm406, %v419, 2147483647
  %v422 = vand.u32 %v421, 65535
  %v423 = vshra.s32 %v421, 16
  %v424 = vcvt.s32.f32 %v422
  %v425 = vcvt.s32.f32 %v423
  %426 = vmin.xlane.f32.xlu0 %v425
  %v427 = vpop.xlane.xlu0 %426
  %vm428 = vcmp.eq.f32.partialorder %v425, %v427
  %v429 = vsel %vm428, %v424, inf
  %430 = vmin.xlane.f32.xlu0 %v429
  %v431 = vpop.xlane.xlu0 %430
  %v432 = vcvt.f32.s32 %v431
  %v433 = vcvt.f32.s32 %v427
  %v434 = vshll.u32 %v433, 16
  %v435 = vadd.s32 %v434, %v432
  %v436 = vsel %vm406, %v420, 2147483647
  %v437 = vand.u32 %v436, 65535
  %v438 = vshra.s32 %v436, 16
  %v439 = vcvt.s32.f32 %v437
  %v440 = vcvt.s32.f32 %v438
  %441 = vmin.xlane.f32.xlu0 %v440
  %v442 = vpop.xlane.xlu0 %441
  %vm443 = vcmp.eq.f32.partialorder %v440, %v442
  %v444 = vsel %vm443, %v439, inf
  %445 = vmin.xlane.f32.xlu0 %v444
  %v446 = vpop.xlane.xlu0 %445
  %v447 = vcvt.f32.s32 %v446
  %v448 = vcvt.f32.s32 %v442
  %v449 = vshll.u32 %v448, 16
  %v450 = vadd.s32 %v449, %v447
  %v451 = vadd.s32 %v435, 1
  %v452 = vadd.s32 %v450, 1
  %vm453 = vcmp.eq.s32.totalorder %v414, %v451
  %vm454 = vcmp.eq.s32.totalorder %v414, %v452
  %v455 = vsel %vm453, 1, 0
  %v456 = vsel %vm454, 1, 0
  %v457 = vcvt.s32.f32 %v455
  %v458 = vcvt.s32.f32 %v456
  %461 = vrot.lane.b32.xlu0 %v457, 5
  %v462 = vpop.permute.xlu0 %461
  %463 = vrot.lane.b32.xlu0 %v458, 5
  %v464 = vpop.permute.xlu0 %463
  %v467 = vmul.f32 %v377, %v462
  %v468 = vmul.f32 %v380, %v464
  %471 = vrot.lane.b32.xlu0 %v467, 123
  %v472 = vpop.permute.xlu0 %471
  %473 = vrot.lane.b32.xlu0 %v468, 123
  %v474 = vpop.permute.xlu0 %473
  %v477 = vsel %vm383, %v472, 0.0
  %478 = vadd.xlane.f32.xlu0 %v477
  %v479 = vpop.xlane.xlu0 %478
  %v480 = vsel %vm383, %v474, 0.0
  %481 = vadd.xlane.f32.xlu0 %v480
  %v482 = vpop.xlane.xlu0 %481
  %483 = vrot.lane.b32.xlu0 %v457, 10
  %v484 = vpop.permute.xlu0 %483
  %485 = vrot.lane.b32.xlu0 %v458, 10
  %v486 = vpop.permute.xlu0 %485
  %v489 = vmul.f32 %v377, %v484
  %v490 = vmul.f32 %v380, %v486
  %493 = vrot.lane.b32.xlu0 %v489, 118
  %v494 = vpop.permute.xlu0 %493
  %495 = vrot.lane.b32.xlu0 %v490, 118
  %v496 = vpop.permute.xlu0 %495
  %v499 = vsel %vm383, %v494, 0.0
  %500 = vadd.xlane.f32.xlu0 %v499
  %v501 = vpop.xlane.xlu0 %500
  %v502 = vsel %vm383, %v496, 0.0
  %503 = vadd.xlane.f32.xlu0 %v502
  %v504 = vpop.xlane.xlu0 %503
  %505 = vrot.lane.b32.xlu0 %v457, 15
  %v506 = vpop.permute.xlu0 %505
  %507 = vrot.lane.b32.xlu0 %v458, 15
  %v508 = vpop.permute.xlu0 %507
  %v511 = vmul.f32 %v377, %v506
  %v512 = vmul.f32 %v380, %v508
  %515 = vrot.lane.b32.xlu0 %v511, 113
  %v516 = vpop.permute.xlu0 %515
  %517 = vrot.lane.b32.xlu0 %v512, 113
  %v518 = vpop.permute.xlu0 %517
  %v521 = vsel %vm383, %v516, 0.0
  %522 = vadd.xlane.f32.xlu0 %v521
  %v523 = vpop.xlane.xlu0 %522
  %v524 = vsel %vm383, %v518, 0.0
  %525 = vadd.xlane.f32.xlu0 %v524
  %v526 = vpop.xlane.xlu0 %525
  %527 = vrot.lane.b32.xlu0 %v457, 20
  %v528 = vpop.permute.xlu0 %527
  %529 = vrot.lane.b32.xlu0 %v458, 20
  %v530 = vpop.permute.xlu0 %529
  %v533 = vmul.f32 %v377, %v528
  %v534 = vmul.f32 %v380, %v530
  %537 = vrot.lane.b32.xlu0 %v533, 108
  %v538 = vpop.permute.xlu0 %537
  %539 = vrot.lane.b32.xlu0 %v534, 108
  %v540 = vpop.permute.xlu0 %539
  %v543 = vsel %vm383, %v538, 0.0
  %544 = vadd.xlane.f32.xlu0 %v543
  %v545 = vpop.xlane.xlu0 %544
  %v546 = vsel %vm383, %v540, 0.0
  %547 = vadd.xlane.f32.xlu0 %v546
  %v548 = vpop.xlane.xlu0 %547
  %vm549 = vcmask 7168
  %v550 = vsel %vm549, %v479, %v501
  %v551 = vsel %vm549, %v482, %v504
  %vm552 = vcmask 15360
  %v553 = vsel %vm552, %v550, %v523
  %v554 = vsel %vm552, %v551, %v526
  %vm555 = vcmask 23552
  %v556 = vsel %vm555, %v553, %v545
  %v557 = vsel %vm555, %v554, %v548
  %v558 = vld [vmem:[%s1] sm:$0xff]
  %v559 = vld [vmem:[%s1 + $0x8] sm:$0xff]
  %562 = vrot.lane.b32.xlu0 %v558, 2
  %v563 = vpop.permute.xlu0 %562
  %564 = vrot.lane.b32.xlu0 %v559, 2
  %v565 = vpop.permute.xlu0 %564
  %v568 = vsub.f32 %v558, %v563
  %v569 = vsub.f32 %v559, %v565
  %v570 = vmul.f32 %v568, 0.5
  %v571 = vmul.f32 %v569, 0.5
  %574 = vrot.lane.b32.xlu0 %v570, 126
  %v575 = vpop.permute.xlu0 %574
  %576 = vrot.lane.b32.xlu0 %v571, 126
  %v577 = vpop.permute.xlu0 %576
  %v580 = vadd.f32 %v558, %v575
  %v581 = vadd.f32 %v559, %v577
  %v582 = vmin.f32 %v556, 4.1351666
  %v583 = vmin.f32 %v557, 4.1351666
  %586 = vrot.lane.b32.xlu0 %v568, 126
  %v587 = vpop.permute.xlu0 %586
  %588 = vrot.lane.b32.xlu0 %v569, 126
  %v589 = vpop.permute.xlu0 %588
  %v592 = vmul.f32 %v556, %v587
  %v593 = vmul.f32 %v557, %v589
  %v594 = vadd.f32 %v592, %v580
  %v595 = vadd.f32 %v593, %v581
  %v596 = vmul.f32 %v582, 1.442695
  %v597 = vpow.pop %v596
  %v598 = vmul.f32 %v583, 1.442695
  %v599 = vpow.pop %v598
  %v600 = vmul.f32 %v597, %v568
  %v601 = vmul.f32 %v599, %v569
  %v602 = vmul.f32 %v600, 0.5
  %v603 = vmul.f32 %v601, 0.5
  %606 = vrot.lane.b32.xlu0 %v602, 126
  %v607 = vpop.permute.xlu0 %606
  %608 = vrot.lane.b32.xlu0 %v603, 126
  %v609 = vpop.permute.xlu0 %608
  %v612 = vsub.f32 %v594, %v607
  %v613 = vsub.f32 %v595, %v609
  %v614 = vmax.f32 %v612, 0.0
  %v615 = vmax.f32 %v613, 0.0
  %v616 = vmin.f32 %v614, 16.0
  %v617 = vmin.f32 %v615, 16.0
  %v618 = vadd.f32 %v594, %v607
  %v619 = vadd.f32 %v595, %v609
  %v620 = vmax.f32 %v618, 0.0
  %v621 = vmax.f32 %v619, 0.0
  %v622 = vmin.f32 %v620, 16.0
  %v623 = vmin.f32 %v621, 16.0
  %626 = vrot.lane.b32.xlu0 %v622, 2
  %v627 = vpop.permute.xlu0 %626
  %628 = vrot.lane.b32.xlu0 %v623, 2
  %v629 = vpop.permute.xlu0 %628
  %v632 = vsel %vm552, %v616, %v627
  %v633 = vsel %vm552, %v617, %v629
  %v634 = vsel %vm555, %v632, %v627
  %v635 = vsel %vm555, %v633, %v629
  %vm636 = vcmask 31744
  %637 = vst.msk [vmem:[%s8] sm:$0xff] %vm636, %v634
  %638 = vst.msk [vmem:[%s8 + $0x8] sm:$0xff] %vm636, %v635
  %639 = vst.msk [vmem:[%s9] sm:$0xff] %vm549, %v409
  %640 = vst.msk [vmem:[%s9 + $0x8] sm:$0xff] %vm549, %v412
  %641 = vst.msk [vmem:[%s10] sm:$0xff] %vm549, %v451
  %642 = vst.msk [vmem:[%s10 + $0x8] sm:$0xff] %vm549, %v452
  // Predicated region
  $region34: #{generalized_rcnn_forward.7} parent=0 // pred_check
    _
  $region35: #{generalized_rcnn_forward.7} parent=0 // pred_check_branch
    %644 = sbr.rel (0) target = $region37
  $region36: #{generalized_rcnn_forward.7} parent=0 // pred_region
    _
  $region37: #{generalized_rcnn_forward.7} parent=0 // pred_fallthru
    _
  // Predicated region
  $region38: #{generalized_rcnn_forward.7} parent=0 // pred_check
    _
  $region39: #{generalized_rcnn_forward.7} parent=0 // pred_check_branch
    %646 = sbr.rel (0) target = $region41
  $region40: #{generalized_rcnn_forward.7} parent=0 // pred_region
    _
  $region41: #{generalized_rcnn_forward.7} parent=0 // pred_fallthru
    _
  // Predicated region
  $region42: #{generalized_rcnn_forward.7} parent=0 // pred_check
    _
  $region43: #{generalized_rcnn_forward.7} parent=0 // pred_check_branch
    %648 = sbr.rel (0) target = $region45
  $region44: #{generalized_rcnn_forward.7} parent=0 // pred_region
    _
  $region45: #{generalized_rcnn_forward.7} parent=0 // pred_fallthru
    _
  // Predicated region
  $region46: #{generalized_rcnn_forward.7} parent=0 // pred_check
    _
  $region47: #{generalized_rcnn_forward.7} parent=0 // pred_check_branch
    %650 = sbr.rel (0) target = $region49
  $region48: #{generalized_rcnn_forward.7} parent=0 // pred_region
    _
  $region49: #{generalized_rcnn_forward.7} parent=0 // pred_fallthru
    _
  // Predicated region
  $region50: #{generalized_rcnn_forward.7} parent=0 // pred_check
    _
  $region51: #{generalized_rcnn_forward.7} parent=0 // pred_check_branch
    %652 = sbr.rel (0) target = $region53
  $region52: #{generalized_rcnn_forward.7} parent=0 // pred_region
    _
  $region53: #{generalized_rcnn_forward.7} parent=0 // pred_fallthru
    _
  // Predicated region
  $region54: #{generalized_rcnn_forward.7} parent=0 // pred_check
    _
  $region55: #{generalized_rcnn_forward.7} parent=0 // pred_check_branch
    %654 = sbr.rel (0) target = $region57
  $region56: #{generalized_rcnn_forward.7} parent=0 // pred_region
    _
  $region57: #{generalized_rcnn_forward.7} parent=0 // pred_fallthru
    _

</llo_original>
